<compile_context>
chip_gen: v7x
topology: tpu7x:2x2x1
jax: 0.10.0
libtpu: 0.0.40
codegen_flags: <defaults>
</compile_context>

<pallas_src>
import math
from functools import partial

import jax
import jax.numpy as jnp
from jax import lax
from jax.experimental import pallas as pl
from jax.experimental.pallas import tpu as pltpu


# ---------------------------------------------------------------------------
# helpers used inside the kernels
# ---------------------------------------------------------------------------
def _layernorm(x, g, b, eps=1e-5):
    mu = jnp.mean(x, axis=-1, keepdims=True)
    var = jnp.mean((x - mu) ** 2, axis=-1, keepdims=True)
    return (x - mu) * lax.rsqrt(var + eps) * g + b


def _mm(x, w):
    """x @ w with f32 accumulation.  Leading dims are flattened so Mosaic sees
    a plain 2-D MXU matmul; x is cast to the (possibly bf16) weight dtype."""
    lead = x.shape[:-1]
    x2 = x.reshape((-1, x.shape[-1])).astype(w.dtype)
    y = jnp.dot(x2, w, preferred_element_type=jnp.float32)
    return y.reshape(lead + (w.shape[-1],))


def _round_up(x, m):
    return ((x + m - 1) // m) * m


# ---------------------------------------------------------------------------
# Kernel 1: embedding + encoder stack + final LN + `linear` MLP
# ---------------------------------------------------------------------------
def encoder_kernel(
    # inputs (order matches the wrapper)
    src_ref,
    e1w_ref, e1b_ref, e2w_ref, e2b_ref, pe_ref, elng_ref, elnb_ref,
    wqkv_ref, bqkv_ref, wo_ref, bo_ref, ln1g_ref, ln1b_ref,
    f1w_ref, f1b_ref, f2w_ref, f2b_ref, ln2g_ref, ln2b_ref,
    flng_ref, flnb_ref,
    l1w_ref, l1b_ref, l2w_ref, l2b_ref, l3w_ref, l3b_ref,
    # output
    z_ref,
    # scratch: activation resident in VMEM across the layer axis
    x_scr,
    *, nhead, act_dtype,
):
    layer = pl.program_id(1)
    nlayers = pl.num_programs(1)

    # ---- embedding MLP + positional encoding + embed_ln (layer 0 only) -----
    @pl.when(layer == 0)
    def _embed():
        x = src_ref[...]                                       # [bb, S, d_model]
        h = jnp.maximum(_mm(x, e1w_ref[...]) + e1b_ref[...], 0.0)
        h = _mm(h, e2w_ref[...]) + e2b_ref[...]
        h = h + pe_ref[...][None, :, :]                        # dropout = identity
        x_scr[...] = _layernorm(h, elng_ref[...], elnb_ref[...])

    # ---- encoder layer `layer` (post-norm: MHA + ReLU FFN) ------------------
    x = x_scr[...]                                             # [bb, S, H] f32
    bb, S, H = x.shape
    hd = H // nhead

    # fused QKV projection (one [H, 3H] matmul); 1/sqrt(hd) folded into Q.
    qkv = (_mm(x, wqkv_ref[...]) + bqkv_ref[...]).astype(act_dtype)   # [bb, S, 3H]

    # fold heads into the batch dim: ONE scores einsum + ONE context einsum.
    q = jnp.concatenate(
        [qkv[:, :, hi * hd:(hi + 1) * hd] for hi in range(nhead)], axis=0)
    k = jnp.concatenate(
        [qkv[:, :, H + hi * hd:H + (hi + 1) * hd] for hi in range(nhead)], axis=0)
    v = jnp.concatenate(
        [qkv[:, :, 2 * H + hi * hd:2 * H + (hi + 1) * hd] for hi in range(nhead)], axis=0)

    s = jnp.einsum("bqd,bkd->bqk", q, k,
                   preferred_element_type=jnp.float32)          # [nhead*bb, S, S]
    s = s - jnp.max(s, axis=-1, keepdims=True)
    p = jnp.exp(s)
    p = p * pl.reciprocal(jnp.sum(p, axis=-1, keepdims=True), approx=True)
    o = jnp.einsum("bqk,bkd->bqd", p.astype(act_dtype), v,
                   preferred_element_type=jnp.float32)          # [nhead*bb, S, hd]

    # regroup heads on the lane axis, then ONE [bb*S,H]x[H,H] output projection.
    o_all = jnp.concatenate([o[hi * bb:(hi + 1) * bb] for hi in range(nhead)],
                            axis=-1)                            # [bb, S, H]
    attn = _mm(o_all, wo_ref[...]) + bo_ref[...]

    y = _layernorm(x + attn, ln1g_ref[...], ln1b_ref[...])      # norm1 (post-norm)
    ff = jnp.maximum(_mm(y, f1w_ref[...]) + f1b_ref[...], 0.0).astype(act_dtype)
    ff = _mm(ff, f2w_ref[...]) + f2b_ref[...]
    x_scr[...] = _layernorm(y + ff, ln2g_ref[...], ln2b_ref[...])   # norm2

    # ---- final encoder LN + per-position `linear` MLP (last layer only) -----
    @pl.when(layer == nlayers - 1)
    def _tail():
        xo = _layernorm(x_scr[...], flng_ref[...], flnb_ref[...])
        z = jnp.maximum(_mm(xo, l1w_ref[...]) + l1b_ref[...], 0.0)
        z = jnp.maximum(_mm(z, l2w_ref[...]) + l2b_ref[...], 0.0)
        z = _mm(z, l3w_ref[...]) + l3b_ref[...]                 # [bb, S, H//8]
        z_ref[...] = z.astype(z_ref.dtype)


# ---------------------------------------------------------------------------
# Kernel 2: dueling head over the full batch
# ---------------------------------------------------------------------------
def dueling_head_kernel(
    z_ref, h1w_ref, h1b_ref,
    vln1g_ref, vln1b_ref, aln1g_ref, aln1b_ref,
    vw2_ref, vb2_ref, vln2g_ref, vln2b_ref, vw3_ref, vb3_ref,
    aw2_ref, ab2_ref, aln2g_ref, aln2b_ref, aw3_ref, ab3_ref,
    o_ref,
    *, num_actions,
):
    z = z_ref[...]                         # [B, S, H//8] f32
    B, S, _ = z.shape
    n1 = h1b_ref.shape[-1]                 # 1024 (= 512 val | 512 adv fused)

    # torch `x.view(B, -1)` flatten replaced by a per-position accumulation:
    #   h1 = sum_s z[:, s, :] @ h1w[s]   (pure MXU work, no lane-axis concat)
    h1 = jnp.zeros((B, n1), jnp.float32)
    for s in range(S):
        h1 = h1 + _mm(z[:, s, :], h1w_ref[s])
    h1 = h1 + h1b_ref[...]

    d1 = vln1g_ref.shape[-1]               # 512
    hv = jnp.maximum(_layernorm(h1[:, :d1], vln1g_ref[...], vln1b_ref[...]), 0.0)
    ha = jnp.maximum(_layernorm(h1[:, d1:], aln1g_ref[...], aln1b_ref[...]), 0.0)
    hv = jnp.maximum(_layernorm(_mm(hv, vw2_ref[...]) + vb2_ref[...],
                                vln2g_ref[...], vln2b_ref[...]), 0.0)
    ha = jnp.maximum(_layernorm(_mm(ha, aw2_ref[...]) + ab2_ref[...],
                                aln2g_ref[...], aln2b_ref[...]), 0.0)
    val = _mm(hv, vw3_ref[...]) + vb3_ref[...]           # [B, 1]
    adv = _mm(ha, aw3_ref[...]) + ab3_ref[...]           # [B, PAD]; cols >= A are 0
    mean_adv = jnp.sum(adv, axis=-1, keepdims=True) * (1.0 / num_actions)
    # lane-dense 128-wide unmasked store; the wrapper slices [:, :num_actions]
    o_ref[...] = val + (adv - mean_adv)


# ---------------------------------------------------------------------------
# parameter construction (deterministic, synthetic, already kernel-layout)
# ---------------------------------------------------------------------------
def make_params(key, *, d_model, nhead, d_hid, nlayers, num_actions,
                hidden_size, seq_dim, matmul_dtype=jnp.bfloat16):
    H = hidden_size
    assert H % nhead == 0 and H % 8 == 0
    hd = H // nhead
    d8 = H // 8
    F = seq_dim * d8
    scale = 1.0 / math.sqrt(hd)
    keys = iter(jax.random.split(key, 256))

    def kw(din, dout):   # kaiming-uniform-ish (relu), f32
        bound = math.sqrt(6.0 / din)
        return jax.random.uniform(next(keys), (din, dout), jnp.float32, -bound, bound)

    w = lambda din, dout: kw(din, dout).astype(matmul_dtype)
    zb = lambda d: jnp.zeros((1, d), jnp.float32)
    lng = lambda d: jnp.ones((1, d), jnp.float32)
    lnb = lambda d: jnp.zeros((1, d), jnp.float32)

    # NOTE: at real (non-toy) sizes, choose/pad 3H, d_hid and the head widths
    # to multiples of 256 (128 on v5e) so each MXU pass is full-width.
    p = {}
    # embedding MLP + embed_ln
    p["e1w"], p["e1b"] = w(d_model, H), zb(H)
    p["e2w"], p["e2b"] = w(H, H), zb(H)
    p["eln_g"], p["eln_b"] = lng(H), lnb(H)

    # positional encoding buffer pe[:seq_dim]
    pos = jnp.arange(seq_dim, dtype=jnp.float32)[:, None]
    div = jnp.exp(jnp.arange(0, H, 2, dtype=jnp.float32) * (-math.log(10000.0) / H))
    pe = jnp.zeros((seq_dim, H), jnp.float32)
    pe = pe.at[:, 0::2].set(jnp.sin(pos * div))
    pe = pe.at[:, 1::2].set(jnp.cos(pos * div))
    p["pe"] = pe

    # stacked per-layer encoder weights (leading axis = nlayers, streamed)
    stacks = {k: [] for k in ("wqkv", "bqkv", "wo", "bo", "ln1_g", "ln1_b",
                              "f1w", "f1b", "f2w", "f2b", "ln2_g", "ln2_b")}
    for _ in range(nlayers):
        wq = kw(H, H) * scale              # fold 1/sqrt(hd) into the Q projection
        wk, wv = kw(H, H), kw(H, H)
        stacks["wqkv"].append(jnp.concatenate([wq, wk, wv], axis=1).astype(matmul_dtype))
        # NOTE: when loading real checkpoints, scale the Q bias by `scale` too.
        stacks["bqkv"].append(jnp.zeros((1, 3 * H), jnp.float32))
        stacks["wo"].append(kw(H, H).astype(matmul_dtype))
        stacks["bo"].append(zb(H))
        stacks["ln1_g"].append(lng(H)); stacks["ln1_b"].append(lnb(H))
        stacks["f1w"].append(w(H, d_hid)); stacks["f1b"].append(zb(d_hid))
        stacks["f2w"].append(w(d_hid, H)); stacks["f2b"].append(zb(H))
        stacks["ln2_g"].append(lng(H)); stacks["ln2_b"].append(lnb(H))
    for k, v in stacks.items():
        p[k] = jnp.stack(v)

    # final encoder LayerNorm + self.linear MLP
    p["fln_g"], p["fln_b"] = lng(H), lnb(H)
    p["l1w"], p["l1b"] = w(H, H // 2), zb(H // 2)
    p["l2w"], p["l2b"] = w(H // 2, H // 4), zb(H // 4)
    p["l3w"], p["l3b"] = w(H // 4, d8), zb(d8)

    # dueling head: val|adv first linears fused into one [F, 1024] matmul and
    # pre-reshaped to [S, H//8, 1024] so the head kernel does per-position
    # matmuls (h1 = sum_s z[:, s, :] @ h1w[s]) instead of a lane-axis flatten.
    vw1, aw1 = kw(F, 512), kw(F, 512)
    h1w = jnp.concatenate([vw1, aw1], axis=1)                # [F, 1024]
    p["h1w"] = h1w.reshape(seq_dim, d8, 1024).astype(matmul_dtype)
    p["h1b"] = jnp.zeros((1, 1024), jnp.float32)
    p["vln1_g"], p["vln1_b"] = lng(512), lnb(512)
    p["aln1_g"], p["aln1_b"] = lng(512), lnb(512)
    p["vw2"], p["vb2"] = w(512, 256), zb(256)
    p["vln2_g"], p["vln2_b"] = lng(256), lnb(256)
    p["aw2"], p["ab2"] = w(512, 256), zb(256)
    p["aln2_g"], p["aln2_b"] = lng(256), lnb(256)
    p["vw3"], p["vb3"] = w(256, 1), jnp.zeros((1, 1), jnp.float32)
    # adv last linear zero-padded to a lane-dense (multiple-of-128) slab
    out_pad = _round_up(num_actions, 128)
    aw3 = kw(256, num_actions)
    p["aw3"] = (jnp.zeros((256, out_pad), jnp.float32)
                .at[:, :num_actions].set(aw3).astype(matmul_dtype))
    p["ab3"] = jnp.zeros((1, out_pad), jnp.float32)
    return p


# ---------------------------------------------------------------------------
# generation-aware knobs
# ---------------------------------------------------------------------------
def _vmem_limit_bytes():
    """~85% of the per-core physical VMEM (≈108 MiB on v5e/v6e, ≈54 MiB on v7x)."""
    try:
        cap = int(pltpu.get_tpu_info().vmem_capacity_bytes)
        return max(32 * 1024 * 1024, int(cap * 0.85))
    except Exception:
        return 48 * 1024 * 1024   # conservative fallback, safe on every generation


def _act_dtype():
    """bf16 qkv/FFN intermediates on v6e/v7x (halves VMEM + vld traffic);
    f32 on v5e (no bf16 VPU/EUP)."""
    try:
        kind = jax.devices()[0].device_kind.lower()
        if "v5 lite" in kind or "v5lite" in kind or "v5e" in kind:
            return jnp.float32
    except Exception:
        pass
    return jnp.bfloat16


# ---------------------------------------------------------------------------
# forward pass: encoder kernel + dueling-head kernel
# ---------------------------------------------------------------------------
def transformer_dueling_forward(src, params, *, nhead, num_actions, batch_block=None):
    # batch_block=None -> bb=B (best MXU row fill on v5e/v6e; amortizes the
    # ~0.35 µs per-grid-step overhead).  On v7x pass batch_block=B//2 so the
    # "parallel" batch axis has >=2 blocks for the two TensorCores.
    B, S, Dm = src.shape
    H = params["pe"].shape[1]
    d8 = H // 8
    nlayers = params["wqkv"].shape[0]
    OUT_PAD = params["aw3"].shape[1]
    bb = B if batch_block is None else batch_block
    assert B % bb == 0
    assert params["pe"].shape[0] == S
    assert params["h1w"].shape[:2] == (S, d8)

    act_dtype = _act_dtype()
    vmem_limit = _vmem_limit_bytes()

    def const_spec(x):
        # TODO(synk): on v7x these never-changing blocks could be single-
        # buffered (pipeline_mode=pl.Buffered(1)) or DMA'd manually to save VMEM.
        nd = x.ndim
        return pl.BlockSpec(x.shape, lambda b, l, _n=nd: (0,) * _n)

    def layer_spec(x):
        # stacked per-layer weights, streamed (double-buffered) along the layer axis.
        # TODO(synk): on v5e, bump f1w/f2w to pipeline_mode=pl.Buffered(3) if
        # profiling shows exposed weight DMA between layer steps.
        nd = x.ndim
        return pl.BlockSpec((None,) + x.shape[1:],
                            lambda b, l, _n=nd: (l,) + (0,) * (_n - 1))

    src_spec = pl.BlockSpec((bb, S, Dm), lambda b, l: (b, 0, 0))
    z_spec = pl.BlockSpec((bb, S, d8), lambda b, l: (b, 0, 0))

    pre_keys = ("e1w", "e1b", "e2w", "e2b", "pe", "eln_g", "eln_b")
    layer_keys = ("wqkv", "bqkv", "wo", "bo", "ln1_g", "ln1_b",
                  "f1w", "f1b", "f2w", "f2b", "ln2_g", "ln2_b")
    tail_keys = ("fln_g", "fln_b", "l1w", "l1b", "l2w", "l2b", "l3w", "l3b")

    enc_args = ([src]
                + [params[k] for k in pre_keys]
                + [params[k] for k in layer_keys]
                + [params[k] for k in tail_keys])
    enc_specs = ([src_spec]
                 + [const_spec(params[k]) for k in pre_keys]
                 + [layer_spec(params[k]) for k in layer_keys]
                 + [const_spec(params[k]) for k in tail_keys])

    z = pl.pallas_call(
        partial(encoder_kernel, nhead=nhead, act_dtype=act_dtype),
        out_shape=jax.ShapeDtypeStruct((B, S, d8), jnp.float32),
        grid_spec=pltpu.PrefetchScalarGridSpec(
            num_scalar_prefetch=0,
            grid=(B // bb, nlayers),
            in_specs=enc_specs,
            out_specs=z_spec,
            scratch_shapes=[pltpu.VMEM((bb, S, H), jnp.float32)],  # resident activation
        ),
        compiler_params=pltpu.CompilerParams(
            dimension_semantics=("parallel", "arbitrary"),   # batch || layers sequential
            vmem_limit_bytes=vmem_limit,
        ),
    )(*enc_args)

    head_keys = ("h1w", "h1b", "vln1_g", "vln1_b", "aln1_g", "aln1_b",
                 "vw2", "vb2", "vln2_g", "vln2_b", "vw3", "vb3",
                 "aw2", "ab2", "aln2_g", "aln2_b", "aw3", "ab3")
    q_pad = pl.pallas_call(
        partial(dueling_head_kernel, num_actions=num_actions),
        out_shape=jax.ShapeDtypeStruct((B, OUT_PAD), jnp.float32),
        compiler_params=pltpu.CompilerParams(vmem_limit_bytes=vmem_limit),
    )(z, *[params[k] for k in head_keys])

    return q_pad[:, :num_actions]   # drop the lane padding


# ---------------------------------------------------------------------------
if __name__ == "__main__":
    # small, consistent shapes
    d_model, nhead, d_hid, nlayers = 16, 2, 64, 2
    num_actions, hidden_size, seq_dim = 4, 32, 8
    batch = 2

    key = jax.random.PRNGKey(0)
    pkey, xkey = jax.random.split(key)
    params = make_params(pkey, d_model=d_model, nhead=nhead, d_hid=d_hid,
                         nlayers=nlayers, num_actions=num_actions,
                         hidden_size=hidden_size, seq_dim=seq_dim)

    src = jax.random.normal(xkey, (batch, seq_dim, d_model), jnp.float32)

    # default batch_block=None -> whole batch per grid step (review item 1)
    fwd = jax.jit(partial(transformer_dueling_forward, nhead=nhead,
                          num_actions=num_actions))
    q_values = jax.block_until_ready(fwd(src, params))

    assert q_values.shape == (batch, num_actions)
    assert bool(jnp.all(jnp.isfinite(q_values)))
    print("KERNEL_OK")
</pallas_src>

<mosaic_0001>
module attributes {stable_mosaic.version = 11 : i64} {
  func.func @dueling_head_kernel(%arg0: memref<2x8x4xf32, #tpu.memory_space<vmem>>, %arg1: memref<8x4x1024xbf16, #tpu.memory_space<vmem>>, %arg2: memref<1x1024xf32, #tpu.memory_space<vmem>>, %arg3: memref<1x512xf32, #tpu.memory_space<vmem>>, %arg4: memref<1x512xf32, #tpu.memory_space<vmem>>, %arg5: memref<1x512xf32, #tpu.memory_space<vmem>>, %arg6: memref<1x512xf32, #tpu.memory_space<vmem>>, %arg7: memref<512x256xbf16, #tpu.memory_space<vmem>>, %arg8: memref<1x256xf32, #tpu.memory_space<vmem>>, %arg9: memref<1x256xf32, #tpu.memory_space<vmem>>, %arg10: memref<1x256xf32, #tpu.memory_space<vmem>>, %arg11: memref<256x1xbf16, #tpu.memory_space<vmem>>, %arg12: memref<1x1xf32, #tpu.memory_space<vmem>>, %arg13: memref<512x256xbf16, #tpu.memory_space<vmem>>, %arg14: memref<1x256xf32, #tpu.memory_space<vmem>>, %arg15: memref<1x256xf32, #tpu.memory_space<vmem>>, %arg16: memref<1x256xf32, #tpu.memory_space<vmem>>, %arg17: memref<256x128xbf16, #tpu.memory_space<vmem>>, %arg18: memref<1x128xf32, #tpu.memory_space<vmem>>, %arg19: memref<2x128xf32, #tpu.memory_space<vmem>>) attributes {dimension_semantics = [], scalar_prefetch = 0 : i64, scratch_operands = 0 : i64, tpu.core_type = #tpu.core_type<tc>} {
    %c0 = arith.constant 0 : index
    %c0_0 = arith.constant 0 : index
    %c0_1 = arith.constant 0 : index
    %0 = vector.load %arg0[%c0, %c0_0, %c0_1] : memref<2x8x4xf32, #tpu.memory_space<vmem>>, vector<2x8x4xf32>
    %cst = arith.constant 0.000000e+00 : f32
    %1 = vector.broadcast %cst : f32 to vector<2x1024xf32>
    %2 = vector.extract_strided_slice %0 {offsets = [0, 0, 0], sizes = [2, 1, 4], strides = [1, 1, 1]} : vector<2x8x4xf32> to vector<2x1x4xf32>
    %3 = vector.shape_cast %2 : vector<2x1x4xf32> to vector<2x4xf32>
    %c0_2 = arith.constant 0 : index
    %c0_3 = arith.constant 0 : index
    %c0_4 = arith.constant 0 : index
    %4 = vector.load %arg1[%c0_2, %c0_3, %c0_4] : memref<8x4x1024xbf16, #tpu.memory_space<vmem>>, vector<1x4x1024xbf16>
    %5 = vector.shape_cast %4 : vector<1x4x1024xbf16> to vector<4x1024xbf16>
    %6 = arith.truncf %3 : vector<2x4xf32> to vector<2x4xbf16>
    %cst_5 = arith.constant dense<0.000000e+00> : vector<2x1024xf32>
    %7 = tpu.matmul %6, %5, %cst_5 {dimension_numbers = #tpu.dot_dimension_numbers<[1], [0], [0], [1], [0, 0, 1, 1], [], []>} : vector<2x4xbf16>, vector<4x1024xbf16>, vector<2x1024xf32> -> vector<2x1024xf32>
    %8 = arith.addf %1, %7 : vector<2x1024xf32>
    %9 = vector.extract_strided_slice %0 {offsets = [0, 1, 0], sizes = [2, 1, 4], strides = [1, 1, 1]} : vector<2x8x4xf32> to vector<2x1x4xf32>
    %10 = vector.shape_cast %9 : vector<2x1x4xf32> to vector<2x4xf32>
    %c1 = arith.constant 1 : index
    %c0_6 = arith.constant 0 : index
    %c0_7 = arith.constant 0 : index
    %11 = vector.load %arg1[%c1, %c0_6, %c0_7] : memref<8x4x1024xbf16, #tpu.memory_space<vmem>>, vector<1x4x1024xbf16>
    %12 = vector.shape_cast %11 : vector<1x4x1024xbf16> to vector<4x1024xbf16>
    %13 = arith.truncf %10 : vector<2x4xf32> to vector<2x4xbf16>
    %cst_8 = arith.constant dense<0.000000e+00> : vector<2x1024xf32>
    %14 = tpu.matmul %13, %12, %cst_8 {dimension_numbers = #tpu.dot_dimension_numbers<[1], [0], [0], [1], [0, 0, 1, 1], [], []>} : vector<2x4xbf16>, vector<4x1024xbf16>, vector<2x1024xf32> -> vector<2x1024xf32>
    %15 = arith.addf %8, %14 : vector<2x1024xf32>
    %16 = vector.extract_strided_slice %0 {offsets = [0, 2, 0], sizes = [2, 1, 4], strides = [1, 1, 1]} : vector<2x8x4xf32> to vector<2x1x4xf32>
    %17 = vector.shape_cast %16 : vector<2x1x4xf32> to vector<2x4xf32>
    %c2 = arith.constant 2 : index
    %c0_9 = arith.constant 0 : index
    %c0_10 = arith.constant 0 : index
    %18 = vector.load %arg1[%c2, %c0_9, %c0_10] : memref<8x4x1024xbf16, #tpu.memory_space<vmem>>, vector<1x4x1024xbf16>
    %19 = vector.shape_cast %18 : vector<1x4x1024xbf16> to vector<4x1024xbf16>
    %20 = arith.truncf %17 : vector<2x4xf32> to vector<2x4xbf16>
    %cst_11 = arith.constant dense<0.000000e+00> : vector<2x1024xf32>
    %21 = tpu.matmul %20, %19, %cst_11 {dimension_numbers = #tpu.dot_dimension_numbers<[1], [0], [0], [1], [0, 0, 1, 1], [], []>} : vector<2x4xbf16>, vector<4x1024xbf16>, vector<2x1024xf32> -> vector<2x1024xf32>
    %22 = arith.addf %15, %21 : vector<2x1024xf32>
    %23 = vector.extract_strided_slice %0 {offsets = [0, 3, 0], sizes = [2, 1, 4], strides = [1, 1, 1]} : vector<2x8x4xf32> to vector<2x1x4xf32>
    %24 = vector.shape_cast %23 : vector<2x1x4xf32> to vector<2x4xf32>
    %c3 = arith.constant 3 : index
    %c0_12 = arith.constant 0 : index
    %c0_13 = arith.constant 0 : index
    %25 = vector.load %arg1[%c3, %c0_12, %c0_13] : memref<8x4x1024xbf16, #tpu.memory_space<vmem>>, vector<1x4x1024xbf16>
    %26 = vector.shape_cast %25 : vector<1x4x1024xbf16> to vector<4x1024xbf16>
    %27 = arith.truncf %24 : vector<2x4xf32> to vector<2x4xbf16>
    %cst_14 = arith.constant dense<0.000000e+00> : vector<2x1024xf32>
    %28 = tpu.matmul %27, %26, %cst_14 {dimension_numbers = #tpu.dot_dimension_numbers<[1], [0], [0], [1], [0, 0, 1, 1], [], []>} : vector<2x4xbf16>, vector<4x1024xbf16>, vector<2x1024xf32> -> vector<2x1024xf32>
    %29 = arith.addf %22, %28 : vector<2x1024xf32>
    %30 = vector.extract_strided_slice %0 {offsets = [0, 4, 0], sizes = [2, 1, 4], strides = [1, 1, 1]} : vector<2x8x4xf32> to vector<2x1x4xf32>
    %31 = vector.shape_cast %30 : vector<2x1x4xf32> to vector<2x4xf32>
    %c4 = arith.constant 4 : index
    %c0_15 = arith.constant 0 : index
    %c0_16 = arith.constant 0 : index
    %32 = vector.load %arg1[%c4, %c0_15, %c0_16] : memref<8x4x1024xbf16, #tpu.memory_space<vmem>>, vector<1x4x1024xbf16>
    %33 = vector.shape_cast %32 : vector<1x4x1024xbf16> to vector<4x1024xbf16>
    %34 = arith.truncf %31 : vector<2x4xf32> to vector<2x4xbf16>
    %cst_17 = arith.constant dense<0.000000e+00> : vector<2x1024xf32>
    %35 = tpu.matmul %34, %33, %cst_17 {dimension_numbers = #tpu.dot_dimension_numbers<[1], [0], [0], [1], [0, 0, 1, 1], [], []>} : vector<2x4xbf16>, vector<4x1024xbf16>, vector<2x1024xf32> -> vector<2x1024xf32>
    %36 = arith.addf %29, %35 : vector<2x1024xf32>
    %37 = vector.extract_strided_slice %0 {offsets = [0, 5, 0], sizes = [2, 1, 4], strides = [1, 1, 1]} : vector<2x8x4xf32> to vector<2x1x4xf32>
    %38 = vector.shape_cast %37 : vector<2x1x4xf32> to vector<2x4xf32>
    %c5 = arith.constant 5 : index
    %c0_18 = arith.constant 0 : index
    %c0_19 = arith.constant 0 : index
    %39 = vector.load %arg1[%c5, %c0_18, %c0_19] : memref<8x4x1024xbf16, #tpu.memory_space<vmem>>, vector<1x4x1024xbf16>
    %40 = vector.shape_cast %39 : vector<1x4x1024xbf16> to vector<4x1024xbf16>
    %41 = arith.truncf %38 : vector<2x4xf32> to vector<2x4xbf16>
    %cst_20 = arith.constant dense<0.000000e+00> : vector<2x1024xf32>
    %42 = tpu.matmul %41, %40, %cst_20 {dimension_numbers = #tpu.dot_dimension_numbers<[1], [0], [0], [1], [0, 0, 1, 1], [], []>} : vector<2x4xbf16>, vector<4x1024xbf16>, vector<2x1024xf32> -> vector<2x1024xf32>
    %43 = arith.addf %36, %42 : vector<2x1024xf32>
    %44 = vector.extract_strided_slice %0 {offsets = [0, 6, 0], sizes = [2, 1, 4], strides = [1, 1, 1]} : vector<2x8x4xf32> to vector<2x1x4xf32>
    %45 = vector.shape_cast %44 : vector<2x1x4xf32> to vector<2x4xf32>
    %c6 = arith.constant 6 : index
    %c0_21 = arith.constant 0 : index
    %c0_22 = arith.constant 0 : index
    %46 = vector.load %arg1[%c6, %c0_21, %c0_22] : memref<8x4x1024xbf16, #tpu.memory_space<vmem>>, vector<1x4x1024xbf16>
    %47 = vector.shape_cast %46 : vector<1x4x1024xbf16> to vector<4x1024xbf16>
    %48 = arith.truncf %45 : vector<2x4xf32> to vector<2x4xbf16>
    %cst_23 = arith.constant dense<0.000000e+00> : vector<2x1024xf32>
    %49 = tpu.matmul %48, %47, %cst_23 {dimension_numbers = #tpu.dot_dimension_numbers<[1], [0], [0], [1], [0, 0, 1, 1], [], []>} : vector<2x4xbf16>, vector<4x1024xbf16>, vector<2x1024xf32> -> vector<2x1024xf32>
    %50 = arith.addf %43, %49 : vector<2x1024xf32>
    %51 = vector.extract_strided_slice %0 {offsets = [0, 7, 0], sizes = [2, 1, 4], strides = [1, 1, 1]} : vector<2x8x4xf32> to vector<2x1x4xf32>
    %52 = vector.shape_cast %51 : vector<2x1x4xf32> to vector<2x4xf32>
    %c7 = arith.constant 7 : index
    %c0_24 = arith.constant 0 : index
    %c0_25 = arith.constant 0 : index
    %53 = vector.load %arg1[%c7, %c0_24, %c0_25] : memref<8x4x1024xbf16, #tpu.memory_space<vmem>>, vector<1x4x1024xbf16>
    %54 = vector.shape_cast %53 : vector<1x4x1024xbf16> to vector<4x1024xbf16>
    %55 = arith.truncf %52 : vector<2x4xf32> to vector<2x4xbf16>
    %cst_26 = arith.constant dense<0.000000e+00> : vector<2x1024xf32>
    %56 = tpu.matmul %55, %54, %cst_26 {dimension_numbers = #tpu.dot_dimension_numbers<[1], [0], [0], [1], [0, 0, 1, 1], [], []>} : vector<2x4xbf16>, vector<4x1024xbf16>, vector<2x1024xf32> -> vector<2x1024xf32>
    %57 = arith.addf %50, %56 : vector<2x1024xf32>
    %c0_27 = arith.constant 0 : index
    %c0_28 = arith.constant 0 : index
    %58 = vector.load %arg2[%c0_27, %c0_28] : memref<1x1024xf32, #tpu.memory_space<vmem>>, vector<1x1024xf32>
    %59 = vector.broadcast %58 : vector<1x1024xf32> to vector<2x1024xf32>
    %60 = arith.addf %57, %59 : vector<2x1024xf32>
    %61 = vector.extract_strided_slice %60 {offsets = [0, 0], sizes = [2, 512], strides = [1, 1]} : vector<2x1024xf32> to vector<2x512xf32>
    %c0_29 = arith.constant 0 : index
    %c0_30 = arith.constant 0 : index
    %62 = vector.load %arg3[%c0_29, %c0_30] : memref<1x512xf32, #tpu.memory_space<vmem>>, vector<1x512xf32>
    %c0_31 = arith.constant 0 : index
    %c0_32 = arith.constant 0 : index
    %63 = vector.load %arg4[%c0_31, %c0_32] : memref<1x512xf32, #tpu.memory_space<vmem>>, vector<1x512xf32>
    %cst_33 = arith.constant dense<0.000000e+00> : vector<2xf32>
    %64 = vector.multi_reduction <add>, %61, %cst_33 [1] : vector<2x512xf32> to vector<2xf32>
    %65 = vector.shape_cast %64 : vector<2xf32> to vector<2x1xf32>
    %cst_34 = arith.constant 5.120000e+02 : f32
    %66 = vector.broadcast %cst_34 : f32 to vector<2x1xf32>
    %67 = arith.divf %65, %66 : vector<2x1xf32>
    %68 = vector.broadcast %67 : vector<2x1xf32> to vector<2x512xf32>
    %69 = arith.subf %61, %68 : vector<2x512xf32>
    %70 = arith.mulf %69, %69 : vector<2x512xf32>
    %cst_35 = arith.constant dense<0.000000e+00> : vector<2xf32>
    %71 = vector.multi_reduction <add>, %70, %cst_35 [1] : vector<2x512xf32> to vector<2xf32>
    %72 = vector.shape_cast %71 : vector<2xf32> to vector<2x1xf32>
    %cst_36 = arith.constant 5.120000e+02 : f32
    %73 = vector.broadcast %cst_36 : f32 to vector<2x1xf32>
    %74 = arith.divf %72, %73 : vector<2x1xf32>
    %75 = vector.broadcast %67 : vector<2x1xf32> to vector<2x512xf32>
    %76 = arith.subf %61, %75 : vector<2x512xf32>
    %cst_37 = arith.constant 9.99999974E-6 : f32
    %77 = vector.broadcast %cst_37 : f32 to vector<2x1xf32>
    %78 = arith.addf %74, %77 : vector<2x1xf32>
    %79 = math.rsqrt %78 : vector<2x1xf32>
    %80 = vector.broadcast %79 : vector<2x1xf32> to vector<2x512xf32>
    %81 = arith.mulf %76, %80 : vector<2x512xf32>
    %82 = vector.broadcast %62 : vector<1x512xf32> to vector<2x512xf32>
    %83 = arith.mulf %81, %82 : vector<2x512xf32>
    %84 = vector.broadcast %63 : vector<1x512xf32> to vector<2x512xf32>
    %85 = arith.addf %83, %84 : vector<2x512xf32>
    %cst_38 = arith.constant 0.000000e+00 : f32
    %86 = vector.broadcast %cst_38 : f32 to vector<2x512xf32>
    %87 = arith.maximumf %85, %86 : vector<2x512xf32>
    %88 = vector.extract_strided_slice %60 {offsets = [0, 512], sizes = [2, 512], strides = [1, 1]} : vector<2x1024xf32> to vector<2x512xf32>
    %c0_39 = arith.constant 0 : index
    %c0_40 = arith.constant 0 : index
    %89 = vector.load %arg5[%c0_39, %c0_40] : memref<1x512xf32, #tpu.memory_space<vmem>>, vector<1x512xf32>
    %c0_41 = arith.constant 0 : index
    %c0_42 = arith.constant 0 : index
    %90 = vector.load %arg6[%c0_41, %c0_42] : memref<1x512xf32, #tpu.memory_space<vmem>>, vector<1x512xf32>
    %cst_43 = arith.constant dense<0.000000e+00> : vector<2xf32>
    %91 = vector.multi_reduction <add>, %88, %cst_43 [1] : vector<2x512xf32> to vector<2xf32>
    %92 = vector.shape_cast %91 : vector<2xf32> to vector<2x1xf32>
    %cst_44 = arith.constant 5.120000e+02 : f32
    %93 = vector.broadcast %cst_44 : f32 to vector<2x1xf32>
    %94 = arith.divf %92, %93 : vector<2x1xf32>
    %95 = vector.broadcast %94 : vector<2x1xf32> to vector<2x512xf32>
    %96 = arith.subf %88, %95 : vector<2x512xf32>
    %97 = arith.mulf %96, %96 : vector<2x512xf32>
    %cst_45 = arith.constant dense<0.000000e+00> : vector<2xf32>
    %98 = vector.multi_reduction <add>, %97, %cst_45 [1] : vector<2x512xf32> to vector<2xf32>
    %99 = vector.shape_cast %98 : vector<2xf32> to vector<2x1xf32>
    %cst_46 = arith.constant 5.120000e+02 : f32
    %100 = vector.broadcast %cst_46 : f32 to vector<2x1xf32>
    %101 = arith.divf %99, %100 : vector<2x1xf32>
    %102 = vector.broadcast %94 : vector<2x1xf32> to vector<2x512xf32>
    %103 = arith.subf %88, %102 : vector<2x512xf32>
    %cst_47 = arith.constant 9.99999974E-6 : f32
    %104 = vector.broadcast %cst_47 : f32 to vector<2x1xf32>
    %105 = arith.addf %101, %104 : vector<2x1xf32>
    %106 = math.rsqrt %105 : vector<2x1xf32>
    %107 = vector.broadcast %106 : vector<2x1xf32> to vector<2x512xf32>
    %108 = arith.mulf %103, %107 : vector<2x512xf32>
    %109 = vector.broadcast %89 : vector<1x512xf32> to vector<2x512xf32>
    %110 = arith.mulf %108, %109 : vector<2x512xf32>
    %111 = vector.broadcast %90 : vector<1x512xf32> to vector<2x512xf32>
    %112 = arith.addf %110, %111 : vector<2x512xf32>
    %cst_48 = arith.constant 0.000000e+00 : f32
    %113 = vector.broadcast %cst_48 : f32 to vector<2x512xf32>
    %114 = arith.maximumf %112, %113 : vector<2x512xf32>
    %c0_49 = arith.constant 0 : index
    %c0_50 = arith.constant 0 : index
    %115 = vector.load %arg7[%c0_49, %c0_50] : memref<512x256xbf16, #tpu.memory_space<vmem>>, vector<512x256xbf16>
    %116 = arith.truncf %87 : vector<2x512xf32> to vector<2x512xbf16>
    %cst_51 = arith.constant dense<0.000000e+00> : vector<2x256xf32>
    %117 = tpu.matmul %116, %115, %cst_51 {dimension_numbers = #tpu.dot_dimension_numbers<[1], [0], [0], [1], [0, 0, 1, 1], [], []>} : vector<2x512xbf16>, vector<512x256xbf16>, vector<2x256xf32> -> vector<2x256xf32>
    %c0_52 = arith.constant 0 : index
    %c0_53 = arith.constant 0 : index
    %118 = vector.load %arg8[%c0_52, %c0_53] : memref<1x256xf32, #tpu.memory_space<vmem>>, vector<1x256xf32>
    %119 = vector.broadcast %118 : vector<1x256xf32> to vector<2x256xf32>
    %120 = arith.addf %117, %119 : vector<2x256xf32>
    %c0_54 = arith.constant 0 : index
    %c0_55 = arith.constant 0 : index
    %121 = vector.load %arg9[%c0_54, %c0_55] : memref<1x256xf32, #tpu.memory_space<vmem>>, vector<1x256xf32>
    %c0_56 = arith.constant 0 : index
    %c0_57 = arith.constant 0 : index
    %122 = vector.load %arg10[%c0_56, %c0_57] : memref<1x256xf32, #tpu.memory_space<vmem>>, vector<1x256xf32>
    %cst_58 = arith.constant dense<0.000000e+00> : vector<2xf32>
    %123 = vector.multi_reduction <add>, %120, %cst_58 [1] : vector<2x256xf32> to vector<2xf32>
    %124 = vector.shape_cast %123 : vector<2xf32> to vector<2x1xf32>
    %cst_59 = arith.constant 2.560000e+02 : f32
    %125 = vector.broadcast %cst_59 : f32 to vector<2x1xf32>
    %126 = arith.divf %124, %125 : vector<2x1xf32>
    %127 = vector.broadcast %126 : vector<2x1xf32> to vector<2x256xf32>
    %128 = arith.subf %120, %127 : vector<2x256xf32>
    %129 = arith.mulf %128, %128 : vector<2x256xf32>
    %cst_60 = arith.constant dense<0.000000e+00> : vector<2xf32>
    %130 = vector.multi_reduction <add>, %129, %cst_60 [1] : vector<2x256xf32> to vector<2xf32>
    %131 = vector.shape_cast %130 : vector<2xf32> to vector<2x1xf32>
    %cst_61 = arith.constant 2.560000e+02 : f32
    %132 = vector.broadcast %cst_61 : f32 to vector<2x1xf32>
    %133 = arith.divf %131, %132 : vector<2x1xf32>
    %134 = vector.broadcast %126 : vector<2x1xf32> to vector<2x256xf32>
    %135 = arith.subf %120, %134 : vector<2x256xf32>
    %cst_62 = arith.constant 9.99999974E-6 : f32
    %136 = vector.broadcast %cst_62 : f32 to vector<2x1xf32>
    %137 = arith.addf %133, %136 : vector<2x1xf32>
    %138 = math.rsqrt %137 : vector<2x1xf32>
    %139 = vector.broadcast %138 : vector<2x1xf32> to vector<2x256xf32>
    %140 = arith.mulf %135, %139 : vector<2x256xf32>
    %141 = vector.broadcast %121 : vector<1x256xf32> to vector<2x256xf32>
    %142 = arith.mulf %140, %141 : vector<2x256xf32>
    %143 = vector.broadcast %122 : vector<1x256xf32> to vector<2x256xf32>
    %144 = arith.addf %142, %143 : vector<2x256xf32>
    %cst_63 = arith.constant 0.000000e+00 : f32
    %145 = vector.broadcast %cst_63 : f32 to vector<2x256xf32>
    %146 = arith.maximumf %144, %145 : vector<2x256xf32>
    %c0_64 = arith.constant 0 : index
    %c0_65 = arith.constant 0 : index
    %147 = vector.load %arg13[%c0_64, %c0_65] : memref<512x256xbf16, #tpu.memory_space<vmem>>, vector<512x256xbf16>
    %148 = arith.truncf %114 : vector<2x512xf32> to vector<2x512xbf16>
    %cst_66 = arith.constant dense<0.000000e+00> : vector<2x256xf32>
    %149 = tpu.matmul %148, %147, %cst_66 {dimension_numbers = #tpu.dot_dimension_numbers<[1], [0], [0], [1], [0, 0, 1, 1], [], []>} : vector<2x512xbf16>, vector<512x256xbf16>, vector<2x256xf32> -> vector<2x256xf32>
    %c0_67 = arith.constant 0 : index
    %c0_68 = arith.constant 0 : index
    %150 = vector.load %arg14[%c0_67, %c0_68] : memref<1x256xf32, #tpu.memory_space<vmem>>, vector<1x256xf32>
    %151 = vector.broadcast %150 : vector<1x256xf32> to vector<2x256xf32>
    %152 = arith.addf %149, %151 : vector<2x256xf32>
    %c0_69 = arith.constant 0 : index
    %c0_70 = arith.constant 0 : index
    %153 = vector.load %arg15[%c0_69, %c0_70] : memref<1x256xf32, #tpu.memory_space<vmem>>, vector<1x256xf32>
    %c0_71 = arith.constant 0 : index
    %c0_72 = arith.constant 0 : index
    %154 = vector.load %arg16[%c0_71, %c0_72] : memref<1x256xf32, #tpu.memory_space<vmem>>, vector<1x256xf32>
    %cst_73 = arith.constant dense<0.000000e+00> : vector<2xf32>
    %155 = vector.multi_reduction <add>, %152, %cst_73 [1] : vector<2x256xf32> to vector<2xf32>
    %156 = vector.shape_cast %155 : vector<2xf32> to vector<2x1xf32>
    %cst_74 = arith.constant 2.560000e+02 : f32
    %157 = vector.broadcast %cst_74 : f32 to vector<2x1xf32>
    %158 = arith.divf %156, %157 : vector<2x1xf32>
    %159 = vector.broadcast %158 : vector<2x1xf32> to vector<2x256xf32>
    %160 = arith.subf %152, %159 : vector<2x256xf32>
    %161 = arith.mulf %160, %160 : vector<2x256xf32>
    %cst_75 = arith.constant dense<0.000000e+00> : vector<2xf32>
    %162 = vector.multi_reduction <add>, %161, %cst_75 [1] : vector<2x256xf32> to vector<2xf32>
    %163 = vector.shape_cast %162 : vector<2xf32> to vector<2x1xf32>
    %cst_76 = arith.constant 2.560000e+02 : f32
    %164 = vector.broadcast %cst_76 : f32 to vector<2x1xf32>
    %165 = arith.divf %163, %164 : vector<2x1xf32>
    %166 = vector.broadcast %158 : vector<2x1xf32> to vector<2x256xf32>
    %167 = arith.subf %152, %166 : vector<2x256xf32>
    %cst_77 = arith.constant 9.99999974E-6 : f32
    %168 = vector.broadcast %cst_77 : f32 to vector<2x1xf32>
    %169 = arith.addf %165, %168 : vector<2x1xf32>
    %170 = math.rsqrt %169 : vector<2x1xf32>
    %171 = vector.broadcast %170 : vector<2x1xf32> to vector<2x256xf32>
    %172 = arith.mulf %167, %171 : vector<2x256xf32>
    %173 = vector.broadcast %153 : vector<1x256xf32> to vector<2x256xf32>
    %174 = arith.mulf %172, %173 : vector<2x256xf32>
    %175 = vector.broadcast %154 : vector<1x256xf32> to vector<2x256xf32>
    %176 = arith.addf %174, %175 : vector<2x256xf32>
    %cst_78 = arith.constant 0.000000e+00 : f32
    %177 = vector.broadcast %cst_78 : f32 to vector<2x256xf32>
    %178 = arith.maximumf %176, %177 : vector<2x256xf32>
    %c0_79 = arith.constant 0 : index
    %c0_80 = arith.constant 0 : index
    %179 = vector.load %arg11[%c0_79, %c0_80] : memref<256x1xbf16, #tpu.memory_space<vmem>>, vector<256x1xbf16>
    %180 = arith.truncf %146 : vector<2x256xf32> to vector<2x256xbf16>
    %cst_81 = arith.constant dense<0.000000e+00> : vector<2x1xf32>
    %181 = tpu.matmul %180, %179, %cst_81 {dimension_numbers = #tpu.dot_dimension_numbers<[1], [0], [0], [1], [0, 0, 1, 1], [], []>} : vector<2x256xbf16>, vector<256x1xbf16>, vector<2x1xf32> -> vector<2x1xf32>
    %c0_82 = arith.constant 0 : index
    %c0_83 = arith.constant 0 : index
    %182 = vector.load %arg12[%c0_82, %c0_83] : memref<1x1xf32, #tpu.memory_space<vmem>>, vector<1x1xf32>
    %183 = vector.broadcast %182 : vector<1x1xf32> to vector<2x1xf32>
    %184 = arith.addf %181, %183 : vector<2x1xf32>
    %c0_84 = arith.constant 0 : index
    %c0_85 = arith.constant 0 : index
    %185 = vector.load %arg17[%c0_84, %c0_85] : memref<256x128xbf16, #tpu.memory_space<vmem>>, vector<256x128xbf16>
    %186 = arith.truncf %178 : vector<2x256xf32> to vector<2x256xbf16>
    %cst_86 = arith.constant dense<0.000000e+00> : vector<2x128xf32>
    %187 = tpu.matmul %186, %185, %cst_86 {dimension_numbers = #tpu.dot_dimension_numbers<[1], [0], [0], [1], [0, 0, 1, 1], [], []>} : vector<2x256xbf16>, vector<256x128xbf16>, vector<2x128xf32> -> vector<2x128xf32>
    %c0_87 = arith.constant 0 : index
    %c0_88 = arith.constant 0 : index
    %188 = vector.load %arg18[%c0_87, %c0_88] : memref<1x128xf32, #tpu.memory_space<vmem>>, vector<1x128xf32>
    %189 = vector.broadcast %188 : vector<1x128xf32> to vector<2x128xf32>
    %190 = arith.addf %187, %189 : vector<2x128xf32>
    %cst_89 = arith.constant dense<0.000000e+00> : vector<2xf32>
    %191 = vector.multi_reduction <add>, %190, %cst_89 [1] : vector<2x128xf32> to vector<2xf32>
    %192 = vector.shape_cast %191 : vector<2xf32> to vector<2x1xf32>
    %cst_90 = arith.constant 2.500000e-01 : f32
    %193 = vector.broadcast %cst_90 : f32 to vector<2x1xf32>
    %194 = arith.mulf %192, %193 : vector<2x1xf32>
    %195 = vector.broadcast %194 : vector<2x1xf32> to vector<2x128xf32>
    %196 = arith.subf %190, %195 : vector<2x128xf32>
    %197 = vector.broadcast %184 : vector<2x1xf32> to vector<2x128xf32>
    %198 = arith.addf %197, %196 : vector<2x128xf32>
    %c0_91 = arith.constant 0 : index
    %c0_92 = arith.constant 0 : index
    %199 = vector.load %arg19[%c0_91, %c0_92] : memref<2x128xf32, #tpu.memory_space<vmem>>, vector<2x128xf32>
    tpu.vector_store %arg19[%c0_91, %c0_92], %198 {strides = array<i32>} : memref<2x128xf32, #tpu.memory_space<vmem>>, vector<2x128xf32>,
    return
  }
}

module attributes {stable_mosaic.version = 11 : i64} {
  func.func @encoder_kernel(%arg0: i32, %arg1: i32, %arg2: memref<2x8x16xf32, #tpu.memory_space<vmem>>, %arg3: memref<16x32xbf16, #tpu.memory_space<vmem>>, %arg4: memref<1x32xf32, #tpu.memory_space<vmem>>, %arg5: memref<32x32xbf16, #tpu.memory_space<vmem>>, %arg6: memref<1x32xf32, #tpu.memory_space<vmem>>, %arg7: memref<8x32xf32, #tpu.memory_space<vmem>>, %arg8: memref<1x32xf32, #tpu.memory_space<vmem>>, %arg9: memref<1x32xf32, #tpu.memory_space<vmem>>, %arg10: memref<1x32x96xbf16, #tpu.memory_space<vmem>>, %arg11: memref<1x1x96xf32, #tpu.memory_space<vmem>>, %arg12: memref<1x32x32xbf16, #tpu.memory_space<vmem>>, %arg13: memref<1x1x32xf32, #tpu.memory_space<vmem>>, %arg14: memref<1x1x32xf32, #tpu.memory_space<vmem>>, %arg15: memref<1x1x32xf32, #tpu.memory_space<vmem>>, %arg16: memref<1x32x64xbf16, #tpu.memory_space<vmem>>, %arg17: memref<1x1x64xf32, #tpu.memory_space<vmem>>, %arg18: memref<1x64x32xbf16, #tpu.memory_space<vmem>>, %arg19: memref<1x1x32xf32, #tpu.memory_space<vmem>>, %arg20: memref<1x1x32xf32, #tpu.memory_space<vmem>>, %arg21: memref<1x1x32xf32, #tpu.memory_space<vmem>>, %arg22: memref<1x32xf32, #tpu.memory_space<vmem>>, %arg23: memref<1x32xf32, #tpu.memory_space<vmem>>, %arg24: memref<32x16xbf16, #tpu.memory_space<vmem>>, %arg25: memref<1x16xf32, #tpu.memory_space<vmem>>, %arg26: memref<16x8xbf16, #tpu.memory_space<vmem>>, %arg27: memref<1x8xf32, #tpu.memory_space<vmem>>, %arg28: memref<8x4xbf16, #tpu.memory_space<vmem>>, %arg29: memref<1x4xf32, #tpu.memory_space<vmem>>, %arg30: memref<2x8x4xf32, #tpu.memory_space<vmem>>, %arg31: memref<2x8x32xf32, #tpu.memory_space<vmem>>) attributes {dimension_semantics = [#tpu.dimension_semantics<parallel>, #tpu.dimension_semantics<arbitrary>], iteration_bounds = array<i64: 1, 2>, scalar_prefetch = 0 : i64, scratch_operands = 1 : i64, tpu.core_type = #tpu.core_type<tc>, window_params = [{transform_indices = @transform_0, window_bounds = array<i64: 2, 8, 16>}, {pipeline_mode = #tpu.pipeline_mode<synchronous>, transform_indices = @transform_1, window_bounds = array<i64: 16, 32>}, {pipeline_mode = #tpu.pipeline_mode<synchronous>, transform_indices = @transform_2, window_bounds = array<i64: 1, 32>}, {pipeline_mode = #tpu.pipeline_mode<synchronous>, transform_indices = @transform_3, window_bounds = array<i64: 32, 32>}, {pipeline_mode = #tpu.pipeline_mode<synchronous>, transform_indices = @transform_4, window_bounds = array<i64: 1, 32>}, {pipeline_mode = #tpu.pipeline_mode<synchronous>, transform_indices = @transform_5, window_bounds = array<i64: 8, 32>}, {pipeline_mode = #tpu.pipeline_mode<synchronous>, transform_indices = @transform_6, window_bounds = array<i64: 1, 32>}, {pipeline_mode = #tpu.pipeline_mode<synchronous>, transform_indices = @transform_7, window_bounds = array<i64: 1, 32>}, {transform_indices = @transform_8, window_bounds = array<i64: 1, 32, 96>}, {transform_indices = @transform_9, window_bounds = array<i64: 1, 1, 96>}, {transform_indices = @transform_10, window_bounds = array<i64: 1, 32, 32>}, {transform_indices = @transform_11, window_bounds = array<i64: 1, 1, 32>}, {transform_indices = @transform_12, window_bounds = array<i64: 1, 1, 32>}, {transform_indices = @transform_13, window_bounds = array<i64: 1, 1, 32>}, {transform_indices = @transform_14, window_bounds = array<i64: 1, 32, 64>}, {transform_indices = @transform_15, window_bounds = array<i64: 1, 1, 64>}, {transform_indices = @transform_16, window_bounds = array<i64: 1, 64, 32>}, {transform_indices = @transform_17, window_bounds = array<i64: 1, 1, 32>}, {transform_indices = @transform_18, window_bounds = array<i64: 1, 1, 32>}, {transform_indices = @transform_19, window_bounds = array<i64: 1, 1, 32>}, {pipeline_mode = #tpu.pipeline_mode<synchronous>, transform_indices = @transform_20, window_bounds = array<i64: 1, 32>}, {pipeline_mode = #tpu.pipeline_mode<synchronous>, transform_indices = @transform_21, window_bounds = array<i64: 1, 32>}, {pipeline_mode = #tpu.pipeline_mode<synchronous>, transform_indices = @transform_22, window_bounds = array<i64: 32, 16>}, {pipeline_mode = #tpu.pipeline_mode<synchronous>, transform_indices = @transform_23, window_bounds = array<i64: 1, 16>}, {pipeline_mode = #tpu.pipeline_mode<synchronous>, transform_indices = @transform_24, window_bounds = array<i64: 16, 8>}, {pipeline_mode = #tpu.pipeline_mode<synchronous>, transform_indices = @transform_25, window_bounds = array<i64: 1, 8>}, {pipeline_mode = #tpu.pipeline_mode<synchronous>, transform_indices = @transform_26, window_bounds = array<i64: 8, 4>}, {pipeline_mode = #tpu.pipeline_mode<synchronous>, transform_indices = @transform_27, window_bounds = array<i64: 1, 4>}, {transform_indices = @transform_28, window_bounds = array<i64: 2, 8, 4>}]} {
    %c0_i32 = arith.constant 0 : i32
    %0 = arith.cmpi eq, %arg1, %c0_i32 : i32
    %1 = arith.extui %0 : i1 to i32
    %c0_i32_0 = arith.constant 0 : i32
    %2 = arith.cmpi ne, %1, %c0_i32_0 : i32
    scf.if %2 {
      %c0_61 = arith.constant 0 : index
      %c0_62 = arith.constant 0 : index
      %c0_63 = arith.constant 0 : index
      %138 = vector.load %arg2[%c0_61, %c0_62, %c0_63] : memref<2x8x16xf32, #tpu.memory_space<vmem>>, vector<2x8x16xf32>
      %c0_64 = arith.constant 0 : index
      %c0_65 = arith.constant 0 : index
      %139 = vector.load %arg3[%c0_64, %c0_65] : memref<16x32xbf16, #tpu.memory_space<vmem>>, vector<16x32xbf16>
      %140 = vector.shape_cast %138 : vector<2x8x16xf32> to vector<16x16xf32>
      %141 = arith.truncf %140 : vector<16x16xf32> to vector<16x16xbf16>
      %cst_66 = arith.constant dense<0.000000e+00> : vector<16x32xf32>
      %142 = tpu.matmul %141, %139, %cst_66 {dimension_numbers = #tpu.dot_dimension_numbers<[1], [0], [0], [1], [0, 0, 1, 1], [], []>} : vector<16x16xbf16>, vector<16x32xbf16>, vector<16x32xf32> -> vector<16x32xf32>
      %143 = vector.shape_cast %142 : vector<16x32xf32> to vector<2x8x32xf32>
      %c0_67 = arith.constant 0 : index
      %c0_68 = arith.constant 0 : index
      %144 = vector.load %arg4[%c0_67, %c0_68] : memref<1x32xf32, #tpu.memory_space<vmem>>, vector<1x32xf32>
      %145 = vector.shape_cast %144 : vector<1x32xf32> to vector<1x1x32xf32>
      %146 = vector.broadcast %145 : vector<1x1x32xf32> to vector<2x8x32xf32>
      %147 = arith.addf %143, %146 : vector<2x8x32xf32>
      %cst_69 = arith.constant 0.000000e+00 : f32
      %148 = vector.broadcast %cst_69 : f32 to vector<2x8x32xf32>
      %149 = arith.maximumf %147, %148 : vector<2x8x32xf32>
      %c0_70 = arith.constant 0 : index
      %c0_71 = arith.constant 0 : index
      %150 = vector.load %arg5[%c0_70, %c0_71] : memref<32x32xbf16, #tpu.memory_space<vmem>>, vector<32x32xbf16>
      %151 = vector.shape_cast %149 : vector<2x8x32xf32> to vector<16x32xf32>
      %152 = arith.truncf %151 : vector<16x32xf32> to vector<16x32xbf16>
      %cst_72 = arith.constant dense<0.000000e+00> : vector<16x32xf32>
      %153 = tpu.matmul %152, %150, %cst_72 {dimension_numbers = #tpu.dot_dimension_numbers<[1], [0], [0], [1], [0, 0, 1, 1], [], []>} : vector<16x32xbf16>, vector<32x32xbf16>, vector<16x32xf32> -> vector<16x32xf32>
      %154 = vector.shape_cast %153 : vector<16x32xf32> to vector<2x8x32xf32>
      %c0_73 = arith.constant 0 : index
      %c0_74 = arith.constant 0 : index
      %155 = vector.load %arg6[%c0_73, %c0_74] : memref<1x32xf32, #tpu.memory_space<vmem>>, vector<1x32xf32>
      %156 = vector.shape_cast %155 : vector<1x32xf32> to vector<1x1x32xf32>
      %157 = vector.broadcast %156 : vector<1x1x32xf32> to vector<2x8x32xf32>
      %158 = arith.addf %154, %157 : vector<2x8x32xf32>
      %c0_75 = arith.constant 0 : index
      %c0_76 = arith.constant 0 : index
      %159 = vector.load %arg7[%c0_75, %c0_76] : memref<8x32xf32, #tpu.memory_space<vmem>>, vector<8x32xf32>
      %160 = vector.shape_cast %159 : vector<8x32xf32> to vector<1x8x32xf32>
      %161 = vector.broadcast %160 : vector<1x8x32xf32> to vector<2x8x32xf32>
      %162 = arith.addf %158, %161 : vector<2x8x32xf32>
      %c0_77 = arith.constant 0 : index
      %c0_78 = arith.constant 0 : index
      %163 = vector.load %arg8[%c0_77, %c0_78] : memref<1x32xf32, #tpu.memory_space<vmem>>, vector<1x32xf32>
      %c0_79 = arith.constant 0 : index
      %c0_80 = arith.constant 0 : index
      %164 = vector.load %arg9[%c0_79, %c0_80] : memref<1x32xf32, #tpu.memory_space<vmem>>, vector<1x32xf32>
      %cst_81 = arith.constant dense<0.000000e+00> : vector<2x8xf32>
      %165 = vector.multi_reduction <add>, %162, %cst_81 [2] : vector<2x8x32xf32> to vector<2x8xf32>
      %166 = vector.shape_cast %165 : vector<2x8xf32> to vector<2x8x1xf32>
      %cst_82 = arith.constant 3.200000e+01 : f32
      %167 = vector.broadcast %cst_82 : f32 to vector<2x8x1xf32>
      %168 = arith.divf %166, %167 : vector<2x8x1xf32>
      %169 = vector.broadcast %168 : vector<2x8x1xf32> to vector<2x8x32xf32>
      %170 = arith.subf %162, %169 : vector<2x8x32xf32>
      %171 = arith.mulf %170, %170 : vector<2x8x32xf32>
      %cst_83 = arith.constant dense<0.000000e+00> : vector<2x8xf32>
      %172 = vector.multi_reduction <add>, %171, %cst_83 [2] : vector<2x8x32xf32> to vector<2x8xf32>
      %173 = vector.shape_cast %172 : vector<2x8xf32> to vector<2x8x1xf32>
      %cst_84 = arith.constant 3.200000e+01 : f32
      %174 = vector.broadcast %cst_84 : f32 to vector<2x8x1xf32>
      %175 = arith.divf %173, %174 : vector<2x8x1xf32>
      %176 = vector.broadcast %168 : vector<2x8x1xf32> to vector<2x8x32xf32>
      %177 = arith.subf %162, %176 : vector<2x8x32xf32>
      %cst_85 = arith.constant 9.99999974E-6 : f32
      %178 = vector.broadcast %cst_85 : f32 to vector<2x8x1xf32>
      %179 = arith.addf %175, %178 : vector<2x8x1xf32>
      %180 = math.rsqrt %179 : vector<2x8x1xf32>
      %181 = vector.broadcast %180 : vector<2x8x1xf32> to vector<2x8x32xf32>
      %182 = arith.mulf %177, %181 : vector<2x8x32xf32>
      %183 = vector.shape_cast %163 : vector<1x32xf32> to vector<1x1x32xf32>
      %184 = vector.broadcast %183 : vector<1x1x32xf32> to vector<2x8x32xf32>
      %185 = arith.mulf %182, %184 : vector<2x8x32xf32>
      %186 = vector.shape_cast %164 : vector<1x32xf32> to vector<1x1x32xf32>
      %187 = vector.broadcast %186 : vector<1x1x32xf32> to vector<2x8x32xf32>
      %188 = arith.addf %185, %187 : vector<2x8x32xf32>
      %c0_86 = arith.constant 0 : index
      %c0_87 = arith.constant 0 : index
      %c0_88 = arith.constant 0 : index
      %189 = vector.load %arg31[%c0_86, %c0_87, %c0_88] : memref<2x8x32xf32, #tpu.memory_space<vmem>>, vector<2x8x32xf32>
      tpu.vector_store %arg31[%c0_86, %c0_87, %c0_88], %188 {strides = array<i32>} : memref<2x8x32xf32, #tpu.memory_space<vmem>>, vector<2x8x32xf32>,
    } else {
    }
    %c0 = arith.constant 0 : index
    %c0_1 = arith.constant 0 : index
    %c0_2 = arith.constant 0 : index
    %3 = vector.load %arg31[%c0, %c0_1, %c0_2] : memref<2x8x32xf32, #tpu.memory_space<vmem>>, vector<2x8x32xf32>
    %c0_3 = arith.constant 0 : index
    %c0_4 = arith.constant 0 : index
    %c0_5 = arith.constant 0 : index
    %4 = vector.load %arg10[%c0_3, %c0_4, %c0_5] : memref<1x32x96xbf16, #tpu.memory_space<vmem>>, vector<1x32x96xbf16>
    %5 = vector.shape_cast %4 : vector<1x32x96xbf16> to vector<32x96xbf16>
    %6 = vector.shape_cast %3 : vector<2x8x32xf32> to vector<16x32xf32>
    %7 = arith.truncf %6 : vector<16x32xf32> to vector<16x32xbf16>
    %cst = arith.constant dense<0.000000e+00> : vector<16x96xf32>
    %8 = tpu.matmul %7, %5, %cst {dimension_numbers = #tpu.dot_dimension_numbers<[1], [0], [0], [1], [0, 0, 1, 1], [], []>} : vector<16x32xbf16>, vector<32x96xbf16>, vector<16x96xf32> -> vector<16x96xf32>
    %9 = vector.shape_cast %8 : vector<16x96xf32> to vector<2x8x96xf32>
    %c0_6 = arith.constant 0 : index
    %c0_7 = arith.constant 0 : index
    %c0_8 = arith.constant 0 : index
    %10 = vector.load %arg11[%c0_6, %c0_7, %c0_8] : memref<1x1x96xf32, #tpu.memory_space<vmem>>, vector<1x1x96xf32>
    %11 = vector.shape_cast %10 : vector<1x1x96xf32> to vector<1x96xf32>
    %12 = vector.shape_cast %11 : vector<1x96xf32> to vector<1x1x96xf32>
    %13 = vector.broadcast %12 : vector<1x1x96xf32> to vector<2x8x96xf32>
    %14 = arith.addf %9, %13 : vector<2x8x96xf32>
    %15 = arith.truncf %14 : vector<2x8x96xf32> to vector<2x8x96xbf16>
    %16 = vector.extract_strided_slice %15 {offsets = [0, 0, 0], sizes = [2, 8, 16], strides = [1, 1, 1]} : vector<2x8x96xbf16> to vector<2x8x16xbf16>
    %17 = vector.extract_strided_slice %15 {offsets = [0, 0, 16], sizes = [2, 8, 16], strides = [1, 1, 1]} : vector<2x8x96xbf16> to vector<2x8x16xbf16>
    %18 = tpu.concatenate %16, %17 in 0 : vector<2x8x16xbf16>, vector<2x8x16xbf16> -> vector<4x8x16xbf16>
    %19 = vector.extract_strided_slice %15 {offsets = [0, 0, 32], sizes = [2, 8, 16], strides = [1, 1, 1]} : vector<2x8x96xbf16> to vector<2x8x16xbf16>
    %20 = vector.extract_strided_slice %15 {offsets = [0, 0, 48], sizes = [2, 8, 16], strides = [1, 1, 1]} : vector<2x8x96xbf16> to vector<2x8x16xbf16>
    %21 = tpu.concatenate %19, %20 in 0 : vector<2x8x16xbf16>, vector<2x8x16xbf16> -> vector<4x8x16xbf16>
    %22 = vector.extract_strided_slice %15 {offsets = [0, 0, 64], sizes = [2, 8, 16], strides = [1, 1, 1]} : vector<2x8x96xbf16> to vector<2x8x16xbf16>
    %23 = vector.extract_strided_slice %15 {offsets = [0, 0, 80], sizes = [2, 8, 16], strides = [1, 1, 1]} : vector<2x8x96xbf16> to vector<2x8x16xbf16>
    %24 = tpu.concatenate %22, %23 in 0 : vector<2x8x16xbf16>, vector<2x8x16xbf16> -> vector<4x8x16xbf16>
    "tpu.trace_start"() <{level = 10 : i32, message = "bqd,bkd->bqk"}> : () -> ()
    %cst_9 = arith.constant dense<0.000000e+00> : vector<4x8x8xf32>
    %25 = tpu.matmul %18, %21, %cst_9 {dimension_numbers = #tpu.dot_dimension_numbers<[2], [2], [1], [1], [0, 0, 0, 1, 1, 1], [0], [0]>} : vector<4x8x16xbf16>, vector<4x8x16xbf16>, vector<4x8x8xf32> -> vector<4x8x8xf32>
    "tpu.trace_stop"() : () -> ()
    %cst_10 = arith.constant dense<0xFF800000> : vector<4x8xf32>
    %26 = vector.multi_reduction <maximumf>, %25, %cst_10 [2] : vector<4x8x8xf32> to vector<4x8xf32>
    %27 = vector.shape_cast %26 : vector<4x8xf32> to vector<4x8x1xf32>
    %28 = vector.broadcast %27 : vector<4x8x1xf32> to vector<4x8x8xf32>
    %29 = arith.subf %25, %28 : vector<4x8x8xf32>
    %30 = math.exp %29 : vector<4x8x8xf32>
    %cst_11 = arith.constant dense<0.000000e+00> : vector<4x8xf32>
    %31 = vector.multi_reduction <add>, %30, %cst_11 [2] : vector<4x8x8xf32> to vector<4x8xf32>
    %32 = vector.shape_cast %31 : vector<4x8xf32> to vector<4x8x1xf32>
    %33 = tpu.reciprocal %32 {approx = true} : vector<4x8x1xf32> -> vector<4x8x1xf32>
    %34 = vector.broadcast %33 : vector<4x8x1xf32> to vector<4x8x8xf32>
    %35 = arith.mulf %30, %34 : vector<4x8x8xf32>
    %36 = arith.truncf %35 : vector<4x8x8xf32> to vector<4x8x8xbf16>
    "tpu.trace_start"() <{level = 10 : i32, message = "bqk,bkd->bqd"}> : () -> ()
    %cst_12 = arith.constant dense<0.000000e+00> : vector<4x8x16xf32>
    %37 = tpu.matmul %36, %24, %cst_12 {dimension_numbers = #tpu.dot_dimension_numbers<[2], [1], [1], [2], [0, 0, 0, 1, 1, 2], [0], [0]>} : vector<4x8x8xbf16>, vector<4x8x16xbf16>, vector<4x8x16xf32> -> vector<4x8x16xf32>
    "tpu.trace_stop"() : () -> ()
    %38 = vector.extract_strided_slice %37 {offsets = [0, 0, 0], sizes = [2, 8, 16], strides = [1, 1, 1]} : vector<4x8x16xf32> to vector<2x8x16xf32>
    %39 = vector.extract_strided_slice %37 {offsets = [2, 0, 0], sizes = [2, 8, 16], strides = [1, 1, 1]} : vector<4x8x16xf32> to vector<2x8x16xf32>
    %40 = tpu.concatenate %38, %39 in 2 : vector<2x8x16xf32>, vector<2x8x16xf32> -> vector<2x8x32xf32>
    %c0_13 = arith.constant 0 : index
    %c0_14 = arith.constant 0 : index
    %c0_15 = arith.constant 0 : index
    %41 = vector.load %arg12[%c0_13, %c0_14, %c0_15] : memref<1x32x32xbf16, #tpu.memory_space<vmem>>, vector<1x32x32xbf16>
    %42 = vector.shape_cast %41 : vector<1x32x32xbf16> to vector<32x32xbf16>
    %43 = vector.shape_cast %40 : vector<2x8x32xf32> to vector<16x32xf32>
    %44 = arith.truncf %43 : vector<16x32xf32> to vector<16x32xbf16>
    %cst_16 = arith.constant dense<0.000000e+00> : vector<16x32xf32>
    %45 = tpu.matmul %44, %42, %cst_16 {dimension_numbers = #tpu.dot_dimension_numbers<[1], [0], [0], [1], [0, 0, 1, 1], [], []>} : vector<16x32xbf16>, vector<32x32xbf16>, vector<16x32xf32> -> vector<16x32xf32>
    %46 = vector.shape_cast %45 : vector<16x32xf32> to vector<2x8x32xf32>
    %c0_17 = arith.constant 0 : index
    %c0_18 = arith.constant 0 : index
    %c0_19 = arith.constant 0 : index
    %47 = vector.load %arg13[%c0_17, %c0_18, %c0_19] : memref<1x1x32xf32, #tpu.memory_space<vmem>>, vector<1x1x32xf32>
    %48 = vector.shape_cast %47 : vector<1x1x32xf32> to vector<1x32xf32>
    %49 = vector.shape_cast %48 : vector<1x32xf32> to vector<1x1x32xf32>
    %50 = vector.broadcast %49 : vector<1x1x32xf32> to vector<2x8x32xf32>
    %51 = arith.addf %46, %50 : vector<2x8x32xf32>
    %52 = arith.addf %3, %51 : vector<2x8x32xf32>
    %c0_20 = arith.constant 0 : index
    %c0_21 = arith.constant 0 : index
    %c0_22 = arith.constant 0 : index
    %53 = vector.load %arg14[%c0_20, %c0_21, %c0_22] : memref<1x1x32xf32, #tpu.memory_space<vmem>>, vector<1x1x32xf32>
    %54 = vector.shape_cast %53 : vector<1x1x32xf32> to vector<1x32xf32>
    %c0_23 = arith.constant 0 : index
    %c0_24 = arith.constant 0 : index
    %c0_25 = arith.constant 0 : index
    %55 = vector.load %arg15[%c0_23, %c0_24, %c0_25] : memref<1x1x32xf32, #tpu.memory_space<vmem>>, vector<1x1x32xf32>
    %56 = vector.shape_cast %55 : vector<1x1x32xf32> to vector<1x32xf32>
    %cst_26 = arith.constant dense<0.000000e+00> : vector<2x8xf32>
    %57 = vector.multi_reduction <add>, %52, %cst_26 [2] : vector<2x8x32xf32> to vector<2x8xf32>
    %58 = vector.shape_cast %57 : vector<2x8xf32> to vector<2x8x1xf32>
    %cst_27 = arith.constant 3.200000e+01 : f32
    %59 = vector.broadcast %cst_27 : f32 to vector<2x8x1xf32>
    %60 = arith.divf %58, %59 : vector<2x8x1xf32>
    %61 = vector.broadcast %60 : vector<2x8x1xf32> to vector<2x8x32xf32>
    %62 = arith.subf %52, %61 : vector<2x8x32xf32>
    %63 = arith.mulf %62, %62 : vector<2x8x32xf32>
    %cst_28 = arith.constant dense<0.000000e+00> : vector<2x8xf32>
    %64 = vector.multi_reduction <add>, %63, %cst_28 [2] : vector<2x8x32xf32> to vector<2x8xf32>
    %65 = vector.shape_cast %64 : vector<2x8xf32> to vector<2x8x1xf32>
    %cst_29 = arith.constant 3.200000e+01 : f32
    %66 = vector.broadcast %cst_29 : f32 to vector<2x8x1xf32>
    %67 = arith.divf %65, %66 : vector<2x8x1xf32>
    %68 = vector.broadcast %60 : vector<2x8x1xf32> to vector<2x8x32xf32>
    %69 = arith.subf %52, %68 : vector<2x8x32xf32>
    %cst_30 = arith.constant 9.99999974E-6 : f32
    %70 = vector.broadcast %cst_30 : f32 to vector<2x8x1xf32>
    %71 = arith.addf %67, %70 : vector<2x8x1xf32>
    %72 = math.rsqrt %71 : vector<2x8x1xf32>
    %73 = vector.broadcast %72 : vector<2x8x1xf32> to vector<2x8x32xf32>
    %74 = arith.mulf %69, %73 : vector<2x8x32xf32>
    %75 = vector.shape_cast %54 : vector<1x32xf32> to vector<1x1x32xf32>
    %76 = vector.broadcast %75 : vector<1x1x32xf32> to vector<2x8x32xf32>
    %77 = arith.mulf %74, %76 : vector<2x8x32xf32>
    %78 = vector.shape_cast %56 : vector<1x32xf32> to vector<1x1x32xf32>
    %79 = vector.broadcast %78 : vector<1x1x32xf32> to vector<2x8x32xf32>
    %80 = arith.addf %77, %79 : vector<2x8x32xf32>
    %c0_31 = arith.constant 0 : index
    %c0_32 = arith.constant 0 : index
    %c0_33 = arith.constant 0 : index
    %81 = vector.load %arg16[%c0_31, %c0_32, %c0_33] : memref<1x32x64xbf16, #tpu.memory_space<vmem>>, vector<1x32x64xbf16>
    %82 = vector.shape_cast %81 : vector<1x32x64xbf16> to vector<32x64xbf16>
    %83 = vector.shape_cast %80 : vector<2x8x32xf32> to vector<16x32xf32>
    %84 = arith.truncf %83 : vector<16x32xf32> to vector<16x32xbf16>
    %cst_34 = arith.constant dense<0.000000e+00> : vector<16x64xf32>
    %85 = tpu.matmul %84, %82, %cst_34 {dimension_numbers = #tpu.dot_dimension_numbers<[1], [0], [0], [1], [0, 0, 1, 1], [], []>} : vector<16x32xbf16>, vector<32x64xbf16>, vector<16x64xf32> -> vector<16x64xf32>
    %86 = vector.shape_cast %85 : vector<16x64xf32> to vector<2x8x64xf32>
    %c0_35 = arith.constant 0 : index
    %c0_36 = arith.constant 0 : index
    %c0_37 = arith.constant 0 : index
    %87 = vector.load %arg17[%c0_35, %c0_36, %c0_37] : memref<1x1x64xf32, #tpu.memory_space<vmem>>, vector<1x1x64xf32>
    %88 = vector.shape_cast %87 : vector<1x1x64xf32> to vector<1x64xf32>
    %89 = vector.shape_cast %88 : vector<1x64xf32> to vector<1x1x64xf32>
    %90 = vector.broadcast %89 : vector<1x1x64xf32> to vector<2x8x64xf32>
    %91 = arith.addf %86, %90 : vector<2x8x64xf32>
    %cst_38 = arith.constant 0.000000e+00 : f32
    %92 = vector.broadcast %cst_38 : f32 to vector<2x8x64xf32>
    %93 = arith.maximumf %91, %92 : vector<2x8x64xf32>
    %94 = arith.truncf %93 : vector<2x8x64xf32> to vector<2x8x64xbf16>
    %c0_39 = arith.constant 0 : index
    %c0_40 = arith.constant 0 : index
    %c0_41 = arith.constant 0 : index
    %95 = vector.load %arg18[%c0_39, %c0_40, %c0_41] : memref<1x64x32xbf16, #tpu.memory_space<vmem>>, vector<1x64x32xbf16>
    %96 = vector.shape_cast %95 : vector<1x64x32xbf16> to vector<64x32xbf16>
    %97 = vector.shape_cast %94 : vector<2x8x64xbf16> to vector<16x64xbf16>
    %cst_42 = arith.constant dense<0.000000e+00> : vector<16x32xf32>
    %98 = tpu.matmul %97, %96, %cst_42 {dimension_numbers = #tpu.dot_dimension_numbers<[1], [0], [0], [1], [0, 0, 1, 1], [], []>} : vector<16x64xbf16>, vector<64x32xbf16>, vector<16x32xf32> -> vector<16x32xf32>
    %99 = vector.shape_cast %98 : vector<16x32xf32> to vector<2x8x32xf32>
    %c0_43 = arith.constant 0 : index
    %c0_44 = arith.constant 0 : index
    %c0_45 = arith.constant 0 : index
    %100 = vector.load %arg19[%c0_43, %c0_44, %c0_45] : memref<1x1x32xf32, #tpu.memory_space<vmem>>, vector<1x1x32xf32>
    %101 = vector.shape_cast %100 : vector<1x1x32xf32> to vector<1x32xf32>
    %102 = vector.shape_cast %101 : vector<1x32xf32> to vector<1x1x32xf32>
    %103 = vector.broadcast %102 : vector<1x1x32xf32> to vector<2x8x32xf32>
    %104 = arith.addf %99, %103 : vector<2x8x32xf32>
    %105 = arith.addf %80, %104 : vector<2x8x32xf32>
    %c0_46 = arith.constant 0 : index
    %c0_47 = arith.constant 0 : index
    %c0_48 = arith.constant 0 : index
    %106 = vector.load %arg20[%c0_46, %c0_47, %c0_48] : memref<1x1x32xf32, #tpu.memory_space<vmem>>, vector<1x1x32xf32>
    %107 = vector.shape_cast %106 : vector<1x1x32xf32> to vector<1x32xf32>
    %c0_49 = arith.constant 0 : index
    %c0_50 = arith.constant 0 : index
    %c0_51 = arith.constant 0 : index
    %108 = vector.load %arg21[%c0_49, %c0_50, %c0_51] : memref<1x1x32xf32, #tpu.memory_space<vmem>>, vector<1x1x32xf32>
    %109 = vector.shape_cast %108 : vector<1x1x32xf32> to vector<1x32xf32>
    %cst_52 = arith.constant dense<0.000000e+00> : vector<2x8xf32>
    %110 = vector.multi_reduction <add>, %105, %cst_52 [2] : vector<2x8x32xf32> to vector<2x8xf32>
    %111 = vector.shape_cast %110 : vector<2x8xf32> to vector<2x8x1xf32>
    %cst_53 = arith.constant 3.200000e+01 : f32
    %112 = vector.broadcast %cst_53 : f32 to vector<2x8x1xf32>
    %113 = arith.divf %111, %112 : vector<2x8x1xf32>
    %114 = vector.broadcast %113 : vector<2x8x1xf32> to vector<2x8x32xf32>
    %115 = arith.subf %105, %114 : vector<2x8x32xf32>
    %116 = arith.mulf %115, %115 : vector<2x8x32xf32>
    %cst_54 = arith.constant dense<0.000000e+00> : vector<2x8xf32>
    %117 = vector.multi_reduction <add>, %116, %cst_54 [2] : vector<2x8x32xf32> to vector<2x8xf32>
    %118 = vector.shape_cast %117 : vector<2x8xf32> to vector<2x8x1xf32>
    %cst_55 = arith.constant 3.200000e+01 : f32
    %119 = vector.broadcast %cst_55 : f32 to vector<2x8x1xf32>
    %120 = arith.divf %118, %119 : vector<2x8x1xf32>
    %121 = vector.broadcast %113 : vector<2x8x1xf32> to vector<2x8x32xf32>
    %122 = arith.subf %105, %121 : vector<2x8x32xf32>
    %cst_56 = arith.constant 9.99999974E-6 : f32
    %123 = vector.broadcast %cst_56 : f32 to vector<2x8x1xf32>
    %124 = arith.addf %120, %123 : vector<2x8x1xf32>
    %125 = math.rsqrt %124 : vector<2x8x1xf32>
    %126 = vector.broadcast %125 : vector<2x8x1xf32> to vector<2x8x32xf32>
    %127 = arith.mulf %122, %126 : vector<2x8x32xf32>
    %128 = vector.shape_cast %107 : vector<1x32xf32> to vector<1x1x32xf32>
    %129 = vector.broadcast %128 : vector<1x1x32xf32> to vector<2x8x32xf32>
    %130 = arith.mulf %127, %129 : vector<2x8x32xf32>
    %131 = vector.shape_cast %109 : vector<1x32xf32> to vector<1x1x32xf32>
    %132 = vector.broadcast %131 : vector<1x1x32xf32> to vector<2x8x32xf32>
    %133 = arith.addf %130, %132 : vector<2x8x32xf32>
    %c0_57 = arith.constant 0 : index
    %c0_58 = arith.constant 0 : index
    %c0_59 = arith.constant 0 : index
    %134 = vector.load %arg31[%c0_57, %c0_58, %c0_59] : memref<2x8x32xf32, #tpu.memory_space<vmem>>, vector<2x8x32xf32>
    tpu.vector_store %arg31[%c0_57, %c0_58, %c0_59], %133 {strides = array<i32>} : memref<2x8x32xf32, #tpu.memory_space<vmem>>, vector<2x8x32xf32>,
    %c1_i32 = arith.constant 1 : i32
    %135 = arith.cmpi eq, %arg1, %c1_i32 : i32
    %136 = arith.extui %135 : i1 to i32
    %c0_i32_60 = arith.constant 0 : i32
    %137 = arith.cmpi ne, %136, %c0_i32_60 : i32
    scf.if %137 {
      %c0_61 = arith.constant 0 : index
      %c0_62 = arith.constant 0 : index
      %c0_63 = arith.constant 0 : index
      %138 = vector.load %arg31[%c0_61, %c0_62, %c0_63] : memref<2x8x32xf32, #tpu.memory_space<vmem>>, vector<2x8x32xf32>
      %c0_64 = arith.constant 0 : index
      %c0_65 = arith.constant 0 : index
      %139 = vector.load %arg22[%c0_64, %c0_65] : memref<1x32xf32, #tpu.memory_space<vmem>>, vector<1x32xf32>
      %c0_66 = arith.constant 0 : index
      %c0_67 = arith.constant 0 : index
      %140 = vector.load %arg23[%c0_66, %c0_67] : memref<1x32xf32, #tpu.memory_space<vmem>>, vector<1x32xf32>
      %cst_68 = arith.constant dense<0.000000e+00> : vector<2x8xf32>
      %141 = vector.multi_reduction <add>, %138, %cst_68 [2] : vector<2x8x32xf32> to vector<2x8xf32>
      %142 = vector.shape_cast %141 : vector<2x8xf32> to vector<2x8x1xf32>
      %cst_69 = arith.constant 3.200000e+01 : f32
      %143 = vector.broadcast %cst_69 : f32 to vector<2x8x1xf32>
      %144 = arith.divf %142, %143 : vector<2x8x1xf32>
      %145 = vector.broadcast %144 : vector<2x8x1xf32> to vector<2x8x32xf32>
      %146 = arith.subf %138, %145 : vector<2x8x32xf32>
      %147 = arith.mulf %146, %146 : vector<2x8x32xf32>
      %cst_70 = arith.constant dense<0.000000e+00> : vector<2x8xf32>
      %148 = vector.multi_reduction <add>, %147, %cst_70 [2] : vector<2x8x32xf32> to vector<2x8xf32>
      %149 = vector.shape_cast %148 : vector<2x8xf32> to vector<2x8x1xf32>
      %cst_71 = arith.constant 3.200000e+01 : f32
      %150 = vector.broadcast %cst_71 : f32 to vector<2x8x1xf32>
      %151 = arith.divf %149, %150 : vector<2x8x1xf32>
      %152 = vector.broadcast %144 : vector<2x8x1xf32> to vector<2x8x32xf32>
      %153 = arith.subf %138, %152 : vector<2x8x32xf32>
      %cst_72 = arith.constant 9.99999974E-6 : f32
      %154 = vector.broadcast %cst_72 : f32 to vector<2x8x1xf32>
      %155 = arith.addf %151, %154 : vector<2x8x1xf32>
      %156 = math.rsqrt %155 : vector<2x8x1xf32>
      %157 = vector.broadcast %156 : vector<2x8x1xf32> to vector<2x8x32xf32>
      %158 = arith.mulf %153, %157 : vector<2x8x32xf32>
      %159 = vector.shape_cast %139 : vector<1x32xf32> to vector<1x1x32xf32>
      %160 = vector.broadcast %159 : vector<1x1x32xf32> to vector<2x8x32xf32>
      %161 = arith.mulf %158, %160 : vector<2x8x32xf32>
      %162 = vector.shape_cast %140 : vector<1x32xf32> to vector<1x1x32xf32>
      %163 = vector.broadcast %162 : vector<1x1x32xf32> to vector<2x8x32xf32>
      %164 = arith.addf %161, %163 : vector<2x8x32xf32>
      %c0_73 = arith.constant 0 : index
      %c0_74 = arith.constant 0 : index
      %165 = vector.load %arg24[%c0_73, %c0_74] : memref<32x16xbf16, #tpu.memory_space<vmem>>, vector<32x16xbf16>
      %166 = vector.shape_cast %164 : vector<2x8x32xf32> to vector<16x32xf32>
      %167 = arith.truncf %166 : vector<16x32xf32> to vector<16x32xbf16>
      %cst_75 = arith.constant dense<0.000000e+00> : vector<16x16xf32>
      %168 = tpu.matmul %167, %165, %cst_75 {dimension_numbers = #tpu.dot_dimension_numbers<[1], [0], [0], [1], [0, 0, 1, 1], [], []>} : vector<16x32xbf16>, vector<32x16xbf16>, vector<16x16xf32> -> vector<16x16xf32>
      %169 = vector.shape_cast %168 : vector<16x16xf32> to vector<2x8x16xf32>
      %c0_76 = arith.constant 0 : index
      %c0_77 = arith.constant 0 : index
      %170 = vector.load %arg25[%c0_76, %c0_77] : memref<1x16xf32, #tpu.memory_space<vmem>>, vector<1x16xf32>
      %171 = vector.shape_cast %170 : vector<1x16xf32> to vector<1x1x16xf32>
      %172 = vector.broadcast %171 : vector<1x1x16xf32> to vector<2x8x16xf32>
      %173 = arith.addf %169, %172 : vector<2x8x16xf32>
      %cst_78 = arith.constant 0.000000e+00 : f32
      %174 = vector.broadcast %cst_78 : f32 to vector<2x8x16xf32>
      %175 = arith.maximumf %173, %174 : vector<2x8x16xf32>
      %c0_79 = arith.constant 0 : index
      %c0_80 = arith.constant 0 : index
      %176 = vector.load %arg26[%c0_79, %c0_80] : memref<16x8xbf16, #tpu.memory_space<vmem>>, vector<16x8xbf16>
      %177 = vector.shape_cast %175 : vector<2x8x16xf32> to vector<16x16xf32>
      %178 = arith.truncf %177 : vector<16x16xf32> to vector<16x16xbf16>
      %cst_81 = arith.constant dense<0.000000e+00> : vector<16x8xf32>
      %179 = tpu.matmul %178, %176, %cst_81 {dimension_numbers = #tpu.dot_dimension_numbers<[1], [0], [0], [1], [0, 0, 1, 1], [], []>} : vector<16x16xbf16>, vector<16x8xbf16>, vector<16x8xf32> -> vector<16x8xf32>
      %180 = vector.shape_cast %179 : vector<16x8xf32> to vector<2x8x8xf32>
      %c0_82 = arith.constant 0 : index
      %c0_83 = arith.constant 0 : index
      %181 = vector.load %arg27[%c0_82, %c0_83] : memref<1x8xf32, #tpu.memory_space<vmem>>, vector<1x8xf32>
      %182 = vector.shape_cast %181 : vector<1x8xf32> to vector<1x1x8xf32>
      %183 = vector.broadcast %182 : vector<1x1x8xf32> to vector<2x8x8xf32>
      %184 = arith.addf %180, %183 : vector<2x8x8xf32>
      %cst_84 = arith.constant 0.000000e+00 : f32
      %185 = vector.broadcast %cst_84 : f32 to vector<2x8x8xf32>
      %186 = arith.maximumf %184, %185 : vector<2x8x8xf32>
      %c0_85 = arith.constant 0 : index
      %c0_86 = arith.constant 0 : index
      %187 = vector.load %arg28[%c0_85, %c0_86] : memref<8x4xbf16, #tpu.memory_space<vmem>>, vector<8x4xbf16>
      %188 = vector.shape_cast %186 : vector<2x8x8xf32> to vector<16x8xf32>
      %189 = arith.truncf %188 : vector<16x8xf32> to vector<16x8xbf16>
      %cst_87 = arith.constant dense<0.000000e+00> : vector<16x4xf32>
      %190 = tpu.matmul %189, %187, %cst_87 {dimension_numbers = #tpu.dot_dimension_numbers<[1], [0], [0], [1], [0, 0, 1, 1], [], []>} : vector<16x8xbf16>, vector<8x4xbf16>, vector<16x4xf32> -> vector<16x4xf32>
      %191 = vector.shape_cast %190 : vector<16x4xf32> to vector<2x8x4xf32>
      %c0_88 = arith.constant 0 : index
      %c0_89 = arith.constant 0 : index
      %192 = vector.load %arg29[%c0_88, %c0_89] : memref<1x4xf32, #tpu.memory_space<vmem>>, vector<1x4xf32>
      %193 = vector.shape_cast %192 : vector<1x4xf32> to vector<1x1x4xf32>
      %194 = vector.broadcast %193 : vector<1x1x4xf32> to vector<2x8x4xf32>
      %195 = arith.addf %191, %194 : vector<2x8x4xf32>
      %c0_90 = arith.constant 0 : index
      %c0_91 = arith.constant 0 : index
      %c0_92 = arith.constant 0 : index
      %196 = vector.load %arg30[%c0_90, %c0_91, %c0_92] : memref<2x8x4xf32, #tpu.memory_space<vmem>>, vector<2x8x4xf32>
      tpu.vector_store %arg30[%c0_90, %c0_91, %c0_92], %195 {strides = array<i32>} : memref<2x8x4xf32, #tpu.memory_space<vmem>>, vector<2x8x4xf32>,
    } else {
    }
    return
  }
  func.func @transform_0(%arg0: i32, %arg1: i32) -> (i32, i32, i32) {
    %c0_i32 = arith.constant 0 : i32
    %c0_i32_0 = arith.constant 0 : i32
    %c0_i32_1 = arith.constant 0 : i32
    return %arg0, %c0_i32, %c0_i32_0 : i32, i32, i32
  }
  func.func @transform_1(%arg0: i32, %arg1: i32) -> (i32, i32) {
    %c0_i32 = arith.constant 0 : i32
    %c0_i32_0 = arith.constant 0 : i32
    %c0_i32_1 = arith.constant 0 : i32
    return %c0_i32, %c0_i32_0 : i32, i32
  }
  func.func @transform_2(%arg0: i32, %arg1: i32) -> (i32, i32) {
    %c0_i32 = arith.constant 0 : i32
    %c0_i32_0 = arith.constant 0 : i32
    %c0_i32_1 = arith.constant 0 : i32
    return %c0_i32, %c0_i32_0 : i32, i32
  }
  func.func @transform_3(%arg0: i32, %arg1: i32) -> (i32, i32) {
    %c0_i32 = arith.constant 0 : i32
    %c0_i32_0 = arith.constant 0 : i32
    %c0_i32_1 = arith.constant 0 : i32
    return %c0_i32, %c0_i32_0 : i32, i32
  }
  func.func @transform_4(%arg0: i32, %arg1: i32) -> (i32, i32) {
    %c0_i32 = arith.constant 0 : i32
    %c0_i32_0 = arith.constant 0 : i32
    %c0_i32_1 = arith.constant 0 : i32
    return %c0_i32, %c0_i32_0 : i32, i32
  }
  func.func @transform_5(%arg0: i32, %arg1: i32) -> (i32, i32) {
    %c0_i32 = arith.constant 0 : i32
    %c0_i32_0 = arith.constant 0 : i32
    %c0_i32_1 = arith.constant 0 : i32
    return %c0_i32, %c0_i32_0 : i32, i32
  }
  func.func @transform_6(%arg0: i32, %arg1: i32) -> (i32, i32) {
    %c0_i32 = arith.constant 0 : i32
    %c0_i32_0 = arith.constant 0 : i32
    %c0_i32_1 = arith.constant 0 : i32
    return %c0_i32, %c0_i32_0 : i32, i32
  }
  func.func @transform_7(%arg0: i32, %arg1: i32) -> (i32, i32) {
    %c0_i32 = arith.constant 0 : i32
    %c0_i32_0 = arith.constant 0 : i32
    %c0_i32_1 = arith.constant 0 : i32
    return %c0_i32, %c0_i32_0 : i32, i32
  }
  func.func @transform_8(%arg0: i32, %arg1: i32) -> (i32, i32, i32) {
    %c0_i32 = arith.constant 0 : i32
    %c0_i32_0 = arith.constant 0 : i32
    %c0_i32_1 = arith.constant 0 : i32
    return %arg1, %c0_i32, %c0_i32_0 : i32, i32, i32
  }
  func.func @transform_9(%arg0: i32, %arg1: i32) -> (i32, i32, i32) {
    %c0_i32 = arith.constant 0 : i32
    %c0_i32_0 = arith.constant 0 : i32
    %c0_i32_1 = arith.constant 0 : i32
    return %arg1, %c0_i32, %c0_i32_0 : i32, i32, i32
  }
  func.func @transform_10(%arg0: i32, %arg1: i32) -> (i32, i32, i32) {
    %c0_i32 = arith.constant 0 : i32
    %c0_i32_0 = arith.constant 0 : i32
    %c0_i32_1 = arith.constant 0 : i32
    return %arg1, %c0_i32, %c0_i32_0 : i32, i32, i32
  }
  func.func @transform_11(%arg0: i32, %arg1: i32) -> (i32, i32, i32) {
    %c0_i32 = arith.constant 0 : i32
    %c0_i32_0 = arith.constant 0 : i32
    %c0_i32_1 = arith.constant 0 : i32
    return %arg1, %c0_i32, %c0_i32_0 : i32, i32, i32
  }
  func.func @transform_12(%arg0: i32, %arg1: i32) -> (i32, i32, i32) {
    %c0_i32 = arith.constant 0 : i32
    %c0_i32_0 = arith.constant 0 : i32
    %c0_i32_1 = arith.constant 0 : i32
    return %arg1, %c0_i32, %c0_i32_0 : i32, i32, i32
  }
  func.func @transform_13(%arg0: i32, %arg1: i32) -> (i32, i32, i32) {
    %c0_i32 = arith.constant 0 : i32
    %c0_i32_0 = arith.constant 0 : i32
    %c0_i32_1 = arith.constant 0 : i32
    return %arg1, %c0_i32, %c0_i32_0 : i32, i32, i32
  }
  func.func @transform_14(%arg0: i32, %arg1: i32) -> (i32, i32, i32) {
    %c0_i32 = arith.constant 0 : i32
    %c0_i32_0 = arith.constant 0 : i32
    %c0_i32_1 = arith.constant 0 : i32
    return %arg1, %c0_i32, %c0_i32_0 : i32, i32, i32
  }
  func.func @transform_15(%arg0: i32, %arg1: i32) -> (i32, i32, i32) {
    %c0_i32 = arith.constant 0 : i32
    %c0_i32_0 = arith.constant 0 : i32
    %c0_i32_1 = arith.constant 0 : i32
    return %arg1, %c0_i32, %c0_i32_0 : i32, i32, i32
  }
  func.func @transform_16(%arg0: i32, %arg1: i32) -> (i32, i32, i32) {
    %c0_i32 = arith.constant 0 : i32
    %c0_i32_0 = arith.constant 0 : i32
    %c0_i32_1 = arith.constant 0 : i32
    return %arg1, %c0_i32, %c0_i32_0 : i32, i32, i32
  }
  func.func @transform_17(%arg0: i32, %arg1: i32) -> (i32, i32, i32) {
    %c0_i32 = arith.constant 0 : i32
    %c0_i32_0 = arith.constant 0 : i32
    %c0_i32_1 = arith.constant 0 : i32
    return %arg1, %c0_i32, %c0_i32_0 : i32, i32, i32
  }
  func.func @transform_18(%arg0: i32, %arg1: i32) -> (i32, i32, i32) {
    %c0_i32 = arith.constant 0 : i32
    %c0_i32_0 = arith.constant 0 : i32
    %c0_i32_1 = arith.constant 0 : i32
    return %arg1, %c0_i32, %c0_i32_0 : i32, i32, i32
  }
  func.func @transform_19(%arg0: i32, %arg1: i32) -> (i32, i32, i32) {
    %c0_i32 = arith.constant 0 : i32
    %c0_i32_0 = arith.constant 0 : i32
    %c0_i32_1 = arith.constant 0 : i32
    return %arg1, %c0_i32, %c0_i32_0 : i32, i32, i32
  }
  func.func @transform_20(%arg0: i32, %arg1: i32) -> (i32, i32) {
    %c0_i32 = arith.constant 0 : i32
    %c0_i32_0 = arith.constant 0 : i32
    %c0_i32_1 = arith.constant 0 : i32
    return %c0_i32, %c0_i32_0 : i32, i32
  }
  func.func @transform_21(%arg0: i32, %arg1: i32) -> (i32, i32) {
    %c0_i32 = arith.constant 0 : i32
    %c0_i32_0 = arith.constant 0 : i32
    %c0_i32_1 = arith.constant 0 : i32
    return %c0_i32, %c0_i32_0 : i32, i32
  }
  func.func @transform_22(%arg0: i32, %arg1: i32) -> (i32, i32) {
    %c0_i32 = arith.constant 0 : i32
    %c0_i32_0 = arith.constant 0 : i32
    %c0_i32_1 = arith.constant 0 : i32
    return %c0_i32, %c0_i32_0 : i32, i32
  }
  func.func @transform_23(%arg0: i32, %arg1: i32) -> (i32, i32) {
    %c0_i32 = arith.constant 0 : i32
    %c0_i32_0 = arith.constant 0 : i32
    %c0_i32_1 = arith.constant 0 : i32
    return %c0_i32, %c0_i32_0 : i32, i32
  }
  func.func @transform_24(%arg0: i32, %arg1: i32) -> (i32, i32) {
    %c0_i32 = arith.constant 0 : i32
    %c0_i32_0 = arith.constant 0 : i32
    %c0_i32_1 = arith.constant 0 : i32
    return %c0_i32, %c0_i32_0 : i32, i32
  }
  func.func @transform_25(%arg0: i32, %arg1: i32) -> (i32, i32) {
    %c0_i32 = arith.constant 0 : i32
    %c0_i32_0 = arith.constant 0 : i32
    %c0_i32_1 = arith.constant 0 : i32
    return %c0_i32, %c0_i32_0 : i32, i32
  }
  func.func @transform_26(%arg0: i32, %arg1: i32) -> (i32, i32) {
    %c0_i32 = arith.constant 0 : i32
    %c0_i32_0 = arith.constant 0 : i32
    %c0_i32_1 = arith.constant 0 : i32
    return %c0_i32, %c0_i32_0 : i32, i32
  }
  func.func @transform_27(%arg0: i32, %arg1: i32) -> (i32, i32) {
    %c0_i32 = arith.constant 0 : i32
    %c0_i32_0 = arith.constant 0 : i32
    %c0_i32_1 = arith.constant 0 : i32
    return %c0_i32, %c0_i32_0 : i32, i32
  }
  func.func @transform_28(%arg0: i32, %arg1: i32) -> (i32, i32, i32) {
    %c0_i32 = arith.constant 0 : i32
    %c0_i32_0 = arith.constant 0 : i32
    %c0_i32_1 = arith.constant 0 : i32
    return %arg0, %c0_i32, %c0_i32_0 : i32, i32, i32
  }
}

</mosaic_0001>

<llo_original>
// kernel: transformer_dueling_forward.2
$region0: #{transformer_dueling_forward.2}
  #allocation0 [shape = 'u32[]', space=smem, size = 0x4, offset = 0x4, fixed_abs, tag = 'smem constant byte address 0x4 - core index']
  #allocation1 [shape = 'u32[144,128]{1,0:T(1,128)}', space=vmem, size = 0x12000, scoped, tag = 'internal scratch']
  #allocation2 [shape = 'f32[2,8,32]{2,1,0:T(8,128)}', space=vmem, size = 0x2000, scoped, tag = 'scratch operand']
  %s0 = inlined_call_operand.hbm [shape: f32[2,8,16], index: 0, kind: input, shape index: {}]
  %s1 = inlined_call_operand.hbm [shape: bf16[16,32], index: 1, kind: input, shape index: {}]
  %s2 = inlined_call_operand.hbm [shape: f32[1,32], index: 2, kind: input, shape index: {}]
  %s3 = inlined_call_operand.hbm [shape: bf16[32,32], index: 3, kind: input, shape index: {}]
  %s4 = inlined_call_operand.hbm [shape: f32[1,32], index: 4, kind: input, shape index: {}]
  %s5 = inlined_call_operand.hbm [shape: f32[8,32], index: 5, kind: input, shape index: {}]
  %s6 = inlined_call_operand.hbm [shape: f32[1,32], index: 6, kind: input, shape index: {}]
  %s7 = inlined_call_operand.hbm [shape: f32[1,32], index: 7, kind: input, shape index: {}]
  %s8 = inlined_call_operand.vmem [shape: bf16[2,32,96], index: 8, kind: input, shape index: {}]
  %s9 = inlined_call_operand.hbm [shape: f32[2,1,96], index: 9, kind: input, shape index: {}]
  %s10 = inlined_call_operand.vmem [shape: bf16[2,32,32], index: 10, kind: input, shape index: {}]
  %s11 = inlined_call_operand.hbm [shape: f32[2,1,32], index: 11, kind: input, shape index: {}]
  %s12 = inlined_call_operand.hbm [shape: f32[2,1,32], index: 12, kind: input, shape index: {}]
  %s13 = inlined_call_operand.hbm [shape: f32[2,1,32], index: 13, kind: input, shape index: {}]
  %s14 = inlined_call_operand.hbm [shape: bf16[2,32,64], index: 14, kind: input, shape index: {}]
  %s15 = inlined_call_operand.hbm [shape: f32[2,1,64], index: 15, kind: input, shape index: {}]
  %s16 = inlined_call_operand.vmem [shape: bf16[2,64,32], index: 16, kind: input, shape index: {}]
  %s17 = inlined_call_operand.hbm [shape: f32[2,1,32], index: 17, kind: input, shape index: {}]
  %s18 = inlined_call_operand.hbm [shape: f32[2,1,32], index: 18, kind: input, shape index: {}]
  %s19 = inlined_call_operand.hbm [shape: f32[2,1,32], index: 19, kind: input, shape index: {}]
  %s20 = inlined_call_operand.hbm [shape: f32[1,32], index: 20, kind: input, shape index: {}]
  %s21 = inlined_call_operand.hbm [shape: f32[1,32], index: 21, kind: input, shape index: {}]
  %s22 = inlined_call_operand.vmem [shape: bf16[32,16], index: 22, kind: input, shape index: {}]
  %s23 = inlined_call_operand.hbm [shape: f32[1,16], index: 23, kind: input, shape index: {}]
  %s24 = inlined_call_operand.vmem [shape: bf16[16,8], index: 24, kind: input, shape index: {}]
  %s25 = inlined_call_operand.hbm [shape: f32[1,8], index: 25, kind: input, shape index: {}]
  %s26 = inlined_call_operand.vmem [shape: bf16[8,4], index: 26, kind: input, shape index: {}]
  %s27 = inlined_call_operand.hbm [shape: f32[1,4], index: 27, kind: input, shape index: {}]
  %s28 = inlined_call_operand.vmem [shape: f32[2,8,4], index: 28, kind: output, shape index: {}]
  %s29 = sld [smem:[#allocation0]]
  $region241: #{transformer_dueling_forward.2} parent=0
    _
  %s31 = ssub.s32 1, %s29
  %s32 = scalar_select 0, %s31, %s29
  $region1: #{transformer_dueling_forward.2} parent=0
    #allocation3 [shape = 'u8[8192]{0}', space=vmem, size = 0x2000, scoped, tag = 'input window, operand 0, single buffered']
    #allocation4 [shape = 's32[2]{0}', space=sflag, size = 0x8, scoped, tag = 'scoped memory for transformer_dueling_forward.2']
    #allocation5 [shape = 'u8[4096]{0}', space=vmem, size = 0x1000, scoped, tag = 'input window, operand 1, single buffered']
    #allocation6 [shape = 's32[1]{0}', space=sflag, size = 0x4, scoped, tag = 'scoped memory for transformer_dueling_forward.2']
    #allocation7 [shape = 'u8[512]{0}', space=vmem, size = 0x400, scoped, tag = 'input window, operand 2, single buffered']
    #allocation8 [shape = 'u8[8192]{0}', space=vmem, size = 0x2000, scoped, tag = 'input window, operand 3, single buffered']
    #allocation9 [shape = 's32[1]{0}', space=sflag, size = 0x4, scoped, tag = 'scoped memory for transformer_dueling_forward.2']
    #allocation10 [shape = 'u8[512]{0}', space=vmem, size = 0x400, scoped, tag = 'input window, operand 4, single buffered']
    #allocation11 [shape = 'u8[4096]{0}', space=vmem, size = 0x1000, scoped, tag = 'input window, operand 5, single buffered']
    #allocation12 [shape = 's32[1]{0}', space=sflag, size = 0x4, scoped, tag = 'scoped memory for transformer_dueling_forward.2']
    #allocation13 [shape = 'u8[512]{0}', space=vmem, size = 0x400, scoped, tag = 'input window, operand 6, single buffered']
    #allocation14 [shape = 'u8[512]{0}', space=vmem, size = 0x400, scoped, tag = 'input window, operand 7, single buffered']
    #allocation15 [shape = 's32[1]{0}', space=sflag, size = 0x4, scoped, tag = 'scoped memory for transformer_dueling_forward.2']
    #allocation16 [shape = 'u8[1024]{0}', space=vmem, size = 0x400, scoped, tag = 'input window, operand 9']
    #allocation17 [shape = 'u8[1024]{0}', space=vmem, size = 0x400, scoped, tag = 'input window, operand 11']
    #allocation18 [shape = 'u8[1024]{0}', space=vmem, size = 0x400, scoped, tag = 'input window, operand 12']
    #allocation19 [shape = 'u8[1024]{0}', space=vmem, size = 0x400, scoped, tag = 'input window, operand 13']
    #allocation20 [shape = 'u8[16384]{0}', space=vmem, size = 0x4000, scoped, tag = 'input window, operand 14']
    #allocation21 [shape = 'u8[1024]{0}', space=vmem, size = 0x400, scoped, tag = 'input window, operand 15']
    #allocation22 [shape = 'u8[1024]{0}', space=vmem, size = 0x400, scoped, tag = 'input window, operand 17']
    #allocation23 [shape = 'u8[1024]{0}', space=vmem, size = 0x400, scoped, tag = 'input window, operand 18']
    #allocation24 [shape = 'u8[1024]{0}', space=vmem, size = 0x400, scoped, tag = 'input window, operand 19']
    #allocation25 [shape = 'u8[512]{0}', space=vmem, size = 0x400, scoped, tag = 'input window, operand 20, single buffered']
    #allocation26 [shape = 'u8[512]{0}', space=vmem, size = 0x400, scoped, tag = 'input window, operand 21, single buffered']
    #allocation27 [shape = 'u8[512]{0}', space=vmem, size = 0x400, scoped, tag = 'input window, operand 23, single buffered']
    #allocation28 [shape = 'u8[512]{0}', space=vmem, size = 0x400, scoped, tag = 'input window, operand 25, single buffered']
    #allocation29 [shape = 'u8[512]{0}', space=vmem, size = 0x400, scoped, tag = 'input window, operand 27, single buffered']
    #allocation30 [shape = 's32[1]{0}', space=sflag, size = 0x4, scoped, tag = 'scoped memory for transformer_dueling_forward.2']
    %33 = vsyncpa [#allocation4], 0
    %34 = vsyncpa [#allocation6], 0
    %35 = vsyncpa [#allocation9], 0
    %36 = vsyncpa [#allocation12], 0
    %37 = vsyncpa [#allocation15], 0
    %38 = vsyncpa [#allocation30], 0
    loop: start=0, step=1, limit=4
    $region2: #{transformer_dueling_forward.2} parent=1 // loop_pre_header
      _
    $region3: #{transformer_dueling_forward.2} parent=1 // loop_header
      %s40 = sphi 0, %s44
      %p41 = scmp.ge.s32.totalorder %s40, 4
      %s47 = sphi 0, %s59
      %s48 = sphi 0, %s55
      %s49 = sphi 0, %s47
      %s50 = sphi 0, %s48
      %s51 = sphi 0, %s49
      %s52 = sphi 0, %s50
      %s62 = sphi 0, %s64
      %s65 = sphi 0, %s62
      %s66 = sphi 0, %s65
      %s82 = sphi 0, %s66
      %s86 = sphi 0, %s86
      %s88 = sphi 0, %s86
      %s89 = sphi 0, %s88
      %s103 = sphi 0, %s89
      %s107 = sphi 0, %s107
      %s109 = sphi 0, %s107
      %s110 = sphi 0, %s109
      %s124 = sphi 0, %s110
      %s128 = sphi 0, %s128
      %s130 = sphi 0, %s128
      %s131 = sphi 0, %s130
      %s145 = sphi 0, %s131
      %s149 = sphi 0, %s149
      %s151 = sphi 0, %s149
      %s152 = sphi 0, %s151
      %s166 = sphi 0, %s152
      %s170 = sphi 0, %s170
      %s172 = sphi 0, %s170
      %s173 = sphi 0, %s172
      %s187 = sphi 0, %s173
      %s191 = sphi 0, %s191
      %s193 = sphi 0, %s191
      %s194 = sphi 0, %s193
      %s208 = sphi 0, %s194
      %s212 = sphi 0, %s212
      %s214 = sphi 0, %s212
      %s215 = sphi 0, %s214
      %s229 = sphi 0, %s215
      %s235 = sphi 0, %s237
      %s238 = sphi 0, %s235
      %s239 = sphi 0, %s238
      %s255 = sphi 0, %s239
      %s261 = sphi 0, %s263
      %s264 = sphi 0, %s261
      %s265 = sphi 0, %s264
      %s281 = sphi 0, %s265
      %s287 = sphi 0, %s289
      %s290 = sphi 0, %s287
      %s291 = sphi 0, %s290
      %s307 = sphi 0, %s291
      %s313 = sphi 0, %s315
      %s316 = sphi 0, %s313
      %s317 = sphi 0, %s316
      %s333 = sphi 0, %s317
      %s339 = sphi 0, %s341
      %s342 = sphi 0, %s339
      %s343 = sphi 0, %s342
      %s359 = sphi 0, %s343
      %s365 = sphi 0, %s367
      %s368 = sphi 0, %s365
      %s369 = sphi 0, %s368
      %s385 = sphi 0, %s369
      %s391 = sphi 0, %s393
      %s394 = sphi 0, %s391
      %s395 = sphi 0, %s394
      %s411 = sphi 0, %s395
      %s417 = sphi 0, %s419
      %s420 = sphi 0, %s417
      %s421 = sphi 0, %s420
      %s437 = sphi 0, %s421
      %s443 = sphi 0, %s445
      %s446 = sphi 0, %s443
      %s447 = sphi 0, %s446
      %s463 = sphi 0, %s447
      %s469 = sphi 0, %s471
      %s472 = sphi 0, %s469
      %s473 = sphi 0, %s472
      %s489 = sphi 0, %s473
      %s495 = sphi 0, %s497
      %s498 = sphi 0, %s495
      %s499 = sphi 0, %s498
      %s515 = sphi 0, %s499
      %s521 = sphi 0, %s523
      %s524 = sphi 0, %s521
      %s525 = sphi 0, %s524
      %s541 = sphi 0, %s525
      %s545 = sphi 0, %s545
      %s547 = sphi 0, %s545
      %s548 = sphi 0, %s547
      %s562 = sphi 0, %s548
      %s566 = sphi 0, %s566
      %s568 = sphi 0, %s566
      %s569 = sphi 0, %s568
      %s583 = sphi 0, %s569
      %s587 = sphi 0, %s587
      %s589 = sphi 0, %s587
      %s590 = sphi 0, %s589
      %s604 = sphi 0, %s590
      %s608 = sphi 0, %s608
      %s610 = sphi 0, %s608
      %s611 = sphi 0, %s610
      %s625 = sphi 0, %s611
      %s629 = sphi 0, %s629
      %s631 = sphi 0, %s629
      %s632 = sphi 0, %s631
      %s646 = sphi 0, %s632
      %s650 = sphi 0, %s650
      %s652 = sphi 0, %s650
      %s653 = sphi 0, %s652
      %s667 = sphi 0, %s653
      %s671 = sphi 0, %s671
      %s673 = sphi 0, %s671
      %s674 = sphi 0, %s673
      %s688 = sphi 0, %s674
      %s692 = sphi 0, %s692
      %s694 = sphi 0, %s692
      %s695 = sphi 0, %s694
      %s709 = sphi 0, %s695
      %s715 = sphi 0, %s717
      %s718 = sphi 0, %s715
      %s719 = sphi 0, %s718
      %s735 = sphi 0, %s719
    $region4: #{transformer_dueling_forward.2} parent=1 // loop_header_branch
      %43 = sbr.rel (%p41) target = $region8
    $region5: #{transformer_dueling_forward.2} parent=1 // loop_body
      %s45 = ssub.s32 %s40, 1
      %s46 = ssub.s32 %s40, 2
      %s53 = sadd.s32 1, %s48
      %p54 = scmp.ge.s32.totalorder %s53, 2
      %s55 = scalar_select %p54, 0, %s53
      %s56 = sadd.s32 1, %s47
      %s57 = scalar_select %p54, %s56, %s47
      %p58 = scmp.ge.s32.totalorder %s57, 1
      %s59 = scalar_select %p58, 0, %s57
      %s60 = ssub.s32 %s47, %s59
      %p61 = scmp.eq.s32.totalorder %s60, 0
      %s63 = sadd.s32 %s62, 1
      %s64 = scalar_select %p61, %s62, %s63
      %p67 = pneg %p61
      %p68 = scmp.eq.s32.totalorder %s40, 1
      %p69 = por %p67, %p68
      %p70 = scmp.ne.s32.totalorder %s62, %s65
      %p71 = scmp.eq.s32.totalorder %s40, 0
      %p72 = por %p70, %p71
      %p73 = scmp.ne.s32.totalorder %s62, %s65
      %p74 = scmp.eq.s32.totalorder %s45, 1
      %p75 = por %p73, %p74
      %p76 = scmp.ne.s32.totalorder %s65, %s66
      %p77 = scmp.eq.s32.totalorder %s45, 0
      %p78 = por %p76, %p77
      %p79 = scmp.ne.s32.totalorder %s65, %s66
      %p80 = scmp.eq.s32.totalorder %s46, 1
      %p81 = por %p79, %p80
      %p83 = scmp.ne.s32.totalorder %s66, %s82
      %p84 = scmp.eq.s32.totalorder %s46, 0
      %p85 = por %p83, %p84
      %s87 = sadd.s32 %s86, 1
      %p90 = scmp.eq.s32.totalorder %s40, 1
      %p91 = scmp.ne.s32.totalorder %s86, %s88
      %p92 = scmp.eq.s32.totalorder %s40, 0
      %p93 = por %p91, %p92
      %p94 = scmp.ne.s32.totalorder %s86, %s88
      %p95 = scmp.eq.s32.totalorder %s45, 1
      %p96 = por %p94, %p95
      %p97 = scmp.ne.s32.totalorder %s88, %s89
      %p98 = scmp.eq.s32.totalorder %s45, 0
      %p99 = por %p97, %p98
      %p100 = scmp.ne.s32.totalorder %s88, %s89
      %p101 = scmp.eq.s32.totalorder %s46, 1
      %p102 = por %p100, %p101
      %p104 = scmp.ne.s32.totalorder %s89, %s103
      %p105 = scmp.eq.s32.totalorder %s46, 0
      %p106 = por %p104, %p105
      %s108 = sadd.s32 %s107, 1
      %p111 = scmp.eq.s32.totalorder %s40, 1
      %p112 = scmp.ne.s32.totalorder %s107, %s109
      %p113 = scmp.eq.s32.totalorder %s40, 0
      %p114 = por %p112, %p113
      %p115 = scmp.ne.s32.totalorder %s107, %s109
      %p116 = scmp.eq.s32.totalorder %s45, 1
      %p117 = por %p115, %p116
      %p118 = scmp.ne.s32.totalorder %s109, %s110
      %p119 = scmp.eq.s32.totalorder %s45, 0
      %p120 = por %p118, %p119
      %p121 = scmp.ne.s32.totalorder %s109, %s110
      %p122 = scmp.eq.s32.totalorder %s46, 1
      %p123 = por %p121, %p122
      %p125 = scmp.ne.s32.totalorder %s110, %s124
      %p126 = scmp.eq.s32.totalorder %s46, 0
      %p127 = por %p125, %p126
      %s129 = sadd.s32 %s128, 1
      %p132 = scmp.eq.s32.totalorder %s40, 1
      %p133 = scmp.ne.s32.totalorder %s128, %s130
      %p134 = scmp.eq.s32.totalorder %s40, 0
      %p135 = por %p133, %p134
      %p136 = scmp.ne.s32.totalorder %s128, %s130
      %p137 = scmp.eq.s32.totalorder %s45, 1
      %p138 = por %p136, %p137
      %p139 = scmp.ne.s32.totalorder %s130, %s131
      %p140 = scmp.eq.s32.totalorder %s45, 0
      %p141 = por %p139, %p140
      %p142 = scmp.ne.s32.totalorder %s130, %s131
      %p143 = scmp.eq.s32.totalorder %s46, 1
      %p144 = por %p142, %p143
      %p146 = scmp.ne.s32.totalorder %s131, %s145
      %p147 = scmp.eq.s32.totalorder %s46, 0
      %p148 = por %p146, %p147
      %s150 = sadd.s32 %s149, 1
      %p153 = scmp.eq.s32.totalorder %s40, 1
      %p154 = scmp.ne.s32.totalorder %s149, %s151
      %p155 = scmp.eq.s32.totalorder %s40, 0
      %p156 = por %p154, %p155
      %p157 = scmp.ne.s32.totalorder %s149, %s151
      %p158 = scmp.eq.s32.totalorder %s45, 1
      %p159 = por %p157, %p158
      %p160 = scmp.ne.s32.totalorder %s151, %s152
      %p161 = scmp.eq.s32.totalorder %s45, 0
      %p162 = por %p160, %p161
      %p163 = scmp.ne.s32.totalorder %s151, %s152
      %p164 = scmp.eq.s32.totalorder %s46, 1
      %p165 = por %p163, %p164
      %p167 = scmp.ne.s32.totalorder %s152, %s166
      %p168 = scmp.eq.s32.totalorder %s46, 0
      %p169 = por %p167, %p168
      %s171 = sadd.s32 %s170, 1
      %p174 = scmp.eq.s32.totalorder %s40, 1
      %p175 = scmp.ne.s32.totalorder %s170, %s172
      %p176 = scmp.eq.s32.totalorder %s40, 0
      %p177 = por %p175, %p176
      %p178 = scmp.ne.s32.totalorder %s170, %s172
      %p179 = scmp.eq.s32.totalorder %s45, 1
      %p180 = por %p178, %p179
      %p181 = scmp.ne.s32.totalorder %s172, %s173
      %p182 = scmp.eq.s32.totalorder %s45, 0
      %p183 = por %p181, %p182
      %p184 = scmp.ne.s32.totalorder %s172, %s173
      %p185 = scmp.eq.s32.totalorder %s46, 1
      %p186 = por %p184, %p185
      %p188 = scmp.ne.s32.totalorder %s173, %s187
      %p189 = scmp.eq.s32.totalorder %s46, 0
      %p190 = por %p188, %p189
      %s192 = sadd.s32 %s191, 1
      %p195 = scmp.eq.s32.totalorder %s40, 1
      %p196 = scmp.ne.s32.totalorder %s191, %s193
      %p197 = scmp.eq.s32.totalorder %s40, 0
      %p198 = por %p196, %p197
      %p199 = scmp.ne.s32.totalorder %s191, %s193
      %p200 = scmp.eq.s32.totalorder %s45, 1
      %p201 = por %p199, %p200
      %p202 = scmp.ne.s32.totalorder %s193, %s194
      %p203 = scmp.eq.s32.totalorder %s45, 0
      %p204 = por %p202, %p203
      %p205 = scmp.ne.s32.totalorder %s193, %s194
      %p206 = scmp.eq.s32.totalorder %s46, 1
      %p207 = por %p205, %p206
      %p209 = scmp.ne.s32.totalorder %s194, %s208
      %p210 = scmp.eq.s32.totalorder %s46, 0
      %p211 = por %p209, %p210
      %s213 = sadd.s32 %s212, 1
      %p216 = scmp.eq.s32.totalorder %s40, 1
      %p217 = scmp.ne.s32.totalorder %s212, %s214
      %p218 = scmp.eq.s32.totalorder %s40, 0
      %p219 = por %p217, %p218
      %p220 = scmp.ne.s32.totalorder %s212, %s214
      %p221 = scmp.eq.s32.totalorder %s45, 1
      %p222 = por %p220, %p221
      %p223 = scmp.ne.s32.totalorder %s214, %s215
      %p224 = scmp.eq.s32.totalorder %s45, 0
      %p225 = por %p223, %p224
      %p226 = scmp.ne.s32.totalorder %s214, %s215
      %p227 = scmp.eq.s32.totalorder %s46, 1
      %p228 = por %p226, %p227
      %p230 = scmp.ne.s32.totalorder %s215, %s229
      %p231 = scmp.eq.s32.totalorder %s46, 0
      %p232 = por %p230, %p231
      %s233 = ssub.s32 %s48, %s55
      %p234 = scmp.eq.s32.totalorder %s233, 0
      %s236 = sadd.s32 %s235, 1
      %s237 = scalar_select %p234, %s235, %s236
      %p240 = pneg %p234
      %p241 = scmp.eq.s32.totalorder %s40, 1
      %p242 = por %p240, %p241
      %p243 = scmp.ne.s32.totalorder %s235, %s238
      %p244 = scmp.eq.s32.totalorder %s40, 0
      %p245 = por %p243, %p244
      %p246 = scmp.ne.s32.totalorder %s235, %s238
      %p247 = scmp.eq.s32.totalorder %s45, 1
      %p248 = por %p246, %p247
      %p249 = scmp.ne.s32.totalorder %s238, %s239
      %p250 = scmp.eq.s32.totalorder %s45, 0
      %p251 = por %p249, %p250
      %p252 = scmp.ne.s32.totalorder %s238, %s239
      %p253 = scmp.eq.s32.totalorder %s46, 1
      %p254 = por %p252, %p253
      %p256 = scmp.ne.s32.totalorder %s239, %s255
      %p257 = scmp.eq.s32.totalorder %s46, 0
      %p258 = por %p256, %p257
      %s259 = ssub.s32 %s48, %s55
      %p260 = scmp.eq.s32.totalorder %s259, 0
      %s262 = sadd.s32 %s261, 1
      %s263 = scalar_select %p260, %s261, %s262
      %p266 = pneg %p260
      %p267 = scmp.eq.s32.totalorder %s40, 1
      %p268 = por %p266, %p267
      %p269 = scmp.ne.s32.totalorder %s261, %s264
      %p270 = scmp.eq.s32.totalorder %s40, 0
      %p271 = por %p269, %p270
      %p272 = scmp.ne.s32.totalorder %s261, %s264
      %p273 = scmp.eq.s32.totalorder %s45, 1
      %p274 = por %p272, %p273
      %p275 = scmp.ne.s32.totalorder %s264, %s265
      %p276 = scmp.eq.s32.totalorder %s45, 0
      %p277 = por %p275, %p276
      %p278 = scmp.ne.s32.totalorder %s264, %s265
      %p279 = scmp.eq.s32.totalorder %s46, 1
      %p280 = por %p278, %p279
      %p282 = scmp.ne.s32.totalorder %s265, %s281
      %p283 = scmp.eq.s32.totalorder %s46, 0
      %p284 = por %p282, %p283
      %s285 = ssub.s32 %s48, %s55
      %p286 = scmp.eq.s32.totalorder %s285, 0
      %s288 = sadd.s32 %s287, 1
      %s289 = scalar_select %p286, %s287, %s288
      %p292 = pneg %p286
      %p293 = scmp.eq.s32.totalorder %s40, 1
      %p294 = por %p292, %p293
      %p295 = scmp.ne.s32.totalorder %s287, %s290
      %p296 = scmp.eq.s32.totalorder %s40, 0
      %p297 = por %p295, %p296
      %p298 = scmp.ne.s32.totalorder %s287, %s290
      %p299 = scmp.eq.s32.totalorder %s45, 1
      %p300 = por %p298, %p299
      %p301 = scmp.ne.s32.totalorder %s290, %s291
      %p302 = scmp.eq.s32.totalorder %s45, 0
      %p303 = por %p301, %p302
      %p304 = scmp.ne.s32.totalorder %s290, %s291
      %p305 = scmp.eq.s32.totalorder %s46, 1
      %p306 = por %p304, %p305
      %p308 = scmp.ne.s32.totalorder %s291, %s307
      %p309 = scmp.eq.s32.totalorder %s46, 0
      %p310 = por %p308, %p309
      %s311 = ssub.s32 %s48, %s55
      %p312 = scmp.eq.s32.totalorder %s311, 0
      %s314 = sadd.s32 %s313, 1
      %s315 = scalar_select %p312, %s313, %s314
      %p318 = pneg %p312
      %p319 = scmp.eq.s32.totalorder %s40, 1
      %p320 = por %p318, %p319
      %p321 = scmp.ne.s32.totalorder %s313, %s316
      %p322 = scmp.eq.s32.totalorder %s40, 0
      %p323 = por %p321, %p322
      %p324 = scmp.ne.s32.totalorder %s313, %s316
      %p325 = scmp.eq.s32.totalorder %s45, 1
      %p326 = por %p324, %p325
      %p327 = scmp.ne.s32.totalorder %s316, %s317
      %p328 = scmp.eq.s32.totalorder %s45, 0
      %p329 = por %p327, %p328
      %p330 = scmp.ne.s32.totalorder %s316, %s317
      %p331 = scmp.eq.s32.totalorder %s46, 1
      %p332 = por %p330, %p331
      %p334 = scmp.ne.s32.totalorder %s317, %s333
      %p335 = scmp.eq.s32.totalorder %s46, 0
      %p336 = por %p334, %p335
      %s337 = ssub.s32 %s48, %s55
      %p338 = scmp.eq.s32.totalorder %s337, 0
      %s340 = sadd.s32 %s339, 1
      %s341 = scalar_select %p338, %s339, %s340
      %p344 = pneg %p338
      %p345 = scmp.eq.s32.totalorder %s40, 1
      %p346 = por %p344, %p345
      %p347 = scmp.ne.s32.totalorder %s339, %s342
      %p348 = scmp.eq.s32.totalorder %s40, 0
      %p349 = por %p347, %p348
      %p350 = scmp.ne.s32.totalorder %s339, %s342
      %p351 = scmp.eq.s32.totalorder %s45, 1
      %p352 = por %p350, %p351
      %p353 = scmp.ne.s32.totalorder %s342, %s343
      %p354 = scmp.eq.s32.totalorder %s45, 0
      %p355 = por %p353, %p354
      %p356 = scmp.ne.s32.totalorder %s342, %s343
      %p357 = scmp.eq.s32.totalorder %s46, 1
      %p358 = por %p356, %p357
      %p360 = scmp.ne.s32.totalorder %s343, %s359
      %p361 = scmp.eq.s32.totalorder %s46, 0
      %p362 = por %p360, %p361
      %s363 = ssub.s32 %s48, %s55
      %p364 = scmp.eq.s32.totalorder %s363, 0
      %s366 = sadd.s32 %s365, 1
      %s367 = scalar_select %p364, %s365, %s366
      %p370 = pneg %p364
      %p371 = scmp.eq.s32.totalorder %s40, 1
      %p372 = por %p370, %p371
      %p373 = scmp.ne.s32.totalorder %s365, %s368
      %p374 = scmp.eq.s32.totalorder %s40, 0
      %p375 = por %p373, %p374
      %p376 = scmp.ne.s32.totalorder %s365, %s368
      %p377 = scmp.eq.s32.totalorder %s45, 1
      %p378 = por %p376, %p377
      %p379 = scmp.ne.s32.totalorder %s368, %s369
      %p380 = scmp.eq.s32.totalorder %s45, 0
      %p381 = por %p379, %p380
      %p382 = scmp.ne.s32.totalorder %s368, %s369
      %p383 = scmp.eq.s32.totalorder %s46, 1
      %p384 = por %p382, %p383
      %p386 = scmp.ne.s32.totalorder %s369, %s385
      %p387 = scmp.eq.s32.totalorder %s46, 0
      %p388 = por %p386, %p387
      %s389 = ssub.s32 %s48, %s55
      %p390 = scmp.eq.s32.totalorder %s389, 0
      %s392 = sadd.s32 %s391, 1
      %s393 = scalar_select %p390, %s391, %s392
      %p396 = pneg %p390
      %p397 = scmp.eq.s32.totalorder %s40, 1
      %p398 = por %p396, %p397
      %p399 = scmp.ne.s32.totalorder %s391, %s394
      %p400 = scmp.eq.s32.totalorder %s40, 0
      %p401 = por %p399, %p400
      %p402 = scmp.ne.s32.totalorder %s391, %s394
      %p403 = scmp.eq.s32.totalorder %s45, 1
      %p404 = por %p402, %p403
      %p405 = scmp.ne.s32.totalorder %s394, %s395
      %p406 = scmp.eq.s32.totalorder %s45, 0
      %p407 = por %p405, %p406
      %p408 = scmp.ne.s32.totalorder %s394, %s395
      %p409 = scmp.eq.s32.totalorder %s46, 1
      %p410 = por %p408, %p409
      %p412 = scmp.ne.s32.totalorder %s395, %s411
      %p413 = scmp.eq.s32.totalorder %s46, 0
      %p414 = por %p412, %p413
      %s415 = ssub.s32 %s48, %s55
      %p416 = scmp.eq.s32.totalorder %s415, 0
      %s418 = sadd.s32 %s417, 1
      %s419 = scalar_select %p416, %s417, %s418
      %p422 = pneg %p416
      %p423 = scmp.eq.s32.totalorder %s40, 1
      %p424 = por %p422, %p423
      %p425 = scmp.ne.s32.totalorder %s417, %s420
      %p426 = scmp.eq.s32.totalorder %s40, 0
      %p427 = por %p425, %p426
      %p428 = scmp.ne.s32.totalorder %s417, %s420
      %p429 = scmp.eq.s32.totalorder %s45, 1
      %p430 = por %p428, %p429
      %p431 = scmp.ne.s32.totalorder %s420, %s421
      %p432 = scmp.eq.s32.totalorder %s45, 0
      %p433 = por %p431, %p432
      %p434 = scmp.ne.s32.totalorder %s420, %s421
      %p435 = scmp.eq.s32.totalorder %s46, 1
      %p436 = por %p434, %p435
      %p438 = scmp.ne.s32.totalorder %s421, %s437
      %p439 = scmp.eq.s32.totalorder %s46, 0
      %p440 = por %p438, %p439
      %s441 = ssub.s32 %s48, %s55
      %p442 = scmp.eq.s32.totalorder %s441, 0
      %s444 = sadd.s32 %s443, 1
      %s445 = scalar_select %p442, %s443, %s444
      %p448 = pneg %p442
      %p449 = scmp.eq.s32.totalorder %s40, 1
      %p450 = por %p448, %p449
      %p451 = scmp.ne.s32.totalorder %s443, %s446
      %p452 = scmp.eq.s32.totalorder %s40, 0
      %p453 = por %p451, %p452
      %p454 = scmp.ne.s32.totalorder %s443, %s446
      %p455 = scmp.eq.s32.totalorder %s45, 1
      %p456 = por %p454, %p455
      %p457 = scmp.ne.s32.totalorder %s446, %s447
      %p458 = scmp.eq.s32.totalorder %s45, 0
      %p459 = por %p457, %p458
      %p460 = scmp.ne.s32.totalorder %s446, %s447
      %p461 = scmp.eq.s32.totalorder %s46, 1
      %p462 = por %p460, %p461
      %p464 = scmp.ne.s32.totalorder %s447, %s463
      %p465 = scmp.eq.s32.totalorder %s46, 0
      %p466 = por %p464, %p465
      %s467 = ssub.s32 %s48, %s55
      %p468 = scmp.eq.s32.totalorder %s467, 0
      %s470 = sadd.s32 %s469, 1
      %s471 = scalar_select %p468, %s469, %s470
      %p474 = pneg %p468
      %p475 = scmp.eq.s32.totalorder %s40, 1
      %p476 = por %p474, %p475
      %p477 = scmp.ne.s32.totalorder %s469, %s472
      %p478 = scmp.eq.s32.totalorder %s40, 0
      %p479 = por %p477, %p478
      %p480 = scmp.ne.s32.totalorder %s469, %s472
      %p481 = scmp.eq.s32.totalorder %s45, 1
      %p482 = por %p480, %p481
      %p483 = scmp.ne.s32.totalorder %s472, %s473
      %p484 = scmp.eq.s32.totalorder %s45, 0
      %p485 = por %p483, %p484
      %p486 = scmp.ne.s32.totalorder %s472, %s473
      %p487 = scmp.eq.s32.totalorder %s46, 1
      %p488 = por %p486, %p487
      %p490 = scmp.ne.s32.totalorder %s473, %s489
      %p491 = scmp.eq.s32.totalorder %s46, 0
      %p492 = por %p490, %p491
      %s493 = ssub.s32 %s48, %s55
      %p494 = scmp.eq.s32.totalorder %s493, 0
      %s496 = sadd.s32 %s495, 1
      %s497 = scalar_select %p494, %s495, %s496
      %p500 = pneg %p494
      %p501 = scmp.eq.s32.totalorder %s40, 1
      %p502 = por %p500, %p501
      %p503 = scmp.ne.s32.totalorder %s495, %s498
      %p504 = scmp.eq.s32.totalorder %s40, 0
      %p505 = por %p503, %p504
      %p506 = scmp.ne.s32.totalorder %s495, %s498
      %p507 = scmp.eq.s32.totalorder %s45, 1
      %p508 = por %p506, %p507
      %p509 = scmp.ne.s32.totalorder %s498, %s499
      %p510 = scmp.eq.s32.totalorder %s45, 0
      %p511 = por %p509, %p510
      %p512 = scmp.ne.s32.totalorder %s498, %s499
      %p513 = scmp.eq.s32.totalorder %s46, 1
      %p514 = por %p512, %p513
      %p516 = scmp.ne.s32.totalorder %s499, %s515
      %p517 = scmp.eq.s32.totalorder %s46, 0
      %p518 = por %p516, %p517
      %s519 = ssub.s32 %s48, %s55
      %p520 = scmp.eq.s32.totalorder %s519, 0
      %s522 = sadd.s32 %s521, 1
      %s523 = scalar_select %p520, %s521, %s522
      %p526 = pneg %p520
      %p527 = scmp.eq.s32.totalorder %s40, 1
      %p528 = por %p526, %p527
      %p529 = scmp.ne.s32.totalorder %s521, %s524
      %p530 = scmp.eq.s32.totalorder %s40, 0
      %p531 = por %p529, %p530
      %p532 = scmp.ne.s32.totalorder %s521, %s524
      %p533 = scmp.eq.s32.totalorder %s45, 1
      %p534 = por %p532, %p533
      %p535 = scmp.ne.s32.totalorder %s524, %s525
      %p536 = scmp.eq.s32.totalorder %s45, 0
      %p537 = por %p535, %p536
      %p538 = scmp.ne.s32.totalorder %s524, %s525
      %p539 = scmp.eq.s32.totalorder %s46, 1
      %p540 = por %p538, %p539
      %p542 = scmp.ne.s32.totalorder %s525, %s541
      %p543 = scmp.eq.s32.totalorder %s46, 0
      %p544 = por %p542, %p543
      %s546 = sadd.s32 %s545, 1
      %p549 = scmp.eq.s32.totalorder %s40, 1
      %p550 = scmp.ne.s32.totalorder %s545, %s547
      %p551 = scmp.eq.s32.totalorder %s40, 0
      %p552 = por %p550, %p551
      %p553 = scmp.ne.s32.totalorder %s545, %s547
      %p554 = scmp.eq.s32.totalorder %s45, 1
      %p555 = por %p553, %p554
      %p556 = scmp.ne.s32.totalorder %s547, %s548
      %p557 = scmp.eq.s32.totalorder %s45, 0
      %p558 = por %p556, %p557
      %p559 = scmp.ne.s32.totalorder %s547, %s548
      %p560 = scmp.eq.s32.totalorder %s46, 1
      %p561 = por %p559, %p560
      %p563 = scmp.ne.s32.totalorder %s548, %s562
      %p564 = scmp.eq.s32.totalorder %s46, 0
      %p565 = por %p563, %p564
      %s567 = sadd.s32 %s566, 1
      %p570 = scmp.eq.s32.totalorder %s40, 1
      %p571 = scmp.ne.s32.totalorder %s566, %s568
      %p572 = scmp.eq.s32.totalorder %s40, 0
      %p573 = por %p571, %p572
      %p574 = scmp.ne.s32.totalorder %s566, %s568
      %p575 = scmp.eq.s32.totalorder %s45, 1
      %p576 = por %p574, %p575
      %p577 = scmp.ne.s32.totalorder %s568, %s569
      %p578 = scmp.eq.s32.totalorder %s45, 0
      %p579 = por %p577, %p578
      %p580 = scmp.ne.s32.totalorder %s568, %s569
      %p581 = scmp.eq.s32.totalorder %s46, 1
      %p582 = por %p580, %p581
      %p584 = scmp.ne.s32.totalorder %s569, %s583
      %p585 = scmp.eq.s32.totalorder %s46, 0
      %p586 = por %p584, %p585
      %s588 = sadd.s32 %s587, 1
      %p591 = scmp.eq.s32.totalorder %s40, 1
      %p592 = scmp.ne.s32.totalorder %s587, %s589
      %p593 = scmp.eq.s32.totalorder %s40, 0
      %p594 = por %p592, %p593
      %p595 = scmp.ne.s32.totalorder %s587, %s589
      %p596 = scmp.eq.s32.totalorder %s45, 1
      %p597 = por %p595, %p596
      %p598 = scmp.ne.s32.totalorder %s589, %s590
      %p599 = scmp.eq.s32.totalorder %s45, 0
      %p600 = por %p598, %p599
      %p601 = scmp.ne.s32.totalorder %s589, %s590
      %p602 = scmp.eq.s32.totalorder %s46, 1
      %p603 = por %p601, %p602
      %p605 = scmp.ne.s32.totalorder %s590, %s604
      %p606 = scmp.eq.s32.totalorder %s46, 0
      %p607 = por %p605, %p606
      %s609 = sadd.s32 %s608, 1
      %p612 = scmp.eq.s32.totalorder %s40, 1
      %p613 = scmp.ne.s32.totalorder %s608, %s610
      %p614 = scmp.eq.s32.totalorder %s40, 0
      %p615 = por %p613, %p614
      %p616 = scmp.ne.s32.totalorder %s608, %s610
      %p617 = scmp.eq.s32.totalorder %s45, 1
      %p618 = por %p616, %p617
      %p619 = scmp.ne.s32.totalorder %s610, %s611
      %p620 = scmp.eq.s32.totalorder %s45, 0
      %p621 = por %p619, %p620
      %p622 = scmp.ne.s32.totalorder %s610, %s611
      %p623 = scmp.eq.s32.totalorder %s46, 1
      %p624 = por %p622, %p623
      %p626 = scmp.ne.s32.totalorder %s611, %s625
      %p627 = scmp.eq.s32.totalorder %s46, 0
      %p628 = por %p626, %p627
      %s630 = sadd.s32 %s629, 1
      %p633 = scmp.eq.s32.totalorder %s40, 1
      %p634 = scmp.ne.s32.totalorder %s629, %s631
      %p635 = scmp.eq.s32.totalorder %s40, 0
      %p636 = por %p634, %p635
      %p637 = scmp.ne.s32.totalorder %s629, %s631
      %p638 = scmp.eq.s32.totalorder %s45, 1
      %p639 = por %p637, %p638
      %p640 = scmp.ne.s32.totalorder %s631, %s632
      %p641 = scmp.eq.s32.totalorder %s45, 0
      %p642 = por %p640, %p641
      %p643 = scmp.ne.s32.totalorder %s631, %s632
      %p644 = scmp.eq.s32.totalorder %s46, 1
      %p645 = por %p643, %p644
      %p647 = scmp.ne.s32.totalorder %s632, %s646
      %p648 = scmp.eq.s32.totalorder %s46, 0
      %p649 = por %p647, %p648
      %s651 = sadd.s32 %s650, 1
      %p654 = scmp.eq.s32.totalorder %s40, 1
      %p655 = scmp.ne.s32.totalorder %s650, %s652
      %p656 = scmp.eq.s32.totalorder %s40, 0
      %p657 = por %p655, %p656
      %p658 = scmp.ne.s32.totalorder %s650, %s652
      %p659 = scmp.eq.s32.totalorder %s45, 1
      %p660 = por %p658, %p659
      %p661 = scmp.ne.s32.totalorder %s652, %s653
      %p662 = scmp.eq.s32.totalorder %s45, 0
      %p663 = por %p661, %p662
      %p664 = scmp.ne.s32.totalorder %s652, %s653
      %p665 = scmp.eq.s32.totalorder %s46, 1
      %p666 = por %p664, %p665
      %p668 = scmp.ne.s32.totalorder %s653, %s667
      %p669 = scmp.eq.s32.totalorder %s46, 0
      %p670 = por %p668, %p669
      %s672 = sadd.s32 %s671, 1
      %p675 = scmp.eq.s32.totalorder %s40, 1
      %p676 = scmp.ne.s32.totalorder %s671, %s673
      %p677 = scmp.eq.s32.totalorder %s40, 0
      %p678 = por %p676, %p677
      %p679 = scmp.ne.s32.totalorder %s671, %s673
      %p680 = scmp.eq.s32.totalorder %s45, 1
      %p681 = por %p679, %p680
      %p682 = scmp.ne.s32.totalorder %s673, %s674
      %p683 = scmp.eq.s32.totalorder %s45, 0
      %p684 = por %p682, %p683
      %p685 = scmp.ne.s32.totalorder %s673, %s674
      %p686 = scmp.eq.s32.totalorder %s46, 1
      %p687 = por %p685, %p686
      %p689 = scmp.ne.s32.totalorder %s674, %s688
      %p690 = scmp.eq.s32.totalorder %s46, 0
      %p691 = por %p689, %p690
      %s693 = sadd.s32 %s692, 1
      %p696 = scmp.eq.s32.totalorder %s40, 1
      %p697 = scmp.ne.s32.totalorder %s692, %s694
      %p698 = scmp.eq.s32.totalorder %s40, 0
      %p699 = por %p697, %p698
      %p700 = scmp.ne.s32.totalorder %s692, %s694
      %p701 = scmp.eq.s32.totalorder %s45, 1
      %p702 = por %p700, %p701
      %p703 = scmp.ne.s32.totalorder %s694, %s695
      %p704 = scmp.eq.s32.totalorder %s45, 0
      %p705 = por %p703, %p704
      %p706 = scmp.ne.s32.totalorder %s694, %s695
      %p707 = scmp.eq.s32.totalorder %s46, 1
      %p708 = por %p706, %p707
      %p710 = scmp.ne.s32.totalorder %s695, %s709
      %p711 = scmp.eq.s32.totalorder %s46, 0
      %p712 = por %p710, %p711
      %s713 = ssub.s32 %s47, %s59
      %p714 = scmp.eq.s32.totalorder %s713, 0
      %s716 = sadd.s32 %s715, 1
      %s717 = scalar_select %p714, %s715, %s716
      %p720 = pneg %p714
      %p721 = scmp.eq.s32.totalorder %s40, 1
      %p722 = por %p720, %p721
      %p723 = scmp.ne.s32.totalorder %s715, %s718
      %p724 = scmp.eq.s32.totalorder %s40, 0
      %p725 = por %p723, %p724
      %p726 = scmp.ne.s32.totalorder %s715, %s718
      %p727 = scmp.eq.s32.totalorder %s45, 1
      %p728 = por %p726, %p727
      %p729 = scmp.ne.s32.totalorder %s718, %s719
      %p730 = scmp.eq.s32.totalorder %s45, 0
      %p731 = por %p729, %p730
      %p732 = scmp.ne.s32.totalorder %s718, %s719
      %p733 = scmp.eq.s32.totalorder %s46, 1
      %p734 = por %p732, %p733
      %p736 = scmp.ne.s32.totalorder %s719, %s735
      %p737 = scmp.eq.s32.totalorder %s46, 0
      %p738 = por %p736, %p737
      %p739 = scmp.le.s32.totalorder 1, %s40
      %p740 = scmp.lt.s32.totalorder %s40, 3
      %p741 = pnand %p739, %p740
      %p742 = pneg %p741
      // Predicated region
      $region9: #{transformer_dueling_forward.2} parent=5 // pred_check
        _
      $region10: #{transformer_dueling_forward.2} parent=5 // pred_check_branch
        %744 = sbr.rel (%p741) target = $region12
      $region11: #{transformer_dueling_forward.2} parent=5 // pred_region
        %s745 = ssub.s32 %s40, 1
        // Predicated region
        $region13: #{transformer_dueling_forward.2} parent=11 // pred_check
          %p746 = pneg %p78
        $region14: #{transformer_dueling_forward.2} parent=11 // pred_check_branch
          %748 = sbr.rel (%p746) target = $region16
        $region15: #{transformer_dueling_forward.2} parent=11 // pred_region
          %s749 = smul.u32 2, %s49
          %s751 = ssub.s32 256, 256
          %752 = vsyncadd [#allocation4], %s751
          %s753 = smul.addr %s749, 128
          %s754 = scalar_lea.hbm %s0, %s753
          %s755 = sshll.u32 [#allocation3], 4
          %s756 = int_to_ptr.vmem [resolvable:$true] %s755
          %761 = dma.hbm_to_vmem [thread:$0]  %s754, 256, %s756, [#allocation4], 128, 128, 8
        $region16: #{transformer_dueling_forward.2} parent=11 // pred_fallthru
          _
        // Predicated region
        $region17: #{transformer_dueling_forward.2} parent=11 // pred_check
          %p762 = pneg %p99
        $region18: #{transformer_dueling_forward.2} parent=11 // pred_check_branch
          %764 = sbr.rel (%p762) target = $region20
        $region19: #{transformer_dueling_forward.2} parent=11 // pred_region
          %s766 = ssub.s32 128, 128
          %767 = vsyncadd [#allocation6], %s766
          %s768 = sshll.u32 [#allocation5], 4
          %s769 = int_to_ptr.vmem [resolvable:$true] %s768
          %774 = dma.hbm_to_vmem [thread:$0]  %s1, 128, %s769, [#allocation6], 64, 64, 4
        $region20: #{transformer_dueling_forward.2} parent=11 // pred_fallthru
          _
        // Predicated region
        $region21: #{transformer_dueling_forward.2} parent=11 // pred_check
          %p775 = pneg %p120
        $region22: #{transformer_dueling_forward.2} parent=11 // pred_check_branch
          %777 = sbr.rel (%p775) target = $region24
        $region23: #{transformer_dueling_forward.2} parent=11 // pred_region
          %s779 = ssub.s32 16, 16
          %780 = vsyncadd [#allocation6], %s779
          %s782 = sshll.u32 [#allocation7], 4
          %s783 = int_to_ptr.vmem [resolvable:$true] %s782
          %785 = dma.hbm_to_vmem [thread:$0]  %s2, 16, %s783, [#allocation6]
        $region24: #{transformer_dueling_forward.2} parent=11 // pred_fallthru
          _
        // Predicated region
        $region25: #{transformer_dueling_forward.2} parent=11 // pred_check
          %p786 = pneg %p141
        $region26: #{transformer_dueling_forward.2} parent=11 // pred_check_branch
          %788 = sbr.rel (%p786) target = $region28
        $region27: #{transformer_dueling_forward.2} parent=11 // pred_region
          %s790 = ssub.s32 256, 256
          %791 = vsyncadd [#allocation9], %s790
          %s792 = sshll.u32 [#allocation8], 4
          %s793 = int_to_ptr.vmem [resolvable:$true] %s792
          %798 = dma.hbm_to_vmem [thread:$0]  %s3, 256, %s793, [#allocation9], 64, 64, 4
        $region28: #{transformer_dueling_forward.2} parent=11 // pred_fallthru
          _
        // Predicated region
        $region29: #{transformer_dueling_forward.2} parent=11 // pred_check
          %p799 = pneg %p162
        $region30: #{transformer_dueling_forward.2} parent=11 // pred_check_branch
          %801 = sbr.rel (%p799) target = $region32
        $region31: #{transformer_dueling_forward.2} parent=11 // pred_region
          %s803 = ssub.s32 16, 16
          %804 = vsyncadd [#allocation9], %s803
          %s806 = sshll.u32 [#allocation10], 4
          %s807 = int_to_ptr.vmem [resolvable:$true] %s806
          %809 = dma.hbm_to_vmem [thread:$0]  %s4, 16, %s807, [#allocation9]
        $region32: #{transformer_dueling_forward.2} parent=11 // pred_fallthru
          _
        // Predicated region
        $region33: #{transformer_dueling_forward.2} parent=11 // pred_check
          %p810 = pneg %p183
        $region34: #{transformer_dueling_forward.2} parent=11 // pred_check_branch
          %812 = sbr.rel (%p810) target = $region36
        $region35: #{transformer_dueling_forward.2} parent=11 // pred_region
          %s814 = ssub.s32 128, 128
          %815 = vsyncadd [#allocation12], %s814
          %s817 = sshll.u32 [#allocation11], 4
          %s818 = int_to_ptr.vmem [resolvable:$true] %s817
          %820 = dma.hbm_to_vmem [thread:$0]  %s5, 128, %s818, [#allocation12]
        $region36: #{transformer_dueling_forward.2} parent=11 // pred_fallthru
          _
        // Predicated region
        $region37: #{transformer_dueling_forward.2} parent=11 // pred_check
          %p821 = pneg %p204
        $region38: #{transformer_dueling_forward.2} parent=11 // pred_check_branch
          %823 = sbr.rel (%p821) target = $region40
        $region39: #{transformer_dueling_forward.2} parent=11 // pred_region
          %s825 = ssub.s32 16, 16
          %826 = vsyncadd [#allocation12], %s825
          %s828 = sshll.u32 [#allocation13], 4
          %s829 = int_to_ptr.vmem [resolvable:$true] %s828
          %831 = dma.hbm_to_vmem [thread:$0]  %s6, 16, %s829, [#allocation12]
        $region40: #{transformer_dueling_forward.2} parent=11 // pred_fallthru
          _
        // Predicated region
        $region41: #{transformer_dueling_forward.2} parent=11 // pred_check
          %p832 = pneg %p225
        $region42: #{transformer_dueling_forward.2} parent=11 // pred_check_branch
          %834 = sbr.rel (%p832) target = $region44
        $region43: #{transformer_dueling_forward.2} parent=11 // pred_region
          %s836 = ssub.s32 16, 16
          %837 = vsyncadd [#allocation15], %s836
          %s839 = sshll.u32 [#allocation14], 4
          %s840 = int_to_ptr.vmem [resolvable:$true] %s839
          %842 = dma.hbm_to_vmem [thread:$0]  %s7, 16, %s840, [#allocation15]
        $region44: #{transformer_dueling_forward.2} parent=11 // pred_fallthru
          _
        // Predicated region
        $region45: #{transformer_dueling_forward.2} parent=11 // pred_check
          %p843 = pneg %p558
        $region46: #{transformer_dueling_forward.2} parent=11 // pred_check_branch
          %845 = sbr.rel (%p843) target = $region48
        $region47: #{transformer_dueling_forward.2} parent=11 // pred_region
          %s847 = ssub.s32 16, 16
          %848 = vsyncadd [#allocation6], %s847
          %s850 = sshll.u32 [#allocation25], 4
          %s851 = int_to_ptr.vmem [resolvable:$true] %s850
          %853 = dma.hbm_to_vmem [thread:$0]  %s20, 16, %s851, [#allocation6]
        $region48: #{transformer_dueling_forward.2} parent=11 // pred_fallthru
          _
        // Predicated region
        $region49: #{transformer_dueling_forward.2} parent=11 // pred_check
          %p854 = pneg %p579
        $region50: #{transformer_dueling_forward.2} parent=11 // pred_check_branch
          %856 = sbr.rel (%p854) target = $region52
        $region51: #{transformer_dueling_forward.2} parent=11 // pred_region
          %s858 = ssub.s32 16, 16
          %859 = vsyncadd [#allocation9], %s858
          %s861 = sshll.u32 [#allocation26], 4
          %s862 = int_to_ptr.vmem [resolvable:$true] %s861
          %864 = dma.hbm_to_vmem [thread:$0]  %s21, 16, %s862, [#allocation9]
        $region52: #{transformer_dueling_forward.2} parent=11 // pred_fallthru
          _
        // Predicated region
        $region53: #{transformer_dueling_forward.2} parent=11 // pred_check
          %p865 = pneg %p600
        $region54: #{transformer_dueling_forward.2} parent=11 // pred_check_branch
          %867 = sbr.rel (%p865) target = $region56
        $region55: #{transformer_dueling_forward.2} parent=11 // pred_region
          _
        $region56: #{transformer_dueling_forward.2} parent=11 // pred_fallthru
          _
        // Predicated region
        $region57: #{transformer_dueling_forward.2} parent=11 // pred_check
          %p868 = pneg %p621
        $region58: #{transformer_dueling_forward.2} parent=11 // pred_check_branch
          %870 = sbr.rel (%p868) target = $region60
        $region59: #{transformer_dueling_forward.2} parent=11 // pred_region
          %s872 = ssub.s32 16, 16
          %873 = vsyncadd [#allocation12], %s872
          %s875 = sshll.u32 [#allocation27], 4
          %s876 = int_to_ptr.vmem [resolvable:$true] %s875
          %878 = dma.hbm_to_vmem [thread:$0]  %s23, 16, %s876, [#allocation12]
        $region60: #{transformer_dueling_forward.2} parent=11 // pred_fallthru
          _
        // Predicated region
        $region61: #{transformer_dueling_forward.2} parent=11 // pred_check
          %p879 = pneg %p642
        $region62: #{transformer_dueling_forward.2} parent=11 // pred_check_branch
          %881 = sbr.rel (%p879) target = $region64
        $region63: #{transformer_dueling_forward.2} parent=11 // pred_region
          _
        $region64: #{transformer_dueling_forward.2} parent=11 // pred_fallthru
          _
        // Predicated region
        $region65: #{transformer_dueling_forward.2} parent=11 // pred_check
          %p882 = pneg %p663
        $region66: #{transformer_dueling_forward.2} parent=11 // pred_check_branch
          %884 = sbr.rel (%p882) target = $region68
        $region67: #{transformer_dueling_forward.2} parent=11 // pred_region
          %s886 = ssub.s32 16, 16
          %887 = vsyncadd [#allocation15], %s886
          %s889 = sshll.u32 [#allocation28], 4
          %s890 = int_to_ptr.vmem [resolvable:$true] %s889
          %892 = dma.hbm_to_vmem [thread:$0]  %s25, 16, %s890, [#allocation15]
        $region68: #{transformer_dueling_forward.2} parent=11 // pred_fallthru
          _
        // Predicated region
        $region69: #{transformer_dueling_forward.2} parent=11 // pred_check
          %p893 = pneg %p684
        $region70: #{transformer_dueling_forward.2} parent=11 // pred_check_branch
          %895 = sbr.rel (%p893) target = $region72
        $region71: #{transformer_dueling_forward.2} parent=11 // pred_region
          _
        $region72: #{transformer_dueling_forward.2} parent=11 // pred_fallthru
          _
        // Predicated region
        $region73: #{transformer_dueling_forward.2} parent=11 // pred_check
          %p896 = pneg %p705
        $region74: #{transformer_dueling_forward.2} parent=11 // pred_check_branch
          %898 = sbr.rel (%p896) target = $region76
        $region75: #{transformer_dueling_forward.2} parent=11 // pred_region
          %s900 = ssub.s32 16, 16
          %901 = vsyncadd [#allocation30], %s900
          %s903 = sshll.u32 [#allocation29], 4
          %s904 = int_to_ptr.vmem [resolvable:$true] %s903
          %906 = dma.hbm_to_vmem [thread:$0]  %s27, 16, %s904, [#allocation30]
        $region76: #{transformer_dueling_forward.2} parent=11 // pred_fallthru
          _
      $region12: #{transformer_dueling_forward.2} parent=5 // pred_fallthru
        _
      %p907 = scmp.lt.s32.totalorder %s40, 2
      // Predicated region
      $region77: #{transformer_dueling_forward.2} parent=5 // pred_check
        %p908 = pneg %p907
      $region78: #{transformer_dueling_forward.2} parent=5 // pred_check_branch
        %910 = sbr.rel (%p908) target = $region80
      $region79: #{transformer_dueling_forward.2} parent=5 // pred_region
        // Predicated region
        $region81: #{transformer_dueling_forward.2} parent=79 // pred_check
          %p911 = pneg %p245
        $region82: #{transformer_dueling_forward.2} parent=79 // pred_check_branch
          %913 = sbr.rel (%p911) target = $region84
        $region83: #{transformer_dueling_forward.2} parent=79 // pred_region
          %p914 = scmp.lt.s32.totalorder %s48, 1
          %s915 = scalar_select %p914, %s48, 1
          %s916 = smul.addr %s915, 4
          %s917 = smul.addr %s916, 4
          %s918 = scalar_lea.vmem %s8, %s917
        $region84: #{transformer_dueling_forward.2} parent=79 // pred_fallthru
          _
        // Predicated region
        $region85: #{transformer_dueling_forward.2} parent=79 // pred_check
          %p919 = pneg %p271
        $region86: #{transformer_dueling_forward.2} parent=79 // pred_check_branch
          %921 = sbr.rel (%p919) target = $region88
        $region87: #{transformer_dueling_forward.2} parent=79 // pred_region
          %s922 = sand.u32 %s40, 1
          %s923 = scalar_lea.sflag [#allocation4], %s922
          %s924 = sand.u32 %s261, 1
          %s925 = scalar_lea.vmem [#allocation16], %s924
          %s927 = ssub.s32 16, 16
          %928 = vsyncadd %s923, %s927
          %s929 = smul.addr %s48, 16
          %s930 = scalar_lea.hbm %s9, %s929
          %s932 = sshll.u32 %s925, 4
          %s933 = int_to_ptr.vmem [resolvable:$true] %s932
          %935 = dma.hbm_to_vmem [thread:$0]  %s930, 16, %s933, %s923
        $region88: #{transformer_dueling_forward.2} parent=79 // pred_fallthru
          _
        // Predicated region
        $region89: #{transformer_dueling_forward.2} parent=79 // pred_check
          %p936 = pneg %p297
        $region90: #{transformer_dueling_forward.2} parent=79 // pred_check_branch
          %938 = sbr.rel (%p936) target = $region92
        $region91: #{transformer_dueling_forward.2} parent=79 // pred_region
          %p939 = scmp.lt.s32.totalorder %s48, 1
          %s940 = scalar_select %p939, %s48, 1
          %s941 = smul.addr %s940, 4
          %s942 = smul.addr %s941, 4
          %s943 = scalar_lea.vmem %s10, %s942
        $region92: #{transformer_dueling_forward.2} parent=79 // pred_fallthru
          _
        // Predicated region
        $region93: #{transformer_dueling_forward.2} parent=79 // pred_check
          %p944 = pneg %p323
        $region94: #{transformer_dueling_forward.2} parent=79 // pred_check_branch
          %946 = sbr.rel (%p944) target = $region96
        $region95: #{transformer_dueling_forward.2} parent=79 // pred_region
          %s947 = sand.u32 %s40, 1
          %s948 = scalar_lea.sflag [#allocation4], %s947
          %s949 = sand.u32 %s313, 1
          %s950 = scalar_lea.vmem [#allocation17], %s949
          %s952 = ssub.s32 16, 16
          %953 = vsyncadd %s948, %s952
          %s954 = smul.addr %s48, 16
          %s955 = scalar_lea.hbm %s11, %s954
          %s957 = sshll.u32 %s950, 4
          %s958 = int_to_ptr.vmem [resolvable:$true] %s957
          %960 = dma.hbm_to_vmem [thread:$0]  %s955, 16, %s958, %s948
        $region96: #{transformer_dueling_forward.2} parent=79 // pred_fallthru
          _
        // Predicated region
        $region97: #{transformer_dueling_forward.2} parent=79 // pred_check
          %p961 = pneg %p349
        $region98: #{transformer_dueling_forward.2} parent=79 // pred_check_branch
          %963 = sbr.rel (%p961) target = $region100
        $region99: #{transformer_dueling_forward.2} parent=79 // pred_region
          %s964 = sand.u32 %s40, 1
          %s965 = scalar_lea.sflag [#allocation4], %s964
          %s966 = sand.u32 %s339, 1
          %s967 = scalar_lea.vmem [#allocation18], %s966
          %s969 = ssub.s32 16, 16
          %970 = vsyncadd %s965, %s969
          %s971 = smul.addr %s48, 16
          %s972 = scalar_lea.hbm %s12, %s971
          %s974 = sshll.u32 %s967, 4
          %s975 = int_to_ptr.vmem [resolvable:$true] %s974
          %977 = dma.hbm_to_vmem [thread:$0]  %s972, 16, %s975, %s965
        $region100: #{transformer_dueling_forward.2} parent=79 // pred_fallthru
          _
        // Predicated region
        $region101: #{transformer_dueling_forward.2} parent=79 // pred_check
          %p978 = pneg %p375
        $region102: #{transformer_dueling_forward.2} parent=79 // pred_check_branch
          %980 = sbr.rel (%p978) target = $region104
        $region103: #{transformer_dueling_forward.2} parent=79 // pred_region
          %s981 = sand.u32 %s40, 1
          %s982 = scalar_lea.sflag [#allocation4], %s981
          %s983 = sand.u32 %s365, 1
          %s984 = scalar_lea.vmem [#allocation19], %s983
          %s986 = ssub.s32 16, 16
          %987 = vsyncadd %s982, %s986
          %s988 = smul.addr %s48, 16
          %s989 = scalar_lea.hbm %s13, %s988
          %s991 = sshll.u32 %s984, 4
          %s992 = int_to_ptr.vmem [resolvable:$true] %s991
          %994 = dma.hbm_to_vmem [thread:$0]  %s989, 16, %s992, %s982
        $region104: #{transformer_dueling_forward.2} parent=79 // pred_fallthru
          _
        // Predicated region
        $region105: #{transformer_dueling_forward.2} parent=79 // pred_check
          %p995 = pneg %p401
        $region106: #{transformer_dueling_forward.2} parent=79 // pred_check_branch
          %997 = sbr.rel (%p995) target = $region108
        $region107: #{transformer_dueling_forward.2} parent=79 // pred_region
          %s998 = sand.u32 %s40, 1
          %s999 = scalar_lea.sflag [#allocation4], %s998
          %s1000 = sand.u32 %s391, 1
          %s1001 = smul.addr %s1000, 16
          %s1002 = scalar_lea.vmem [#allocation20], %s1001
          %s1004 = ssub.s32 256, 256
          %1005 = vsyncadd %s999, %s1004
          %s1006 = smul.addr %s48, 4
          %s1007 = smul.addr %s1006, 64
          %s1008 = scalar_lea.hbm %s14, %s1007
          %s1009 = sshll.u32 %s1002, 4
          %s1010 = int_to_ptr.vmem [resolvable:$true] %s1009
          %1015 = dma.hbm_to_vmem [thread:$0]  %s1008, 256, %s1010, %s999, 64, 64, 4
        $region108: #{transformer_dueling_forward.2} parent=79 // pred_fallthru
          _
        // Predicated region
        $region109: #{transformer_dueling_forward.2} parent=79 // pred_check
          %p1016 = pneg %p427
        $region110: #{transformer_dueling_forward.2} parent=79 // pred_check_branch
          %1018 = sbr.rel (%p1016) target = $region112
        $region111: #{transformer_dueling_forward.2} parent=79 // pred_region
          %s1019 = sand.u32 %s40, 1
          %s1020 = scalar_lea.sflag [#allocation4], %s1019
          %s1021 = sand.u32 %s417, 1
          %s1022 = scalar_lea.vmem [#allocation21], %s1021
          %s1024 = ssub.s32 16, 16
          %1025 = vsyncadd %s1020, %s1024
          %s1026 = smul.addr %s48, 16
          %s1027 = scalar_lea.hbm %s15, %s1026
          %s1029 = sshll.u32 %s1022, 4
          %s1030 = int_to_ptr.vmem [resolvable:$true] %s1029
          %1032 = dma.hbm_to_vmem [thread:$0]  %s1027, 16, %s1030, %s1020
        $region112: #{transformer_dueling_forward.2} parent=79 // pred_fallthru
          _
        // Predicated region
        $region113: #{transformer_dueling_forward.2} parent=79 // pred_check
          %p1033 = pneg %p453
        $region114: #{transformer_dueling_forward.2} parent=79 // pred_check_branch
          %1035 = sbr.rel (%p1033) target = $region116
        $region115: #{transformer_dueling_forward.2} parent=79 // pred_region
          %p1036 = scmp.lt.s32.totalorder %s48, 1
          %s1037 = scalar_select %p1036, %s48, 1
          %s1038 = smul.addr %s1037, 8
          %s1039 = smul.addr %s1038, 4
          %s1040 = scalar_lea.vmem %s16, %s1039
        $region116: #{transformer_dueling_forward.2} parent=79 // pred_fallthru
          _
        // Predicated region
        $region117: #{transformer_dueling_forward.2} parent=79 // pred_check
          %p1041 = pneg %p479
        $region118: #{transformer_dueling_forward.2} parent=79 // pred_check_branch
          %1043 = sbr.rel (%p1041) target = $region120
        $region119: #{transformer_dueling_forward.2} parent=79 // pred_region
          %s1044 = sand.u32 %s40, 1
          %s1045 = scalar_lea.sflag [#allocation4], %s1044
          %s1046 = sand.u32 %s469, 1
          %s1047 = scalar_lea.vmem [#allocation22], %s1046
          %s1049 = ssub.s32 16, 16
          %1050 = vsyncadd %s1045, %s1049
          %s1051 = smul.addr %s48, 16
          %s1052 = scalar_lea.hbm %s17, %s1051
          %s1054 = sshll.u32 %s1047, 4
          %s1055 = int_to_ptr.vmem [resolvable:$true] %s1054
          %1057 = dma.hbm_to_vmem [thread:$0]  %s1052, 16, %s1055, %s1045
        $region120: #{transformer_dueling_forward.2} parent=79 // pred_fallthru
          _
        // Predicated region
        $region121: #{transformer_dueling_forward.2} parent=79 // pred_check
          %p1058 = pneg %p505
        $region122: #{transformer_dueling_forward.2} parent=79 // pred_check_branch
          %1060 = sbr.rel (%p1058) target = $region124
        $region123: #{transformer_dueling_forward.2} parent=79 // pred_region
          %s1061 = sand.u32 %s40, 1
          %s1062 = scalar_lea.sflag [#allocation4], %s1061
          %s1063 = sand.u32 %s495, 1
          %s1064 = scalar_lea.vmem [#allocation23], %s1063
          %s1066 = ssub.s32 16, 16
          %1067 = vsyncadd %s1062, %s1066
          %s1068 = smul.addr %s48, 16
          %s1069 = scalar_lea.hbm %s18, %s1068
          %s1071 = sshll.u32 %s1064, 4
          %s1072 = int_to_ptr.vmem [resolvable:$true] %s1071
          %1074 = dma.hbm_to_vmem [thread:$0]  %s1069, 16, %s1072, %s1062
        $region124: #{transformer_dueling_forward.2} parent=79 // pred_fallthru
          _
        // Predicated region
        $region125: #{transformer_dueling_forward.2} parent=79 // pred_check
          %p1075 = pneg %p531
        $region126: #{transformer_dueling_forward.2} parent=79 // pred_check_branch
          %1077 = sbr.rel (%p1075) target = $region128
        $region127: #{transformer_dueling_forward.2} parent=79 // pred_region
          %s1078 = sand.u32 %s40, 1
          %s1079 = scalar_lea.sflag [#allocation4], %s1078
          %s1080 = sand.u32 %s521, 1
          %s1081 = scalar_lea.vmem [#allocation24], %s1080
          %s1083 = ssub.s32 16, 16
          %1084 = vsyncadd %s1079, %s1083
          %s1085 = smul.addr %s48, 16
          %s1086 = scalar_lea.hbm %s19, %s1085
          %s1088 = sshll.u32 %s1081, 4
          %s1089 = int_to_ptr.vmem [resolvable:$true] %s1088
          %1091 = dma.hbm_to_vmem [thread:$0]  %s1086, 16, %s1089, %s1079
        $region128: #{transformer_dueling_forward.2} parent=79 // pred_fallthru
          _
      $region80: #{transformer_dueling_forward.2} parent=5 // pred_fallthru
        _
      %p1092 = scmp.le.s32.totalorder 1, %s40
      %p1093 = scmp.lt.s32.totalorder %s40, 3
      %p1094 = pnand %p1092, %p1093
      %p1095 = pneg %p1094
      // Predicated region
      $region129: #{transformer_dueling_forward.2} parent=5 // pred_check
        _
      $region130: #{transformer_dueling_forward.2} parent=5 // pred_check_branch
        %1097 = sbr.rel (%p1094) target = $region132
      $region131: #{transformer_dueling_forward.2} parent=5 // pred_region
        %s1098 = ssub.s32 %s40, 1
        // Predicated region
        $region133: #{transformer_dueling_forward.2} parent=131 // pred_check
          %p1099 = pneg %p78
        $region134: #{transformer_dueling_forward.2} parent=131 // pred_check_branch
          %1101 = sbr.rel (%p1099) target = $region136
        $region135: #{transformer_dueling_forward.2} parent=131 // pred_region
          %1102 = dma.done [#allocation4], 256
        $region136: #{transformer_dueling_forward.2} parent=131 // pred_fallthru
          _
        // Predicated region
        $region137: #{transformer_dueling_forward.2} parent=131 // pred_check
          %p1103 = pneg %p99
        $region138: #{transformer_dueling_forward.2} parent=131 // pred_check_branch
          %1105 = sbr.rel (%p1103) target = $region140
        $region139: #{transformer_dueling_forward.2} parent=131 // pred_region
          %1106 = dma.done [#allocation6], 128
        $region140: #{transformer_dueling_forward.2} parent=131 // pred_fallthru
          _
        // Predicated region
        $region141: #{transformer_dueling_forward.2} parent=131 // pred_check
          %p1107 = pneg %p120
        $region142: #{transformer_dueling_forward.2} parent=131 // pred_check_branch
          %1109 = sbr.rel (%p1107) target = $region144
        $region143: #{transformer_dueling_forward.2} parent=131 // pred_region
          %1110 = dma.done [#allocation6], 16
        $region144: #{transformer_dueling_forward.2} parent=131 // pred_fallthru
          _
        // Predicated region
        $region145: #{transformer_dueling_forward.2} parent=131 // pred_check
          %p1111 = pneg %p141
        $region146: #{transformer_dueling_forward.2} parent=131 // pred_check_branch
          %1113 = sbr.rel (%p1111) target = $region148
        $region147: #{transformer_dueling_forward.2} parent=131 // pred_region
          %1114 = dma.done [#allocation9], 256
        $region148: #{transformer_dueling_forward.2} parent=131 // pred_fallthru
          _
        // Predicated region
        $region149: #{transformer_dueling_forward.2} parent=131 // pred_check
          %p1115 = pneg %p162
        $region150: #{transformer_dueling_forward.2} parent=131 // pred_check_branch
          %1117 = sbr.rel (%p1115) target = $region152
        $region151: #{transformer_dueling_forward.2} parent=131 // pred_region
          %1118 = dma.done [#allocation9], 16
        $region152: #{transformer_dueling_forward.2} parent=131 // pred_fallthru
          _
        // Predicated region
        $region153: #{transformer_dueling_forward.2} parent=131 // pred_check
          %p1119 = pneg %p183
        $region154: #{transformer_dueling_forward.2} parent=131 // pred_check_branch
          %1121 = sbr.rel (%p1119) target = $region156
        $region155: #{transformer_dueling_forward.2} parent=131 // pred_region
          %1122 = dma.done [#allocation12], 128
        $region156: #{transformer_dueling_forward.2} parent=131 // pred_fallthru
          _
        // Predicated region
        $region157: #{transformer_dueling_forward.2} parent=131 // pred_check
          %p1123 = pneg %p204
        $region158: #{transformer_dueling_forward.2} parent=131 // pred_check_branch
          %1125 = sbr.rel (%p1123) target = $region160
        $region159: #{transformer_dueling_forward.2} parent=131 // pred_region
          %1126 = dma.done [#allocation12], 16
        $region160: #{transformer_dueling_forward.2} parent=131 // pred_fallthru
          _
        // Predicated region
        $region161: #{transformer_dueling_forward.2} parent=131 // pred_check
          %p1127 = pneg %p225
        $region162: #{transformer_dueling_forward.2} parent=131 // pred_check_branch
          %1129 = sbr.rel (%p1127) target = $region164
        $region163: #{transformer_dueling_forward.2} parent=131 // pred_region
          %1130 = dma.done [#allocation15], 16
        $region164: #{transformer_dueling_forward.2} parent=131 // pred_fallthru
          _
        %s1131 = sand.u32 %s45, 1
        %s1132 = scalar_lea.sflag [#allocation4], %s1131
        %s1133 = sand.u32 %s264, 1
        %s1134 = scalar_lea.vmem [#allocation16], %s1133
        // Predicated region
        $region165: #{transformer_dueling_forward.2} parent=131 // pred_check
          %p1135 = pneg %p277
        $region166: #{transformer_dueling_forward.2} parent=131 // pred_check_branch
          %1137 = sbr.rel (%p1135) target = $region168
        $region167: #{transformer_dueling_forward.2} parent=131 // pred_region
          %1138 = dma.done %s1132, 16
        $region168: #{transformer_dueling_forward.2} parent=131 // pred_fallthru
          _
        %s1139 = sand.u32 %s45, 1
        %s1140 = scalar_lea.sflag [#allocation4], %s1139
        %s1141 = sand.u32 %s316, 1
        %s1142 = scalar_lea.vmem [#allocation17], %s1141
        // Predicated region
        $region169: #{transformer_dueling_forward.2} parent=131 // pred_check
          %p1143 = pneg %p329
        $region170: #{transformer_dueling_forward.2} parent=131 // pred_check_branch
          %1145 = sbr.rel (%p1143) target = $region172
        $region171: #{transformer_dueling_forward.2} parent=131 // pred_region
          %1146 = dma.done %s1140, 16
        $region172: #{transformer_dueling_forward.2} parent=131 // pred_fallthru
          _
        %s1147 = sand.u32 %s45, 1
        %s1148 = scalar_lea.sflag [#allocation4], %s1147
        %s1149 = sand.u32 %s342, 1
        %s1150 = scalar_lea.vmem [#allocation18], %s1149
        // Predicated region
        $region173: #{transformer_dueling_forward.2} parent=131 // pred_check
          %p1151 = pneg %p355
        $region174: #{transformer_dueling_forward.2} parent=131 // pred_check_branch
          %1153 = sbr.rel (%p1151) target = $region176
        $region175: #{transformer_dueling_forward.2} parent=131 // pred_region
          %1154 = dma.done %s1148, 16
        $region176: #{transformer_dueling_forward.2} parent=131 // pred_fallthru
          _
        %s1155 = sand.u32 %s45, 1
        %s1156 = scalar_lea.sflag [#allocation4], %s1155
        %s1157 = sand.u32 %s368, 1
        %s1158 = scalar_lea.vmem [#allocation19], %s1157
        // Predicated region
        $region177: #{transformer_dueling_forward.2} parent=131 // pred_check
          %p1159 = pneg %p381
        $region178: #{transformer_dueling_forward.2} parent=131 // pred_check_branch
          %1161 = sbr.rel (%p1159) target = $region180
        $region179: #{transformer_dueling_forward.2} parent=131 // pred_region
          %1162 = dma.done %s1156, 16
        $region180: #{transformer_dueling_forward.2} parent=131 // pred_fallthru
          _
        %s1163 = sand.u32 %s45, 1
        %s1164 = scalar_lea.sflag [#allocation4], %s1163
        %s1165 = sand.u32 %s394, 1
        %s1166 = smul.addr %s1165, 16
        %s1167 = scalar_lea.vmem [#allocation20], %s1166
        // Predicated region
        $region181: #{transformer_dueling_forward.2} parent=131 // pred_check
          %p1168 = pneg %p407
        $region182: #{transformer_dueling_forward.2} parent=131 // pred_check_branch
          %1170 = sbr.rel (%p1168) target = $region184
        $region183: #{transformer_dueling_forward.2} parent=131 // pred_region
          %1171 = dma.done %s1164, 256
        $region184: #{transformer_dueling_forward.2} parent=131 // pred_fallthru
          _
        %s1172 = sand.u32 %s45, 1
        %s1173 = scalar_lea.sflag [#allocation4], %s1172
        %s1174 = sand.u32 %s420, 1
        %s1175 = scalar_lea.vmem [#allocation21], %s1174
        // Predicated region
        $region185: #{transformer_dueling_forward.2} parent=131 // pred_check
          %p1176 = pneg %p433
        $region186: #{transformer_dueling_forward.2} parent=131 // pred_check_branch
          %1178 = sbr.rel (%p1176) target = $region188
        $region187: #{transformer_dueling_forward.2} parent=131 // pred_region
          %1179 = dma.done %s1173, 16
        $region188: #{transformer_dueling_forward.2} parent=131 // pred_fallthru
          _
        %s1180 = sand.u32 %s45, 1
        %s1181 = scalar_lea.sflag [#allocation4], %s1180
        %s1182 = sand.u32 %s472, 1
        %s1183 = scalar_lea.vmem [#allocation22], %s1182
        // Predicated region
        $region189: #{transformer_dueling_forward.2} parent=131 // pred_check
          %p1184 = pneg %p485
        $region190: #{transformer_dueling_forward.2} parent=131 // pred_check_branch
          %1186 = sbr.rel (%p1184) target = $region192
        $region191: #{transformer_dueling_forward.2} parent=131 // pred_region
          %1187 = dma.done %s1181, 16
        $region192: #{transformer_dueling_forward.2} parent=131 // pred_fallthru
          _
        %s1188 = sand.u32 %s45, 1
        %s1189 = scalar_lea.sflag [#allocation4], %s1188
        %s1190 = sand.u32 %s498, 1
        %s1191 = scalar_lea.vmem [#allocation23], %s1190
        // Predicated region
        $region193: #{transformer_dueling_forward.2} parent=131 // pred_check
          %p1192 = pneg %p511
        $region194: #{transformer_dueling_forward.2} parent=131 // pred_check_branch
          %1194 = sbr.rel (%p1192) target = $region196
        $region195: #{transformer_dueling_forward.2} parent=131 // pred_region
          %1195 = dma.done %s1189, 16
        $region196: #{transformer_dueling_forward.2} parent=131 // pred_fallthru
          _
        %s1196 = sand.u32 %s45, 1
        %s1197 = scalar_lea.sflag [#allocation4], %s1196
        %s1198 = sand.u32 %s524, 1
        %s1199 = scalar_lea.vmem [#allocation24], %s1198
        // Predicated region
        $region197: #{transformer_dueling_forward.2} parent=131 // pred_check
          %p1200 = pneg %p537
        $region198: #{transformer_dueling_forward.2} parent=131 // pred_check_branch
          %1202 = sbr.rel (%p1200) target = $region200
        $region199: #{transformer_dueling_forward.2} parent=131 // pred_region
          %1203 = dma.done %s1197, 16
        $region200: #{transformer_dueling_forward.2} parent=131 // pred_fallthru
          _
        // Predicated region
        $region201: #{transformer_dueling_forward.2} parent=131 // pred_check
          %p1204 = pneg %p558
        $region202: #{transformer_dueling_forward.2} parent=131 // pred_check_branch
          %1206 = sbr.rel (%p1204) target = $region204
        $region203: #{transformer_dueling_forward.2} parent=131 // pred_region
          %1207 = dma.done [#allocation6], 16
        $region204: #{transformer_dueling_forward.2} parent=131 // pred_fallthru
          _
        // Predicated region
        $region205: #{transformer_dueling_forward.2} parent=131 // pred_check
          %p1208 = pneg %p579
        $region206: #{transformer_dueling_forward.2} parent=131 // pred_check_branch
          %1210 = sbr.rel (%p1208) target = $region208
        $region207: #{transformer_dueling_forward.2} parent=131 // pred_region
          %1211 = dma.done [#allocation9], 16
        $region208: #{transformer_dueling_forward.2} parent=131 // pred_fallthru
          _
        // Predicated region
        $region209: #{transformer_dueling_forward.2} parent=131 // pred_check
          %p1212 = pneg %p621
        $region210: #{transformer_dueling_forward.2} parent=131 // pred_check_branch
          %1214 = sbr.rel (%p1212) target = $region212
        $region211: #{transformer_dueling_forward.2} parent=131 // pred_region
          %1215 = dma.done [#allocation12], 16
        $region212: #{transformer_dueling_forward.2} parent=131 // pred_fallthru
          _
        // Predicated region
        $region213: #{transformer_dueling_forward.2} parent=131 // pred_check
          %p1216 = pneg %p663
        $region214: #{transformer_dueling_forward.2} parent=131 // pred_check_branch
          %1218 = sbr.rel (%p1216) target = $region216
        $region215: #{transformer_dueling_forward.2} parent=131 // pred_region
          %1219 = dma.done [#allocation15], 16
        $region216: #{transformer_dueling_forward.2} parent=131 // pred_fallthru
          _
        // Predicated region
        $region217: #{transformer_dueling_forward.2} parent=131 // pred_check
          %p1220 = pneg %p705
        $region218: #{transformer_dueling_forward.2} parent=131 // pred_check_branch
          %1222 = sbr.rel (%p1220) target = $region220
        $region219: #{transformer_dueling_forward.2} parent=131 // pred_region
          %1223 = dma.done [#allocation30], 16
        $region220: #{transformer_dueling_forward.2} parent=131 // pred_fallthru
          _
        %p1224 = pneg %p78
        %p1225 = pneg %p75
        %p1226 = pneg %p99
        %p1227 = pneg %p96
        %p1228 = pneg %p120
        %p1229 = pneg %p117
        %p1230 = pneg %p141
        %p1231 = pneg %p138
        %p1232 = pneg %p162
        %p1233 = pneg %p159
        %p1234 = pneg %p183
        %p1235 = pneg %p180
        %p1236 = pneg %p204
        %p1237 = pneg %p201
        %p1238 = pneg %p225
        %p1239 = pneg %p222
        %p1240 = scmp.lt.s32.totalorder %s50, 1
        %s1241 = scalar_select %p1240, %s50, 1
        %s1242 = smul.addr %s1241, 4
        %s1243 = smul.addr %s1242, 4
        %s1244 = scalar_lea.vmem %s8, %s1243
        %p1245 = pneg %p251
        %p1246 = pneg %p248
        %s1247 = sand.u32 %s45, 1
        %s1248 = scalar_lea.sflag [#allocation4], %s1247
        %s1249 = sand.u32 %s264, 1
        %s1250 = scalar_lea.vmem [#allocation16], %s1249
        %p1251 = pneg %p277
        %p1252 = pneg %p274
        %p1253 = scmp.lt.s32.totalorder %s50, 1
        %s1254 = scalar_select %p1253, %s50, 1
        %s1255 = smul.addr %s1254, 4
        %s1256 = smul.addr %s1255, 4
        %s1257 = scalar_lea.vmem %s10, %s1256
        %p1258 = pneg %p303
        %p1259 = pneg %p300
        %s1260 = sand.u32 %s45, 1
        %s1261 = scalar_lea.sflag [#allocation4], %s1260
        %s1262 = sand.u32 %s316, 1
        %s1263 = scalar_lea.vmem [#allocation17], %s1262
        %p1264 = pneg %p329
        %p1265 = pneg %p326
        %s1266 = sand.u32 %s45, 1
        %s1267 = scalar_lea.sflag [#allocation4], %s1266
        %s1268 = sand.u32 %s342, 1
        %s1269 = scalar_lea.vmem [#allocation18], %s1268
        %p1270 = pneg %p355
        %p1271 = pneg %p352
        %s1272 = sand.u32 %s45, 1
        %s1273 = scalar_lea.sflag [#allocation4], %s1272
        %s1274 = sand.u32 %s368, 1
        %s1275 = scalar_lea.vmem [#allocation19], %s1274
        %p1276 = pneg %p381
        %p1277 = pneg %p378
        %s1278 = sand.u32 %s45, 1
        %s1279 = scalar_lea.sflag [#allocation4], %s1278
        %s1280 = sand.u32 %s394, 1
        %s1281 = smul.addr %s1280, 16
        %s1282 = scalar_lea.vmem [#allocation20], %s1281
        %p1283 = pneg %p407
        %p1284 = pneg %p404
        %s1285 = sand.u32 %s45, 1
        %s1286 = scalar_lea.sflag [#allocation4], %s1285
        %s1287 = sand.u32 %s420, 1
        %s1288 = scalar_lea.vmem [#allocation21], %s1287
        %p1289 = pneg %p433
        %p1290 = pneg %p430
        %p1291 = scmp.lt.s32.totalorder %s50, 1
        %s1292 = scalar_select %p1291, %s50, 1
        %s1293 = smul.addr %s1292, 8
        %s1294 = smul.addr %s1293, 4
        %s1295 = scalar_lea.vmem %s16, %s1294
        %p1296 = pneg %p459
        %p1297 = pneg %p456
        %s1298 = sand.u32 %s45, 1
        %s1299 = scalar_lea.sflag [#allocation4], %s1298
        %s1300 = sand.u32 %s472, 1
        %s1301 = scalar_lea.vmem [#allocation22], %s1300
        %p1302 = pneg %p485
        %p1303 = pneg %p482
        %s1304 = sand.u32 %s45, 1
        %s1305 = scalar_lea.sflag [#allocation4], %s1304
        %s1306 = sand.u32 %s498, 1
        %s1307 = scalar_lea.vmem [#allocation23], %s1306
        %p1308 = pneg %p511
        %p1309 = pneg %p508
        %s1310 = sand.u32 %s45, 1
        %s1311 = scalar_lea.sflag [#allocation4], %s1310
        %s1312 = sand.u32 %s524, 1
        %s1313 = scalar_lea.vmem [#allocation24], %s1312
        %p1314 = pneg %p537
        %p1315 = pneg %p534
        %p1316 = pneg %p558
        %p1317 = pneg %p555
        %p1318 = pneg %p579
        %p1319 = pneg %p576
        %p1320 = pneg %p600
        %p1321 = pneg %p597
        %p1322 = pneg %p621
        %p1323 = pneg %p618
        %p1324 = pneg %p642
        %p1325 = pneg %p639
        %p1326 = pneg %p663
        %p1327 = pneg %p660
        %p1328 = pneg %p684
        %p1329 = pneg %p681
        %p1330 = pneg %p705
        %p1331 = pneg %p702
        %p1332 = pneg %p731
        %p1333 = pneg %p728
        %s1334 = smul.u32 2, %s49
        %p1335 = scmp.lt.s32.totalorder %s1334, 1
        %s1336 = scalar_select %p1335, %s1334, 1
        %s1337 = smul.addr %s1336, 8
        %s1338 = scalar_lea.vmem %s28, %s1337
        %s1339 = smul.u32 2, %s49
        %p1340 = scmp.lt.s32.totalorder %s50, 1
        %s1341 = scalar_select %p1340, %s50, 1
        %s1342 = smul.addr %s1341, 4
        %s1343 = smul.addr %s1342, 4
        %s1344 = scalar_lea.vmem %s8, %s1343
        %p1345 = scmp.lt.s32.totalorder %s50, 1
        %s1346 = scalar_select %p1345, %s50, 1
        %s1347 = smul.addr %s1346, 4
        %s1348 = smul.addr %s1347, 4
        %s1349 = scalar_lea.vmem %s10, %s1348
        %p1350 = scmp.lt.s32.totalorder %s50, 1
        %s1351 = scalar_select %p1350, %s50, 1
        %s1352 = smul.addr %s1351, 8
        %s1353 = smul.addr %s1352, 4
        %s1354 = scalar_lea.vmem %s16, %s1353
        %s1355 = smul.u32 2, %s49
        %p1356 = scmp.lt.s32.totalorder %s1355, 1
        %s1357 = scalar_select %p1356, %s1355, 1
        %s1358 = smul.addr %s1357, 8
        %s1359 = scalar_lea.vmem %s28, %s1358
        %s1360 = smul.u32 2, %s49
        %p1362 = scmp.eq.s32.totalorder %s50, 0
        // Predicated region
        $region221: #{transformer_dueling_forward.2} parent=131 // pred_check
          %p1363 = pneg %p1362
        $region222: #{transformer_dueling_forward.2} parent=131 // pred_check_branch
          %1365 = sbr.rel (%p1363) target = $region224
        $region223: #{transformer_dueling_forward.2} parent=131 // pred_region
          %v1366 = vld [vmem:[#allocation3] sm:$0xff]
          %v1367 = vld [vmem:[#allocation3 + $0x8] sm:$0xff]
          %v1368 = vld [vmem:[#allocation5] sm:$0xf]
          %v1369 = vld [vmem:[#allocation5 + $0x4] sm:$0xf]
          %v1370 = vpack.c.bf16 %v1367, %v1366
          %v1373 = vunpack.c.l.b16 %v1368
          %v1374 = vunpack.c.l.b16 %v1369
          %v1375 = vpack.c.b16 %v1374, %v1373
          %vm1377 = vcmask 130048
          %v1379 = vsel %vm1377, %v1370, 0
          %1381 = vmatprep.subr.bf16.mxu0 0
          %1382 = vmatpush1.bf16.msra.mxu0 %v1375
          %1383 = vmatprep.subr.bf16.mxu0 0
          %1384 = vmatpush1.bf16.msra.mxu0 0
          %1385 = vmatprep.subr.bf16.mxu0 0
          %1386 = vmatpush1.bf16.msra.mxu0 0
          %1387 = vmatprep.subr.bf16.mxu0 0
          %1388 = vmatpush1.bf16.msra.mxu0 0
          %1389 = vmatprep.subr.bf16.mxu0 0
          %1390 = vmatpush1.bf16.msra.mxu0 0
          %1391 = vmatprep.subr.bf16.mxu0 0
          %1392 = vmatpush1.bf16.msra.mxu0 0
          %1393 = vmatprep.subr.bf16.mxu0 0
          %1394 = vmatpush1.bf16.msra.mxu0 0
          %1395 = vmatprep.subr.bf16.mxu0 0
          %1396 = vmatpush1.bf16.msra.mxu0 0
          %1397 = vmatprep.subr.bf16.mxu0 0
          %1398 = vmatpush1.bf16.msra.mxu0 0
          %1399 = vmatprep.subr.bf16.mxu0 0
          %1400 = vmatpush1.bf16.msra.mxu0 0
          %1401 = vmatprep.subr.bf16.mxu0 0
          %1402 = vmatpush1.bf16.msra.mxu0 0
          %1403 = vmatprep.subr.bf16.mxu0 0
          %1404 = vmatpush1.bf16.msra.mxu0 0
          %1405 = vmatprep.subr.bf16.mxu0 0
          %1406 = vmatpush1.bf16.msra.mxu0 0
          %1407 = vmatprep.subr.bf16.mxu0 0
          %1408 = vmatpush1.bf16.msra.mxu0 0
          %1409 = vmatprep.subr.bf16.mxu0 0
          %1410 = vmatpush1.bf16.msra.mxu0 0
          %1411 = vmatprep.subr.bf16.mxu0 0
          %1412 = vmatpush1.bf16.msra.mxu0 0
          %1413 = vmatprep.mubr.bf16.mxu0 0
          %1414 = vmatmul.mubr.bf16.gmra.mrb[0].mxu0 %v1379
          %v1415 = vpop.f32.mrb[0].mxu0
          %v1416 = vadd.f32 0.0, %v1415
          %v1417 = vpop.f32.mrb[0].mxu0
          %v1418 = vpop.f32.mrb[0].mxu0
          %v1419 = vadd.f32 0.0, %v1418
          %v1420 = vpop.f32.mrb[0].mxu0
          %1421 = vdwg.mxu0
          %v1422 = vld [vmem:[#allocation7] sm:$0x1]
          %v1424 = vlaneseq
          %v1425 = vshrl.u32 %v1424, 7
          %v1426 = vsub.s32 0, %v1425
          %v1427 = vrot.slane %v1422, %v1426
          %v1429 = vadd.f32 %v1416, %v1427
          %v1430 = vadd.f32 %v1419, %v1427
          %v1431 = vmax.f32 %v1429, 0.0
          %v1432 = vmax.f32 %v1430, 0.0
          %v1433 = vld [vmem:[#allocation8] sm:$0xf]
          %v1434 = vld [vmem:[#allocation8 + $0x4] sm:$0xf]
          %v1435 = vld [vmem:[#allocation8 + $0x8] sm:$0xf]
          %v1436 = vld [vmem:[#allocation8 + $0xc] sm:$0xf]
          %v1437 = vpack.c.bf16 %v1432, %v1431
          %v1442 = vunpack.c.l.b16 %v1433
          %v1443 = vunpack.c.l.b16 %v1434
          %v1444 = vunpack.c.l.b16 %v1435
          %v1445 = vunpack.c.l.b16 %v1436
          %v1446 = vpack.c.b16 %v1443, %v1442
          %v1447 = vpack.c.b16 %v1445, %v1444
          %vm1450 = vcmask 261120
          %v1452 = vsel %vm1450, %v1437, 0
          %1454 = vmatprep.subr.bf16.mxu0 0
          %1455 = vmatpush1.bf16.msra.mxu0 %v1446
          %1456 = vmatprep.subr.bf16.mxu0 0
          %1457 = vmatpush1.bf16.msra.mxu0 %v1447
          %1458 = vmatprep.subr.bf16.mxu0 0
          %1459 = vmatpush1.bf16.msra.mxu0 0
          %1460 = vmatprep.subr.bf16.mxu0 0
          %1461 = vmatpush1.bf16.msra.mxu0 0
          %1462 = vmatprep.subr.bf16.mxu0 0
          %1463 = vmatpush1.bf16.msra.mxu0 0
          %1464 = vmatprep.subr.bf16.mxu0 0
          %1465 = vmatpush1.bf16.msra.mxu0 0
          %1466 = vmatprep.subr.bf16.mxu0 0
          %1467 = vmatpush1.bf16.msra.mxu0 0
          %1468 = vmatprep.subr.bf16.mxu0 0
          %1469 = vmatpush1.bf16.msra.mxu0 0
          %1470 = vmatprep.subr.bf16.mxu0 0
          %1471 = vmatpush1.bf16.msra.mxu0 0
          %1472 = vmatprep.subr.bf16.mxu0 0
          %1473 = vmatpush1.bf16.msra.mxu0 0
          %1474 = vmatprep.subr.bf16.mxu0 0
          %1475 = vmatpush1.bf16.msra.mxu0 0
          %1476 = vmatprep.subr.bf16.mxu0 0
          %1477 = vmatpush1.bf16.msra.mxu0 0
          %1478 = vmatprep.subr.bf16.mxu0 0
          %1479 = vmatpush1.bf16.msra.mxu0 0
          %1480 = vmatprep.subr.bf16.mxu0 0
          %1481 = vmatpush1.bf16.msra.mxu0 0
          %1482 = vmatprep.subr.bf16.mxu0 0
          %1483 = vmatpush1.bf16.msra.mxu0 0
          %1484 = vmatprep.subr.bf16.mxu0 0
          %1485 = vmatpush1.bf16.msra.mxu0 0
          %1486 = vmatprep.mubr.bf16.mxu0 0
          %1487 = vmatmul.mubr.bf16.gmra.mrb[0].mxu0 %v1452
          %v1488 = vpop.f32.mrb[0].mxu0
          %v1489 = vadd.f32 0.0, %v1488
          %v1490 = vpop.f32.mrb[0].mxu0
          %v1491 = vpop.f32.mrb[0].mxu0
          %v1492 = vadd.f32 0.0, %v1491
          %v1493 = vpop.f32.mrb[0].mxu0
          %1494 = vdwg.mxu0
          %v1495 = vld [vmem:[#allocation10] sm:$0x1]
          %v1497 = vlaneseq
          %v1498 = vshrl.u32 %v1497, 7
          %v1499 = vsub.s32 0, %v1498
          %v1500 = vrot.slane %v1495, %v1499
          %v1502 = vadd.f32 %v1489, %v1500
          %v1503 = vadd.f32 %v1492, %v1500
          %v1504 = vld [vmem:[#allocation11] sm:$0xff]
          %v1505 = vadd.f32 %v1502, %v1504
          %v1506 = vadd.f32 %v1503, %v1504
          %v1507 = vld [vmem:[#allocation13] sm:$0x1]
          %v1508 = vld [vmem:[#allocation14] sm:$0x1]
          %v1509 = vsel %vm1450, %v1505, 0.0
          %1510 = vadd.xlane.f32.xlu0 %v1509
          %v1511 = vpop.xlane.xlu0 %1510
          %v1512 = vsel %vm1450, %v1506, 0.0
          %1513 = vadd.xlane.f32.xlu0 %v1512
          %v1514 = vpop.xlane.xlu0 %1513
          %v1515 = vrcp.pop 32.0
          %v1516 = vmul.f32 %v1511, %v1515
          %v1517 = vmul.f32 %v1514, %v1515
          %v1518 = vsub.f32 %v1505, %v1516
          %v1519 = vsub.f32 %v1506, %v1517
          %v1520 = vmul.f32 %v1518, %v1518
          %v1521 = vmul.f32 %v1519, %v1519
          %v1522 = vsel %vm1450, %v1520, 0.0
          %1523 = vadd.xlane.f32.xlu0 %v1522
          %v1524 = vpop.xlane.xlu0 %1523
          %v1525 = vsel %vm1450, %v1521, 0.0
          %1526 = vadd.xlane.f32.xlu0 %v1525
          %v1527 = vpop.xlane.xlu0 %1526
          %v1528 = vmul.f32 %v1524, %v1515
          %v1529 = vmul.f32 %v1527, %v1515
          %v1530 = vadd.f32 %v1528, 1e-05
          %v1531 = vadd.f32 %v1529, 1e-05
          %v1532 = vrsqrt.pop %v1530
          %v1533 = vrsqrt.pop %v1531
          %v1534 = vmul.f32 %v1518, %v1532
          %v1535 = vmul.f32 %v1519, %v1533
          %v1537 = vlaneseq
          %v1538 = vshrl.u32 %v1537, 7
          %v1539 = vsub.s32 0, %v1538
          %v1540 = vrot.slane %v1507, %v1539
          %v1542 = vmul.f32 %v1534, %v1540
          %v1543 = vmul.f32 %v1535, %v1540
          %v1545 = vlaneseq
          %v1546 = vshrl.u32 %v1545, 7
          %v1547 = vsub.s32 0, %v1546
          %v1548 = vrot.slane %v1508, %v1547
          %v1550 = vadd.f32 %v1542, %v1548
          %v1551 = vadd.f32 %v1543, %v1548
          %1552 = vst.msk [vmem:[#allocation2] sm:$0xff] %vm1450, %v1550
          %1553 = vst.msk [vmem:[#allocation2 + $0x8] sm:$0xff] %vm1450, %v1551
        $region224: #{transformer_dueling_forward.2} parent=131 // pred_fallthru
          _
        %v1554 = vld [vmem:[#allocation2] sm:$0xff]
        %v1555 = vld [vmem:[#allocation2 + $0x8] sm:$0xff]
        %v1556 = vld [vmem:[%s1344] sm:$0xf]
        %v1557 = vld [vmem:[%s1344 + $0x4] sm:$0xf]
        %v1558 = vld [vmem:[%s1344 + $0x8] sm:$0xf]
        %v1559 = vld [vmem:[%s1344 + $0xc] sm:$0xf]
        %v1560 = vpack.c.bf16 %v1555, %v1554
        %v1565 = vunpack.c.l.b16 %v1556
        %v1566 = vunpack.c.l.b16 %v1557
        %v1567 = vunpack.c.l.b16 %v1558
        %v1568 = vunpack.c.l.b16 %v1559
        %v1569 = vpack.c.b16 %v1566, %v1565
        %v1570 = vpack.c.b16 %v1568, %v1567
        %vm1573 = vcmask 261120
        %v1575 = vsel %vm1573, %v1560, 0
        %1577 = vmatprep.subr.bf16.mxu0 0
        %1578 = vmatpush1.bf16.msra.mxu0 %v1569
        %1579 = vmatprep.subr.bf16.mxu0 0
        %1580 = vmatpush1.bf16.msra.mxu0 %v1570
        %1581 = vmatprep.subr.bf16.mxu0 0
        %1582 = vmatpush1.bf16.msra.mxu0 0
        %1583 = vmatprep.subr.bf16.mxu0 0
        %1584 = vmatpush1.bf16.msra.mxu0 0
        %1585 = vmatprep.subr.bf16.mxu0 0
        %1586 = vmatpush1.bf16.msra.mxu0 0
        %1587 = vmatprep.subr.bf16.mxu0 0
        %1588 = vmatpush1.bf16.msra.mxu0 0
        %1589 = vmatprep.subr.bf16.mxu0 0
        %1590 = vmatpush1.bf16.msra.mxu0 0
        %1591 = vmatprep.subr.bf16.mxu0 0
        %1592 = vmatpush1.bf16.msra.mxu0 0
        %1593 = vmatprep.subr.bf16.mxu0 0
        %1594 = vmatpush1.bf16.msra.mxu0 0
        %1595 = vmatprep.subr.bf16.mxu0 0
        %1596 = vmatpush1.bf16.msra.mxu0 0
        %1597 = vmatprep.subr.bf16.mxu0 0
        %1598 = vmatpush1.bf16.msra.mxu0 0
        %1599 = vmatprep.subr.bf16.mxu0 0
        %1600 = vmatpush1.bf16.msra.mxu0 0
        %1601 = vmatprep.subr.bf16.mxu0 0
        %1602 = vmatpush1.bf16.msra.mxu0 0
        %1603 = vmatprep.subr.bf16.mxu0 0
        %1604 = vmatpush1.bf16.msra.mxu0 0
        %1605 = vmatprep.subr.bf16.mxu0 0
        %1606 = vmatpush1.bf16.msra.mxu0 0
        %1607 = vmatprep.subr.bf16.mxu0 0
        %1608 = vmatpush1.bf16.msra.mxu0 0
        %1609 = vmatprep.mubr.bf16.mxu0 0
        %1610 = vmatmul.mubr.bf16.gmra.mrb[0].mxu0 %v1575
        %v1611 = vpop.f32.mrb[0].mxu0
        %v1612 = vadd.f32 0.0, %v1611
        %v1613 = vpop.f32.mrb[0].mxu0
        %v1614 = vpop.f32.mrb[0].mxu0
        %v1615 = vadd.f32 0.0, %v1614
        %v1616 = vpop.f32.mrb[0].mxu0
        %1617 = vdwg.mxu0
        %v1618 = vld [vmem:[%s1134] sm:$0x1]
        %v1620 = vlaneseq
        %v1621 = vshrl.u32 %v1620, 7
        %v1622 = vsub.s32 0, %v1621
        %v1623 = vrot.slane %v1618, %v1622
        %v1625 = vadd.f32 %v1612, %v1623
        %v1626 = vadd.f32 %v1615, %v1623
        %v1627 = vpack.c.bf16 %v1625, %v1625
        %v1628 = vpack.c.bf16 %v1626, %v1626
        %1631 = vrot.lane.b32.xlu0 %v1627, 112
        %v1632 = vpop.permute.xlu0 %1631
        %1633 = vrot.lane.b32.xlu0 %v1628, 112
        %v1634 = vpop.permute.xlu0 %1633
        %1635 = vrot.lane.b32.xlu0 %v1627, 96
        %v1636 = vpop.permute.xlu0 %1635
        %vm1637 = vcmask 130048
        %v1639 = vsel %vm1637, %v1627, 0
        %v1642 = vsel %vm1637, %v1636, 0
        %1644 = vmatprep.subr.bf16.mxu0 0
        %1645 = vmatpush1.bf16.xpose.msra.mxu0 %v1642
        %1646 = vmatprep.subr.bf16.mxu0 0
        %1647 = vmatpush1.bf16.xpose.msra.mxu0 0
        %1648 = vmatprep.subr.bf16.mxu0 0
        %1649 = vmatpush1.bf16.xpose.msra.mxu0 0
        %1650 = vmatprep.subr.bf16.mxu0 0
        %1651 = vmatpush1.bf16.xpose.msra.mxu0 0
        %1652 = vmatprep.subr.bf16.mxu0 0
        %1653 = vmatpush1.bf16.xpose.msra.mxu0 0
        %1654 = vmatprep.subr.bf16.mxu0 0
        %1655 = vmatpush1.bf16.xpose.msra.mxu0 0
        %1656 = vmatprep.subr.bf16.mxu0 0
        %1657 = vmatpush1.bf16.xpose.msra.mxu0 0
        %1658 = vmatprep.subr.bf16.mxu0 0
        %1659 = vmatpush1.bf16.xpose.msra.mxu0 0
        %1660 = vmatprep.subr.bf16.mxu0 0
        %1661 = vmatpush1.bf16.xpose.msra.mxu0 0
        %1662 = vmatprep.subr.bf16.mxu0 0
        %1663 = vmatpush1.bf16.xpose.msra.mxu0 0
        %1664 = vmatprep.subr.bf16.mxu0 0
        %1665 = vmatpush1.bf16.xpose.msra.mxu0 0
        %1666 = vmatprep.subr.bf16.mxu0 0
        %1667 = vmatpush1.bf16.xpose.msra.mxu0 0
        %1668 = vmatprep.subr.bf16.mxu0 0
        %1669 = vmatpush1.bf16.xpose.msra.mxu0 0
        %1670 = vmatprep.subr.bf16.mxu0 0
        %1671 = vmatpush1.bf16.xpose.msra.mxu0 0
        %1672 = vmatprep.subr.bf16.mxu0 0
        %1673 = vmatpush1.bf16.xpose.msra.mxu0 0
        %1674 = vmatprep.subr.bf16.mxu0 0
        %1675 = vmatpush1.bf16.xpose.msra.mxu0 0
        %1676 = vmatprep.mubr.bf16.mxu0 0
        %1677 = vmatmul.mubr.bf16.gmra.mrb[0].mxu0 %v1639
        %v1678 = vpop.f32.mrb[0].mxu0
        %v1679 = vadd.f32 0.0, %v1678
        %v1680 = vpop.f32.mrb[0].mxu0
        %v1681 = vpop.f32.mrb[0].mxu0
        %v1682 = vpop.f32.mrb[0].mxu0
        %1683 = vdwg.mxu0
        %1684 = vrot.lane.b32.xlu0 %v1628, 96
        %v1685 = vpop.permute.xlu0 %1684
        %v1687 = vsel %vm1637, %v1628, 0
        %v1690 = vsel %vm1637, %v1685, 0
        %1692 = vmatprep.subr.bf16.mxu0 0
        %1693 = vmatpush1.bf16.xpose.msra.mxu0 %v1690
        %1694 = vmatprep.subr.bf16.mxu0 0
        %1695 = vmatpush1.bf16.xpose.msra.mxu0 0
        %1696 = vmatprep.subr.bf16.mxu0 0
        %1697 = vmatpush1.bf16.xpose.msra.mxu0 0
        %1698 = vmatprep.subr.bf16.mxu0 0
        %1699 = vmatpush1.bf16.xpose.msra.mxu0 0
        %1700 = vmatprep.subr.bf16.mxu0 0
        %1701 = vmatpush1.bf16.xpose.msra.mxu0 0
        %1702 = vmatprep.subr.bf16.mxu0 0
        %1703 = vmatpush1.bf16.xpose.msra.mxu0 0
        %1704 = vmatprep.subr.bf16.mxu0 0
        %1705 = vmatpush1.bf16.xpose.msra.mxu0 0
        %1706 = vmatprep.subr.bf16.mxu0 0
        %1707 = vmatpush1.bf16.xpose.msra.mxu0 0
        %1708 = vmatprep.subr.bf16.mxu0 0
        %1709 = vmatpush1.bf16.xpose.msra.mxu0 0
        %1710 = vmatprep.subr.bf16.mxu0 0
        %1711 = vmatpush1.bf16.xpose.msra.mxu0 0
        %1712 = vmatprep.subr.bf16.mxu0 0
        %1713 = vmatpush1.bf16.xpose.msra.mxu0 0
        %1714 = vmatprep.subr.bf16.mxu0 0
        %1715 = vmatpush1.bf16.xpose.msra.mxu0 0
        %1716 = vmatprep.subr.bf16.mxu0 0
        %1717 = vmatpush1.bf16.xpose.msra.mxu0 0
        %1718 = vmatprep.subr.bf16.mxu0 0
        %1719 = vmatpush1.bf16.xpose.msra.mxu0 0
        %1720 = vmatprep.subr.bf16.mxu0 0
        %1721 = vmatpush1.bf16.xpose.msra.mxu0 0
        %1722 = vmatprep.subr.bf16.mxu0 0
        %1723 = vmatpush1.bf16.xpose.msra.mxu0 0
        %1724 = vmatprep.mubr.bf16.mxu0 0
        %1725 = vmatmul.mubr.bf16.gmra.mrb[0].mxu0 %v1687
        %v1726 = vpop.f32.mrb[0].mxu0
        %v1727 = vadd.f32 0.0, %v1726
        %v1728 = vpop.f32.mrb[0].mxu0
        %v1729 = vpop.f32.mrb[0].mxu0
        %v1730 = vpop.f32.mrb[0].mxu0
        %1731 = vdwg.mxu0
        %1732 = vrot.lane.b32.xlu0 %v1632, 96
        %v1733 = vpop.permute.xlu0 %1732
        %v1735 = vsel %vm1637, %v1632, 0
        %v1738 = vsel %vm1637, %v1733, 0
        %1740 = vmatprep.subr.bf16.mxu0 0
        %1741 = vmatpush1.bf16.xpose.msra.mxu0 %v1738
        %1742 = vmatprep.subr.bf16.mxu0 0
        %1743 = vmatpush1.bf16.xpose.msra.mxu0 0
        %1744 = vmatprep.subr.bf16.mxu0 0
        %1745 = vmatpush1.bf16.xpose.msra.mxu0 0
        %1746 = vmatprep.subr.bf16.mxu0 0
        %1747 = vmatpush1.bf16.xpose.msra.mxu0 0
        %1748 = vmatprep.subr.bf16.mxu0 0
        %1749 = vmatpush1.bf16.xpose.msra.mxu0 0
        %1750 = vmatprep.subr.bf16.mxu0 0
        %1751 = vmatpush1.bf16.xpose.msra.mxu0 0
        %1752 = vmatprep.subr.bf16.mxu0 0
        %1753 = vmatpush1.bf16.xpose.msra.mxu0 0
        %1754 = vmatprep.subr.bf16.mxu0 0
        %1755 = vmatpush1.bf16.xpose.msra.mxu0 0
        %1756 = vmatprep.subr.bf16.mxu0 0
        %1757 = vmatpush1.bf16.xpose.msra.mxu0 0
        %1758 = vmatprep.subr.bf16.mxu0 0
        %1759 = vmatpush1.bf16.xpose.msra.mxu0 0
        %1760 = vmatprep.subr.bf16.mxu0 0
        %1761 = vmatpush1.bf16.xpose.msra.mxu0 0
        %1762 = vmatprep.subr.bf16.mxu0 0
        %1763 = vmatpush1.bf16.xpose.msra.mxu0 0
        %1764 = vmatprep.subr.bf16.mxu0 0
        %1765 = vmatpush1.bf16.xpose.msra.mxu0 0
        %1766 = vmatprep.subr.bf16.mxu0 0
        %1767 = vmatpush1.bf16.xpose.msra.mxu0 0
        %1768 = vmatprep.subr.bf16.mxu0 0
        %1769 = vmatpush1.bf16.xpose.msra.mxu0 0
        %1770 = vmatprep.subr.bf16.mxu0 0
        %1771 = vmatpush1.bf16.xpose.msra.mxu0 0
        %1772 = vmatprep.mubr.bf16.mxu0 0
        %1773 = vmatmul.mubr.bf16.gmra.mrb[0].mxu0 %v1735
        %v1774 = vpop.f32.mrb[0].mxu0
        %v1775 = vadd.f32 0.0, %v1774
        %v1776 = vpop.f32.mrb[0].mxu0
        %v1777 = vpop.f32.mrb[0].mxu0
        %v1778 = vpop.f32.mrb[0].mxu0
        %1779 = vdwg.mxu0
        %1780 = vrot.lane.b32.xlu0 %v1634, 96
        %v1781 = vpop.permute.xlu0 %1780
        %v1783 = vsel %vm1637, %v1634, 0
        %v1786 = vsel %vm1637, %v1781, 0
        %1788 = vmatprep.subr.bf16.mxu0 0
        %1789 = vmatpush1.bf16.xpose.msra.mxu0 %v1786
        %1790 = vmatprep.subr.bf16.mxu0 0
        %1791 = vmatpush1.bf16.xpose.msra.mxu0 0
        %1792 = vmatprep.subr.bf16.mxu0 0
        %1793 = vmatpush1.bf16.xpose.msra.mxu0 0
        %1794 = vmatprep.subr.bf16.mxu0 0
        %1795 = vmatpush1.bf16.xpose.msra.mxu0 0
        %1796 = vmatprep.subr.bf16.mxu0 0
        %1797 = vmatpush1.bf16.xpose.msra.mxu0 0
        %1798 = vmatprep.subr.bf16.mxu0 0
        %1799 = vmatpush1.bf16.xpose.msra.mxu0 0
        %1800 = vmatprep.subr.bf16.mxu0 0
        %1801 = vmatpush1.bf16.xpose.msra.mxu0 0
        %1802 = vmatprep.subr.bf16.mxu0 0
        %1803 = vmatpush1.bf16.xpose.msra.mxu0 0
        %1804 = vmatprep.subr.bf16.mxu0 0
        %1805 = vmatpush1.bf16.xpose.msra.mxu0 0
        %1806 = vmatprep.subr.bf16.mxu0 0
        %1807 = vmatpush1.bf16.xpose.msra.mxu0 0
        %1808 = vmatprep.subr.bf16.mxu0 0
        %1809 = vmatpush1.bf16.xpose.msra.mxu0 0
        %1810 = vmatprep.subr.bf16.mxu0 0
        %1811 = vmatpush1.bf16.xpose.msra.mxu0 0
        %1812 = vmatprep.subr.bf16.mxu0 0
        %1813 = vmatpush1.bf16.xpose.msra.mxu0 0
        %1814 = vmatprep.subr.bf16.mxu0 0
        %1815 = vmatpush1.bf16.xpose.msra.mxu0 0
        %1816 = vmatprep.subr.bf16.mxu0 0
        %1817 = vmatpush1.bf16.xpose.msra.mxu0 0
        %1818 = vmatprep.subr.bf16.mxu0 0
        %1819 = vmatpush1.bf16.xpose.msra.mxu0 0
        %1820 = vmatprep.mubr.bf16.mxu0 0
        %1821 = vmatmul.mubr.bf16.gmra.mrb[0].mxu0 %v1783
        %v1822 = vpop.f32.mrb[0].mxu0
        %v1823 = vadd.f32 0.0, %v1822
        %v1824 = vpop.f32.mrb[0].mxu0
        %v1825 = vpop.f32.mrb[0].mxu0
        %v1826 = vpop.f32.mrb[0].mxu0
        %1827 = vdwg.mxu0
        %vm1828 = vcmask 64512
        %v1829 = vsel %vm1828, %v1679, -inf
        %1830 = vmax.xlane.f32.xlu0 %v1829
        %v1831 = vpop.xlane.xlu0 %1830
        %v1832 = vsel %vm1828, %v1727, -inf
        %1833 = vmax.xlane.f32.xlu0 %v1832
        %v1834 = vpop.xlane.xlu0 %1833
        %v1835 = vsel %vm1828, %v1775, -inf
        %1836 = vmax.xlane.f32.xlu0 %v1835
        %v1837 = vpop.xlane.xlu0 %1836
        %v1838 = vsel %vm1828, %v1823, -inf
        %1839 = vmax.xlane.f32.xlu0 %v1838
        %v1840 = vpop.xlane.xlu0 %1839
        %v1841 = vsub.f32 %v1679, %v1831
        %v1842 = vsub.f32 %v1727, %v1834
        %v1843 = vsub.f32 %v1775, %v1837
        %v1844 = vsub.f32 %v1823, %v1840
        %v1845 = vmul.f32 %v1841, 1.442695
        %v1846 = vpow.pop %v1845
        %v1847 = vmul.f32 %v1842, 1.442695
        %v1848 = vpow.pop %v1847
        %v1849 = vmul.f32 %v1843, 1.442695
        %v1850 = vpow.pop %v1849
        %v1851 = vmul.f32 %v1844, 1.442695
        %v1852 = vpow.pop %v1851
        %v1853 = vsel %vm1828, %v1846, 0.0
        %1854 = vadd.xlane.f32.xlu0 %v1853
        %v1855 = vpop.xlane.xlu0 %1854
        %v1856 = vsel %vm1828, %v1848, 0.0
        %1857 = vadd.xlane.f32.xlu0 %v1856
        %v1858 = vpop.xlane.xlu0 %1857
        %v1859 = vsel %vm1828, %v1850, 0.0
        %1860 = vadd.xlane.f32.xlu0 %v1859
        %v1861 = vpop.xlane.xlu0 %1860
        %v1862 = vsel %vm1828, %v1852, 0.0
        %1863 = vadd.xlane.f32.xlu0 %v1862
        %v1864 = vpop.xlane.xlu0 %1863
        %v1865 = vrcp.pop %v1855
        %v1866 = vrcp.pop %v1858
        %v1867 = vrcp.pop %v1861
        %v1868 = vrcp.pop %v1864
        %v1869 = vmul.f32 %v1846, %v1865
        %v1870 = vmul.f32 %v1848, %v1866
        %v1871 = vmul.f32 %v1850, %v1867
        %v1872 = vmul.f32 %v1852, %v1868
        %v1873 = vpack.c.bf16 %v1869, %v1869
        %v1874 = vpack.c.bf16 %v1870, %v1870
        %v1875 = vpack.c.bf16 %v1871, %v1871
        %v1876 = vpack.c.bf16 %v1872, %v1872
        %1877 = vrot.lane.b32.xlu0 %v1627, 64
        %v1878 = vpop.permute.xlu0 %1877
        %v1880 = vsel %vm1828, %v1873, 0
        %vm1882 = vcmask 1043456
        %v1884 = vsel %vm1882, %v1878, 0
        %1886 = vmatprep.subr.bf16.mxu0 0
        %1887 = vmatpush1.bf16.msra.mxu0 %v1884
        %1888 = vmatprep.subr.bf16.mxu0 0
        %1889 = vmatpush1.bf16.msra.mxu0 0
        %1890 = vmatprep.subr.bf16.mxu0 0
        %1891 = vmatpush1.bf16.msra.mxu0 0
        %1892 = vmatprep.subr.bf16.mxu0 0
        %1893 = vmatpush1.bf16.msra.mxu0 0
        %1894 = vmatprep.subr.bf16.mxu0 0
        %1895 = vmatpush1.bf16.msra.mxu0 0
        %1896 = vmatprep.subr.bf16.mxu0 0
        %1897 = vmatpush1.bf16.msra.mxu0 0
        %1898 = vmatprep.subr.bf16.mxu0 0
        %1899 = vmatpush1.bf16.msra.mxu0 0
        %1900 = vmatprep.subr.bf16.mxu0 0
        %1901 = vmatpush1.bf16.msra.mxu0 0
        %1902 = vmatprep.subr.bf16.mxu0 0
        %1903 = vmatpush1.bf16.msra.mxu0 0
        %1904 = vmatprep.subr.bf16.mxu0 0
        %1905 = vmatpush1.bf16.msra.mxu0 0
        %1906 = vmatprep.subr.bf16.mxu0 0
        %1907 = vmatpush1.bf16.msra.mxu0 0
        %1908 = vmatprep.subr.bf16.mxu0 0
        %1909 = vmatpush1.bf16.msra.mxu0 0
        %1910 = vmatprep.subr.bf16.mxu0 0
        %1911 = vmatpush1.bf16.msra.mxu0 0
        %1912 = vmatprep.subr.bf16.mxu0 0
        %1913 = vmatpush1.bf16.msra.mxu0 0
        %1914 = vmatprep.subr.bf16.mxu0 0
        %1915 = vmatpush1.bf16.msra.mxu0 0
        %1916 = vmatprep.subr.bf16.mxu0 0
        %1917 = vmatpush1.bf16.msra.mxu0 0
        %1918 = vmatprep.mubr.bf16.mxu0 0
        %1919 = vmatmul.mubr.bf16.gmra.mrb[0].mxu0 %v1880
        %v1920 = vpop.f32.mrb[0].mxu0
        %v1921 = vadd.f32 0.0, %v1920
        %v1922 = vpop.f32.mrb[0].mxu0
        %v1923 = vpop.f32.mrb[0].mxu0
        %v1924 = vpop.f32.mrb[0].mxu0
        %1925 = vdwg.mxu0
        %1926 = vrot.lane.b32.xlu0 %v1628, 64
        %v1927 = vpop.permute.xlu0 %1926
        %v1929 = vsel %vm1828, %v1874, 0
        %v1932 = vsel %vm1882, %v1927, 0
        %1934 = vmatprep.subr.bf16.mxu0 0
        %1935 = vmatpush1.bf16.msra.mxu0 %v1932
        %1936 = vmatprep.subr.bf16.mxu0 0
        %1937 = vmatpush1.bf16.msra.mxu0 0
        %1938 = vmatprep.subr.bf16.mxu0 0
        %1939 = vmatpush1.bf16.msra.mxu0 0
        %1940 = vmatprep.subr.bf16.mxu0 0
        %1941 = vmatpush1.bf16.msra.mxu0 0
        %1942 = vmatprep.subr.bf16.mxu0 0
        %1943 = vmatpush1.bf16.msra.mxu0 0
        %1944 = vmatprep.subr.bf16.mxu0 0
        %1945 = vmatpush1.bf16.msra.mxu0 0
        %1946 = vmatprep.subr.bf16.mxu0 0
        %1947 = vmatpush1.bf16.msra.mxu0 0
        %1948 = vmatprep.subr.bf16.mxu0 0
        %1949 = vmatpush1.bf16.msra.mxu0 0
        %1950 = vmatprep.subr.bf16.mxu0 0
        %1951 = vmatpush1.bf16.msra.mxu0 0
        %1952 = vmatprep.subr.bf16.mxu0 0
        %1953 = vmatpush1.bf16.msra.mxu0 0
        %1954 = vmatprep.subr.bf16.mxu0 0
        %1955 = vmatpush1.bf16.msra.mxu0 0
        %1956 = vmatprep.subr.bf16.mxu0 0
        %1957 = vmatpush1.bf16.msra.mxu0 0
        %1958 = vmatprep.subr.bf16.mxu0 0
        %1959 = vmatpush1.bf16.msra.mxu0 0
        %1960 = vmatprep.subr.bf16.mxu0 0
        %1961 = vmatpush1.bf16.msra.mxu0 0
        %1962 = vmatprep.subr.bf16.mxu0 0
        %1963 = vmatpush1.bf16.msra.mxu0 0
        %1964 = vmatprep.subr.bf16.mxu0 0
        %1965 = vmatpush1.bf16.msra.mxu0 0
        %1966 = vmatprep.mubr.bf16.mxu0 0
        %1967 = vmatmul.mubr.bf16.gmra.mrb[0].mxu0 %v1929
        %v1968 = vpop.f32.mrb[0].mxu0
        %v1969 = vadd.f32 0.0, %v1968
        %v1970 = vpop.f32.mrb[0].mxu0
        %v1971 = vpop.f32.mrb[0].mxu0
        %v1972 = vpop.f32.mrb[0].mxu0
        %1973 = vdwg.mxu0
        %1974 = vrot.lane.b32.xlu0 %v1632, 64
        %v1975 = vpop.permute.xlu0 %1974
        %v1977 = vsel %vm1828, %v1875, 0
        %v1980 = vsel %vm1882, %v1975, 0
        %1982 = vmatprep.subr.bf16.mxu0 0
        %1983 = vmatpush1.bf16.msra.mxu0 %v1980
        %1984 = vmatprep.subr.bf16.mxu0 0
        %1985 = vmatpush1.bf16.msra.mxu0 0
        %1986 = vmatprep.subr.bf16.mxu0 0
        %1987 = vmatpush1.bf16.msra.mxu0 0
        %1988 = vmatprep.subr.bf16.mxu0 0
        %1989 = vmatpush1.bf16.msra.mxu0 0
        %1990 = vmatprep.subr.bf16.mxu0 0
        %1991 = vmatpush1.bf16.msra.mxu0 0
        %1992 = vmatprep.subr.bf16.mxu0 0
        %1993 = vmatpush1.bf16.msra.mxu0 0
        %1994 = vmatprep.subr.bf16.mxu0 0
        %1995 = vmatpush1.bf16.msra.mxu0 0
        %1996 = vmatprep.subr.bf16.mxu0 0
        %1997 = vmatpush1.bf16.msra.mxu0 0
        %1998 = vmatprep.subr.bf16.mxu0 0
        %1999 = vmatpush1.bf16.msra.mxu0 0
        %2000 = vmatprep.subr.bf16.mxu0 0
        %2001 = vmatpush1.bf16.msra.mxu0 0
        %2002 = vmatprep.subr.bf16.mxu0 0
        %2003 = vmatpush1.bf16.msra.mxu0 0
        %2004 = vmatprep.subr.bf16.mxu0 0
        %2005 = vmatpush1.bf16.msra.mxu0 0
        %2006 = vmatprep.subr.bf16.mxu0 0
        %2007 = vmatpush1.bf16.msra.mxu0 0
        %2008 = vmatprep.subr.bf16.mxu0 0
        %2009 = vmatpush1.bf16.msra.mxu0 0
        %2010 = vmatprep.subr.bf16.mxu0 0
        %2011 = vmatpush1.bf16.msra.mxu0 0
        %2012 = vmatprep.subr.bf16.mxu0 0
        %2013 = vmatpush1.bf16.msra.mxu0 0
        %2014 = vmatprep.mubr.bf16.mxu0 0
        %2015 = vmatmul.mubr.bf16.gmra.mrb[0].mxu0 %v1977
        %v2016 = vpop.f32.mrb[0].mxu0
        %v2017 = vadd.f32 0.0, %v2016
        %v2018 = vpop.f32.mrb[0].mxu0
        %v2019 = vpop.f32.mrb[0].mxu0
        %v2020 = vpop.f32.mrb[0].mxu0
        %2021 = vdwg.mxu0
        %2022 = vrot.lane.b32.xlu0 %v1634, 64
        %v2023 = vpop.permute.xlu0 %2022
        %v2025 = vsel %vm1828, %v1876, 0
        %v2028 = vsel %vm1882, %v2023, 0
        %2030 = vmatprep.subr.bf16.mxu0 0
        %2031 = vmatpush1.bf16.msra.mxu0 %v2028
        %2032 = vmatprep.subr.bf16.mxu0 0
        %2033 = vmatpush1.bf16.msra.mxu0 0
        %2034 = vmatprep.subr.bf16.mxu0 0
        %2035 = vmatpush1.bf16.msra.mxu0 0
        %2036 = vmatprep.subr.bf16.mxu0 0
        %2037 = vmatpush1.bf16.msra.mxu0 0
        %2038 = vmatprep.subr.bf16.mxu0 0
        %2039 = vmatpush1.bf16.msra.mxu0 0
        %2040 = vmatprep.subr.bf16.mxu0 0
        %2041 = vmatpush1.bf16.msra.mxu0 0
        %2042 = vmatprep.subr.bf16.mxu0 0
        %2043 = vmatpush1.bf16.msra.mxu0 0
        %2044 = vmatprep.subr.bf16.mxu0 0
        %2045 = vmatpush1.bf16.msra.mxu0 0
        %2046 = vmatprep.subr.bf16.mxu0 0
        %2047 = vmatpush1.bf16.msra.mxu0 0
        %2048 = vmatprep.subr.bf16.mxu0 0
        %2049 = vmatpush1.bf16.msra.mxu0 0
        %2050 = vmatprep.subr.bf16.mxu0 0
        %2051 = vmatpush1.bf16.msra.mxu0 0
        %2052 = vmatprep.subr.bf16.mxu0 0
        %2053 = vmatpush1.bf16.msra.mxu0 0
        %2054 = vmatprep.subr.bf16.mxu0 0
        %2055 = vmatpush1.bf16.msra.mxu0 0
        %2056 = vmatprep.subr.bf16.mxu0 0
        %2057 = vmatpush1.bf16.msra.mxu0 0
        %2058 = vmatprep.subr.bf16.mxu0 0
        %2059 = vmatpush1.bf16.msra.mxu0 0
        %2060 = vmatprep.subr.bf16.mxu0 0
        %2061 = vmatpush1.bf16.msra.mxu0 0
        %2062 = vmatprep.mubr.bf16.mxu0 0
        %2063 = vmatmul.mubr.bf16.gmra.mrb[0].mxu0 %v2025
        %v2064 = vpop.f32.mrb[0].mxu0
        %v2065 = vadd.f32 0.0, %v2064
        %v2066 = vpop.f32.mrb[0].mxu0
        %v2067 = vpop.f32.mrb[0].mxu0
        %v2068 = vpop.f32.mrb[0].mxu0
        %2069 = vdwg.mxu0
        %2072 = vrot.lane.b32.xlu0 %v2017, 16
        %v2073 = vpop.permute.xlu0 %2072
        %2074 = vrot.lane.b32.xlu0 %v2065, 16
        %v2075 = vpop.permute.xlu0 %2074
        %v2078 = vsel %vm1637, %v1921, %v2073
        %v2079 = vsel %vm1637, %v1969, %v2075
        %v2080 = vld [vmem:[%s1349] sm:$0xf]
        %v2081 = vld [vmem:[%s1349 + $0x4] sm:$0xf]
        %v2082 = vld [vmem:[%s1349 + $0x8] sm:$0xf]
        %v2083 = vld [vmem:[%s1349 + $0xc] sm:$0xf]
        %v2084 = vpack.c.bf16 %v2079, %v2078
        %v2089 = vunpack.c.l.b16 %v2080
        %v2090 = vunpack.c.l.b16 %v2081
        %v2091 = vunpack.c.l.b16 %v2082
        %v2092 = vunpack.c.l.b16 %v2083
        %v2093 = vpack.c.b16 %v2090, %v2089
        %v2094 = vpack.c.b16 %v2092, %v2091
        %v2098 = vsel %vm1573, %v2084, 0
        %2100 = vmatprep.subr.bf16.mxu0 0
        %2101 = vmatpush1.bf16.msra.mxu0 %v2093
        %2102 = vmatprep.subr.bf16.mxu0 0
        %2103 = vmatpush1.bf16.msra.mxu0 %v2094
        %2104 = vmatprep.subr.bf16.mxu0 0
        %2105 = vmatpush1.bf16.msra.mxu0 0
        %2106 = vmatprep.subr.bf16.mxu0 0
        %2107 = vmatpush1.bf16.msra.mxu0 0
        %2108 = vmatprep.subr.bf16.mxu0 0
        %2109 = vmatpush1.bf16.msra.mxu0 0
        %2110 = vmatprep.subr.bf16.mxu0 0
        %2111 = vmatpush1.bf16.msra.mxu0 0
        %2112 = vmatprep.subr.bf16.mxu0 0
        %2113 = vmatpush1.bf16.msra.mxu0 0
        %2114 = vmatprep.subr.bf16.mxu0 0
        %2115 = vmatpush1.bf16.msra.mxu0 0
        %2116 = vmatprep.subr.bf16.mxu0 0
        %2117 = vmatpush1.bf16.msra.mxu0 0
        %2118 = vmatprep.subr.bf16.mxu0 0
        %2119 = vmatpush1.bf16.msra.mxu0 0
        %2120 = vmatprep.subr.bf16.mxu0 0
        %2121 = vmatpush1.bf16.msra.mxu0 0
        %2122 = vmatprep.subr.bf16.mxu0 0
        %2123 = vmatpush1.bf16.msra.mxu0 0
        %2124 = vmatprep.subr.bf16.mxu0 0
        %2125 = vmatpush1.bf16.msra.mxu0 0
        %2126 = vmatprep.subr.bf16.mxu0 0
        %2127 = vmatpush1.bf16.msra.mxu0 0
        %2128 = vmatprep.subr.bf16.mxu0 0
        %2129 = vmatpush1.bf16.msra.mxu0 0
        %2130 = vmatprep.subr.bf16.mxu0 0
        %2131 = vmatpush1.bf16.msra.mxu0 0
        %2132 = vmatprep.mubr.bf16.mxu0 0
        %2133 = vmatmul.mubr.bf16.gmra.mrb[0].mxu0 %v2098
        %v2134 = vpop.f32.mrb[0].mxu0
        %v2135 = vadd.f32 0.0, %v2134
        %v2136 = vpop.f32.mrb[0].mxu0
        %v2137 = vpop.f32.mrb[0].mxu0
        %v2138 = vadd.f32 0.0, %v2137
        %v2139 = vpop.f32.mrb[0].mxu0
        %2140 = vdwg.mxu0
        %v2141 = vld [vmem:[%s1142] sm:$0x1]
        %v2143 = vlaneseq
        %v2144 = vshrl.u32 %v2143, 7
        %v2145 = vsub.s32 0, %v2144
        %v2146 = vrot.slane %v2141, %v2145
        %v2148 = vadd.f32 %v2135, %v2146
        %v2149 = vadd.f32 %v2138, %v2146
        %v2150 = vadd.f32 %v1554, %v2148
        %v2151 = vadd.f32 %v1555, %v2149
        %v2152 = vld [vmem:[%s1150] sm:$0x1]
        %v2153 = vld [vmem:[%s1158] sm:$0x1]
        %v2154 = vsel %vm1573, %v2150, 0.0
        %2155 = vadd.xlane.f32.xlu0 %v2154
        %v2156 = vpop.xlane.xlu0 %2155
        %v2157 = vsel %vm1573, %v2151, 0.0
        %2158 = vadd.xlane.f32.xlu0 %v2157
        %v2159 = vpop.xlane.xlu0 %2158
        %v2160 = vrcp.pop 32.0
        %v2161 = vmul.f32 %v2156, %v2160
        %v2162 = vmul.f32 %v2159, %v2160
        %v2163 = vsub.f32 %v2150, %v2161
        %v2164 = vsub.f32 %v2151, %v2162
        %v2165 = vmul.f32 %v2163, %v2163
        %v2166 = vmul.f32 %v2164, %v2164
        %v2167 = vsel %vm1573, %v2165, 0.0
        %2168 = vadd.xlane.f32.xlu0 %v2167
        %v2169 = vpop.xlane.xlu0 %2168
        %v2170 = vsel %vm1573, %v2166, 0.0
        %2171 = vadd.xlane.f32.xlu0 %v2170
        %v2172 = vpop.xlane.xlu0 %2171
        %v2173 = vmul.f32 %v2169, %v2160
        %v2174 = vmul.f32 %v2172, %v2160
        %v2175 = vadd.f32 %v2173, 1e-05
        %v2176 = vadd.f32 %v2174, 1e-05
        %v2177 = vrsqrt.pop %v2175
        %v2178 = vrsqrt.pop %v2176
        %v2179 = vmul.f32 %v2163, %v2177
        %v2180 = vmul.f32 %v2164, %v2178
        %v2182 = vlaneseq
        %v2183 = vshrl.u32 %v2182, 7
        %v2184 = vsub.s32 0, %v2183
        %v2185 = vrot.slane %v2152, %v2184
        %v2187 = vmul.f32 %v2179, %v2185
        %v2188 = vmul.f32 %v2180, %v2185
        %v2190 = vlaneseq
        %v2191 = vshrl.u32 %v2190, 7
        %v2192 = vsub.s32 0, %v2191
        %v2193 = vrot.slane %v2153, %v2192
        %v2195 = vadd.f32 %v2187, %v2193
        %v2196 = vadd.f32 %v2188, %v2193
        %v2197 = vld [vmem:[%s1167] sm:$0xf]
        %v2198 = vld [vmem:[%s1167 + $0x4] sm:$0xf]
        %v2199 = vld [vmem:[%s1167 + $0x8] sm:$0xf]
        %v2200 = vld [vmem:[%s1167 + $0xc] sm:$0xf]
        %v2201 = vpack.c.bf16 %v2196, %v2195
        %v2206 = vunpack.c.l.b16 %v2197
        %v2207 = vunpack.c.l.b16 %v2198
        %v2208 = vunpack.c.l.b16 %v2199
        %v2209 = vunpack.c.l.b16 %v2200
        %v2210 = vpack.c.b16 %v2207, %v2206
        %v2211 = vpack.c.b16 %v2209, %v2208
        %v2215 = vsel %vm1573, %v2201, 0
        %2217 = vmatprep.subr.bf16.mxu0 0
        %2218 = vmatpush1.bf16.msra.mxu0 %v2210
        %2219 = vmatprep.subr.bf16.mxu0 0
        %2220 = vmatpush1.bf16.msra.mxu0 %v2211
        %2221 = vmatprep.subr.bf16.mxu0 0
        %2222 = vmatpush1.bf16.msra.mxu0 0
        %2223 = vmatprep.subr.bf16.mxu0 0
        %2224 = vmatpush1.bf16.msra.mxu0 0
        %2225 = vmatprep.subr.bf16.mxu0 0
        %2226 = vmatpush1.bf16.msra.mxu0 0
        %2227 = vmatprep.subr.bf16.mxu0 0
        %2228 = vmatpush1.bf16.msra.mxu0 0
        %2229 = vmatprep.subr.bf16.mxu0 0
        %2230 = vmatpush1.bf16.msra.mxu0 0
        %2231 = vmatprep.subr.bf16.mxu0 0
        %2232 = vmatpush1.bf16.msra.mxu0 0
        %2233 = vmatprep.subr.bf16.mxu0 0
        %2234 = vmatpush1.bf16.msra.mxu0 0
        %2235 = vmatprep.subr.bf16.mxu0 0
        %2236 = vmatpush1.bf16.msra.mxu0 0
        %2237 = vmatprep.subr.bf16.mxu0 0
        %2238 = vmatpush1.bf16.msra.mxu0 0
        %2239 = vmatprep.subr.bf16.mxu0 0
        %2240 = vmatpush1.bf16.msra.mxu0 0
        %2241 = vmatprep.subr.bf16.mxu0 0
        %2242 = vmatpush1.bf16.msra.mxu0 0
        %2243 = vmatprep.subr.bf16.mxu0 0
        %2244 = vmatpush1.bf16.msra.mxu0 0
        %2245 = vmatprep.subr.bf16.mxu0 0
        %2246 = vmatpush1.bf16.msra.mxu0 0
        %2247 = vmatprep.subr.bf16.mxu0 0
        %2248 = vmatpush1.bf16.msra.mxu0 0
        %2249 = vmatprep.mubr.bf16.mxu0 0
        %2250 = vmatmul.mubr.bf16.gmra.mrb[0].mxu0 %v2215
        %v2251 = vpop.f32.mrb[0].mxu0
        %v2252 = vadd.f32 0.0, %v2251
        %v2253 = vpop.f32.mrb[0].mxu0
        %v2254 = vpop.f32.mrb[0].mxu0
        %v2255 = vadd.f32 0.0, %v2254
        %v2256 = vpop.f32.mrb[0].mxu0
        %2257 = vdwg.mxu0
        %v2258 = vld [vmem:[%s1175] sm:$0x1]
        %v2260 = vlaneseq
        %v2261 = vshrl.u32 %v2260, 7
        %v2262 = vsub.s32 0, %v2261
        %v2263 = vrot.slane %v2258, %v2262
        %v2265 = vadd.f32 %v2252, %v2263
        %v2266 = vadd.f32 %v2255, %v2263
        %v2267 = vmax.f32 %v2265, 0.0
        %v2268 = vmax.f32 %v2266, 0.0
        %v2269 = vpack.c.bf16 %v2267, %v2267
        %v2270 = vpack.c.bf16 %v2268, %v2268
        %v2271 = vld [vmem:[%s1354] sm:$0xf]
        %v2272 = vld [vmem:[%s1354 + $0x4] sm:$0xf]
        %v2273 = vld [vmem:[%s1354 + $0x8] sm:$0xf]
        %v2274 = vld [vmem:[%s1354 + $0xc] sm:$0xf]
        %v2275 = vld [vmem:[%s1354 + $0x10] sm:$0xf]
        %v2276 = vld [vmem:[%s1354 + $0x14] sm:$0xf]
        %v2277 = vld [vmem:[%s1354 + $0x18] sm:$0xf]
        %v2278 = vld [vmem:[%s1354 + $0x1c] sm:$0xf]
        %v2281 = vunpack.c.l.b16 %v2269
        %v2282 = vunpack.c.l.b16 %v2270
        %v2283 = vpack.c.b16 %v2282, %v2281
        %v2292 = vunpack.c.l.b16 %v2271
        %v2293 = vunpack.c.l.b16 %v2272
        %v2294 = vunpack.c.l.b16 %v2273
        %v2295 = vunpack.c.l.b16 %v2274
        %v2296 = vunpack.c.l.b16 %v2275
        %v2297 = vunpack.c.l.b16 %v2276
        %v2298 = vunpack.c.l.b16 %v2277
        %v2299 = vunpack.c.l.b16 %v2278
        %v2300 = vpack.c.b16 %v2293, %v2292
        %v2301 = vpack.c.b16 %v2295, %v2294
        %v2302 = vpack.c.b16 %v2297, %v2296
        %v2303 = vpack.c.b16 %v2299, %v2298
        %vm2308 = vcmask 523264
        %v2310 = vsel %vm2308, %v2283, 0
        %2312 = vmatprep.subr.bf16.mxu0 0
        %2313 = vmatpush1.bf16.msra.mxu0 %v2300
        %2314 = vmatprep.subr.bf16.mxu0 0
        %2315 = vmatpush1.bf16.msra.mxu0 %v2301
        %2316 = vmatprep.subr.bf16.mxu0 0
        %2317 = vmatpush1.bf16.msra.mxu0 %v2302
        %2318 = vmatprep.subr.bf16.mxu0 0
        %2319 = vmatpush1.bf16.msra.mxu0 %v2303
        %2320 = vmatprep.subr.bf16.mxu0 0
        %2321 = vmatpush1.bf16.msra.mxu0 0
        %2322 = vmatprep.subr.bf16.mxu0 0
        %2323 = vmatpush1.bf16.msra.mxu0 0
        %2324 = vmatprep.subr.bf16.mxu0 0
        %2325 = vmatpush1.bf16.msra.mxu0 0
        %2326 = vmatprep.subr.bf16.mxu0 0
        %2327 = vmatpush1.bf16.msra.mxu0 0
        %2328 = vmatprep.subr.bf16.mxu0 0
        %2329 = vmatpush1.bf16.msra.mxu0 0
        %2330 = vmatprep.subr.bf16.mxu0 0
        %2331 = vmatpush1.bf16.msra.mxu0 0
        %2332 = vmatprep.subr.bf16.mxu0 0
        %2333 = vmatpush1.bf16.msra.mxu0 0
        %2334 = vmatprep.subr.bf16.mxu0 0
        %2335 = vmatpush1.bf16.msra.mxu0 0
        %2336 = vmatprep.subr.bf16.mxu0 0
        %2337 = vmatpush1.bf16.msra.mxu0 0
        %2338 = vmatprep.subr.bf16.mxu0 0
        %2339 = vmatpush1.bf16.msra.mxu0 0
        %2340 = vmatprep.subr.bf16.mxu0 0
        %2341 = vmatpush1.bf16.msra.mxu0 0
        %2342 = vmatprep.subr.bf16.mxu0 0
        %2343 = vmatpush1.bf16.msra.mxu0 0
        %2344 = vmatprep.mubr.bf16.mxu0 0
        %2345 = vmatmul.mubr.bf16.gmra.mrb[0].mxu0 %v2310
        %v2346 = vpop.f32.mrb[0].mxu0
        %v2347 = vadd.f32 0.0, %v2346
        %v2348 = vpop.f32.mrb[0].mxu0
        %v2349 = vpop.f32.mrb[0].mxu0
        %v2350 = vadd.f32 0.0, %v2349
        %v2351 = vpop.f32.mrb[0].mxu0
        %2352 = vdwg.mxu0
        %v2353 = vld [vmem:[%s1183] sm:$0x1]
        %v2355 = vlaneseq
        %v2356 = vshrl.u32 %v2355, 7
        %v2357 = vsub.s32 0, %v2356
        %v2358 = vrot.slane %v2353, %v2357
        %v2360 = vadd.f32 %v2347, %v2358
        %v2361 = vadd.f32 %v2350, %v2358
        %v2362 = vadd.f32 %v2195, %v2360
        %v2363 = vadd.f32 %v2196, %v2361
        %v2364 = vld [vmem:[%s1191] sm:$0x1]
        %v2365 = vld [vmem:[%s1199] sm:$0x1]
        %v2366 = vsel %vm1573, %v2362, 0.0
        %2367 = vadd.xlane.f32.xlu0 %v2366
        %v2368 = vpop.xlane.xlu0 %2367
        %v2369 = vsel %vm1573, %v2363, 0.0
        %2370 = vadd.xlane.f32.xlu0 %v2369
        %v2371 = vpop.xlane.xlu0 %2370
        %v2372 = vmul.f32 %v2368, %v2160
        %v2373 = vmul.f32 %v2371, %v2160
        %v2374 = vsub.f32 %v2362, %v2372
        %v2375 = vsub.f32 %v2363, %v2373
        %v2376 = vmul.f32 %v2374, %v2374
        %v2377 = vmul.f32 %v2375, %v2375
        %v2378 = vsel %vm1573, %v2376, 0.0
        %2379 = vadd.xlane.f32.xlu0 %v2378
        %v2380 = vpop.xlane.xlu0 %2379
        %v2381 = vsel %vm1573, %v2377, 0.0
        %2382 = vadd.xlane.f32.xlu0 %v2381
        %v2383 = vpop.xlane.xlu0 %2382
        %v2384 = vmul.f32 %v2380, %v2160
        %v2385 = vmul.f32 %v2383, %v2160
        %v2386 = vadd.f32 %v2384, 1e-05
        %v2387 = vadd.f32 %v2385, 1e-05
        %v2388 = vrsqrt.pop %v2386
        %v2389 = vrsqrt.pop %v2387
        %v2390 = vmul.f32 %v2374, %v2388
        %v2391 = vmul.f32 %v2375, %v2389
        %v2393 = vlaneseq
        %v2394 = vshrl.u32 %v2393, 7
        %v2395 = vsub.s32 0, %v2394
        %v2396 = vrot.slane %v2364, %v2395
        %v2398 = vmul.f32 %v2390, %v2396
        %v2399 = vmul.f32 %v2391, %v2396
        %v2401 = vlaneseq
        %v2402 = vshrl.u32 %v2401, 7
        %v2403 = vsub.s32 0, %v2402
        %v2404 = vrot.slane %v2365, %v2403
        %v2406 = vadd.f32 %v2398, %v2404
        %v2407 = vadd.f32 %v2399, %v2404
        %2408 = vst.msk [vmem:[#allocation2] sm:$0xff] %vm1573, %v2406
        %2409 = vst.msk [vmem:[#allocation2 + $0x8] sm:$0xff] %vm1573, %v2407
        %p2410 = scmp.eq.s32.totalorder %s50, 1
        // Predicated region
        $region225: #{transformer_dueling_forward.2} parent=131 // pred_check
          %p2411 = pneg %p2410
        $region226: #{transformer_dueling_forward.2} parent=131 // pred_check_branch
          %2413 = sbr.rel (%p2411) target = $region228
        $region227: #{transformer_dueling_forward.2} parent=131 // pred_region
          %v2414 = vld [vmem:[#allocation2] sm:$0xff]
          %v2415 = vld [vmem:[#allocation2 + $0x8] sm:$0xff]
          %v2416 = vld [vmem:[#allocation25] sm:$0x1]
          %v2417 = vld [vmem:[#allocation26] sm:$0x1]
          %v2418 = vsel %vm1573, %v2414, 0.0
          %2419 = vadd.xlane.f32.xlu0 %v2418
          %v2420 = vpop.xlane.xlu0 %2419
          %v2421 = vsel %vm1573, %v2415, 0.0
          %2422 = vadd.xlane.f32.xlu0 %v2421
          %v2423 = vpop.xlane.xlu0 %2422
          %v2424 = vmul.f32 %v2420, %v2160
          %v2425 = vmul.f32 %v2423, %v2160
          %v2426 = vsub.f32 %v2414, %v2424
          %v2427 = vsub.f32 %v2415, %v2425
          %v2428 = vmul.f32 %v2426, %v2426
          %v2429 = vmul.f32 %v2427, %v2427
          %v2430 = vsel %vm1573, %v2428, 0.0
          %2431 = vadd.xlane.f32.xlu0 %v2430
          %v2432 = vpop.xlane.xlu0 %2431
          %v2433 = vsel %vm1573, %v2429, 0.0
          %2434 = vadd.xlane.f32.xlu0 %v2433
          %v2435 = vpop.xlane.xlu0 %2434
          %v2436 = vmul.f32 %v2432, %v2160
          %v2437 = vmul.f32 %v2435, %v2160
          %v2438 = vadd.f32 %v2436, 1e-05
          %v2439 = vadd.f32 %v2437, 1e-05
          %v2440 = vrsqrt.pop %v2438
          %v2441 = vrsqrt.pop %v2439
          %v2442 = vmul.f32 %v2426, %v2440
          %v2443 = vmul.f32 %v2427, %v2441
          %v2445 = vlaneseq
          %v2446 = vshrl.u32 %v2445, 7
          %v2447 = vsub.s32 0, %v2446
          %v2448 = vrot.slane %v2416, %v2447
          %v2450 = vmul.f32 %v2442, %v2448
          %v2451 = vmul.f32 %v2443, %v2448
          %v2453 = vlaneseq
          %v2454 = vshrl.u32 %v2453, 7
          %v2455 = vsub.s32 0, %v2454
          %v2456 = vrot.slane %v2417, %v2455
          %v2458 = vadd.f32 %v2450, %v2456
          %v2459 = vadd.f32 %v2451, %v2456
          %v2460 = vld [vmem:[%s22] sm:$0xf]
          %v2461 = vld [vmem:[%s22 + $0x4] sm:$0xf]
          %v2462 = vld [vmem:[%s22 + $0x8] sm:$0xf]
          %v2463 = vld [vmem:[%s22 + $0xc] sm:$0xf]
          %v2464 = vpack.c.bf16 %v2459, %v2458
          %v2469 = vunpack.c.l.b16 %v2460
          %v2470 = vunpack.c.l.b16 %v2461
          %v2471 = vunpack.c.l.b16 %v2462
          %v2472 = vunpack.c.l.b16 %v2463
          %v2473 = vpack.c.b16 %v2470, %v2469
          %v2474 = vpack.c.b16 %v2472, %v2471
          %v2478 = vsel %vm1573, %v2464, 0
          %2480 = vmatprep.subr.bf16.mxu0 0
          %2481 = vmatpush1.bf16.msra.mxu0 %v2473
          %2482 = vmatprep.subr.bf16.mxu0 0
          %2483 = vmatpush1.bf16.msra.mxu0 %v2474
          %2484 = vmatprep.subr.bf16.mxu0 0
          %2485 = vmatpush1.bf16.msra.mxu0 0
          %2486 = vmatprep.subr.bf16.mxu0 0
          %2487 = vmatpush1.bf16.msra.mxu0 0
          %2488 = vmatprep.subr.bf16.mxu0 0
          %2489 = vmatpush1.bf16.msra.mxu0 0
          %2490 = vmatprep.subr.bf16.mxu0 0
          %2491 = vmatpush1.bf16.msra.mxu0 0
          %2492 = vmatprep.subr.bf16.mxu0 0
          %2493 = vmatpush1.bf16.msra.mxu0 0
          %2494 = vmatprep.subr.bf16.mxu0 0
          %2495 = vmatpush1.bf16.msra.mxu0 0
          %2496 = vmatprep.subr.bf16.mxu0 0
          %2497 = vmatpush1.bf16.msra.mxu0 0
          %2498 = vmatprep.subr.bf16.mxu0 0
          %2499 = vmatpush1.bf16.msra.mxu0 0
          %2500 = vmatprep.subr.bf16.mxu0 0
          %2501 = vmatpush1.bf16.msra.mxu0 0
          %2502 = vmatprep.subr.bf16.mxu0 0
          %2503 = vmatpush1.bf16.msra.mxu0 0
          %2504 = vmatprep.subr.bf16.mxu0 0
          %2505 = vmatpush1.bf16.msra.mxu0 0
          %2506 = vmatprep.subr.bf16.mxu0 0
          %2507 = vmatpush1.bf16.msra.mxu0 0
          %2508 = vmatprep.subr.bf16.mxu0 0
          %2509 = vmatpush1.bf16.msra.mxu0 0
          %2510 = vmatprep.subr.bf16.mxu0 0
          %2511 = vmatpush1.bf16.msra.mxu0 0
          %2512 = vmatprep.mubr.bf16.mxu0 0
          %2513 = vmatmul.mubr.bf16.gmra.mrb[0].mxu0 %v2478
          %v2514 = vpop.f32.mrb[0].mxu0
          %v2515 = vadd.f32 0.0, %v2514
          %v2516 = vpop.f32.mrb[0].mxu0
          %v2517 = vpop.f32.mrb[0].mxu0
          %v2518 = vadd.f32 0.0, %v2517
          %v2519 = vpop.f32.mrb[0].mxu0
          %2520 = vdwg.mxu0
          %v2521 = vld [vmem:[#allocation27] sm:$0x1]
          %v2523 = vlaneseq
          %v2524 = vshrl.u32 %v2523, 7
          %v2525 = vsub.s32 0, %v2524
          %v2526 = vrot.slane %v2521, %v2525
          %v2528 = vadd.f32 %v2515, %v2526
          %v2529 = vadd.f32 %v2518, %v2526
          %v2530 = vmax.f32 %v2528, 0.0
          %v2531 = vmax.f32 %v2529, 0.0
          %v2532 = vld [vmem:[%s24] sm:$0xf]
          %v2533 = vld [vmem:[%s24 + $0x4] sm:$0xf]
          %v2534 = vpack.c.bf16 %v2531, %v2530
          %v2537 = vunpack.c.l.b16 %v2532
          %v2538 = vunpack.c.l.b16 %v2533
          %v2539 = vpack.c.b16 %v2538, %v2537
          %v2542 = vsel %vm1637, %v2534, 0
          %2544 = vmatprep.subr.bf16.mxu0 0
          %2545 = vmatpush1.bf16.msra.mxu0 %v2539
          %2546 = vmatprep.subr.bf16.mxu0 0
          %2547 = vmatpush1.bf16.msra.mxu0 0
          %2548 = vmatprep.subr.bf16.mxu0 0
          %2549 = vmatpush1.bf16.msra.mxu0 0
          %2550 = vmatprep.subr.bf16.mxu0 0
          %2551 = vmatpush1.bf16.msra.mxu0 0
          %2552 = vmatprep.subr.bf16.mxu0 0
          %2553 = vmatpush1.bf16.msra.mxu0 0
          %2554 = vmatprep.subr.bf16.mxu0 0
          %2555 = vmatpush1.bf16.msra.mxu0 0
          %2556 = vmatprep.subr.bf16.mxu0 0
          %2557 = vmatpush1.bf16.msra.mxu0 0
          %2558 = vmatprep.subr.bf16.mxu0 0
          %2559 = vmatpush1.bf16.msra.mxu0 0
          %2560 = vmatprep.subr.bf16.mxu0 0
          %2561 = vmatpush1.bf16.msra.mxu0 0
          %2562 = vmatprep.subr.bf16.mxu0 0
          %2563 = vmatpush1.bf16.msra.mxu0 0
          %2564 = vmatprep.subr.bf16.mxu0 0
          %2565 = vmatpush1.bf16.msra.mxu0 0
          %2566 = vmatprep.subr.bf16.mxu0 0
          %2567 = vmatpush1.bf16.msra.mxu0 0
          %2568 = vmatprep.subr.bf16.mxu0 0
          %2569 = vmatpush1.bf16.msra.mxu0 0
          %2570 = vmatprep.subr.bf16.mxu0 0
          %2571 = vmatpush1.bf16.msra.mxu0 0
          %2572 = vmatprep.subr.bf16.mxu0 0
          %2573 = vmatpush1.bf16.msra.mxu0 0
          %2574 = vmatprep.subr.bf16.mxu0 0
          %2575 = vmatpush1.bf16.msra.mxu0 0
          %2576 = vmatprep.mubr.bf16.mxu0 0
          %2577 = vmatmul.mubr.bf16.gmra.mrb[0].mxu0 %v2542
          %v2578 = vpop.f32.mrb[0].mxu0
          %v2579 = vadd.f32 0.0, %v2578
          %v2580 = vpop.f32.mrb[0].mxu0
          %v2581 = vpop.f32.mrb[0].mxu0
          %v2582 = vadd.f32 0.0, %v2581
          %v2583 = vpop.f32.mrb[0].mxu0
          %2584 = vdwg.mxu0
          %v2585 = vld [vmem:[#allocation28] sm:$0x1]
          %v2587 = vlaneseq
          %v2588 = vshrl.u32 %v2587, 7
          %v2589 = vsub.s32 0, %v2588
          %v2590 = vrot.slane %v2585, %v2589
          %v2592 = vadd.f32 %v2579, %v2590
          %v2593 = vadd.f32 %v2582, %v2590
          %v2594 = vmax.f32 %v2592, 0.0
          %v2595 = vmax.f32 %v2593, 0.0
          %v2596 = vld [vmem:[%s26] sm:$0xf]
          %v2597 = vpack.c.bf16 %v2595, %v2594
          %v2599 = vsel %vm1828, %v2597, 0
          %v2602 = vsel %vm1882, %v2596, 0
          %2604 = vmatprep.subr.bf16.mxu0 0
          %2605 = vmatpush1.bf16.msra.mxu0 %v2602
          %2606 = vmatprep.subr.bf16.mxu0 0
          %2607 = vmatpush1.bf16.msra.mxu0 0
          %2608 = vmatprep.subr.bf16.mxu0 0
          %2609 = vmatpush1.bf16.msra.mxu0 0
          %2610 = vmatprep.subr.bf16.mxu0 0
          %2611 = vmatpush1.bf16.msra.mxu0 0
          %2612 = vmatprep.subr.bf16.mxu0 0
          %2613 = vmatpush1.bf16.msra.mxu0 0
          %2614 = vmatprep.subr.bf16.mxu0 0
          %2615 = vmatpush1.bf16.msra.mxu0 0
          %2616 = vmatprep.subr.bf16.mxu0 0
          %2617 = vmatpush1.bf16.msra.mxu0 0
          %2618 = vmatprep.subr.bf16.mxu0 0
          %2619 = vmatpush1.bf16.msra.mxu0 0
          %2620 = vmatprep.subr.bf16.mxu0 0
          %2621 = vmatpush1.bf16.msra.mxu0 0
          %2622 = vmatprep.subr.bf16.mxu0 0
          %2623 = vmatpush1.bf16.msra.mxu0 0
          %2624 = vmatprep.subr.bf16.mxu0 0
          %2625 = vmatpush1.bf16.msra.mxu0 0
          %2626 = vmatprep.subr.bf16.mxu0 0
          %2627 = vmatpush1.bf16.msra.mxu0 0
          %2628 = vmatprep.subr.bf16.mxu0 0
          %2629 = vmatpush1.bf16.msra.mxu0 0
          %2630 = vmatprep.subr.bf16.mxu0 0
          %2631 = vmatpush1.bf16.msra.mxu0 0
          %2632 = vmatprep.subr.bf16.mxu0 0
          %2633 = vmatpush1.bf16.msra.mxu0 0
          %2634 = vmatprep.subr.bf16.mxu0 0
          %2635 = vmatpush1.bf16.msra.mxu0 0
          %2636 = vmatprep.mubr.bf16.mxu0 0
          %2637 = vmatmul.mubr.bf16.gmra.mrb[0].mxu0 %v2599
          %v2638 = vpop.f32.mrb[0].mxu0
          %v2639 = vadd.f32 0.0, %v2638
          %v2640 = vpop.f32.mrb[0].mxu0
          %v2641 = vpop.f32.mrb[0].mxu0
          %v2642 = vadd.f32 0.0, %v2641
          %v2643 = vpop.f32.mrb[0].mxu0
          %2644 = vdwg.mxu0
          %v2645 = vld [vmem:[#allocation29] sm:$0x1]
          %v2647 = vlaneseq
          %v2648 = vshrl.u32 %v2647, 7
          %v2649 = vsub.s32 0, %v2648
          %v2650 = vrot.slane %v2645, %v2649
          %v2652 = vadd.f32 %v2639, %v2650
          %v2653 = vadd.f32 %v2642, %v2650
          %vm2654 = vcmask 31744
          %2655 = vst.msk [vmem:[%s1359] sm:$0xff] %vm2654, %v2652
          %2656 = vst.msk [vmem:[%s1359 + $0x8] sm:$0xff] %vm2654, %v2653
        $region228: #{transformer_dueling_forward.2} parent=131 // pred_fallthru
          _
        %s2657 = smul.u32 2, %s49
        %p2658 = scmp.lt.s32.totalorder %s2657, 1
        %s2659 = scalar_select %p2658, %s2657, 1
        %s2660 = smul.addr %s2659, 8
        %s2661 = scalar_lea.vmem %s28, %s2660
        // Predicated region
        $region229: #{transformer_dueling_forward.2} parent=131 // pred_check
          %p2662 = pneg %p728
        $region230: #{transformer_dueling_forward.2} parent=131 // pred_check_branch
          %2664 = sbr.rel (%p2662) target = $region232
        $region231: #{transformer_dueling_forward.2} parent=131 // pred_region
          %s2665 = smul.u32 2, %s49
        $region232: #{transformer_dueling_forward.2} parent=131 // pred_fallthru
          _
        // Predicated region
        $region233: #{transformer_dueling_forward.2} parent=131 // pred_check
          %p2666 = pneg %p728
        $region234: #{transformer_dueling_forward.2} parent=131 // pred_check_branch
          %2668 = sbr.rel (%p2666) target = $region236
        $region235: #{transformer_dueling_forward.2} parent=131 // pred_region
          %s2669 = smul.u32 2, %s49
          %p2670 = scmp.lt.s32.totalorder %s2669, 1
          %s2671 = scalar_select %p2670, %s2669, 1
          %s2672 = smul.addr %s2671, 8
          %s2673 = scalar_lea.vmem %s28, %s2672
        $region236: #{transformer_dueling_forward.2} parent=131 // pred_fallthru
          _
      $region132: #{transformer_dueling_forward.2} parent=5 // pred_fallthru
        _
      %p2674 = scmp.le.s32.totalorder 2, %s40
      // Predicated region
      $region237: #{transformer_dueling_forward.2} parent=5 // pred_check
        %p2675 = pneg %p2674
      $region238: #{transformer_dueling_forward.2} parent=5 // pred_check_branch
        %2677 = sbr.rel (%p2675) target = $region240
      $region239: #{transformer_dueling_forward.2} parent=5 // pred_region
        %s2678 = ssub.s32 %s40, 2
      $region240: #{transformer_dueling_forward.2} parent=5 // pred_fallthru
        _
    $region6: #{transformer_dueling_forward.2} parent=1 // loop_footer
      %s44 = sadd.s32 1, %s40
    $region7: #{transformer_dueling_forward.2} parent=1 // loop_footer_branch
      %39 = sbr.rel target = $region3
    $region8: #{transformer_dueling_forward.2} parent=1 // loop_exit
      _
    %2679 = vsyncpa [#allocation4], 1
    %s2680 = scalar_lea.sflag [#allocation4], 1
    %2681 = vsyncpa %s2680, 1
    %2682 = vsyncpa [#allocation6], 1
    %2683 = vsyncpa [#allocation9], 1
    %2684 = vsyncpa [#allocation12], 1
    %2685 = vsyncpa [#allocation15], 1
    %2686 = vsyncpa [#allocation30], 1

// kernel: transformer_dueling_forward.3
$region0: #{transformer_dueling_forward.3}
  #allocation0 [shape = 'u32[]', space=smem, size = 0x4, offset = 0x4, fixed_abs, tag = 'smem constant byte address 0x4 - core index']
  #allocation1 [shape = 'u32[144,128]{1,0:T(1,128)}', space=vmem, size = 0x12000, scoped, tag = 'internal scratch']
  #allocation2 [shape = 'f32[1,1]{1,0:T(1,128)S(1)}', space=vmem, size = 0x200, scoped, tag = 'scoped memory for transformer_dueling_forward.3']
  %s0 = inlined_call_operand.vmem [shape: f32[2,8,4], index: 0, kind: input, shape index: {}]
  %s1 = inlined_call_operand.vmem [shape: bf16[8,4,1024], index: 1, kind: input, shape index: {}]
  %s2 = inlined_call_operand.hbm [shape: f32[1,1024], index: 2, kind: input, shape index: {}]
  %s3 = inlined_call_operand.hbm [shape: f32[1,512], index: 3, kind: input, shape index: {}]
  %s4 = inlined_call_operand.hbm [shape: f32[1,512], index: 4, kind: input, shape index: {}]
  %s5 = inlined_call_operand.hbm [shape: f32[1,512], index: 5, kind: input, shape index: {}]
  %s6 = inlined_call_operand.hbm [shape: f32[1,512], index: 6, kind: input, shape index: {}]
  %s7 = inlined_call_operand.vmem [shape: bf16[512,256], index: 7, kind: input, shape index: {}]
  %s8 = inlined_call_operand.vmem [shape: f32[1,256], index: 8, kind: input, shape index: {}]
  %s9 = inlined_call_operand.hbm [shape: f32[1,256], index: 9, kind: input, shape index: {}]
  %s10 = inlined_call_operand.hbm [shape: f32[1,256], index: 10, kind: input, shape index: {}]
  %s11 = inlined_call_operand.vmem [shape: bf16[256,1], index: 11, kind: input, shape index: {}]
  %s12 = inlined_call_operand.<no memory space> [shape: f32[1,1], index: 12, kind: input, shape index: {}]
  %s13 = inlined_call_operand.hbm [shape: bf16[512,256], index: 13, kind: input, shape index: {}]
  %s14 = inlined_call_operand.hbm [shape: f32[1,256], index: 14, kind: input, shape index: {}]
  %s15 = inlined_call_operand.hbm [shape: f32[1,256], index: 15, kind: input, shape index: {}]
  %s16 = inlined_call_operand.hbm [shape: f32[1,256], index: 16, kind: input, shape index: {}]
  %s17 = inlined_call_operand.hbm [shape: bf16[256,128], index: 17, kind: input, shape index: {}]
  %s18 = inlined_call_operand.vmem [shape: f32[1,128], index: 18, kind: input, shape index: {}]
  %s19 = inlined_call_operand.hbm [shape: f32[2,128], index: 19, kind: output, shape index: {}]
  %s20 = sld [smem:[#allocation0]]
  $region134: #{transformer_dueling_forward.3} parent=0
    _
  %s22 = ssub.s32 1, %s20
  %s23 = scalar_select 0, %s22, %s20
  %v24 = vstv %s12
  %25 = vst [vmem:[#allocation2] sm:$0x1] %v24
  $region1: #{transformer_dueling_forward.3} parent=0
    #allocation3 [shape = 'u8[4096]{0}', space=vmem, size = 0x1000, scoped, tag = 'input window, operand 2, single buffered']
    #allocation4 [shape = 's32[1]{0}', space=sflag, size = 0x4, scoped, tag = 'scoped memory for transformer_dueling_forward.3']
    #allocation5 [shape = 's32[1]{0}', space=sflag, size = 0x4, scoped, tag = 'scoped memory for transformer_dueling_forward.3']
    #allocation6 [shape = 'u8[2048]{0}', space=vmem, size = 0x800, scoped, tag = 'input window, operand 3, single buffered']
    #allocation7 [shape = 's32[1]{0}', space=sflag, size = 0x4, scoped, tag = 'scoped memory for transformer_dueling_forward.3']
    #allocation8 [shape = 'u8[2048]{0}', space=vmem, size = 0x800, scoped, tag = 'input window, operand 4, single buffered']
    #allocation9 [shape = 'u8[2048]{0}', space=vmem, size = 0x800, scoped, tag = 'input window, operand 5, single buffered']
    #allocation10 [shape = 's32[1]{0}', space=sflag, size = 0x4, scoped, tag = 'scoped memory for transformer_dueling_forward.3']
    #allocation11 [shape = 'u8[2048]{0}', space=vmem, size = 0x800, scoped, tag = 'input window, operand 6, single buffered']
    #allocation12 [shape = 'u8[1024]{0}', space=vmem, size = 0x400, scoped, tag = 'input window, operand 9, single buffered']
    #allocation13 [shape = 's32[1]{0}', space=sflag, size = 0x4, scoped, tag = 'scoped memory for transformer_dueling_forward.3']
    #allocation14 [shape = 'u8[1024]{0}', space=vmem, size = 0x400, scoped, tag = 'input window, operand 10, single buffered']
    #allocation15 [shape = 'u8[262144]{0}', space=vmem, size = 0x40000, scoped, tag = 'input window, operand 13, single buffered']
    #allocation16 [shape = 's32[1]{0}', space=sflag, size = 0x4, scoped, tag = 'scoped memory for transformer_dueling_forward.3']
    #allocation17 [shape = 'u8[1024]{0}', space=vmem, size = 0x400, scoped, tag = 'input window, operand 14, single buffered']
    #allocation18 [shape = 'u8[1024]{0}', space=vmem, size = 0x400, scoped, tag = 'input window, operand 15, single buffered']
    #allocation19 [shape = 's32[1]{0}', space=sflag, size = 0x4, scoped, tag = 'scoped memory for transformer_dueling_forward.3']
    #allocation20 [shape = 'u8[1024]{0}', space=vmem, size = 0x400, scoped, tag = 'input window, operand 16, single buffered']
    #allocation21 [shape = 'u8[65536]{0}', space=vmem, size = 0x10000, scoped, tag = 'input window, operand 17, single buffered']
    #allocation22 [shape = 's32[1]{0}', space=sflag, size = 0x4, scoped, tag = 'scoped memory for transformer_dueling_forward.3']
    #allocation23 [shape = 'u8[1024]{0}', space=vmem, size = 0x400, scoped, tag = 'output window, operand 0, single buffered']
    %26 = vsyncpa [#allocation4], 0
    %27 = vsyncpa [#allocation7], 0
    %28 = vsyncpa [#allocation10], 0
    %29 = vsyncpa [#allocation13], 0
    %30 = vsyncpa [#allocation16], 0
    %31 = vsyncpa [#allocation19], 0
    %32 = vsyncpa [#allocation22], 0
    %33 = vsyncpa [#allocation5], 0
    // Predicated region
    $region2: #{transformer_dueling_forward.3} parent=1 // pred_check
      _
    $region3: #{transformer_dueling_forward.3} parent=1 // pred_check_branch
      %35 = sbr.rel (0) target = $region5
    $region4: #{transformer_dueling_forward.3} parent=1 // pred_region
      _
    $region5: #{transformer_dueling_forward.3} parent=1 // pred_fallthru
      _
    // Predicated region
    $region6: #{transformer_dueling_forward.3} parent=1 // pred_check
      _
    $region7: #{transformer_dueling_forward.3} parent=1 // pred_check_branch
      %37 = sbr.rel (0) target = $region9
    $region8: #{transformer_dueling_forward.3} parent=1 // pred_region
      _
    $region9: #{transformer_dueling_forward.3} parent=1 // pred_fallthru
      _
    // Predicated region
    $region10: #{transformer_dueling_forward.3} parent=1 // pred_check
      _
    $region11: #{transformer_dueling_forward.3} parent=1 // pred_check_branch
      %39 = sbr.rel (0) target = $region13
    $region12: #{transformer_dueling_forward.3} parent=1 // pred_region
      %s41 = ssub.s32 128, 128
      %42 = vsyncadd [#allocation4], %s41
      %s44 = sshll.u32 [#allocation3], 4
      %s45 = int_to_ptr.vmem [resolvable:$true] %s44
      %47 = dma.hbm_to_vmem [thread:$0]  %s2, 128, %s45, [#allocation4]
    $region13: #{transformer_dueling_forward.3} parent=1 // pred_fallthru
      _
    // Predicated region
    $region14: #{transformer_dueling_forward.3} parent=1 // pred_check
      _
    $region15: #{transformer_dueling_forward.3} parent=1 // pred_check_branch
      %49 = sbr.rel (0) target = $region17
    $region16: #{transformer_dueling_forward.3} parent=1 // pred_region
      %s51 = ssub.s32 64, 64
      %52 = vsyncadd [#allocation7], %s51
      %s54 = sshll.u32 [#allocation6], 4
      %s55 = int_to_ptr.vmem [resolvable:$true] %s54
      %57 = dma.hbm_to_vmem [thread:$0]  %s3, 64, %s55, [#allocation7]
    $region17: #{transformer_dueling_forward.3} parent=1 // pred_fallthru
      _
    // Predicated region
    $region18: #{transformer_dueling_forward.3} parent=1 // pred_check
      _
    $region19: #{transformer_dueling_forward.3} parent=1 // pred_check_branch
      %59 = sbr.rel (0) target = $region21
    $region20: #{transformer_dueling_forward.3} parent=1 // pred_region
      %s61 = ssub.s32 64, 64
      %62 = vsyncadd [#allocation7], %s61
      %s64 = sshll.u32 [#allocation8], 4
      %s65 = int_to_ptr.vmem [resolvable:$true] %s64
      %67 = dma.hbm_to_vmem [thread:$0]  %s4, 64, %s65, [#allocation7]
    $region21: #{transformer_dueling_forward.3} parent=1 // pred_fallthru
      _
    // Predicated region
    $region22: #{transformer_dueling_forward.3} parent=1 // pred_check
      _
    $region23: #{transformer_dueling_forward.3} parent=1 // pred_check_branch
      %69 = sbr.rel (0) target = $region25
    $region24: #{transformer_dueling_forward.3} parent=1 // pred_region
      %s71 = ssub.s32 64, 64
      %72 = vsyncadd [#allocation10], %s71
      %s74 = sshll.u32 [#allocation9], 4
      %s75 = int_to_ptr.vmem [resolvable:$true] %s74
      %77 = dma.hbm_to_vmem [thread:$0]  %s5, 64, %s75, [#allocation10]
    $region25: #{transformer_dueling_forward.3} parent=1 // pred_fallthru
      _
    // Predicated region
    $region26: #{transformer_dueling_forward.3} parent=1 // pred_check
      _
    $region27: #{transformer_dueling_forward.3} parent=1 // pred_check_branch
      %79 = sbr.rel (0) target = $region29
    $region28: #{transformer_dueling_forward.3} parent=1 // pred_region
      %s81 = ssub.s32 64, 64
      %82 = vsyncadd [#allocation10], %s81
      %s84 = sshll.u32 [#allocation11], 4
      %s85 = int_to_ptr.vmem [resolvable:$true] %s84
      %87 = dma.hbm_to_vmem [thread:$0]  %s6, 64, %s85, [#allocation10]
    $region29: #{transformer_dueling_forward.3} parent=1 // pred_fallthru
      _
    // Predicated region
    $region30: #{transformer_dueling_forward.3} parent=1 // pred_check
      _
    $region31: #{transformer_dueling_forward.3} parent=1 // pred_check_branch
      %89 = sbr.rel (0) target = $region33
    $region32: #{transformer_dueling_forward.3} parent=1 // pred_region
      _
    $region33: #{transformer_dueling_forward.3} parent=1 // pred_fallthru
      _
    // Predicated region
    $region34: #{transformer_dueling_forward.3} parent=1 // pred_check
      _
    $region35: #{transformer_dueling_forward.3} parent=1 // pred_check_branch
      %91 = sbr.rel (0) target = $region37
    $region36: #{transformer_dueling_forward.3} parent=1 // pred_region
      _
    $region37: #{transformer_dueling_forward.3} parent=1 // pred_fallthru
      _
    // Predicated region
    $region38: #{transformer_dueling_forward.3} parent=1 // pred_check
      _
    $region39: #{transformer_dueling_forward.3} parent=1 // pred_check_branch
      %93 = sbr.rel (0) target = $region41
    $region40: #{transformer_dueling_forward.3} parent=1 // pred_region
      %s95 = ssub.s32 32, 32
      %96 = vsyncadd [#allocation13], %s95
      %s98 = sshll.u32 [#allocation12], 4
      %s99 = int_to_ptr.vmem [resolvable:$true] %s98
      %101 = dma.hbm_to_vmem [thread:$0]  %s9, 32, %s99, [#allocation13]
    $region41: #{transformer_dueling_forward.3} parent=1 // pred_fallthru
      _
    // Predicated region
    $region42: #{transformer_dueling_forward.3} parent=1 // pred_check
      _
    $region43: #{transformer_dueling_forward.3} parent=1 // pred_check_branch
      %103 = sbr.rel (0) target = $region45
    $region44: #{transformer_dueling_forward.3} parent=1 // pred_region
      %s105 = ssub.s32 32, 32
      %106 = vsyncadd [#allocation13], %s105
      %s108 = sshll.u32 [#allocation14], 4
      %s109 = int_to_ptr.vmem [resolvable:$true] %s108
      %111 = dma.hbm_to_vmem [thread:$0]  %s10, 32, %s109, [#allocation13]
    $region45: #{transformer_dueling_forward.3} parent=1 // pred_fallthru
      _
    // Predicated region
    $region46: #{transformer_dueling_forward.3} parent=1 // pred_check
      _
    $region47: #{transformer_dueling_forward.3} parent=1 // pred_check_branch
      %113 = sbr.rel (0) target = $region49
    $region48: #{transformer_dueling_forward.3} parent=1 // pred_region
      _
    $region49: #{transformer_dueling_forward.3} parent=1 // pred_fallthru
      _
    // Predicated region
    $region50: #{transformer_dueling_forward.3} parent=1 // pred_check
      _
    $region51: #{transformer_dueling_forward.3} parent=1 // pred_check_branch
      %115 = sbr.rel (0) target = $region53
    $region52: #{transformer_dueling_forward.3} parent=1 // pred_region
      _
    $region53: #{transformer_dueling_forward.3} parent=1 // pred_fallthru
      _
    // Predicated region
    $region54: #{transformer_dueling_forward.3} parent=1 // pred_check
      _
    $region55: #{transformer_dueling_forward.3} parent=1 // pred_check_branch
      %117 = sbr.rel (0) target = $region57
    $region56: #{transformer_dueling_forward.3} parent=1 // pred_region
      %s119 = ssub.s32 8192, 8192
      %120 = vsyncadd [#allocation16], %s119
      %s121 = sshll.u32 [#allocation15], 4
      %s122 = int_to_ptr.vmem [resolvable:$true] %s121
      %127 = dma.hbm_to_vmem [thread:$0]  %s13, 8192, %s122, [#allocation16], 128, 128, 8
    $region57: #{transformer_dueling_forward.3} parent=1 // pred_fallthru
      _
    // Predicated region
    $region58: #{transformer_dueling_forward.3} parent=1 // pred_check
      _
    $region59: #{transformer_dueling_forward.3} parent=1 // pred_check_branch
      %129 = sbr.rel (0) target = $region61
    $region60: #{transformer_dueling_forward.3} parent=1 // pred_region
      %s131 = ssub.s32 32, 32
      %132 = vsyncadd [#allocation16], %s131
      %s134 = sshll.u32 [#allocation17], 4
      %s135 = int_to_ptr.vmem [resolvable:$true] %s134
      %137 = dma.hbm_to_vmem [thread:$0]  %s14, 32, %s135, [#allocation16]
    $region61: #{transformer_dueling_forward.3} parent=1 // pred_fallthru
      _
    // Predicated region
    $region62: #{transformer_dueling_forward.3} parent=1 // pred_check
      _
    $region63: #{transformer_dueling_forward.3} parent=1 // pred_check_branch
      %139 = sbr.rel (0) target = $region65
    $region64: #{transformer_dueling_forward.3} parent=1 // pred_region
      %s141 = ssub.s32 32, 32
      %142 = vsyncadd [#allocation19], %s141
      %s144 = sshll.u32 [#allocation18], 4
      %s145 = int_to_ptr.vmem [resolvable:$true] %s144
      %147 = dma.hbm_to_vmem [thread:$0]  %s15, 32, %s145, [#allocation19]
    $region65: #{transformer_dueling_forward.3} parent=1 // pred_fallthru
      _
    // Predicated region
    $region66: #{transformer_dueling_forward.3} parent=1 // pred_check
      _
    $region67: #{transformer_dueling_forward.3} parent=1 // pred_check_branch
      %149 = sbr.rel (0) target = $region69
    $region68: #{transformer_dueling_forward.3} parent=1 // pred_region
      %s151 = ssub.s32 32, 32
      %152 = vsyncadd [#allocation19], %s151
      %s154 = sshll.u32 [#allocation20], 4
      %s155 = int_to_ptr.vmem [resolvable:$true] %s154
      %157 = dma.hbm_to_vmem [thread:$0]  %s16, 32, %s155, [#allocation19]
    $region69: #{transformer_dueling_forward.3} parent=1 // pred_fallthru
      _
    // Predicated region
    $region70: #{transformer_dueling_forward.3} parent=1 // pred_check
      _
    $region71: #{transformer_dueling_forward.3} parent=1 // pred_check_branch
      %159 = sbr.rel (0) target = $region73
    $region72: #{transformer_dueling_forward.3} parent=1 // pred_region
      %s161 = ssub.s32 2048, 2048
      %162 = vsyncadd [#allocation22], %s161
      %s163 = sshll.u32 [#allocation21], 4
      %s164 = int_to_ptr.vmem [resolvable:$true] %s163
      %169 = dma.hbm_to_vmem [thread:$0]  %s17, 2048, %s164, [#allocation22], 64, 64, 4
    $region73: #{transformer_dueling_forward.3} parent=1 // pred_fallthru
      _
    // Predicated region
    $region74: #{transformer_dueling_forward.3} parent=1 // pred_check
      _
    $region75: #{transformer_dueling_forward.3} parent=1 // pred_check_branch
      %171 = sbr.rel (0) target = $region77
    $region76: #{transformer_dueling_forward.3} parent=1 // pred_region
      _
    $region77: #{transformer_dueling_forward.3} parent=1 // pred_fallthru
      _
    // Predicated region
    $region78: #{transformer_dueling_forward.3} parent=1 // pred_check
      _
    $region79: #{transformer_dueling_forward.3} parent=1 // pred_check_branch
      %173 = sbr.rel (0) target = $region81
    $region80: #{transformer_dueling_forward.3} parent=1 // pred_region
      %174 = dma.done [#allocation4], 128
    $region81: #{transformer_dueling_forward.3} parent=1 // pred_fallthru
      _
    // Predicated region
    $region82: #{transformer_dueling_forward.3} parent=1 // pred_check
      _
    $region83: #{transformer_dueling_forward.3} parent=1 // pred_check_branch
      %176 = sbr.rel (0) target = $region85
    $region84: #{transformer_dueling_forward.3} parent=1 // pred_region
      %177 = dma.done [#allocation7], 64
    $region85: #{transformer_dueling_forward.3} parent=1 // pred_fallthru
      _
    // Predicated region
    $region86: #{transformer_dueling_forward.3} parent=1 // pred_check
      _
    $region87: #{transformer_dueling_forward.3} parent=1 // pred_check_branch
      %179 = sbr.rel (0) target = $region89
    $region88: #{transformer_dueling_forward.3} parent=1 // pred_region
      %180 = dma.done [#allocation7], 64
    $region89: #{transformer_dueling_forward.3} parent=1 // pred_fallthru
      _
    // Predicated region
    $region90: #{transformer_dueling_forward.3} parent=1 // pred_check
      _
    $region91: #{transformer_dueling_forward.3} parent=1 // pred_check_branch
      %182 = sbr.rel (0) target = $region93
    $region92: #{transformer_dueling_forward.3} parent=1 // pred_region
      %183 = dma.done [#allocation10], 64
    $region93: #{transformer_dueling_forward.3} parent=1 // pred_fallthru
      _
    // Predicated region
    $region94: #{transformer_dueling_forward.3} parent=1 // pred_check
      _
    $region95: #{transformer_dueling_forward.3} parent=1 // pred_check_branch
      %185 = sbr.rel (0) target = $region97
    $region96: #{transformer_dueling_forward.3} parent=1 // pred_region
      %186 = dma.done [#allocation10], 64
    $region97: #{transformer_dueling_forward.3} parent=1 // pred_fallthru
      _
    // Predicated region
    $region98: #{transformer_dueling_forward.3} parent=1 // pred_check
      _
    $region99: #{transformer_dueling_forward.3} parent=1 // pred_check_branch
      %188 = sbr.rel (0) target = $region101
    $region100: #{transformer_dueling_forward.3} parent=1 // pred_region
      %189 = dma.done [#allocation13], 32
    $region101: #{transformer_dueling_forward.3} parent=1 // pred_fallthru
      _
    // Predicated region
    $region102: #{transformer_dueling_forward.3} parent=1 // pred_check
      _
    $region103: #{transformer_dueling_forward.3} parent=1 // pred_check_branch
      %191 = sbr.rel (0) target = $region105
    $region104: #{transformer_dueling_forward.3} parent=1 // pred_region
      %192 = dma.done [#allocation13], 32
    $region105: #{transformer_dueling_forward.3} parent=1 // pred_fallthru
      _
    // Predicated region
    $region106: #{transformer_dueling_forward.3} parent=1 // pred_check
      _
    $region107: #{transformer_dueling_forward.3} parent=1 // pred_check_branch
      %194 = sbr.rel (0) target = $region109
    $region108: #{transformer_dueling_forward.3} parent=1 // pred_region
      %195 = dma.done [#allocation16], 8192
    $region109: #{transformer_dueling_forward.3} parent=1 // pred_fallthru
      _
    // Predicated region
    $region110: #{transformer_dueling_forward.3} parent=1 // pred_check
      _
    $region111: #{transformer_dueling_forward.3} parent=1 // pred_check_branch
      %197 = sbr.rel (0) target = $region113
    $region112: #{transformer_dueling_forward.3} parent=1 // pred_region
      %198 = dma.done [#allocation16], 32
    $region113: #{transformer_dueling_forward.3} parent=1 // pred_fallthru
      _
    // Predicated region
    $region114: #{transformer_dueling_forward.3} parent=1 // pred_check
      _
    $region115: #{transformer_dueling_forward.3} parent=1 // pred_check_branch
      %200 = sbr.rel (0) target = $region117
    $region116: #{transformer_dueling_forward.3} parent=1 // pred_region
      %201 = dma.done [#allocation19], 32
    $region117: #{transformer_dueling_forward.3} parent=1 // pred_fallthru
      _
    // Predicated region
    $region118: #{transformer_dueling_forward.3} parent=1 // pred_check
      _
    $region119: #{transformer_dueling_forward.3} parent=1 // pred_check_branch
      %203 = sbr.rel (0) target = $region121
    $region120: #{transformer_dueling_forward.3} parent=1 // pred_region
      %204 = dma.done [#allocation19], 32
    $region121: #{transformer_dueling_forward.3} parent=1 // pred_fallthru
      _
    // Predicated region
    $region122: #{transformer_dueling_forward.3} parent=1 // pred_check
      _
    $region123: #{transformer_dueling_forward.3} parent=1 // pred_check_branch
      %206 = sbr.rel (0) target = $region125
    $region124: #{transformer_dueling_forward.3} parent=1 // pred_region
      %207 = dma.done [#allocation22], 2048
    $region125: #{transformer_dueling_forward.3} parent=1 // pred_fallthru
      _
    %v209 = vld [vmem:[%s0] sm:$0xff]
    %v210 = vld [vmem:[%s0 + $0x8] sm:$0xff]
    %v211 = vld [vmem:[%s1] sm:$0xff]
    %v212 = vld [vmem:[%s1 + $0x8] sm:$0xff]
    %v213 = vpack.c.bf16 %v209, %v209
    %v214 = vpack.c.bf16 %v210, %v210
    %s215 = scalar_lea.vmem %s1, 16
    %v216 = vld [vmem:[%s215] sm:$0xff]
    %v217 = vld [vmem:[%s215 + $0x8] sm:$0xff]
    %v220 = vunpack.c.l.b16 %v213
    %v221 = vunpack.c.l.b16 %v214
    %v222 = vrot.slane %v220, 1
    %vm223 = vcmask 1041409
    %v224 = vsel %vm223, %v221, %v222
    %v225 = vpack.c.b16 %v224, %v224
    %v228 = vcombine.high %v216, %v216
    %v230 = vunpack.c.l.s4 1983009808
    %v231 = vunpack.c.0.s8 %v230
    %v232 = vlaneseq
    %v233 = vshrl.u32 %v232, 7
    %v234 = vsub.s32 %v231, %v233
    %v235 = vrot.slane %v216, %v234
    %v237 = vunpack.c.l.s4 1983009808
    %v238 = vunpack.c.0.s8 %v237
    %v239 = vlaneseq
    %v240 = vshrl.u32 %v239, 7
    %v241 = vsub.s32 %v238, %v240
    %v242 = vrot.slane %v228, %v241
    %v243 = vcombine.high %v235, %v235
    %v244 = vcombine.high %v242, %v242
    %v245 = vcombine.high %v217, %v217
    %v247 = vunpack.c.l.s4 1983009808
    %v248 = vunpack.c.0.s8 %v247
    %v249 = vlaneseq
    %v250 = vshrl.u32 %v249, 7
    %v251 = vsub.s32 %v248, %v250
    %v252 = vrot.slane %v217, %v251
    %v254 = vunpack.c.l.s4 1983009808
    %v255 = vunpack.c.0.s8 %v254
    %v256 = vlaneseq
    %v257 = vshrl.u32 %v256, 7
    %v258 = vsub.s32 %v255, %v257
    %v259 = vrot.slane %v245, %v258
    %v260 = vcombine.high %v252, %v252
    %v261 = vcombine.high %v259, %v259
    %vm262 = vcmask 31744
    %v264 = vsel %vm262, %v225, 0
    %vm266 = vcmask 1041408
    %v268 = vsel %vm266, %v235, 0
    %v271 = vsel %vm266, %v243, 0
    %v274 = vsel %vm266, %v242, 0
    %v277 = vsel %vm266, %v244, 0
    %v280 = vsel %vm266, %v252, 0
    %v283 = vsel %vm266, %v260, 0
    %v286 = vsel %vm266, %v259, 0
    %v289 = vsel %vm266, %v261, 0
    %291 = vmatprep.subr.bf16.mxu0 %v271
    %292 = vmatpush1.bf16.msra.mxu0 %v268
    %293 = vmatprep.subr.bf16.mxu0 0
    %294 = vmatpush1.bf16.msra.mxu0 0
    %295 = vmatprep.subr.bf16.mxu0 0
    %296 = vmatpush1.bf16.msra.mxu0 0
    %297 = vmatprep.subr.bf16.mxu0 0
    %298 = vmatpush1.bf16.msra.mxu0 0
    %299 = vmatprep.subr.bf16.mxu0 0
    %300 = vmatpush1.bf16.msra.mxu0 0
    %301 = vmatprep.subr.bf16.mxu0 0
    %302 = vmatpush1.bf16.msra.mxu0 0
    %303 = vmatprep.subr.bf16.mxu0 0
    %304 = vmatpush1.bf16.msra.mxu0 0
    %305 = vmatprep.subr.bf16.mxu0 0
    %306 = vmatpush1.bf16.msra.mxu0 0
    %307 = vmatprep.subr.bf16.mxu0 0
    %308 = vmatpush1.bf16.msra.mxu0 0
    %309 = vmatprep.subr.bf16.mxu0 0
    %310 = vmatpush1.bf16.msra.mxu0 0
    %311 = vmatprep.subr.bf16.mxu0 0
    %312 = vmatpush1.bf16.msra.mxu0 0
    %313 = vmatprep.subr.bf16.mxu0 0
    %314 = vmatpush1.bf16.msra.mxu0 0
    %315 = vmatprep.subr.bf16.mxu0 0
    %316 = vmatpush1.bf16.msra.mxu0 0
    %317 = vmatprep.subr.bf16.mxu0 0
    %318 = vmatpush1.bf16.msra.mxu0 0
    %319 = vmatprep.subr.bf16.mxu0 0
    %320 = vmatpush1.bf16.msra.mxu0 0
    %321 = vmatprep.subr.bf16.mxu0 0
    %322 = vmatpush1.bf16.msra.mxu0 0
    %323 = vmatprep.mubr.bf16.mxu0 0
    %324 = vmatmul.mubr.bf16.gmra.mrb[0].mxu0 %v264
    %v325 = vpop.f32.mrb[0].mxu0
    %v326 = vadd.f32 0.0, %v325
    %v327 = vpop.f32.mrb[0].mxu0
    %v328 = vadd.f32 0.0, %v327
    %v329 = vpop.f32.mrb[0].mxu0
    %v330 = vpop.f32.mrb[0].mxu0
    %331 = vdwg.mxu0
    %332 = vmatprep.subr.bf16.mxu0 %v277
    %333 = vmatpush1.bf16.msra.mxu0 %v274
    %334 = vmatprep.subr.bf16.mxu0 0
    %335 = vmatpush1.bf16.msra.mxu0 0
    %336 = vmatprep.subr.bf16.mxu0 0
    %337 = vmatpush1.bf16.msra.mxu0 0
    %338 = vmatprep.subr.bf16.mxu0 0
    %339 = vmatpush1.bf16.msra.mxu0 0
    %340 = vmatprep.subr.bf16.mxu0 0
    %341 = vmatpush1.bf16.msra.mxu0 0
    %342 = vmatprep.subr.bf16.mxu0 0
    %343 = vmatpush1.bf16.msra.mxu0 0
    %344 = vmatprep.subr.bf16.mxu0 0
    %345 = vmatpush1.bf16.msra.mxu0 0
    %346 = vmatprep.subr.bf16.mxu0 0
    %347 = vmatpush1.bf16.msra.mxu0 0
    %348 = vmatprep.subr.bf16.mxu0 0
    %349 = vmatpush1.bf16.msra.mxu0 0
    %350 = vmatprep.subr.bf16.mxu0 0
    %351 = vmatpush1.bf16.msra.mxu0 0
    %352 = vmatprep.subr.bf16.mxu0 0
    %353 = vmatpush1.bf16.msra.mxu0 0
    %354 = vmatprep.subr.bf16.mxu0 0
    %355 = vmatpush1.bf16.msra.mxu0 0
    %356 = vmatprep.subr.bf16.mxu0 0
    %357 = vmatpush1.bf16.msra.mxu0 0
    %358 = vmatprep.subr.bf16.mxu0 0
    %359 = vmatpush1.bf16.msra.mxu0 0
    %360 = vmatprep.subr.bf16.mxu0 0
    %361 = vmatpush1.bf16.msra.mxu0 0
    %362 = vmatprep.subr.bf16.mxu0 0
    %363 = vmatpush1.bf16.msra.mxu0 0
    %364 = vmatprep.mubr.bf16.mxu0 0
    %365 = vmatmul.mubr.bf16.gmra.mrb[0].mxu0 %v264
    %v366 = vpop.f32.mrb[0].mxu0
    %v367 = vadd.f32 0.0, %v366
    %v368 = vpop.f32.mrb[0].mxu0
    %v369 = vadd.f32 0.0, %v368
    %v370 = vpop.f32.mrb[0].mxu0
    %v371 = vpop.f32.mrb[0].mxu0
    %372 = vdwg.mxu0
    %373 = vmatprep.subr.bf16.mxu0 %v283
    %374 = vmatpush1.bf16.msra.mxu0 %v280
    %375 = vmatprep.subr.bf16.mxu0 0
    %376 = vmatpush1.bf16.msra.mxu0 0
    %377 = vmatprep.subr.bf16.mxu0 0
    %378 = vmatpush1.bf16.msra.mxu0 0
    %379 = vmatprep.subr.bf16.mxu0 0
    %380 = vmatpush1.bf16.msra.mxu0 0
    %381 = vmatprep.subr.bf16.mxu0 0
    %382 = vmatpush1.bf16.msra.mxu0 0
    %383 = vmatprep.subr.bf16.mxu0 0
    %384 = vmatpush1.bf16.msra.mxu0 0
    %385 = vmatprep.subr.bf16.mxu0 0
    %386 = vmatpush1.bf16.msra.mxu0 0
    %387 = vmatprep.subr.bf16.mxu0 0
    %388 = vmatpush1.bf16.msra.mxu0 0
    %389 = vmatprep.subr.bf16.mxu0 0
    %390 = vmatpush1.bf16.msra.mxu0 0
    %391 = vmatprep.subr.bf16.mxu0 0
    %392 = vmatpush1.bf16.msra.mxu0 0
    %393 = vmatprep.subr.bf16.mxu0 0
    %394 = vmatpush1.bf16.msra.mxu0 0
    %395 = vmatprep.subr.bf16.mxu0 0
    %396 = vmatpush1.bf16.msra.mxu0 0
    %397 = vmatprep.subr.bf16.mxu0 0
    %398 = vmatpush1.bf16.msra.mxu0 0
    %399 = vmatprep.subr.bf16.mxu0 0
    %400 = vmatpush1.bf16.msra.mxu0 0
    %401 = vmatprep.subr.bf16.mxu0 0
    %402 = vmatpush1.bf16.msra.mxu0 0
    %403 = vmatprep.subr.bf16.mxu0 0
    %404 = vmatpush1.bf16.msra.mxu0 0
    %405 = vmatprep.mubr.bf16.mxu0 0
    %406 = vmatmul.mubr.bf16.gmra.mrb[0].mxu0 %v264
    %v407 = vpop.f32.mrb[0].mxu0
    %v408 = vadd.f32 0.0, %v407
    %v409 = vpop.f32.mrb[0].mxu0
    %v410 = vadd.f32 0.0, %v409
    %v411 = vpop.f32.mrb[0].mxu0
    %v412 = vpop.f32.mrb[0].mxu0
    %413 = vdwg.mxu0
    %414 = vmatprep.subr.bf16.mxu0 %v289
    %415 = vmatpush1.bf16.msra.mxu0 %v286
    %416 = vmatprep.subr.bf16.mxu0 0
    %417 = vmatpush1.bf16.msra.mxu0 0
    %418 = vmatprep.subr.bf16.mxu0 0
    %419 = vmatpush1.bf16.msra.mxu0 0
    %420 = vmatprep.subr.bf16.mxu0 0
    %421 = vmatpush1.bf16.msra.mxu0 0
    %422 = vmatprep.subr.bf16.mxu0 0
    %423 = vmatpush1.bf16.msra.mxu0 0
    %424 = vmatprep.subr.bf16.mxu0 0
    %425 = vmatpush1.bf16.msra.mxu0 0
    %426 = vmatprep.subr.bf16.mxu0 0
    %427 = vmatpush1.bf16.msra.mxu0 0
    %428 = vmatprep.subr.bf16.mxu0 0
    %429 = vmatpush1.bf16.msra.mxu0 0
    %430 = vmatprep.subr.bf16.mxu0 0
    %431 = vmatpush1.bf16.msra.mxu0 0
    %432 = vmatprep.subr.bf16.mxu0 0
    %433 = vmatpush1.bf16.msra.mxu0 0
    %434 = vmatprep.subr.bf16.mxu0 0
    %435 = vmatpush1.bf16.msra.mxu0 0
    %436 = vmatprep.subr.bf16.mxu0 0
    %437 = vmatpush1.bf16.msra.mxu0 0
    %438 = vmatprep.subr.bf16.mxu0 0
    %439 = vmatpush1.bf16.msra.mxu0 0
    %440 = vmatprep.subr.bf16.mxu0 0
    %441 = vmatpush1.bf16.msra.mxu0 0
    %442 = vmatprep.subr.bf16.mxu0 0
    %443 = vmatpush1.bf16.msra.mxu0 0
    %444 = vmatprep.subr.bf16.mxu0 0
    %445 = vmatpush1.bf16.msra.mxu0 0
    %446 = vmatprep.mubr.bf16.mxu0 0
    %447 = vmatmul.mubr.bf16.gmra.mrb[0].mxu0 %v264
    %v448 = vpop.f32.mrb[0].mxu0
    %v449 = vadd.f32 0.0, %v448
    %v450 = vpop.f32.mrb[0].mxu0
    %v451 = vadd.f32 0.0, %v450
    %v452 = vpop.f32.mrb[0].mxu0
    %v453 = vpop.f32.mrb[0].mxu0
    %454 = vdwg.mxu0
    %v455 = vrot.slane %v221, 7
    %v456 = vsel %vm223, %v455, %v220
    %v457 = vpack.c.b16 %v456, %v456
    %v460 = vcombine.high %v211, %v211
    %v462 = vunpack.c.l.s4 1983009808
    %v463 = vunpack.c.0.s8 %v462
    %v464 = vlaneseq
    %v465 = vshrl.u32 %v464, 7
    %v466 = vsub.s32 %v463, %v465
    %v467 = vrot.slane %v211, %v466
    %v469 = vunpack.c.l.s4 1983009808
    %v470 = vunpack.c.0.s8 %v469
    %v471 = vlaneseq
    %v472 = vshrl.u32 %v471, 7
    %v473 = vsub.s32 %v470, %v472
    %v474 = vrot.slane %v460, %v473
    %v475 = vcombine.high %v467, %v467
    %v476 = vcombine.high %v474, %v474
    %v477 = vcombine.high %v212, %v212
    %v479 = vunpack.c.l.s4 1983009808
    %v480 = vunpack.c.0.s8 %v479
    %v481 = vlaneseq
    %v482 = vshrl.u32 %v481, 7
    %v483 = vsub.s32 %v480, %v482
    %v484 = vrot.slane %v212, %v483
    %v486 = vunpack.c.l.s4 1983009808
    %v487 = vunpack.c.0.s8 %v486
    %v488 = vlaneseq
    %v489 = vshrl.u32 %v488, 7
    %v490 = vsub.s32 %v487, %v489
    %v491 = vrot.slane %v477, %v490
    %v492 = vcombine.high %v484, %v484
    %v493 = vcombine.high %v491, %v491
    %v495 = vsel %vm262, %v457, 0
    %v498 = vsel %vm266, %v467, 0
    %v501 = vsel %vm266, %v475, 0
    %v504 = vsel %vm266, %v474, 0
    %v507 = vsel %vm266, %v476, 0
    %v510 = vsel %vm266, %v484, 0
    %v513 = vsel %vm266, %v492, 0
    %v516 = vsel %vm266, %v491, 0
    %v519 = vsel %vm266, %v493, 0
    %521 = vmatprep.subr.bf16.mxu0 %v501
    %522 = vmatpush1.bf16.msra.mxu0 %v498
    %523 = vmatprep.subr.bf16.mxu0 0
    %524 = vmatpush1.bf16.msra.mxu0 0
    %525 = vmatprep.subr.bf16.mxu0 0
    %526 = vmatpush1.bf16.msra.mxu0 0
    %527 = vmatprep.subr.bf16.mxu0 0
    %528 = vmatpush1.bf16.msra.mxu0 0
    %529 = vmatprep.subr.bf16.mxu0 0
    %530 = vmatpush1.bf16.msra.mxu0 0
    %531 = vmatprep.subr.bf16.mxu0 0
    %532 = vmatpush1.bf16.msra.mxu0 0
    %533 = vmatprep.subr.bf16.mxu0 0
    %534 = vmatpush1.bf16.msra.mxu0 0
    %535 = vmatprep.subr.bf16.mxu0 0
    %536 = vmatpush1.bf16.msra.mxu0 0
    %537 = vmatprep.subr.bf16.mxu0 0
    %538 = vmatpush1.bf16.msra.mxu0 0
    %539 = vmatprep.subr.bf16.mxu0 0
    %540 = vmatpush1.bf16.msra.mxu0 0
    %541 = vmatprep.subr.bf16.mxu0 0
    %542 = vmatpush1.bf16.msra.mxu0 0
    %543 = vmatprep.subr.bf16.mxu0 0
    %544 = vmatpush1.bf16.msra.mxu0 0
    %545 = vmatprep.subr.bf16.mxu0 0
    %546 = vmatpush1.bf16.msra.mxu0 0
    %547 = vmatprep.subr.bf16.mxu0 0
    %548 = vmatpush1.bf16.msra.mxu0 0
    %549 = vmatprep.subr.bf16.mxu0 0
    %550 = vmatpush1.bf16.msra.mxu0 0
    %551 = vmatprep.subr.bf16.mxu0 0
    %552 = vmatpush1.bf16.msra.mxu0 0
    %553 = vmatprep.mubr.bf16.mxu0 0
    %554 = vmatmul.mubr.bf16.gmra.mrb[0].mxu0 %v495
    %v555 = vpop.f32.mrb[0].mxu0
    %v556 = vadd.f32 %v326, %v555
    %v557 = vpop.f32.mrb[0].mxu0
    %v558 = vadd.f32 %v328, %v557
    %v559 = vpop.f32.mrb[0].mxu0
    %v560 = vpop.f32.mrb[0].mxu0
    %561 = vdwg.mxu0
    %562 = vmatprep.subr.bf16.mxu0 %v507
    %563 = vmatpush1.bf16.msra.mxu0 %v504
    %564 = vmatprep.subr.bf16.mxu0 0
    %565 = vmatpush1.bf16.msra.mxu0 0
    %566 = vmatprep.subr.bf16.mxu0 0
    %567 = vmatpush1.bf16.msra.mxu0 0
    %568 = vmatprep.subr.bf16.mxu0 0
    %569 = vmatpush1.bf16.msra.mxu0 0
    %570 = vmatprep.subr.bf16.mxu0 0
    %571 = vmatpush1.bf16.msra.mxu0 0
    %572 = vmatprep.subr.bf16.mxu0 0
    %573 = vmatpush1.bf16.msra.mxu0 0
    %574 = vmatprep.subr.bf16.mxu0 0
    %575 = vmatpush1.bf16.msra.mxu0 0
    %576 = vmatprep.subr.bf16.mxu0 0
    %577 = vmatpush1.bf16.msra.mxu0 0
    %578 = vmatprep.subr.bf16.mxu0 0
    %579 = vmatpush1.bf16.msra.mxu0 0
    %580 = vmatprep.subr.bf16.mxu0 0
    %581 = vmatpush1.bf16.msra.mxu0 0
    %582 = vmatprep.subr.bf16.mxu0 0
    %583 = vmatpush1.bf16.msra.mxu0 0
    %584 = vmatprep.subr.bf16.mxu0 0
    %585 = vmatpush1.bf16.msra.mxu0 0
    %586 = vmatprep.subr.bf16.mxu0 0
    %587 = vmatpush1.bf16.msra.mxu0 0
    %588 = vmatprep.subr.bf16.mxu0 0
    %589 = vmatpush1.bf16.msra.mxu0 0
    %590 = vmatprep.subr.bf16.mxu0 0
    %591 = vmatpush1.bf16.msra.mxu0 0
    %592 = vmatprep.subr.bf16.mxu0 0
    %593 = vmatpush1.bf16.msra.mxu0 0
    %594 = vmatprep.mubr.bf16.mxu0 0
    %595 = vmatmul.mubr.bf16.gmra.mrb[0].mxu0 %v495
    %v596 = vpop.f32.mrb[0].mxu0
    %v597 = vadd.f32 %v367, %v596
    %v598 = vpop.f32.mrb[0].mxu0
    %v599 = vadd.f32 %v369, %v598
    %v600 = vpop.f32.mrb[0].mxu0
    %v601 = vpop.f32.mrb[0].mxu0
    %602 = vdwg.mxu0
    %603 = vmatprep.subr.bf16.mxu0 %v513
    %604 = vmatpush1.bf16.msra.mxu0 %v510
    %605 = vmatprep.subr.bf16.mxu0 0
    %606 = vmatpush1.bf16.msra.mxu0 0
    %607 = vmatprep.subr.bf16.mxu0 0
    %608 = vmatpush1.bf16.msra.mxu0 0
    %609 = vmatprep.subr.bf16.mxu0 0
    %610 = vmatpush1.bf16.msra.mxu0 0
    %611 = vmatprep.subr.bf16.mxu0 0
    %612 = vmatpush1.bf16.msra.mxu0 0
    %613 = vmatprep.subr.bf16.mxu0 0
    %614 = vmatpush1.bf16.msra.mxu0 0
    %615 = vmatprep.subr.bf16.mxu0 0
    %616 = vmatpush1.bf16.msra.mxu0 0
    %617 = vmatprep.subr.bf16.mxu0 0
    %618 = vmatpush1.bf16.msra.mxu0 0
    %619 = vmatprep.subr.bf16.mxu0 0
    %620 = vmatpush1.bf16.msra.mxu0 0
    %621 = vmatprep.subr.bf16.mxu0 0
    %622 = vmatpush1.bf16.msra.mxu0 0
    %623 = vmatprep.subr.bf16.mxu0 0
    %624 = vmatpush1.bf16.msra.mxu0 0
    %625 = vmatprep.subr.bf16.mxu0 0
    %626 = vmatpush1.bf16.msra.mxu0 0
    %627 = vmatprep.subr.bf16.mxu0 0
    %628 = vmatpush1.bf16.msra.mxu0 0
    %629 = vmatprep.subr.bf16.mxu0 0
    %630 = vmatpush1.bf16.msra.mxu0 0
    %631 = vmatprep.subr.bf16.mxu0 0
    %632 = vmatpush1.bf16.msra.mxu0 0
    %633 = vmatprep.subr.bf16.mxu0 0
    %634 = vmatpush1.bf16.msra.mxu0 0
    %635 = vmatprep.mubr.bf16.mxu0 0
    %636 = vmatmul.mubr.bf16.gmra.mrb[0].mxu0 %v495
    %v637 = vpop.f32.mrb[0].mxu0
    %v638 = vadd.f32 %v408, %v637
    %v639 = vpop.f32.mrb[0].mxu0
    %v640 = vadd.f32 %v410, %v639
    %v641 = vpop.f32.mrb[0].mxu0
    %v642 = vpop.f32.mrb[0].mxu0
    %643 = vdwg.mxu0
    %644 = vmatprep.subr.bf16.mxu0 %v519
    %645 = vmatpush1.bf16.msra.mxu0 %v516
    %646 = vmatprep.subr.bf16.mxu0 0
    %647 = vmatpush1.bf16.msra.mxu0 0
    %648 = vmatprep.subr.bf16.mxu0 0
    %649 = vmatpush1.bf16.msra.mxu0 0
    %650 = vmatprep.subr.bf16.mxu0 0
    %651 = vmatpush1.bf16.msra.mxu0 0
    %652 = vmatprep.subr.bf16.mxu0 0
    %653 = vmatpush1.bf16.msra.mxu0 0
    %654 = vmatprep.subr.bf16.mxu0 0
    %655 = vmatpush1.bf16.msra.mxu0 0
    %656 = vmatprep.subr.bf16.mxu0 0
    %657 = vmatpush1.bf16.msra.mxu0 0
    %658 = vmatprep.subr.bf16.mxu0 0
    %659 = vmatpush1.bf16.msra.mxu0 0
    %660 = vmatprep.subr.bf16.mxu0 0
    %661 = vmatpush1.bf16.msra.mxu0 0
    %662 = vmatprep.subr.bf16.mxu0 0
    %663 = vmatpush1.bf16.msra.mxu0 0
    %664 = vmatprep.subr.bf16.mxu0 0
    %665 = vmatpush1.bf16.msra.mxu0 0
    %666 = vmatprep.subr.bf16.mxu0 0
    %667 = vmatpush1.bf16.msra.mxu0 0
    %668 = vmatprep.subr.bf16.mxu0 0
    %669 = vmatpush1.bf16.msra.mxu0 0
    %670 = vmatprep.subr.bf16.mxu0 0
    %671 = vmatpush1.bf16.msra.mxu0 0
    %672 = vmatprep.subr.bf16.mxu0 0
    %673 = vmatpush1.bf16.msra.mxu0 0
    %674 = vmatprep.subr.bf16.mxu0 0
    %675 = vmatpush1.bf16.msra.mxu0 0
    %676 = vmatprep.mubr.bf16.mxu0 0
    %677 = vmatmul.mubr.bf16.gmra.mrb[0].mxu0 %v495
    %v678 = vpop.f32.mrb[0].mxu0
    %v679 = vadd.f32 %v449, %v678
    %v680 = vpop.f32.mrb[0].mxu0
    %v681 = vadd.f32 %v451, %v680
    %v682 = vpop.f32.mrb[0].mxu0
    %v683 = vpop.f32.mrb[0].mxu0
    %684 = vdwg.mxu0
    %s685 = scalar_lea.vmem %s1, 32
    %v686 = vld [vmem:[%s685] sm:$0xff]
    %v687 = vld [vmem:[%s685 + $0x8] sm:$0xff]
    %v688 = vrot.slane %v220, 2
    %v689 = vrot.slane %v221, 1
    %v690 = vsel %vm223, %v689, %v688
    %v691 = vpack.c.b16 %v690, %v690
    %v694 = vcombine.high %v686, %v686
    %v696 = vunpack.c.l.s4 1983009808
    %v697 = vunpack.c.0.s8 %v696
    %v698 = vlaneseq
    %v699 = vshrl.u32 %v698, 7
    %v700 = vsub.s32 %v697, %v699
    %v701 = vrot.slane %v686, %v700
    %v703 = vunpack.c.l.s4 1983009808
    %v704 = vunpack.c.0.s8 %v703
    %v705 = vlaneseq
    %v706 = vshrl.u32 %v705, 7
    %v707 = vsub.s32 %v704, %v706
    %v708 = vrot.slane %v694, %v707
    %v709 = vcombine.high %v701, %v701
    %v710 = vcombine.high %v708, %v708
    %v711 = vcombine.high %v687, %v687
    %v713 = vunpack.c.l.s4 1983009808
    %v714 = vunpack.c.0.s8 %v713
    %v715 = vlaneseq
    %v716 = vshrl.u32 %v715, 7
    %v717 = vsub.s32 %v714, %v716
    %v718 = vrot.slane %v687, %v717
    %v720 = vunpack.c.l.s4 1983009808
    %v721 = vunpack.c.0.s8 %v720
    %v722 = vlaneseq
    %v723 = vshrl.u32 %v722, 7
    %v724 = vsub.s32 %v721, %v723
    %v725 = vrot.slane %v711, %v724
    %v726 = vcombine.high %v718, %v718
    %v727 = vcombine.high %v725, %v725
    %v729 = vsel %vm262, %v691, 0
    %v732 = vsel %vm266, %v701, 0
    %v735 = vsel %vm266, %v709, 0
    %v738 = vsel %vm266, %v708, 0
    %v741 = vsel %vm266, %v710, 0
    %v744 = vsel %vm266, %v718, 0
    %v747 = vsel %vm266, %v726, 0
    %v750 = vsel %vm266, %v725, 0
    %v753 = vsel %vm266, %v727, 0
    %755 = vmatprep.subr.bf16.mxu0 %v735
    %756 = vmatpush1.bf16.msra.mxu0 %v732
    %757 = vmatprep.subr.bf16.mxu0 0
    %758 = vmatpush1.bf16.msra.mxu0 0
    %759 = vmatprep.subr.bf16.mxu0 0
    %760 = vmatpush1.bf16.msra.mxu0 0
    %761 = vmatprep.subr.bf16.mxu0 0
    %762 = vmatpush1.bf16.msra.mxu0 0
    %763 = vmatprep.subr.bf16.mxu0 0
    %764 = vmatpush1.bf16.msra.mxu0 0
    %765 = vmatprep.subr.bf16.mxu0 0
    %766 = vmatpush1.bf16.msra.mxu0 0
    %767 = vmatprep.subr.bf16.mxu0 0
    %768 = vmatpush1.bf16.msra.mxu0 0
    %769 = vmatprep.subr.bf16.mxu0 0
    %770 = vmatpush1.bf16.msra.mxu0 0
    %771 = vmatprep.subr.bf16.mxu0 0
    %772 = vmatpush1.bf16.msra.mxu0 0
    %773 = vmatprep.subr.bf16.mxu0 0
    %774 = vmatpush1.bf16.msra.mxu0 0
    %775 = vmatprep.subr.bf16.mxu0 0
    %776 = vmatpush1.bf16.msra.mxu0 0
    %777 = vmatprep.subr.bf16.mxu0 0
    %778 = vmatpush1.bf16.msra.mxu0 0
    %779 = vmatprep.subr.bf16.mxu0 0
    %780 = vmatpush1.bf16.msra.mxu0 0
    %781 = vmatprep.subr.bf16.mxu0 0
    %782 = vmatpush1.bf16.msra.mxu0 0
    %783 = vmatprep.subr.bf16.mxu0 0
    %784 = vmatpush1.bf16.msra.mxu0 0
    %785 = vmatprep.subr.bf16.mxu0 0
    %786 = vmatpush1.bf16.msra.mxu0 0
    %787 = vmatprep.mubr.bf16.mxu0 0
    %788 = vmatmul.mubr.bf16.gmra.mrb[0].mxu0 %v729
    %v789 = vpop.f32.mrb[0].mxu0
    %v790 = vadd.f32 0.0, %v789
    %v791 = vpop.f32.mrb[0].mxu0
    %v792 = vadd.f32 0.0, %v791
    %v793 = vpop.f32.mrb[0].mxu0
    %v794 = vpop.f32.mrb[0].mxu0
    %795 = vdwg.mxu0
    %796 = vmatprep.subr.bf16.mxu0 %v741
    %797 = vmatpush1.bf16.msra.mxu0 %v738
    %798 = vmatprep.subr.bf16.mxu0 0
    %799 = vmatpush1.bf16.msra.mxu0 0
    %800 = vmatprep.subr.bf16.mxu0 0
    %801 = vmatpush1.bf16.msra.mxu0 0
    %802 = vmatprep.subr.bf16.mxu0 0
    %803 = vmatpush1.bf16.msra.mxu0 0
    %804 = vmatprep.subr.bf16.mxu0 0
    %805 = vmatpush1.bf16.msra.mxu0 0
    %806 = vmatprep.subr.bf16.mxu0 0
    %807 = vmatpush1.bf16.msra.mxu0 0
    %808 = vmatprep.subr.bf16.mxu0 0
    %809 = vmatpush1.bf16.msra.mxu0 0
    %810 = vmatprep.subr.bf16.mxu0 0
    %811 = vmatpush1.bf16.msra.mxu0 0
    %812 = vmatprep.subr.bf16.mxu0 0
    %813 = vmatpush1.bf16.msra.mxu0 0
    %814 = vmatprep.subr.bf16.mxu0 0
    %815 = vmatpush1.bf16.msra.mxu0 0
    %816 = vmatprep.subr.bf16.mxu0 0
    %817 = vmatpush1.bf16.msra.mxu0 0
    %818 = vmatprep.subr.bf16.mxu0 0
    %819 = vmatpush1.bf16.msra.mxu0 0
    %820 = vmatprep.subr.bf16.mxu0 0
    %821 = vmatpush1.bf16.msra.mxu0 0
    %822 = vmatprep.subr.bf16.mxu0 0
    %823 = vmatpush1.bf16.msra.mxu0 0
    %824 = vmatprep.subr.bf16.mxu0 0
    %825 = vmatpush1.bf16.msra.mxu0 0
    %826 = vmatprep.subr.bf16.mxu0 0
    %827 = vmatpush1.bf16.msra.mxu0 0
    %828 = vmatprep.mubr.bf16.mxu0 0
    %829 = vmatmul.mubr.bf16.gmra.mrb[0].mxu0 %v729
    %v830 = vpop.f32.mrb[0].mxu0
    %v831 = vadd.f32 0.0, %v830
    %v832 = vpop.f32.mrb[0].mxu0
    %v833 = vadd.f32 0.0, %v832
    %v834 = vpop.f32.mrb[0].mxu0
    %v835 = vpop.f32.mrb[0].mxu0
    %836 = vdwg.mxu0
    %837 = vmatprep.subr.bf16.mxu0 %v747
    %838 = vmatpush1.bf16.msra.mxu0 %v744
    %839 = vmatprep.subr.bf16.mxu0 0
    %840 = vmatpush1.bf16.msra.mxu0 0
    %841 = vmatprep.subr.bf16.mxu0 0
    %842 = vmatpush1.bf16.msra.mxu0 0
    %843 = vmatprep.subr.bf16.mxu0 0
    %844 = vmatpush1.bf16.msra.mxu0 0
    %845 = vmatprep.subr.bf16.mxu0 0
    %846 = vmatpush1.bf16.msra.mxu0 0
    %847 = vmatprep.subr.bf16.mxu0 0
    %848 = vmatpush1.bf16.msra.mxu0 0
    %849 = vmatprep.subr.bf16.mxu0 0
    %850 = vmatpush1.bf16.msra.mxu0 0
    %851 = vmatprep.subr.bf16.mxu0 0
    %852 = vmatpush1.bf16.msra.mxu0 0
    %853 = vmatprep.subr.bf16.mxu0 0
    %854 = vmatpush1.bf16.msra.mxu0 0
    %855 = vmatprep.subr.bf16.mxu0 0
    %856 = vmatpush1.bf16.msra.mxu0 0
    %857 = vmatprep.subr.bf16.mxu0 0
    %858 = vmatpush1.bf16.msra.mxu0 0
    %859 = vmatprep.subr.bf16.mxu0 0
    %860 = vmatpush1.bf16.msra.mxu0 0
    %861 = vmatprep.subr.bf16.mxu0 0
    %862 = vmatpush1.bf16.msra.mxu0 0
    %863 = vmatprep.subr.bf16.mxu0 0
    %864 = vmatpush1.bf16.msra.mxu0 0
    %865 = vmatprep.subr.bf16.mxu0 0
    %866 = vmatpush1.bf16.msra.mxu0 0
    %867 = vmatprep.subr.bf16.mxu0 0
    %868 = vmatpush1.bf16.msra.mxu0 0
    %869 = vmatprep.mubr.bf16.mxu0 0
    %870 = vmatmul.mubr.bf16.gmra.mrb[0].mxu0 %v729
    %v871 = vpop.f32.mrb[0].mxu0
    %v872 = vadd.f32 0.0, %v871
    %v873 = vpop.f32.mrb[0].mxu0
    %v874 = vadd.f32 0.0, %v873
    %v875 = vpop.f32.mrb[0].mxu0
    %v876 = vpop.f32.mrb[0].mxu0
    %877 = vdwg.mxu0
    %878 = vmatprep.subr.bf16.mxu0 %v753
    %879 = vmatpush1.bf16.msra.mxu0 %v750
    %880 = vmatprep.subr.bf16.mxu0 0
    %881 = vmatpush1.bf16.msra.mxu0 0
    %882 = vmatprep.subr.bf16.mxu0 0
    %883 = vmatpush1.bf16.msra.mxu0 0
    %884 = vmatprep.subr.bf16.mxu0 0
    %885 = vmatpush1.bf16.msra.mxu0 0
    %886 = vmatprep.subr.bf16.mxu0 0
    %887 = vmatpush1.bf16.msra.mxu0 0
    %888 = vmatprep.subr.bf16.mxu0 0
    %889 = vmatpush1.bf16.msra.mxu0 0
    %890 = vmatprep.subr.bf16.mxu0 0
    %891 = vmatpush1.bf16.msra.mxu0 0
    %892 = vmatprep.subr.bf16.mxu0 0
    %893 = vmatpush1.bf16.msra.mxu0 0
    %894 = vmatprep.subr.bf16.mxu0 0
    %895 = vmatpush1.bf16.msra.mxu0 0
    %896 = vmatprep.subr.bf16.mxu0 0
    %897 = vmatpush1.bf16.msra.mxu0 0
    %898 = vmatprep.subr.bf16.mxu0 0
    %899 = vmatpush1.bf16.msra.mxu0 0
    %900 = vmatprep.subr.bf16.mxu0 0
    %901 = vmatpush1.bf16.msra.mxu0 0
    %902 = vmatprep.subr.bf16.mxu0 0
    %903 = vmatpush1.bf16.msra.mxu0 0
    %904 = vmatprep.subr.bf16.mxu0 0
    %905 = vmatpush1.bf16.msra.mxu0 0
    %906 = vmatprep.subr.bf16.mxu0 0
    %907 = vmatpush1.bf16.msra.mxu0 0
    %908 = vmatprep.subr.bf16.mxu0 0
    %909 = vmatpush1.bf16.msra.mxu0 0
    %910 = vmatprep.mubr.bf16.mxu0 0
    %911 = vmatmul.mubr.bf16.gmra.mrb[0].mxu0 %v729
    %v912 = vpop.f32.mrb[0].mxu0
    %v913 = vadd.f32 0.0, %v912
    %v914 = vpop.f32.mrb[0].mxu0
    %v915 = vadd.f32 0.0, %v914
    %v916 = vpop.f32.mrb[0].mxu0
    %v917 = vpop.f32.mrb[0].mxu0
    %918 = vdwg.mxu0
    %v919 = vadd.f32 %v556, %v790
    %v920 = vadd.f32 %v558, %v792
    %v921 = vadd.f32 %v597, %v831
    %v922 = vadd.f32 %v599, %v833
    %v923 = vadd.f32 %v638, %v872
    %v924 = vadd.f32 %v640, %v874
    %v925 = vadd.f32 %v679, %v913
    %v926 = vadd.f32 %v681, %v915
    %s927 = scalar_lea.vmem %s1, 48
    %v928 = vld [vmem:[%s927] sm:$0xff]
    %v929 = vld [vmem:[%s927 + $0x8] sm:$0xff]
    %v930 = vrot.slane %v220, 3
    %v931 = vrot.slane %v221, 2
    %v932 = vsel %vm223, %v931, %v930
    %v933 = vpack.c.b16 %v932, %v932
    %v936 = vcombine.high %v928, %v928
    %v938 = vunpack.c.l.s4 1983009808
    %v939 = vunpack.c.0.s8 %v938
    %v940 = vlaneseq
    %v941 = vshrl.u32 %v940, 7
    %v942 = vsub.s32 %v939, %v941
    %v943 = vrot.slane %v928, %v942
    %v945 = vunpack.c.l.s4 1983009808
    %v946 = vunpack.c.0.s8 %v945
    %v947 = vlaneseq
    %v948 = vshrl.u32 %v947, 7
    %v949 = vsub.s32 %v946, %v948
    %v950 = vrot.slane %v936, %v949
    %v951 = vcombine.high %v943, %v943
    %v952 = vcombine.high %v950, %v950
    %v953 = vcombine.high %v929, %v929
    %v955 = vunpack.c.l.s4 1983009808
    %v956 = vunpack.c.0.s8 %v955
    %v957 = vlaneseq
    %v958 = vshrl.u32 %v957, 7
    %v959 = vsub.s32 %v956, %v958
    %v960 = vrot.slane %v929, %v959
    %v962 = vunpack.c.l.s4 1983009808
    %v963 = vunpack.c.0.s8 %v962
    %v964 = vlaneseq
    %v965 = vshrl.u32 %v964, 7
    %v966 = vsub.s32 %v963, %v965
    %v967 = vrot.slane %v953, %v966
    %v968 = vcombine.high %v960, %v960
    %v969 = vcombine.high %v967, %v967
    %v971 = vsel %vm262, %v933, 0
    %v974 = vsel %vm266, %v943, 0
    %v977 = vsel %vm266, %v951, 0
    %v980 = vsel %vm266, %v950, 0
    %v983 = vsel %vm266, %v952, 0
    %v986 = vsel %vm266, %v960, 0
    %v989 = vsel %vm266, %v968, 0
    %v992 = vsel %vm266, %v967, 0
    %v995 = vsel %vm266, %v969, 0
    %997 = vmatprep.subr.bf16.mxu0 %v977
    %998 = vmatpush1.bf16.msra.mxu0 %v974
    %999 = vmatprep.subr.bf16.mxu0 0
    %1000 = vmatpush1.bf16.msra.mxu0 0
    %1001 = vmatprep.subr.bf16.mxu0 0
    %1002 = vmatpush1.bf16.msra.mxu0 0
    %1003 = vmatprep.subr.bf16.mxu0 0
    %1004 = vmatpush1.bf16.msra.mxu0 0
    %1005 = vmatprep.subr.bf16.mxu0 0
    %1006 = vmatpush1.bf16.msra.mxu0 0
    %1007 = vmatprep.subr.bf16.mxu0 0
    %1008 = vmatpush1.bf16.msra.mxu0 0
    %1009 = vmatprep.subr.bf16.mxu0 0
    %1010 = vmatpush1.bf16.msra.mxu0 0
    %1011 = vmatprep.subr.bf16.mxu0 0
    %1012 = vmatpush1.bf16.msra.mxu0 0
    %1013 = vmatprep.subr.bf16.mxu0 0
    %1014 = vmatpush1.bf16.msra.mxu0 0
    %1015 = vmatprep.subr.bf16.mxu0 0
    %1016 = vmatpush1.bf16.msra.mxu0 0
    %1017 = vmatprep.subr.bf16.mxu0 0
    %1018 = vmatpush1.bf16.msra.mxu0 0
    %1019 = vmatprep.subr.bf16.mxu0 0
    %1020 = vmatpush1.bf16.msra.mxu0 0
    %1021 = vmatprep.subr.bf16.mxu0 0
    %1022 = vmatpush1.bf16.msra.mxu0 0
    %1023 = vmatprep.subr.bf16.mxu0 0
    %1024 = vmatpush1.bf16.msra.mxu0 0
    %1025 = vmatprep.subr.bf16.mxu0 0
    %1026 = vmatpush1.bf16.msra.mxu0 0
    %1027 = vmatprep.subr.bf16.mxu0 0
    %1028 = vmatpush1.bf16.msra.mxu0 0
    %1029 = vmatprep.mubr.bf16.mxu0 0
    %1030 = vmatmul.mubr.bf16.gmra.mrb[0].mxu0 %v971
    %v1031 = vpop.f32.mrb[0].mxu0
    %v1032 = vadd.f32 0.0, %v1031
    %v1033 = vpop.f32.mrb[0].mxu0
    %v1034 = vadd.f32 0.0, %v1033
    %v1035 = vpop.f32.mrb[0].mxu0
    %v1036 = vpop.f32.mrb[0].mxu0
    %1037 = vdwg.mxu0
    %1038 = vmatprep.subr.bf16.mxu0 %v983
    %1039 = vmatpush1.bf16.msra.mxu0 %v980
    %1040 = vmatprep.subr.bf16.mxu0 0
    %1041 = vmatpush1.bf16.msra.mxu0 0
    %1042 = vmatprep.subr.bf16.mxu0 0
    %1043 = vmatpush1.bf16.msra.mxu0 0
    %1044 = vmatprep.subr.bf16.mxu0 0
    %1045 = vmatpush1.bf16.msra.mxu0 0
    %1046 = vmatprep.subr.bf16.mxu0 0
    %1047 = vmatpush1.bf16.msra.mxu0 0
    %1048 = vmatprep.subr.bf16.mxu0 0
    %1049 = vmatpush1.bf16.msra.mxu0 0
    %1050 = vmatprep.subr.bf16.mxu0 0
    %1051 = vmatpush1.bf16.msra.mxu0 0
    %1052 = vmatprep.subr.bf16.mxu0 0
    %1053 = vmatpush1.bf16.msra.mxu0 0
    %1054 = vmatprep.subr.bf16.mxu0 0
    %1055 = vmatpush1.bf16.msra.mxu0 0
    %1056 = vmatprep.subr.bf16.mxu0 0
    %1057 = vmatpush1.bf16.msra.mxu0 0
    %1058 = vmatprep.subr.bf16.mxu0 0
    %1059 = vmatpush1.bf16.msra.mxu0 0
    %1060 = vmatprep.subr.bf16.mxu0 0
    %1061 = vmatpush1.bf16.msra.mxu0 0
    %1062 = vmatprep.subr.bf16.mxu0 0
    %1063 = vmatpush1.bf16.msra.mxu0 0
    %1064 = vmatprep.subr.bf16.mxu0 0
    %1065 = vmatpush1.bf16.msra.mxu0 0
    %1066 = vmatprep.subr.bf16.mxu0 0
    %1067 = vmatpush1.bf16.msra.mxu0 0
    %1068 = vmatprep.subr.bf16.mxu0 0
    %1069 = vmatpush1.bf16.msra.mxu0 0
    %1070 = vmatprep.mubr.bf16.mxu0 0
    %1071 = vmatmul.mubr.bf16.gmra.mrb[0].mxu0 %v971
    %v1072 = vpop.f32.mrb[0].mxu0
    %v1073 = vadd.f32 0.0, %v1072
    %v1074 = vpop.f32.mrb[0].mxu0
    %v1075 = vadd.f32 0.0, %v1074
    %v1076 = vpop.f32.mrb[0].mxu0
    %v1077 = vpop.f32.mrb[0].mxu0
    %1078 = vdwg.mxu0
    %1079 = vmatprep.subr.bf16.mxu0 %v989
    %1080 = vmatpush1.bf16.msra.mxu0 %v986
    %1081 = vmatprep.subr.bf16.mxu0 0
    %1082 = vmatpush1.bf16.msra.mxu0 0
    %1083 = vmatprep.subr.bf16.mxu0 0
    %1084 = vmatpush1.bf16.msra.mxu0 0
    %1085 = vmatprep.subr.bf16.mxu0 0
    %1086 = vmatpush1.bf16.msra.mxu0 0
    %1087 = vmatprep.subr.bf16.mxu0 0
    %1088 = vmatpush1.bf16.msra.mxu0 0
    %1089 = vmatprep.subr.bf16.mxu0 0
    %1090 = vmatpush1.bf16.msra.mxu0 0
    %1091 = vmatprep.subr.bf16.mxu0 0
    %1092 = vmatpush1.bf16.msra.mxu0 0
    %1093 = vmatprep.subr.bf16.mxu0 0
    %1094 = vmatpush1.bf16.msra.mxu0 0
    %1095 = vmatprep.subr.bf16.mxu0 0
    %1096 = vmatpush1.bf16.msra.mxu0 0
    %1097 = vmatprep.subr.bf16.mxu0 0
    %1098 = vmatpush1.bf16.msra.mxu0 0
    %1099 = vmatprep.subr.bf16.mxu0 0
    %1100 = vmatpush1.bf16.msra.mxu0 0
    %1101 = vmatprep.subr.bf16.mxu0 0
    %1102 = vmatpush1.bf16.msra.mxu0 0
    %1103 = vmatprep.subr.bf16.mxu0 0
    %1104 = vmatpush1.bf16.msra.mxu0 0
    %1105 = vmatprep.subr.bf16.mxu0 0
    %1106 = vmatpush1.bf16.msra.mxu0 0
    %1107 = vmatprep.subr.bf16.mxu0 0
    %1108 = vmatpush1.bf16.msra.mxu0 0
    %1109 = vmatprep.subr.bf16.mxu0 0
    %1110 = vmatpush1.bf16.msra.mxu0 0
    %1111 = vmatprep.mubr.bf16.mxu0 0
    %1112 = vmatmul.mubr.bf16.gmra.mrb[0].mxu0 %v971
    %v1113 = vpop.f32.mrb[0].mxu0
    %v1114 = vadd.f32 0.0, %v1113
    %v1115 = vpop.f32.mrb[0].mxu0
    %v1116 = vadd.f32 0.0, %v1115
    %v1117 = vpop.f32.mrb[0].mxu0
    %v1118 = vpop.f32.mrb[0].mxu0
    %1119 = vdwg.mxu0
    %1120 = vmatprep.subr.bf16.mxu0 %v995
    %1121 = vmatpush1.bf16.msra.mxu0 %v992
    %1122 = vmatprep.subr.bf16.mxu0 0
    %1123 = vmatpush1.bf16.msra.mxu0 0
    %1124 = vmatprep.subr.bf16.mxu0 0
    %1125 = vmatpush1.bf16.msra.mxu0 0
    %1126 = vmatprep.subr.bf16.mxu0 0
    %1127 = vmatpush1.bf16.msra.mxu0 0
    %1128 = vmatprep.subr.bf16.mxu0 0
    %1129 = vmatpush1.bf16.msra.mxu0 0
    %1130 = vmatprep.subr.bf16.mxu0 0
    %1131 = vmatpush1.bf16.msra.mxu0 0
    %1132 = vmatprep.subr.bf16.mxu0 0
    %1133 = vmatpush1.bf16.msra.mxu0 0
    %1134 = vmatprep.subr.bf16.mxu0 0
    %1135 = vmatpush1.bf16.msra.mxu0 0
    %1136 = vmatprep.subr.bf16.mxu0 0
    %1137 = vmatpush1.bf16.msra.mxu0 0
    %1138 = vmatprep.subr.bf16.mxu0 0
    %1139 = vmatpush1.bf16.msra.mxu0 0
    %1140 = vmatprep.subr.bf16.mxu0 0
    %1141 = vmatpush1.bf16.msra.mxu0 0
    %1142 = vmatprep.subr.bf16.mxu0 0
    %1143 = vmatpush1.bf16.msra.mxu0 0
    %1144 = vmatprep.subr.bf16.mxu0 0
    %1145 = vmatpush1.bf16.msra.mxu0 0
    %1146 = vmatprep.subr.bf16.mxu0 0
    %1147 = vmatpush1.bf16.msra.mxu0 0
    %1148 = vmatprep.subr.bf16.mxu0 0
    %1149 = vmatpush1.bf16.msra.mxu0 0
    %1150 = vmatprep.subr.bf16.mxu0 0
    %1151 = vmatpush1.bf16.msra.mxu0 0
    %1152 = vmatprep.mubr.bf16.mxu0 0
    %1153 = vmatmul.mubr.bf16.gmra.mrb[0].mxu0 %v971
    %v1154 = vpop.f32.mrb[0].mxu0
    %v1155 = vadd.f32 0.0, %v1154
    %v1156 = vpop.f32.mrb[0].mxu0
    %v1157 = vadd.f32 0.0, %v1156
    %v1158 = vpop.f32.mrb[0].mxu0
    %v1159 = vpop.f32.mrb[0].mxu0
    %1160 = vdwg.mxu0
    %v1161 = vadd.f32 %v919, %v1032
    %v1162 = vadd.f32 %v920, %v1034
    %v1163 = vadd.f32 %v921, %v1073
    %v1164 = vadd.f32 %v922, %v1075
    %v1165 = vadd.f32 %v923, %v1114
    %v1166 = vadd.f32 %v924, %v1116
    %v1167 = vadd.f32 %v925, %v1155
    %v1168 = vadd.f32 %v926, %v1157
    %s1169 = scalar_lea.vmem %s1, 64
    %v1170 = vld [vmem:[%s1169] sm:$0xff]
    %v1171 = vld [vmem:[%s1169 + $0x8] sm:$0xff]
    %v1172 = vrot.slane %v220, 4
    %v1173 = vrot.slane %v221, 3
    %v1174 = vsel %vm223, %v1173, %v1172
    %v1175 = vpack.c.b16 %v1174, %v1174
    %v1178 = vcombine.high %v1170, %v1170
    %v1180 = vunpack.c.l.s4 1983009808
    %v1181 = vunpack.c.0.s8 %v1180
    %v1182 = vlaneseq
    %v1183 = vshrl.u32 %v1182, 7
    %v1184 = vsub.s32 %v1181, %v1183
    %v1185 = vrot.slane %v1170, %v1184
    %v1187 = vunpack.c.l.s4 1983009808
    %v1188 = vunpack.c.0.s8 %v1187
    %v1189 = vlaneseq
    %v1190 = vshrl.u32 %v1189, 7
    %v1191 = vsub.s32 %v1188, %v1190
    %v1192 = vrot.slane %v1178, %v1191
    %v1193 = vcombine.high %v1185, %v1185
    %v1194 = vcombine.high %v1192, %v1192
    %v1195 = vcombine.high %v1171, %v1171
    %v1197 = vunpack.c.l.s4 1983009808
    %v1198 = vunpack.c.0.s8 %v1197
    %v1199 = vlaneseq
    %v1200 = vshrl.u32 %v1199, 7
    %v1201 = vsub.s32 %v1198, %v1200
    %v1202 = vrot.slane %v1171, %v1201
    %v1204 = vunpack.c.l.s4 1983009808
    %v1205 = vunpack.c.0.s8 %v1204
    %v1206 = vlaneseq
    %v1207 = vshrl.u32 %v1206, 7
    %v1208 = vsub.s32 %v1205, %v1207
    %v1209 = vrot.slane %v1195, %v1208
    %v1210 = vcombine.high %v1202, %v1202
    %v1211 = vcombine.high %v1209, %v1209
    %v1213 = vsel %vm262, %v1175, 0
    %v1216 = vsel %vm266, %v1185, 0
    %v1219 = vsel %vm266, %v1193, 0
    %v1222 = vsel %vm266, %v1192, 0
    %v1225 = vsel %vm266, %v1194, 0
    %v1228 = vsel %vm266, %v1202, 0
    %v1231 = vsel %vm266, %v1210, 0
    %v1234 = vsel %vm266, %v1209, 0
    %v1237 = vsel %vm266, %v1211, 0
    %1239 = vmatprep.subr.bf16.mxu0 %v1219
    %1240 = vmatpush1.bf16.msra.mxu0 %v1216
    %1241 = vmatprep.subr.bf16.mxu0 0
    %1242 = vmatpush1.bf16.msra.mxu0 0
    %1243 = vmatprep.subr.bf16.mxu0 0
    %1244 = vmatpush1.bf16.msra.mxu0 0
    %1245 = vmatprep.subr.bf16.mxu0 0
    %1246 = vmatpush1.bf16.msra.mxu0 0
    %1247 = vmatprep.subr.bf16.mxu0 0
    %1248 = vmatpush1.bf16.msra.mxu0 0
    %1249 = vmatprep.subr.bf16.mxu0 0
    %1250 = vmatpush1.bf16.msra.mxu0 0
    %1251 = vmatprep.subr.bf16.mxu0 0
    %1252 = vmatpush1.bf16.msra.mxu0 0
    %1253 = vmatprep.subr.bf16.mxu0 0
    %1254 = vmatpush1.bf16.msra.mxu0 0
    %1255 = vmatprep.subr.bf16.mxu0 0
    %1256 = vmatpush1.bf16.msra.mxu0 0
    %1257 = vmatprep.subr.bf16.mxu0 0
    %1258 = vmatpush1.bf16.msra.mxu0 0
    %1259 = vmatprep.subr.bf16.mxu0 0
    %1260 = vmatpush1.bf16.msra.mxu0 0
    %1261 = vmatprep.subr.bf16.mxu0 0
    %1262 = vmatpush1.bf16.msra.mxu0 0
    %1263 = vmatprep.subr.bf16.mxu0 0
    %1264 = vmatpush1.bf16.msra.mxu0 0
    %1265 = vmatprep.subr.bf16.mxu0 0
    %1266 = vmatpush1.bf16.msra.mxu0 0
    %1267 = vmatprep.subr.bf16.mxu0 0
    %1268 = vmatpush1.bf16.msra.mxu0 0
    %1269 = vmatprep.subr.bf16.mxu0 0
    %1270 = vmatpush1.bf16.msra.mxu0 0
    %1271 = vmatprep.mubr.bf16.mxu0 0
    %1272 = vmatmul.mubr.bf16.gmra.mrb[0].mxu0 %v1213
    %v1273 = vpop.f32.mrb[0].mxu0
    %v1274 = vadd.f32 0.0, %v1273
    %v1275 = vpop.f32.mrb[0].mxu0
    %v1276 = vadd.f32 0.0, %v1275
    %v1277 = vpop.f32.mrb[0].mxu0
    %v1278 = vpop.f32.mrb[0].mxu0
    %1279 = vdwg.mxu0
    %1280 = vmatprep.subr.bf16.mxu0 %v1225
    %1281 = vmatpush1.bf16.msra.mxu0 %v1222
    %1282 = vmatprep.subr.bf16.mxu0 0
    %1283 = vmatpush1.bf16.msra.mxu0 0
    %1284 = vmatprep.subr.bf16.mxu0 0
    %1285 = vmatpush1.bf16.msra.mxu0 0
    %1286 = vmatprep.subr.bf16.mxu0 0
    %1287 = vmatpush1.bf16.msra.mxu0 0
    %1288 = vmatprep.subr.bf16.mxu0 0
    %1289 = vmatpush1.bf16.msra.mxu0 0
    %1290 = vmatprep.subr.bf16.mxu0 0
    %1291 = vmatpush1.bf16.msra.mxu0 0
    %1292 = vmatprep.subr.bf16.mxu0 0
    %1293 = vmatpush1.bf16.msra.mxu0 0
    %1294 = vmatprep.subr.bf16.mxu0 0
    %1295 = vmatpush1.bf16.msra.mxu0 0
    %1296 = vmatprep.subr.bf16.mxu0 0
    %1297 = vmatpush1.bf16.msra.mxu0 0
    %1298 = vmatprep.subr.bf16.mxu0 0
    %1299 = vmatpush1.bf16.msra.mxu0 0
    %1300 = vmatprep.subr.bf16.mxu0 0
    %1301 = vmatpush1.bf16.msra.mxu0 0
    %1302 = vmatprep.subr.bf16.mxu0 0
    %1303 = vmatpush1.bf16.msra.mxu0 0
    %1304 = vmatprep.subr.bf16.mxu0 0
    %1305 = vmatpush1.bf16.msra.mxu0 0
    %1306 = vmatprep.subr.bf16.mxu0 0
    %1307 = vmatpush1.bf16.msra.mxu0 0
    %1308 = vmatprep.subr.bf16.mxu0 0
    %1309 = vmatpush1.bf16.msra.mxu0 0
    %1310 = vmatprep.subr.bf16.mxu0 0
    %1311 = vmatpush1.bf16.msra.mxu0 0
    %1312 = vmatprep.mubr.bf16.mxu0 0
    %1313 = vmatmul.mubr.bf16.gmra.mrb[0].mxu0 %v1213
    %v1314 = vpop.f32.mrb[0].mxu0
    %v1315 = vadd.f32 0.0, %v1314
    %v1316 = vpop.f32.mrb[0].mxu0
    %v1317 = vadd.f32 0.0, %v1316
    %v1318 = vpop.f32.mrb[0].mxu0
    %v1319 = vpop.f32.mrb[0].mxu0
    %1320 = vdwg.mxu0
    %1321 = vmatprep.subr.bf16.mxu0 %v1231
    %1322 = vmatpush1.bf16.msra.mxu0 %v1228
    %1323 = vmatprep.subr.bf16.mxu0 0
    %1324 = vmatpush1.bf16.msra.mxu0 0
    %1325 = vmatprep.subr.bf16.mxu0 0
    %1326 = vmatpush1.bf16.msra.mxu0 0
    %1327 = vmatprep.subr.bf16.mxu0 0
    %1328 = vmatpush1.bf16.msra.mxu0 0
    %1329 = vmatprep.subr.bf16.mxu0 0
    %1330 = vmatpush1.bf16.msra.mxu0 0
    %1331 = vmatprep.subr.bf16.mxu0 0
    %1332 = vmatpush1.bf16.msra.mxu0 0
    %1333 = vmatprep.subr.bf16.mxu0 0
    %1334 = vmatpush1.bf16.msra.mxu0 0
    %1335 = vmatprep.subr.bf16.mxu0 0
    %1336 = vmatpush1.bf16.msra.mxu0 0
    %1337 = vmatprep.subr.bf16.mxu0 0
    %1338 = vmatpush1.bf16.msra.mxu0 0
    %1339 = vmatprep.subr.bf16.mxu0 0
    %1340 = vmatpush1.bf16.msra.mxu0 0
    %1341 = vmatprep.subr.bf16.mxu0 0
    %1342 = vmatpush1.bf16.msra.mxu0 0
    %1343 = vmatprep.subr.bf16.mxu0 0
    %1344 = vmatpush1.bf16.msra.mxu0 0
    %1345 = vmatprep.subr.bf16.mxu0 0
    %1346 = vmatpush1.bf16.msra.mxu0 0
    %1347 = vmatprep.subr.bf16.mxu0 0
    %1348 = vmatpush1.bf16.msra.mxu0 0
    %1349 = vmatprep.subr.bf16.mxu0 0
    %1350 = vmatpush1.bf16.msra.mxu0 0
    %1351 = vmatprep.subr.bf16.mxu0 0
    %1352 = vmatpush1.bf16.msra.mxu0 0
    %1353 = vmatprep.mubr.bf16.mxu0 0
    %1354 = vmatmul.mubr.bf16.gmra.mrb[0].mxu0 %v1213
    %v1355 = vpop.f32.mrb[0].mxu0
    %v1356 = vadd.f32 0.0, %v1355
    %v1357 = vpop.f32.mrb[0].mxu0
    %v1358 = vadd.f32 0.0, %v1357
    %v1359 = vpop.f32.mrb[0].mxu0
    %v1360 = vpop.f32.mrb[0].mxu0
    %1361 = vdwg.mxu0
    %1362 = vmatprep.subr.bf16.mxu0 %v1237
    %1363 = vmatpush1.bf16.msra.mxu0 %v1234
    %1364 = vmatprep.subr.bf16.mxu0 0
    %1365 = vmatpush1.bf16.msra.mxu0 0
    %1366 = vmatprep.subr.bf16.mxu0 0
    %1367 = vmatpush1.bf16.msra.mxu0 0
    %1368 = vmatprep.subr.bf16.mxu0 0
    %1369 = vmatpush1.bf16.msra.mxu0 0
    %1370 = vmatprep.subr.bf16.mxu0 0
    %1371 = vmatpush1.bf16.msra.mxu0 0
    %1372 = vmatprep.subr.bf16.mxu0 0
    %1373 = vmatpush1.bf16.msra.mxu0 0
    %1374 = vmatprep.subr.bf16.mxu0 0
    %1375 = vmatpush1.bf16.msra.mxu0 0
    %1376 = vmatprep.subr.bf16.mxu0 0
    %1377 = vmatpush1.bf16.msra.mxu0 0
    %1378 = vmatprep.subr.bf16.mxu0 0
    %1379 = vmatpush1.bf16.msra.mxu0 0
    %1380 = vmatprep.subr.bf16.mxu0 0
    %1381 = vmatpush1.bf16.msra.mxu0 0
    %1382 = vmatprep.subr.bf16.mxu0 0
    %1383 = vmatpush1.bf16.msra.mxu0 0
    %1384 = vmatprep.subr.bf16.mxu0 0
    %1385 = vmatpush1.bf16.msra.mxu0 0
    %1386 = vmatprep.subr.bf16.mxu0 0
    %1387 = vmatpush1.bf16.msra.mxu0 0
    %1388 = vmatprep.subr.bf16.mxu0 0
    %1389 = vmatpush1.bf16.msra.mxu0 0
    %1390 = vmatprep.subr.bf16.mxu0 0
    %1391 = vmatpush1.bf16.msra.mxu0 0
    %1392 = vmatprep.subr.bf16.mxu0 0
    %1393 = vmatpush1.bf16.msra.mxu0 0
    %1394 = vmatprep.mubr.bf16.mxu0 0
    %1395 = vmatmul.mubr.bf16.gmra.mrb[0].mxu0 %v1213
    %v1396 = vpop.f32.mrb[0].mxu0
    %v1397 = vadd.f32 0.0, %v1396
    %v1398 = vpop.f32.mrb[0].mxu0
    %v1399 = vadd.f32 0.0, %v1398
    %v1400 = vpop.f32.mrb[0].mxu0
    %v1401 = vpop.f32.mrb[0].mxu0
    %1402 = vdwg.mxu0
    %v1403 = vadd.f32 %v1161, %v1274
    %v1404 = vadd.f32 %v1162, %v1276
    %v1405 = vadd.f32 %v1163, %v1315
    %v1406 = vadd.f32 %v1164, %v1317
    %v1407 = vadd.f32 %v1165, %v1356
    %v1408 = vadd.f32 %v1166, %v1358
    %v1409 = vadd.f32 %v1167, %v1397
    %v1410 = vadd.f32 %v1168, %v1399
    %s1411 = scalar_lea.vmem %s1, 80
    %v1412 = vld [vmem:[%s1411] sm:$0xff]
    %v1413 = vld [vmem:[%s1411 + $0x8] sm:$0xff]
    %v1414 = vrot.slane %v220, 5
    %v1415 = vrot.slane %v221, 4
    %v1416 = vsel %vm223, %v1415, %v1414
    %v1417 = vpack.c.b16 %v1416, %v1416
    %v1420 = vcombine.high %v1412, %v1412
    %v1422 = vunpack.c.l.s4 1983009808
    %v1423 = vunpack.c.0.s8 %v1422
    %v1424 = vlaneseq
    %v1425 = vshrl.u32 %v1424, 7
    %v1426 = vsub.s32 %v1423, %v1425
    %v1427 = vrot.slane %v1412, %v1426
    %v1429 = vunpack.c.l.s4 1983009808
    %v1430 = vunpack.c.0.s8 %v1429
    %v1431 = vlaneseq
    %v1432 = vshrl.u32 %v1431, 7
    %v1433 = vsub.s32 %v1430, %v1432
    %v1434 = vrot.slane %v1420, %v1433
    %v1435 = vcombine.high %v1427, %v1427
    %v1436 = vcombine.high %v1434, %v1434
    %v1437 = vcombine.high %v1413, %v1413
    %v1439 = vunpack.c.l.s4 1983009808
    %v1440 = vunpack.c.0.s8 %v1439
    %v1441 = vlaneseq
    %v1442 = vshrl.u32 %v1441, 7
    %v1443 = vsub.s32 %v1440, %v1442
    %v1444 = vrot.slane %v1413, %v1443
    %v1446 = vunpack.c.l.s4 1983009808
    %v1447 = vunpack.c.0.s8 %v1446
    %v1448 = vlaneseq
    %v1449 = vshrl.u32 %v1448, 7
    %v1450 = vsub.s32 %v1447, %v1449
    %v1451 = vrot.slane %v1437, %v1450
    %v1452 = vcombine.high %v1444, %v1444
    %v1453 = vcombine.high %v1451, %v1451
    %v1455 = vsel %vm262, %v1417, 0
    %v1458 = vsel %vm266, %v1427, 0
    %v1461 = vsel %vm266, %v1435, 0
    %v1464 = vsel %vm266, %v1434, 0
    %v1467 = vsel %vm266, %v1436, 0
    %v1470 = vsel %vm266, %v1444, 0
    %v1473 = vsel %vm266, %v1452, 0
    %v1476 = vsel %vm266, %v1451, 0
    %v1479 = vsel %vm266, %v1453, 0
    %1481 = vmatprep.subr.bf16.mxu0 %v1461
    %1482 = vmatpush1.bf16.msra.mxu0 %v1458
    %1483 = vmatprep.subr.bf16.mxu0 0
    %1484 = vmatpush1.bf16.msra.mxu0 0
    %1485 = vmatprep.subr.bf16.mxu0 0
    %1486 = vmatpush1.bf16.msra.mxu0 0
    %1487 = vmatprep.subr.bf16.mxu0 0
    %1488 = vmatpush1.bf16.msra.mxu0 0
    %1489 = vmatprep.subr.bf16.mxu0 0
    %1490 = vmatpush1.bf16.msra.mxu0 0
    %1491 = vmatprep.subr.bf16.mxu0 0
    %1492 = vmatpush1.bf16.msra.mxu0 0
    %1493 = vmatprep.subr.bf16.mxu0 0
    %1494 = vmatpush1.bf16.msra.mxu0 0
    %1495 = vmatprep.subr.bf16.mxu0 0
    %1496 = vmatpush1.bf16.msra.mxu0 0
    %1497 = vmatprep.subr.bf16.mxu0 0
    %1498 = vmatpush1.bf16.msra.mxu0 0
    %1499 = vmatprep.subr.bf16.mxu0 0
    %1500 = vmatpush1.bf16.msra.mxu0 0
    %1501 = vmatprep.subr.bf16.mxu0 0
    %1502 = vmatpush1.bf16.msra.mxu0 0
    %1503 = vmatprep.subr.bf16.mxu0 0
    %1504 = vmatpush1.bf16.msra.mxu0 0
    %1505 = vmatprep.subr.bf16.mxu0 0
    %1506 = vmatpush1.bf16.msra.mxu0 0
    %1507 = vmatprep.subr.bf16.mxu0 0
    %1508 = vmatpush1.bf16.msra.mxu0 0
    %1509 = vmatprep.subr.bf16.mxu0 0
    %1510 = vmatpush1.bf16.msra.mxu0 0
    %1511 = vmatprep.subr.bf16.mxu0 0
    %1512 = vmatpush1.bf16.msra.mxu0 0
    %1513 = vmatprep.mubr.bf16.mxu0 0
    %1514 = vmatmul.mubr.bf16.gmra.mrb[0].mxu0 %v1455
    %v1515 = vpop.f32.mrb[0].mxu0
    %v1516 = vadd.f32 0.0, %v1515
    %v1517 = vpop.f32.mrb[0].mxu0
    %v1518 = vadd.f32 0.0, %v1517
    %v1519 = vpop.f32.mrb[0].mxu0
    %v1520 = vpop.f32.mrb[0].mxu0
    %1521 = vdwg.mxu0
    %1522 = vmatprep.subr.bf16.mxu0 %v1467
    %1523 = vmatpush1.bf16.msra.mxu0 %v1464
    %1524 = vmatprep.subr.bf16.mxu0 0
    %1525 = vmatpush1.bf16.msra.mxu0 0
    %1526 = vmatprep.subr.bf16.mxu0 0
    %1527 = vmatpush1.bf16.msra.mxu0 0
    %1528 = vmatprep.subr.bf16.mxu0 0
    %1529 = vmatpush1.bf16.msra.mxu0 0
    %1530 = vmatprep.subr.bf16.mxu0 0
    %1531 = vmatpush1.bf16.msra.mxu0 0
    %1532 = vmatprep.subr.bf16.mxu0 0
    %1533 = vmatpush1.bf16.msra.mxu0 0
    %1534 = vmatprep.subr.bf16.mxu0 0
    %1535 = vmatpush1.bf16.msra.mxu0 0
    %1536 = vmatprep.subr.bf16.mxu0 0
    %1537 = vmatpush1.bf16.msra.mxu0 0
    %1538 = vmatprep.subr.bf16.mxu0 0
    %1539 = vmatpush1.bf16.msra.mxu0 0
    %1540 = vmatprep.subr.bf16.mxu0 0
    %1541 = vmatpush1.bf16.msra.mxu0 0
    %1542 = vmatprep.subr.bf16.mxu0 0
    %1543 = vmatpush1.bf16.msra.mxu0 0
    %1544 = vmatprep.subr.bf16.mxu0 0
    %1545 = vmatpush1.bf16.msra.mxu0 0
    %1546 = vmatprep.subr.bf16.mxu0 0
    %1547 = vmatpush1.bf16.msra.mxu0 0
    %1548 = vmatprep.subr.bf16.mxu0 0
    %1549 = vmatpush1.bf16.msra.mxu0 0
    %1550 = vmatprep.subr.bf16.mxu0 0
    %1551 = vmatpush1.bf16.msra.mxu0 0
    %1552 = vmatprep.subr.bf16.mxu0 0
    %1553 = vmatpush1.bf16.msra.mxu0 0
    %1554 = vmatprep.mubr.bf16.mxu0 0
    %1555 = vmatmul.mubr.bf16.gmra.mrb[0].mxu0 %v1455
    %v1556 = vpop.f32.mrb[0].mxu0
    %v1557 = vadd.f32 0.0, %v1556
    %v1558 = vpop.f32.mrb[0].mxu0
    %v1559 = vadd.f32 0.0, %v1558
    %v1560 = vpop.f32.mrb[0].mxu0
    %v1561 = vpop.f32.mrb[0].mxu0
    %1562 = vdwg.mxu0
    %1563 = vmatprep.subr.bf16.mxu0 %v1473
    %1564 = vmatpush1.bf16.msra.mxu0 %v1470
    %1565 = vmatprep.subr.bf16.mxu0 0
    %1566 = vmatpush1.bf16.msra.mxu0 0
    %1567 = vmatprep.subr.bf16.mxu0 0
    %1568 = vmatpush1.bf16.msra.mxu0 0
    %1569 = vmatprep.subr.bf16.mxu0 0
    %1570 = vmatpush1.bf16.msra.mxu0 0
    %1571 = vmatprep.subr.bf16.mxu0 0
    %1572 = vmatpush1.bf16.msra.mxu0 0
    %1573 = vmatprep.subr.bf16.mxu0 0
    %1574 = vmatpush1.bf16.msra.mxu0 0
    %1575 = vmatprep.subr.bf16.mxu0 0
    %1576 = vmatpush1.bf16.msra.mxu0 0
    %1577 = vmatprep.subr.bf16.mxu0 0
    %1578 = vmatpush1.bf16.msra.mxu0 0
    %1579 = vmatprep.subr.bf16.mxu0 0
    %1580 = vmatpush1.bf16.msra.mxu0 0
    %1581 = vmatprep.subr.bf16.mxu0 0
    %1582 = vmatpush1.bf16.msra.mxu0 0
    %1583 = vmatprep.subr.bf16.mxu0 0
    %1584 = vmatpush1.bf16.msra.mxu0 0
    %1585 = vmatprep.subr.bf16.mxu0 0
    %1586 = vmatpush1.bf16.msra.mxu0 0
    %1587 = vmatprep.subr.bf16.mxu0 0
    %1588 = vmatpush1.bf16.msra.mxu0 0
    %1589 = vmatprep.subr.bf16.mxu0 0
    %1590 = vmatpush1.bf16.msra.mxu0 0
    %1591 = vmatprep.subr.bf16.mxu0 0
    %1592 = vmatpush1.bf16.msra.mxu0 0
    %1593 = vmatprep.subr.bf16.mxu0 0
    %1594 = vmatpush1.bf16.msra.mxu0 0
    %1595 = vmatprep.mubr.bf16.mxu0 0
    %1596 = vmatmul.mubr.bf16.gmra.mrb[0].mxu0 %v1455
    %v1597 = vpop.f32.mrb[0].mxu0
    %v1598 = vadd.f32 0.0, %v1597
    %v1599 = vpop.f32.mrb[0].mxu0
    %v1600 = vadd.f32 0.0, %v1599
    %v1601 = vpop.f32.mrb[0].mxu0
    %v1602 = vpop.f32.mrb[0].mxu0
    %1603 = vdwg.mxu0
    %1604 = vmatprep.subr.bf16.mxu0 %v1479
    %1605 = vmatpush1.bf16.msra.mxu0 %v1476
    %1606 = vmatprep.subr.bf16.mxu0 0
    %1607 = vmatpush1.bf16.msra.mxu0 0
    %1608 = vmatprep.subr.bf16.mxu0 0
    %1609 = vmatpush1.bf16.msra.mxu0 0
    %1610 = vmatprep.subr.bf16.mxu0 0
    %1611 = vmatpush1.bf16.msra.mxu0 0
    %1612 = vmatprep.subr.bf16.mxu0 0
    %1613 = vmatpush1.bf16.msra.mxu0 0
    %1614 = vmatprep.subr.bf16.mxu0 0
    %1615 = vmatpush1.bf16.msra.mxu0 0
    %1616 = vmatprep.subr.bf16.mxu0 0
    %1617 = vmatpush1.bf16.msra.mxu0 0
    %1618 = vmatprep.subr.bf16.mxu0 0
    %1619 = vmatpush1.bf16.msra.mxu0 0
    %1620 = vmatprep.subr.bf16.mxu0 0
    %1621 = vmatpush1.bf16.msra.mxu0 0
    %1622 = vmatprep.subr.bf16.mxu0 0
    %1623 = vmatpush1.bf16.msra.mxu0 0
    %1624 = vmatprep.subr.bf16.mxu0 0
    %1625 = vmatpush1.bf16.msra.mxu0 0
    %1626 = vmatprep.subr.bf16.mxu0 0
    %1627 = vmatpush1.bf16.msra.mxu0 0
    %1628 = vmatprep.subr.bf16.mxu0 0
    %1629 = vmatpush1.bf16.msra.mxu0 0
    %1630 = vmatprep.subr.bf16.mxu0 0
    %1631 = vmatpush1.bf16.msra.mxu0 0
    %1632 = vmatprep.subr.bf16.mxu0 0
    %1633 = vmatpush1.bf16.msra.mxu0 0
    %1634 = vmatprep.subr.bf16.mxu0 0
    %1635 = vmatpush1.bf16.msra.mxu0 0
    %1636 = vmatprep.mubr.bf16.mxu0 0
    %1637 = vmatmul.mubr.bf16.gmra.mrb[0].mxu0 %v1455
    %v1638 = vpop.f32.mrb[0].mxu0
    %v1639 = vadd.f32 0.0, %v1638
    %v1640 = vpop.f32.mrb[0].mxu0
    %v1641 = vadd.f32 0.0, %v1640
    %v1642 = vpop.f32.mrb[0].mxu0
    %v1643 = vpop.f32.mrb[0].mxu0
    %1644 = vdwg.mxu0
    %v1645 = vadd.f32 %v1403, %v1516
    %v1646 = vadd.f32 %v1404, %v1518
    %v1647 = vadd.f32 %v1405, %v1557
    %v1648 = vadd.f32 %v1406, %v1559
    %v1649 = vadd.f32 %v1407, %v1598
    %v1650 = vadd.f32 %v1408, %v1600
    %v1651 = vadd.f32 %v1409, %v1639
    %v1652 = vadd.f32 %v1410, %v1641
    %s1653 = scalar_lea.vmem %s1, 96
    %v1654 = vld [vmem:[%s1653] sm:$0xff]
    %v1655 = vld [vmem:[%s1653 + $0x8] sm:$0xff]
    %v1656 = vrot.slane %v220, 6
    %v1657 = vrot.slane %v221, 5
    %v1658 = vsel %vm223, %v1657, %v1656
    %v1659 = vpack.c.b16 %v1658, %v1658
    %v1662 = vcombine.high %v1654, %v1654
    %v1664 = vunpack.c.l.s4 1983009808
    %v1665 = vunpack.c.0.s8 %v1664
    %v1666 = vlaneseq
    %v1667 = vshrl.u32 %v1666, 7
    %v1668 = vsub.s32 %v1665, %v1667
    %v1669 = vrot.slane %v1654, %v1668
    %v1671 = vunpack.c.l.s4 1983009808
    %v1672 = vunpack.c.0.s8 %v1671
    %v1673 = vlaneseq
    %v1674 = vshrl.u32 %v1673, 7
    %v1675 = vsub.s32 %v1672, %v1674
    %v1676 = vrot.slane %v1662, %v1675
    %v1677 = vcombine.high %v1669, %v1669
    %v1678 = vcombine.high %v1676, %v1676
    %v1679 = vcombine.high %v1655, %v1655
    %v1681 = vunpack.c.l.s4 1983009808
    %v1682 = vunpack.c.0.s8 %v1681
    %v1683 = vlaneseq
    %v1684 = vshrl.u32 %v1683, 7
    %v1685 = vsub.s32 %v1682, %v1684
    %v1686 = vrot.slane %v1655, %v1685
    %v1688 = vunpack.c.l.s4 1983009808
    %v1689 = vunpack.c.0.s8 %v1688
    %v1690 = vlaneseq
    %v1691 = vshrl.u32 %v1690, 7
    %v1692 = vsub.s32 %v1689, %v1691
    %v1693 = vrot.slane %v1679, %v1692
    %v1694 = vcombine.high %v1686, %v1686
    %v1695 = vcombine.high %v1693, %v1693
    %v1697 = vsel %vm262, %v1659, 0
    %v1700 = vsel %vm266, %v1669, 0
    %v1703 = vsel %vm266, %v1677, 0
    %v1706 = vsel %vm266, %v1676, 0
    %v1709 = vsel %vm266, %v1678, 0
    %v1712 = vsel %vm266, %v1686, 0
    %v1715 = vsel %vm266, %v1694, 0
    %v1718 = vsel %vm266, %v1693, 0
    %v1721 = vsel %vm266, %v1695, 0
    %1723 = vmatprep.subr.bf16.mxu0 %v1703
    %1724 = vmatpush1.bf16.msra.mxu0 %v1700
    %1725 = vmatprep.subr.bf16.mxu0 0
    %1726 = vmatpush1.bf16.msra.mxu0 0
    %1727 = vmatprep.subr.bf16.mxu0 0
    %1728 = vmatpush1.bf16.msra.mxu0 0
    %1729 = vmatprep.subr.bf16.mxu0 0
    %1730 = vmatpush1.bf16.msra.mxu0 0
    %1731 = vmatprep.subr.bf16.mxu0 0
    %1732 = vmatpush1.bf16.msra.mxu0 0
    %1733 = vmatprep.subr.bf16.mxu0 0
    %1734 = vmatpush1.bf16.msra.mxu0 0
    %1735 = vmatprep.subr.bf16.mxu0 0
    %1736 = vmatpush1.bf16.msra.mxu0 0
    %1737 = vmatprep.subr.bf16.mxu0 0
    %1738 = vmatpush1.bf16.msra.mxu0 0
    %1739 = vmatprep.subr.bf16.mxu0 0
    %1740 = vmatpush1.bf16.msra.mxu0 0
    %1741 = vmatprep.subr.bf16.mxu0 0
    %1742 = vmatpush1.bf16.msra.mxu0 0
    %1743 = vmatprep.subr.bf16.mxu0 0
    %1744 = vmatpush1.bf16.msra.mxu0 0
    %1745 = vmatprep.subr.bf16.mxu0 0
    %1746 = vmatpush1.bf16.msra.mxu0 0
    %1747 = vmatprep.subr.bf16.mxu0 0
    %1748 = vmatpush1.bf16.msra.mxu0 0
    %1749 = vmatprep.subr.bf16.mxu0 0
    %1750 = vmatpush1.bf16.msra.mxu0 0
    %1751 = vmatprep.subr.bf16.mxu0 0
    %1752 = vmatpush1.bf16.msra.mxu0 0
    %1753 = vmatprep.subr.bf16.mxu0 0
    %1754 = vmatpush1.bf16.msra.mxu0 0
    %1755 = vmatprep.mubr.bf16.mxu0 0
    %1756 = vmatmul.mubr.bf16.gmra.mrb[0].mxu0 %v1697
    %v1757 = vpop.f32.mrb[0].mxu0
    %v1758 = vadd.f32 0.0, %v1757
    %v1759 = vpop.f32.mrb[0].mxu0
    %v1760 = vadd.f32 0.0, %v1759
    %v1761 = vpop.f32.mrb[0].mxu0
    %v1762 = vpop.f32.mrb[0].mxu0
    %1763 = vdwg.mxu0
    %1764 = vmatprep.subr.bf16.mxu0 %v1709
    %1765 = vmatpush1.bf16.msra.mxu0 %v1706
    %1766 = vmatprep.subr.bf16.mxu0 0
    %1767 = vmatpush1.bf16.msra.mxu0 0
    %1768 = vmatprep.subr.bf16.mxu0 0
    %1769 = vmatpush1.bf16.msra.mxu0 0
    %1770 = vmatprep.subr.bf16.mxu0 0
    %1771 = vmatpush1.bf16.msra.mxu0 0
    %1772 = vmatprep.subr.bf16.mxu0 0
    %1773 = vmatpush1.bf16.msra.mxu0 0
    %1774 = vmatprep.subr.bf16.mxu0 0
    %1775 = vmatpush1.bf16.msra.mxu0 0
    %1776 = vmatprep.subr.bf16.mxu0 0
    %1777 = vmatpush1.bf16.msra.mxu0 0
    %1778 = vmatprep.subr.bf16.mxu0 0
    %1779 = vmatpush1.bf16.msra.mxu0 0
    %1780 = vmatprep.subr.bf16.mxu0 0
    %1781 = vmatpush1.bf16.msra.mxu0 0
    %1782 = vmatprep.subr.bf16.mxu0 0
    %1783 = vmatpush1.bf16.msra.mxu0 0
    %1784 = vmatprep.subr.bf16.mxu0 0
    %1785 = vmatpush1.bf16.msra.mxu0 0
    %1786 = vmatprep.subr.bf16.mxu0 0
    %1787 = vmatpush1.bf16.msra.mxu0 0
    %1788 = vmatprep.subr.bf16.mxu0 0
    %1789 = vmatpush1.bf16.msra.mxu0 0
    %1790 = vmatprep.subr.bf16.mxu0 0
    %1791 = vmatpush1.bf16.msra.mxu0 0
    %1792 = vmatprep.subr.bf16.mxu0 0
    %1793 = vmatpush1.bf16.msra.mxu0 0
    %1794 = vmatprep.subr.bf16.mxu0 0
    %1795 = vmatpush1.bf16.msra.mxu0 0
    %1796 = vmatprep.mubr.bf16.mxu0 0
    %1797 = vmatmul.mubr.bf16.gmra.mrb[0].mxu0 %v1697
    %v1798 = vpop.f32.mrb[0].mxu0
    %v1799 = vadd.f32 0.0, %v1798
    %v1800 = vpop.f32.mrb[0].mxu0
    %v1801 = vadd.f32 0.0, %v1800
    %v1802 = vpop.f32.mrb[0].mxu0
    %v1803 = vpop.f32.mrb[0].mxu0
    %1804 = vdwg.mxu0
    %1805 = vmatprep.subr.bf16.mxu0 %v1715
    %1806 = vmatpush1.bf16.msra.mxu0 %v1712
    %1807 = vmatprep.subr.bf16.mxu0 0
    %1808 = vmatpush1.bf16.msra.mxu0 0
    %1809 = vmatprep.subr.bf16.mxu0 0
    %1810 = vmatpush1.bf16.msra.mxu0 0
    %1811 = vmatprep.subr.bf16.mxu0 0
    %1812 = vmatpush1.bf16.msra.mxu0 0
    %1813 = vmatprep.subr.bf16.mxu0 0
    %1814 = vmatpush1.bf16.msra.mxu0 0
    %1815 = vmatprep.subr.bf16.mxu0 0
    %1816 = vmatpush1.bf16.msra.mxu0 0
    %1817 = vmatprep.subr.bf16.mxu0 0
    %1818 = vmatpush1.bf16.msra.mxu0 0
    %1819 = vmatprep.subr.bf16.mxu0 0
    %1820 = vmatpush1.bf16.msra.mxu0 0
    %1821 = vmatprep.subr.bf16.mxu0 0
    %1822 = vmatpush1.bf16.msra.mxu0 0
    %1823 = vmatprep.subr.bf16.mxu0 0
    %1824 = vmatpush1.bf16.msra.mxu0 0
    %1825 = vmatprep.subr.bf16.mxu0 0
    %1826 = vmatpush1.bf16.msra.mxu0 0
    %1827 = vmatprep.subr.bf16.mxu0 0
    %1828 = vmatpush1.bf16.msra.mxu0 0
    %1829 = vmatprep.subr.bf16.mxu0 0
    %1830 = vmatpush1.bf16.msra.mxu0 0
    %1831 = vmatprep.subr.bf16.mxu0 0
    %1832 = vmatpush1.bf16.msra.mxu0 0
    %1833 = vmatprep.subr.bf16.mxu0 0
    %1834 = vmatpush1.bf16.msra.mxu0 0
    %1835 = vmatprep.subr.bf16.mxu0 0
    %1836 = vmatpush1.bf16.msra.mxu0 0
    %1837 = vmatprep.mubr.bf16.mxu0 0
    %1838 = vmatmul.mubr.bf16.gmra.mrb[0].mxu0 %v1697
    %v1839 = vpop.f32.mrb[0].mxu0
    %v1840 = vadd.f32 0.0, %v1839
    %v1841 = vpop.f32.mrb[0].mxu0
    %v1842 = vadd.f32 0.0, %v1841
    %v1843 = vpop.f32.mrb[0].mxu0
    %v1844 = vpop.f32.mrb[0].mxu0
    %1845 = vdwg.mxu0
    %1846 = vmatprep.subr.bf16.mxu0 %v1721
    %1847 = vmatpush1.bf16.msra.mxu0 %v1718
    %1848 = vmatprep.subr.bf16.mxu0 0
    %1849 = vmatpush1.bf16.msra.mxu0 0
    %1850 = vmatprep.subr.bf16.mxu0 0
    %1851 = vmatpush1.bf16.msra.mxu0 0
    %1852 = vmatprep.subr.bf16.mxu0 0
    %1853 = vmatpush1.bf16.msra.mxu0 0
    %1854 = vmatprep.subr.bf16.mxu0 0
    %1855 = vmatpush1.bf16.msra.mxu0 0
    %1856 = vmatprep.subr.bf16.mxu0 0
    %1857 = vmatpush1.bf16.msra.mxu0 0
    %1858 = vmatprep.subr.bf16.mxu0 0
    %1859 = vmatpush1.bf16.msra.mxu0 0
    %1860 = vmatprep.subr.bf16.mxu0 0
    %1861 = vmatpush1.bf16.msra.mxu0 0
    %1862 = vmatprep.subr.bf16.mxu0 0
    %1863 = vmatpush1.bf16.msra.mxu0 0
    %1864 = vmatprep.subr.bf16.mxu0 0
    %1865 = vmatpush1.bf16.msra.mxu0 0
    %1866 = vmatprep.subr.bf16.mxu0 0
    %1867 = vmatpush1.bf16.msra.mxu0 0
    %1868 = vmatprep.subr.bf16.mxu0 0
    %1869 = vmatpush1.bf16.msra.mxu0 0
    %1870 = vmatprep.subr.bf16.mxu0 0
    %1871 = vmatpush1.bf16.msra.mxu0 0
    %1872 = vmatprep.subr.bf16.mxu0 0
    %1873 = vmatpush1.bf16.msra.mxu0 0
    %1874 = vmatprep.subr.bf16.mxu0 0
    %1875 = vmatpush1.bf16.msra.mxu0 0
    %1876 = vmatprep.subr.bf16.mxu0 0
    %1877 = vmatpush1.bf16.msra.mxu0 0
    %1878 = vmatprep.mubr.bf16.mxu0 0
    %1879 = vmatmul.mubr.bf16.gmra.mrb[0].mxu0 %v1697
    %v1880 = vpop.f32.mrb[0].mxu0
    %v1881 = vadd.f32 0.0, %v1880
    %v1882 = vpop.f32.mrb[0].mxu0
    %v1883 = vadd.f32 0.0, %v1882
    %v1884 = vpop.f32.mrb[0].mxu0
    %v1885 = vpop.f32.mrb[0].mxu0
    %1886 = vdwg.mxu0
    %v1887 = vadd.f32 %v1645, %v1758
    %v1888 = vadd.f32 %v1646, %v1760
    %v1889 = vadd.f32 %v1647, %v1799
    %v1890 = vadd.f32 %v1648, %v1801
    %v1891 = vadd.f32 %v1649, %v1840
    %v1892 = vadd.f32 %v1650, %v1842
    %v1893 = vadd.f32 %v1651, %v1881
    %v1894 = vadd.f32 %v1652, %v1883
    %s1895 = scalar_lea.vmem %s1, 112
    %v1896 = vld [vmem:[%s1895] sm:$0xff]
    %v1897 = vld [vmem:[%s1895 + $0x8] sm:$0xff]
    %v1898 = vrot.slane %v220, 7
    %v1899 = vrot.slane %v221, 6
    %v1900 = vsel %vm223, %v1899, %v1898
    %v1901 = vpack.c.b16 %v1900, %v1900
    %v1904 = vcombine.high %v1896, %v1896
    %v1906 = vunpack.c.l.s4 1983009808
    %v1907 = vunpack.c.0.s8 %v1906
    %v1908 = vlaneseq
    %v1909 = vshrl.u32 %v1908, 7
    %v1910 = vsub.s32 %v1907, %v1909
    %v1911 = vrot.slane %v1896, %v1910
    %v1913 = vunpack.c.l.s4 1983009808
    %v1914 = vunpack.c.0.s8 %v1913
    %v1915 = vlaneseq
    %v1916 = vshrl.u32 %v1915, 7
    %v1917 = vsub.s32 %v1914, %v1916
    %v1918 = vrot.slane %v1904, %v1917
    %v1919 = vcombine.high %v1911, %v1911
    %v1920 = vcombine.high %v1918, %v1918
    %v1921 = vcombine.high %v1897, %v1897
    %v1923 = vunpack.c.l.s4 1983009808
    %v1924 = vunpack.c.0.s8 %v1923
    %v1925 = vlaneseq
    %v1926 = vshrl.u32 %v1925, 7
    %v1927 = vsub.s32 %v1924, %v1926
    %v1928 = vrot.slane %v1897, %v1927
    %v1930 = vunpack.c.l.s4 1983009808
    %v1931 = vunpack.c.0.s8 %v1930
    %v1932 = vlaneseq
    %v1933 = vshrl.u32 %v1932, 7
    %v1934 = vsub.s32 %v1931, %v1933
    %v1935 = vrot.slane %v1921, %v1934
    %v1936 = vcombine.high %v1928, %v1928
    %v1937 = vcombine.high %v1935, %v1935
    %v1939 = vsel %vm262, %v1901, 0
    %v1942 = vsel %vm266, %v1911, 0
    %v1945 = vsel %vm266, %v1919, 0
    %v1948 = vsel %vm266, %v1918, 0
    %v1951 = vsel %vm266, %v1920, 0
    %v1954 = vsel %vm266, %v1928, 0
    %v1957 = vsel %vm266, %v1936, 0
    %v1960 = vsel %vm266, %v1935, 0
    %v1963 = vsel %vm266, %v1937, 0
    %1965 = vmatprep.subr.bf16.mxu0 %v1945
    %1966 = vmatpush1.bf16.msra.mxu0 %v1942
    %1967 = vmatprep.subr.bf16.mxu0 0
    %1968 = vmatpush1.bf16.msra.mxu0 0
    %1969 = vmatprep.subr.bf16.mxu0 0
    %1970 = vmatpush1.bf16.msra.mxu0 0
    %1971 = vmatprep.subr.bf16.mxu0 0
    %1972 = vmatpush1.bf16.msra.mxu0 0
    %1973 = vmatprep.subr.bf16.mxu0 0
    %1974 = vmatpush1.bf16.msra.mxu0 0
    %1975 = vmatprep.subr.bf16.mxu0 0
    %1976 = vmatpush1.bf16.msra.mxu0 0
    %1977 = vmatprep.subr.bf16.mxu0 0
    %1978 = vmatpush1.bf16.msra.mxu0 0
    %1979 = vmatprep.subr.bf16.mxu0 0
    %1980 = vmatpush1.bf16.msra.mxu0 0
    %1981 = vmatprep.subr.bf16.mxu0 0
    %1982 = vmatpush1.bf16.msra.mxu0 0
    %1983 = vmatprep.subr.bf16.mxu0 0
    %1984 = vmatpush1.bf16.msra.mxu0 0
    %1985 = vmatprep.subr.bf16.mxu0 0
    %1986 = vmatpush1.bf16.msra.mxu0 0
    %1987 = vmatprep.subr.bf16.mxu0 0
    %1988 = vmatpush1.bf16.msra.mxu0 0
    %1989 = vmatprep.subr.bf16.mxu0 0
    %1990 = vmatpush1.bf16.msra.mxu0 0
    %1991 = vmatprep.subr.bf16.mxu0 0
    %1992 = vmatpush1.bf16.msra.mxu0 0
    %1993 = vmatprep.subr.bf16.mxu0 0
    %1994 = vmatpush1.bf16.msra.mxu0 0
    %1995 = vmatprep.subr.bf16.mxu0 0
    %1996 = vmatpush1.bf16.msra.mxu0 0
    %1997 = vmatprep.mubr.bf16.mxu0 0
    %1998 = vmatmul.mubr.bf16.gmra.mrb[0].mxu0 %v1939
    %v1999 = vpop.f32.mrb[0].mxu0
    %v2000 = vadd.f32 0.0, %v1999
    %v2001 = vpop.f32.mrb[0].mxu0
    %v2002 = vadd.f32 0.0, %v2001
    %v2003 = vpop.f32.mrb[0].mxu0
    %v2004 = vpop.f32.mrb[0].mxu0
    %2005 = vdwg.mxu0
    %2006 = vmatprep.subr.bf16.mxu0 %v1951
    %2007 = vmatpush1.bf16.msra.mxu0 %v1948
    %2008 = vmatprep.subr.bf16.mxu0 0
    %2009 = vmatpush1.bf16.msra.mxu0 0
    %2010 = vmatprep.subr.bf16.mxu0 0
    %2011 = vmatpush1.bf16.msra.mxu0 0
    %2012 = vmatprep.subr.bf16.mxu0 0
    %2013 = vmatpush1.bf16.msra.mxu0 0
    %2014 = vmatprep.subr.bf16.mxu0 0
    %2015 = vmatpush1.bf16.msra.mxu0 0
    %2016 = vmatprep.subr.bf16.mxu0 0
    %2017 = vmatpush1.bf16.msra.mxu0 0
    %2018 = vmatprep.subr.bf16.mxu0 0
    %2019 = vmatpush1.bf16.msra.mxu0 0
    %2020 = vmatprep.subr.bf16.mxu0 0
    %2021 = vmatpush1.bf16.msra.mxu0 0
    %2022 = vmatprep.subr.bf16.mxu0 0
    %2023 = vmatpush1.bf16.msra.mxu0 0
    %2024 = vmatprep.subr.bf16.mxu0 0
    %2025 = vmatpush1.bf16.msra.mxu0 0
    %2026 = vmatprep.subr.bf16.mxu0 0
    %2027 = vmatpush1.bf16.msra.mxu0 0
    %2028 = vmatprep.subr.bf16.mxu0 0
    %2029 = vmatpush1.bf16.msra.mxu0 0
    %2030 = vmatprep.subr.bf16.mxu0 0
    %2031 = vmatpush1.bf16.msra.mxu0 0
    %2032 = vmatprep.subr.bf16.mxu0 0
    %2033 = vmatpush1.bf16.msra.mxu0 0
    %2034 = vmatprep.subr.bf16.mxu0 0
    %2035 = vmatpush1.bf16.msra.mxu0 0
    %2036 = vmatprep.subr.bf16.mxu0 0
    %2037 = vmatpush1.bf16.msra.mxu0 0
    %2038 = vmatprep.mubr.bf16.mxu0 0
    %2039 = vmatmul.mubr.bf16.gmra.mrb[0].mxu0 %v1939
    %v2040 = vpop.f32.mrb[0].mxu0
    %v2041 = vadd.f32 0.0, %v2040
    %v2042 = vpop.f32.mrb[0].mxu0
    %v2043 = vadd.f32 0.0, %v2042
    %v2044 = vpop.f32.mrb[0].mxu0
    %v2045 = vpop.f32.mrb[0].mxu0
    %2046 = vdwg.mxu0
    %2047 = vmatprep.subr.bf16.mxu0 %v1957
    %2048 = vmatpush1.bf16.msra.mxu0 %v1954
    %2049 = vmatprep.subr.bf16.mxu0 0
    %2050 = vmatpush1.bf16.msra.mxu0 0
    %2051 = vmatprep.subr.bf16.mxu0 0
    %2052 = vmatpush1.bf16.msra.mxu0 0
    %2053 = vmatprep.subr.bf16.mxu0 0
    %2054 = vmatpush1.bf16.msra.mxu0 0
    %2055 = vmatprep.subr.bf16.mxu0 0
    %2056 = vmatpush1.bf16.msra.mxu0 0
    %2057 = vmatprep.subr.bf16.mxu0 0
    %2058 = vmatpush1.bf16.msra.mxu0 0
    %2059 = vmatprep.subr.bf16.mxu0 0
    %2060 = vmatpush1.bf16.msra.mxu0 0
    %2061 = vmatprep.subr.bf16.mxu0 0
    %2062 = vmatpush1.bf16.msra.mxu0 0
    %2063 = vmatprep.subr.bf16.mxu0 0
    %2064 = vmatpush1.bf16.msra.mxu0 0
    %2065 = vmatprep.subr.bf16.mxu0 0
    %2066 = vmatpush1.bf16.msra.mxu0 0
    %2067 = vmatprep.subr.bf16.mxu0 0
    %2068 = vmatpush1.bf16.msra.mxu0 0
    %2069 = vmatprep.subr.bf16.mxu0 0
    %2070 = vmatpush1.bf16.msra.mxu0 0
    %2071 = vmatprep.subr.bf16.mxu0 0
    %2072 = vmatpush1.bf16.msra.mxu0 0
    %2073 = vmatprep.subr.bf16.mxu0 0
    %2074 = vmatpush1.bf16.msra.mxu0 0
    %2075 = vmatprep.subr.bf16.mxu0 0
    %2076 = vmatpush1.bf16.msra.mxu0 0
    %2077 = vmatprep.subr.bf16.mxu0 0
    %2078 = vmatpush1.bf16.msra.mxu0 0
    %2079 = vmatprep.mubr.bf16.mxu0 0
    %2080 = vmatmul.mubr.bf16.gmra.mrb[0].mxu0 %v1939
    %v2081 = vpop.f32.mrb[0].mxu0
    %v2082 = vadd.f32 0.0, %v2081
    %v2083 = vpop.f32.mrb[0].mxu0
    %v2084 = vadd.f32 0.0, %v2083
    %v2085 = vpop.f32.mrb[0].mxu0
    %v2086 = vpop.f32.mrb[0].mxu0
    %2087 = vdwg.mxu0
    %2088 = vmatprep.subr.bf16.mxu0 %v1963
    %2089 = vmatpush1.bf16.msra.mxu0 %v1960
    %2090 = vmatprep.subr.bf16.mxu0 0
    %2091 = vmatpush1.bf16.msra.mxu0 0
    %2092 = vmatprep.subr.bf16.mxu0 0
    %2093 = vmatpush1.bf16.msra.mxu0 0
    %2094 = vmatprep.subr.bf16.mxu0 0
    %2095 = vmatpush1.bf16.msra.mxu0 0
    %2096 = vmatprep.subr.bf16.mxu0 0
    %2097 = vmatpush1.bf16.msra.mxu0 0
    %2098 = vmatprep.subr.bf16.mxu0 0
    %2099 = vmatpush1.bf16.msra.mxu0 0
    %2100 = vmatprep.subr.bf16.mxu0 0
    %2101 = vmatpush1.bf16.msra.mxu0 0
    %2102 = vmatprep.subr.bf16.mxu0 0
    %2103 = vmatpush1.bf16.msra.mxu0 0
    %2104 = vmatprep.subr.bf16.mxu0 0
    %2105 = vmatpush1.bf16.msra.mxu0 0
    %2106 = vmatprep.subr.bf16.mxu0 0
    %2107 = vmatpush1.bf16.msra.mxu0 0
    %2108 = vmatprep.subr.bf16.mxu0 0
    %2109 = vmatpush1.bf16.msra.mxu0 0
    %2110 = vmatprep.subr.bf16.mxu0 0
    %2111 = vmatpush1.bf16.msra.mxu0 0
    %2112 = vmatprep.subr.bf16.mxu0 0
    %2113 = vmatpush1.bf16.msra.mxu0 0
    %2114 = vmatprep.subr.bf16.mxu0 0
    %2115 = vmatpush1.bf16.msra.mxu0 0
    %2116 = vmatprep.subr.bf16.mxu0 0
    %2117 = vmatpush1.bf16.msra.mxu0 0
    %2118 = vmatprep.subr.bf16.mxu0 0
    %2119 = vmatpush1.bf16.msra.mxu0 0
    %2120 = vmatprep.mubr.bf16.mxu0 0
    %2121 = vmatmul.mubr.bf16.gmra.mrb[0].mxu0 %v1939
    %v2122 = vpop.f32.mrb[0].mxu0
    %v2123 = vadd.f32 0.0, %v2122
    %v2124 = vpop.f32.mrb[0].mxu0
    %v2125 = vadd.f32 0.0, %v2124
    %v2126 = vpop.f32.mrb[0].mxu0
    %v2127 = vpop.f32.mrb[0].mxu0
    %2128 = vdwg.mxu0
    %v2129 = vadd.f32 %v1887, %v2000
    %v2130 = vadd.f32 %v1888, %v2002
    %v2131 = vadd.f32 %v1889, %v2041
    %v2132 = vadd.f32 %v1890, %v2043
    %v2133 = vadd.f32 %v1891, %v2082
    %v2134 = vadd.f32 %v1892, %v2084
    %v2135 = vadd.f32 %v1893, %v2123
    %v2136 = vadd.f32 %v1894, %v2125
    %v2137 = vld [vmem:[#allocation3] sm:$0xff]
    %v2139 = vlaneseq
    %v2140 = vshrl.u32 %v2139, 7
    %v2141 = vsub.s32 0, %v2140
    %v2142 = vrot.slane %v2137, %v2141
    %v2143 = vlaneseq
    %v2144 = vshrl.u32 %v2143, 7
    %v2145 = vsub.s32 1, %v2144
    %v2146 = vrot.slane %v2137, %v2145
    %v2147 = vlaneseq
    %v2148 = vshrl.u32 %v2147, 7
    %v2149 = vsub.s32 2, %v2148
    %v2150 = vrot.slane %v2137, %v2149
    %v2151 = vlaneseq
    %v2152 = vshrl.u32 %v2151, 7
    %v2153 = vsub.s32 3, %v2152
    %v2154 = vrot.slane %v2137, %v2153
    %v2155 = vlaneseq
    %v2156 = vshrl.u32 %v2155, 7
    %v2157 = vsub.s32 4, %v2156
    %v2158 = vrot.slane %v2137, %v2157
    %v2159 = vlaneseq
    %v2160 = vshrl.u32 %v2159, 7
    %v2161 = vsub.s32 5, %v2160
    %v2162 = vrot.slane %v2137, %v2161
    %v2163 = vlaneseq
    %v2164 = vshrl.u32 %v2163, 7
    %v2165 = vsub.s32 6, %v2164
    %v2166 = vrot.slane %v2137, %v2165
    %v2167 = vlaneseq
    %v2168 = vshrl.u32 %v2167, 7
    %v2169 = vsub.s32 7, %v2168
    %v2170 = vrot.slane %v2137, %v2169
    %v2179 = vadd.f32 %v2129, %v2142
    %v2180 = vadd.f32 %v2130, %v2146
    %v2181 = vadd.f32 %v2131, %v2150
    %v2182 = vadd.f32 %v2132, %v2154
    %v2183 = vadd.f32 %v2133, %v2158
    %v2184 = vadd.f32 %v2134, %v2162
    %v2185 = vadd.f32 %v2135, %v2166
    %v2186 = vadd.f32 %v2136, %v2170
    %v2187 = vld [vmem:[#allocation6] sm:$0xf]
    %v2188 = vld [vmem:[#allocation8] sm:$0xf]
    %v2189 = vsel %vm266, %v2179, 0.0
    %v2190 = vsel %vm266, %v2180, 0.0
    %v2191 = vadd.f32 %v2189, %v2190
    %v2192 = vsel %vm266, %v2181, 0.0
    %v2193 = vadd.f32 %v2191, %v2192
    %v2194 = vsel %vm266, %v2182, 0.0
    %v2195 = vadd.f32 %v2193, %v2194
    %2196 = vadd.xlane.f32.xlu0 %v2195
    %v2197 = vpop.xlane.xlu0 %2196
    %v2198 = vrcp.pop 512.0
    %v2199 = vmul.f32 %v2197, %v2198
    %v2200 = vsub.f32 %v2179, %v2199
    %v2201 = vsub.f32 %v2180, %v2199
    %v2202 = vsub.f32 %v2181, %v2199
    %v2203 = vsub.f32 %v2182, %v2199
    %v2204 = vmul.f32 %v2200, %v2200
    %v2205 = vmul.f32 %v2201, %v2201
    %v2206 = vmul.f32 %v2202, %v2202
    %v2207 = vmul.f32 %v2203, %v2203
    %v2208 = vsel %vm266, %v2204, 0.0
    %v2209 = vsel %vm266, %v2205, 0.0
    %v2210 = vadd.f32 %v2208, %v2209
    %v2211 = vsel %vm266, %v2206, 0.0
    %v2212 = vadd.f32 %v2210, %v2211
    %v2213 = vsel %vm266, %v2207, 0.0
    %v2214 = vadd.f32 %v2212, %v2213
    %2215 = vadd.xlane.f32.xlu0 %v2214
    %v2216 = vpop.xlane.xlu0 %2215
    %v2217 = vmul.f32 %v2216, %v2198
    %v2218 = vadd.f32 %v2217, 1e-05
    %v2219 = vrsqrt.pop %v2218
    %v2220 = vmul.f32 %v2200, %v2219
    %v2221 = vmul.f32 %v2201, %v2219
    %v2222 = vmul.f32 %v2202, %v2219
    %v2223 = vmul.f32 %v2203, %v2219
    %v2225 = vlaneseq
    %v2226 = vshrl.u32 %v2225, 7
    %v2227 = vsub.s32 0, %v2226
    %v2228 = vrot.slane %v2187, %v2227
    %v2229 = vlaneseq
    %v2230 = vshrl.u32 %v2229, 7
    %v2231 = vsub.s32 1, %v2230
    %v2232 = vrot.slane %v2187, %v2231
    %v2233 = vlaneseq
    %v2234 = vshrl.u32 %v2233, 7
    %v2235 = vsub.s32 2, %v2234
    %v2236 = vrot.slane %v2187, %v2235
    %v2237 = vlaneseq
    %v2238 = vshrl.u32 %v2237, 7
    %v2239 = vsub.s32 3, %v2238
    %v2240 = vrot.slane %v2187, %v2239
    %v2245 = vmul.f32 %v2220, %v2228
    %v2246 = vmul.f32 %v2221, %v2232
    %v2247 = vmul.f32 %v2222, %v2236
    %v2248 = vmul.f32 %v2223, %v2240
    %v2250 = vlaneseq
    %v2251 = vshrl.u32 %v2250, 7
    %v2252 = vsub.s32 0, %v2251
    %v2253 = vrot.slane %v2188, %v2252
    %v2254 = vlaneseq
    %v2255 = vshrl.u32 %v2254, 7
    %v2256 = vsub.s32 1, %v2255
    %v2257 = vrot.slane %v2188, %v2256
    %v2258 = vlaneseq
    %v2259 = vshrl.u32 %v2258, 7
    %v2260 = vsub.s32 2, %v2259
    %v2261 = vrot.slane %v2188, %v2260
    %v2262 = vlaneseq
    %v2263 = vshrl.u32 %v2262, 7
    %v2264 = vsub.s32 3, %v2263
    %v2265 = vrot.slane %v2188, %v2264
    %v2270 = vadd.f32 %v2245, %v2253
    %v2271 = vadd.f32 %v2246, %v2257
    %v2272 = vadd.f32 %v2247, %v2261
    %v2273 = vadd.f32 %v2248, %v2265
    %v2274 = vmax.f32 %v2270, 0.0
    %v2275 = vmax.f32 %v2271, 0.0
    %v2276 = vmax.f32 %v2272, 0.0
    %v2277 = vmax.f32 %v2273, 0.0
    %v2278 = vld [vmem:[#allocation9] sm:$0xf]
    %v2279 = vld [vmem:[#allocation11] sm:$0xf]
    %v2280 = vsel %vm266, %v2183, 0.0
    %v2281 = vsel %vm266, %v2184, 0.0
    %v2282 = vadd.f32 %v2280, %v2281
    %v2283 = vsel %vm266, %v2185, 0.0
    %v2284 = vadd.f32 %v2282, %v2283
    %v2285 = vsel %vm266, %v2186, 0.0
    %v2286 = vadd.f32 %v2284, %v2285
    %2287 = vadd.xlane.f32.xlu0 %v2286
    %v2288 = vpop.xlane.xlu0 %2287
    %v2289 = vmul.f32 %v2288, %v2198
    %v2290 = vsub.f32 %v2183, %v2289
    %v2291 = vsub.f32 %v2184, %v2289
    %v2292 = vsub.f32 %v2185, %v2289
    %v2293 = vsub.f32 %v2186, %v2289
    %v2294 = vmul.f32 %v2290, %v2290
    %v2295 = vmul.f32 %v2291, %v2291
    %v2296 = vmul.f32 %v2292, %v2292
    %v2297 = vmul.f32 %v2293, %v2293
    %v2298 = vsel %vm266, %v2294, 0.0
    %v2299 = vsel %vm266, %v2295, 0.0
    %v2300 = vadd.f32 %v2298, %v2299
    %v2301 = vsel %vm266, %v2296, 0.0
    %v2302 = vadd.f32 %v2300, %v2301
    %v2303 = vsel %vm266, %v2297, 0.0
    %v2304 = vadd.f32 %v2302, %v2303
    %2305 = vadd.xlane.f32.xlu0 %v2304
    %v2306 = vpop.xlane.xlu0 %2305
    %v2307 = vmul.f32 %v2306, %v2198
    %v2308 = vadd.f32 %v2307, 1e-05
    %v2309 = vrsqrt.pop %v2308
    %v2310 = vmul.f32 %v2290, %v2309
    %v2311 = vmul.f32 %v2291, %v2309
    %v2312 = vmul.f32 %v2292, %v2309
    %v2313 = vmul.f32 %v2293, %v2309
    %v2315 = vlaneseq
    %v2316 = vshrl.u32 %v2315, 7
    %v2317 = vsub.s32 0, %v2316
    %v2318 = vrot.slane %v2278, %v2317
    %v2319 = vlaneseq
    %v2320 = vshrl.u32 %v2319, 7
    %v2321 = vsub.s32 1, %v2320
    %v2322 = vrot.slane %v2278, %v2321
    %v2323 = vlaneseq
    %v2324 = vshrl.u32 %v2323, 7
    %v2325 = vsub.s32 2, %v2324
    %v2326 = vrot.slane %v2278, %v2325
    %v2327 = vlaneseq
    %v2328 = vshrl.u32 %v2327, 7
    %v2329 = vsub.s32 3, %v2328
    %v2330 = vrot.slane %v2278, %v2329
    %v2335 = vmul.f32 %v2310, %v2318
    %v2336 = vmul.f32 %v2311, %v2322
    %v2337 = vmul.f32 %v2312, %v2326
    %v2338 = vmul.f32 %v2313, %v2330
    %v2340 = vlaneseq
    %v2341 = vshrl.u32 %v2340, 7
    %v2342 = vsub.s32 0, %v2341
    %v2343 = vrot.slane %v2279, %v2342
    %v2344 = vlaneseq
    %v2345 = vshrl.u32 %v2344, 7
    %v2346 = vsub.s32 1, %v2345
    %v2347 = vrot.slane %v2279, %v2346
    %v2348 = vlaneseq
    %v2349 = vshrl.u32 %v2348, 7
    %v2350 = vsub.s32 2, %v2349
    %v2351 = vrot.slane %v2279, %v2350
    %v2352 = vlaneseq
    %v2353 = vshrl.u32 %v2352, 7
    %v2354 = vsub.s32 3, %v2353
    %v2355 = vrot.slane %v2279, %v2354
    %v2360 = vadd.f32 %v2335, %v2343
    %v2361 = vadd.f32 %v2336, %v2347
    %v2362 = vadd.f32 %v2337, %v2351
    %v2363 = vadd.f32 %v2338, %v2355
    %v2364 = vmax.f32 %v2360, 0.0
    %v2365 = vmax.f32 %v2361, 0.0
    %v2366 = vmax.f32 %v2362, 0.0
    %v2367 = vmax.f32 %v2363, 0.0
    %v2368 = vld [vmem:[%s7] sm:$0xff]
    %v2369 = vld [vmem:[%s7 + $0x8] sm:$0xff]
    %v2370 = vld [vmem:[%s7 + $0x10] sm:$0xff]
    %v2371 = vld [vmem:[%s7 + $0x18] sm:$0xff]
    %v2372 = vld [vmem:[%s7 + $0x20] sm:$0xff]
    %v2373 = vld [vmem:[%s7 + $0x28] sm:$0xff]
    %v2374 = vld [vmem:[%s7 + $0x30] sm:$0xff]
    %v2375 = vld [vmem:[%s7 + $0x38] sm:$0xff]
    %v2376 = vld [vmem:[%s7 + $0x40] sm:$0xff]
    %v2377 = vld [vmem:[%s7 + $0x48] sm:$0xff]
    %v2378 = vld [vmem:[%s7 + $0x50] sm:$0xff]
    %v2379 = vld [vmem:[%s7 + $0x58] sm:$0xff]
    %v2380 = vld [vmem:[%s7 + $0x60] sm:$0xff]
    %v2381 = vld [vmem:[%s7 + $0x68] sm:$0xff]
    %v2382 = vld [vmem:[%s7 + $0x70] sm:$0xff]
    %v2383 = vld [vmem:[%s7 + $0x78] sm:$0xff]
    %v2384 = vld [vmem:[%s7 + $0x80] sm:$0xff]
    %v2385 = vld [vmem:[%s7 + $0x88] sm:$0xff]
    %v2386 = vld [vmem:[%s7 + $0x90] sm:$0xff]
    %v2387 = vld [vmem:[%s7 + $0x98] sm:$0xff]
    %v2388 = vld [vmem:[%s7 + $0xa0] sm:$0xff]
    %v2389 = vld [vmem:[%s7 + $0xa8] sm:$0xff]
    %v2390 = vld [vmem:[%s7 + $0xb0] sm:$0xff]
    %v2391 = vld [vmem:[%s7 + $0xb8] sm:$0xff]
    %v2392 = vld [vmem:[%s7 + $0xc0] sm:$0xff]
    %v2393 = vld [vmem:[%s7 + $0xc8] sm:$0xff]
    %v2394 = vld [vmem:[%s7 + $0xd0] sm:$0xff]
    %v2395 = vld [vmem:[%s7 + $0xd8] sm:$0xff]
    %v2396 = vld [vmem:[%s7 + $0xe0] sm:$0xff]
    %v2397 = vld [vmem:[%s7 + $0xe8] sm:$0xff]
    %v2398 = vld [vmem:[%s7 + $0xf0] sm:$0xff]
    %v2399 = vld [vmem:[%s7 + $0xf8] sm:$0xff]
    %v2400 = vld [vmem:[%s7 + $0x100] sm:$0xff]
    %v2401 = vld [vmem:[%s7 + $0x108] sm:$0xff]
    %v2402 = vld [vmem:[%s7 + $0x110] sm:$0xff]
    %v2403 = vld [vmem:[%s7 + $0x118] sm:$0xff]
    %v2404 = vld [vmem:[%s7 + $0x120] sm:$0xff]
    %v2405 = vld [vmem:[%s7 + $0x128] sm:$0xff]
    %v2406 = vld [vmem:[%s7 + $0x130] sm:$0xff]
    %v2407 = vld [vmem:[%s7 + $0x138] sm:$0xff]
    %v2408 = vld [vmem:[%s7 + $0x140] sm:$0xff]
    %v2409 = vld [vmem:[%s7 + $0x148] sm:$0xff]
    %v2410 = vld [vmem:[%s7 + $0x150] sm:$0xff]
    %v2411 = vld [vmem:[%s7 + $0x158] sm:$0xff]
    %v2412 = vld [vmem:[%s7 + $0x160] sm:$0xff]
    %v2413 = vld [vmem:[%s7 + $0x168] sm:$0xff]
    %v2414 = vld [vmem:[%s7 + $0x170] sm:$0xff]
    %v2415 = vld [vmem:[%s7 + $0x178] sm:$0xff]
    %v2416 = vld [vmem:[%s7 + $0x180] sm:$0xff]
    %v2417 = vld [vmem:[%s7 + $0x188] sm:$0xff]
    %v2418 = vld [vmem:[%s7 + $0x190] sm:$0xff]
    %v2419 = vld [vmem:[%s7 + $0x198] sm:$0xff]
    %v2420 = vld [vmem:[%s7 + $0x1a0] sm:$0xff]
    %v2421 = vld [vmem:[%s7 + $0x1a8] sm:$0xff]
    %v2422 = vld [vmem:[%s7 + $0x1b0] sm:$0xff]
    %v2423 = vld [vmem:[%s7 + $0x1b8] sm:$0xff]
    %v2424 = vld [vmem:[%s7 + $0x1c0] sm:$0xff]
    %v2425 = vld [vmem:[%s7 + $0x1c8] sm:$0xff]
    %v2426 = vld [vmem:[%s7 + $0x1d0] sm:$0xff]
    %v2427 = vld [vmem:[%s7 + $0x1d8] sm:$0xff]
    %v2428 = vld [vmem:[%s7 + $0x1e0] sm:$0xff]
    %v2429 = vld [vmem:[%s7 + $0x1e8] sm:$0xff]
    %v2430 = vld [vmem:[%s7 + $0x1f0] sm:$0xff]
    %v2431 = vld [vmem:[%s7 + $0x1f8] sm:$0xff]
    %v2432 = vpack.c.bf16 %v2274, %v2274
    %v2433 = vpack.c.bf16 %v2275, %v2275
    %v2434 = vpack.c.bf16 %v2276, %v2276
    %v2435 = vpack.c.bf16 %v2277, %v2277
    %v2436 = vld [vmem:[%s8] sm:$0x3]
    %v2438 = vlaneseq
    %v2439 = vshrl.u32 %v2438, 7
    %v2440 = vsub.s32 0, %v2439
    %v2441 = vrot.slane %v2436, %v2440
    %v2442 = vlaneseq
    %v2443 = vshrl.u32 %v2442, 7
    %v2444 = vsub.s32 1, %v2443
    %v2445 = vrot.slane %v2436, %v2444
    %v2512 = vunpack.c.l.b16 %v2368
    %v2513 = vunpack.c.h.b16 %v2368
    %v2514 = vunpack.c.l.b16 %v2369
    %v2515 = vunpack.c.h.b16 %v2369
    %v2516 = vunpack.c.l.b16 %v2370
    %v2517 = vunpack.c.h.b16 %v2370
    %v2518 = vunpack.c.l.b16 %v2371
    %v2519 = vunpack.c.h.b16 %v2371
    %v2520 = vunpack.c.l.b16 %v2372
    %v2521 = vunpack.c.h.b16 %v2372
    %v2522 = vunpack.c.l.b16 %v2373
    %v2523 = vunpack.c.h.b16 %v2373
    %v2524 = vunpack.c.l.b16 %v2374
    %v2525 = vunpack.c.h.b16 %v2374
    %v2526 = vunpack.c.l.b16 %v2375
    %v2527 = vunpack.c.h.b16 %v2375
    %v2528 = vunpack.c.l.b16 %v2376
    %v2529 = vunpack.c.h.b16 %v2376
    %v2530 = vunpack.c.l.b16 %v2377
    %v2531 = vunpack.c.h.b16 %v2377
    %v2532 = vunpack.c.l.b16 %v2378
    %v2533 = vunpack.c.h.b16 %v2378
    %v2534 = vunpack.c.l.b16 %v2379
    %v2535 = vunpack.c.h.b16 %v2379
    %v2536 = vunpack.c.l.b16 %v2380
    %v2537 = vunpack.c.h.b16 %v2380
    %v2538 = vunpack.c.l.b16 %v2381
    %v2539 = vunpack.c.h.b16 %v2381
    %v2540 = vunpack.c.l.b16 %v2382
    %v2541 = vunpack.c.h.b16 %v2382
    %v2542 = vunpack.c.l.b16 %v2383
    %v2543 = vunpack.c.h.b16 %v2383
    %v2544 = vunpack.c.l.b16 %v2384
    %v2545 = vunpack.c.h.b16 %v2384
    %v2546 = vunpack.c.l.b16 %v2385
    %v2547 = vunpack.c.h.b16 %v2385
    %v2548 = vunpack.c.l.b16 %v2386
    %v2549 = vunpack.c.h.b16 %v2386
    %v2550 = vunpack.c.l.b16 %v2387
    %v2551 = vunpack.c.h.b16 %v2387
    %v2552 = vunpack.c.l.b16 %v2388
    %v2553 = vunpack.c.h.b16 %v2388
    %v2554 = vunpack.c.l.b16 %v2389
    %v2555 = vunpack.c.h.b16 %v2389
    %v2556 = vunpack.c.l.b16 %v2390
    %v2557 = vunpack.c.h.b16 %v2390
    %v2558 = vunpack.c.l.b16 %v2391
    %v2559 = vunpack.c.h.b16 %v2391
    %v2560 = vunpack.c.l.b16 %v2392
    %v2561 = vunpack.c.h.b16 %v2392
    %v2562 = vunpack.c.l.b16 %v2393
    %v2563 = vunpack.c.h.b16 %v2393
    %v2564 = vunpack.c.l.b16 %v2394
    %v2565 = vunpack.c.h.b16 %v2394
    %v2566 = vunpack.c.l.b16 %v2395
    %v2567 = vunpack.c.h.b16 %v2395
    %v2568 = vunpack.c.l.b16 %v2396
    %v2569 = vunpack.c.h.b16 %v2396
    %v2570 = vunpack.c.l.b16 %v2397
    %v2571 = vunpack.c.h.b16 %v2397
    %v2572 = vunpack.c.l.b16 %v2398
    %v2573 = vunpack.c.h.b16 %v2398
    %v2574 = vunpack.c.l.b16 %v2399
    %v2575 = vunpack.c.h.b16 %v2399
    %v2576 = vunpack.c.l.b16 %v2400
    %v2577 = vunpack.c.h.b16 %v2400
    %v2578 = vunpack.c.l.b16 %v2401
    %v2579 = vunpack.c.h.b16 %v2401
    %v2580 = vunpack.c.l.b16 %v2402
    %v2581 = vunpack.c.h.b16 %v2402
    %v2582 = vunpack.c.l.b16 %v2403
    %v2583 = vunpack.c.h.b16 %v2403
    %v2584 = vunpack.c.l.b16 %v2404
    %v2585 = vunpack.c.h.b16 %v2404
    %v2586 = vunpack.c.l.b16 %v2405
    %v2587 = vunpack.c.h.b16 %v2405
    %v2588 = vunpack.c.l.b16 %v2406
    %v2589 = vunpack.c.h.b16 %v2406
    %v2590 = vunpack.c.l.b16 %v2407
    %v2591 = vunpack.c.h.b16 %v2407
    %v2592 = vunpack.c.l.b16 %v2408
    %v2593 = vunpack.c.h.b16 %v2408
    %v2594 = vunpack.c.l.b16 %v2409
    %v2595 = vunpack.c.h.b16 %v2409
    %v2596 = vunpack.c.l.b16 %v2410
    %v2597 = vunpack.c.h.b16 %v2410
    %v2598 = vunpack.c.l.b16 %v2411
    %v2599 = vunpack.c.h.b16 %v2411
    %v2600 = vunpack.c.l.b16 %v2412
    %v2601 = vunpack.c.h.b16 %v2412
    %v2602 = vunpack.c.l.b16 %v2413
    %v2603 = vunpack.c.h.b16 %v2413
    %v2604 = vunpack.c.l.b16 %v2414
    %v2605 = vunpack.c.h.b16 %v2414
    %v2606 = vunpack.c.l.b16 %v2415
    %v2607 = vunpack.c.h.b16 %v2415
    %v2608 = vunpack.c.l.b16 %v2416
    %v2609 = vunpack.c.h.b16 %v2416
    %v2610 = vunpack.c.l.b16 %v2417
    %v2611 = vunpack.c.h.b16 %v2417
    %v2612 = vunpack.c.l.b16 %v2418
    %v2613 = vunpack.c.h.b16 %v2418
    %v2614 = vunpack.c.l.b16 %v2419
    %v2615 = vunpack.c.h.b16 %v2419
    %v2616 = vunpack.c.l.b16 %v2420
    %v2617 = vunpack.c.h.b16 %v2420
    %v2618 = vunpack.c.l.b16 %v2421
    %v2619 = vunpack.c.h.b16 %v2421
    %v2620 = vunpack.c.l.b16 %v2422
    %v2621 = vunpack.c.h.b16 %v2422
    %v2622 = vunpack.c.l.b16 %v2423
    %v2623 = vunpack.c.h.b16 %v2423
    %v2624 = vunpack.c.l.b16 %v2424
    %v2625 = vunpack.c.h.b16 %v2424
    %v2626 = vunpack.c.l.b16 %v2425
    %v2627 = vunpack.c.h.b16 %v2425
    %v2628 = vunpack.c.l.b16 %v2426
    %v2629 = vunpack.c.h.b16 %v2426
    %v2630 = vunpack.c.l.b16 %v2427
    %v2631 = vunpack.c.h.b16 %v2427
    %v2632 = vunpack.c.l.b16 %v2428
    %v2633 = vunpack.c.h.b16 %v2428
    %v2634 = vunpack.c.l.b16 %v2429
    %v2635 = vunpack.c.h.b16 %v2429
    %v2636 = vunpack.c.l.b16 %v2430
    %v2637 = vunpack.c.h.b16 %v2430
    %v2638 = vunpack.c.l.b16 %v2431
    %v2639 = vunpack.c.h.b16 %v2431
    %v2640 = vpack.c.b16 %v2514, %v2512
    %v2641 = vpack.c.b16 %v2515, %v2513
    %v2642 = vpack.c.b16 %v2518, %v2516
    %v2643 = vpack.c.b16 %v2519, %v2517
    %v2644 = vpack.c.b16 %v2522, %v2520
    %v2645 = vpack.c.b16 %v2523, %v2521
    %v2646 = vpack.c.b16 %v2526, %v2524
    %v2647 = vpack.c.b16 %v2527, %v2525
    %v2648 = vpack.c.b16 %v2530, %v2528
    %v2649 = vpack.c.b16 %v2531, %v2529
    %v2650 = vpack.c.b16 %v2534, %v2532
    %v2651 = vpack.c.b16 %v2535, %v2533
    %v2652 = vpack.c.b16 %v2538, %v2536
    %v2653 = vpack.c.b16 %v2539, %v2537
    %v2654 = vpack.c.b16 %v2542, %v2540
    %v2655 = vpack.c.b16 %v2543, %v2541
    %v2656 = vpack.c.b16 %v2546, %v2544
    %v2657 = vpack.c.b16 %v2547, %v2545
    %v2658 = vpack.c.b16 %v2550, %v2548
    %v2659 = vpack.c.b16 %v2551, %v2549
    %v2660 = vpack.c.b16 %v2554, %v2552
    %v2661 = vpack.c.b16 %v2555, %v2553
    %v2662 = vpack.c.b16 %v2558, %v2556
    %v2663 = vpack.c.b16 %v2559, %v2557
    %v2664 = vpack.c.b16 %v2562, %v2560
    %v2665 = vpack.c.b16 %v2563, %v2561
    %v2666 = vpack.c.b16 %v2566, %v2564
    %v2667 = vpack.c.b16 %v2567, %v2565
    %v2668 = vpack.c.b16 %v2570, %v2568
    %v2669 = vpack.c.b16 %v2571, %v2569
    %v2670 = vpack.c.b16 %v2574, %v2572
    %v2671 = vpack.c.b16 %v2575, %v2573
    %v2672 = vpack.c.b16 %v2578, %v2576
    %v2673 = vpack.c.b16 %v2579, %v2577
    %v2674 = vpack.c.b16 %v2582, %v2580
    %v2675 = vpack.c.b16 %v2583, %v2581
    %v2676 = vpack.c.b16 %v2586, %v2584
    %v2677 = vpack.c.b16 %v2587, %v2585
    %v2678 = vpack.c.b16 %v2590, %v2588
    %v2679 = vpack.c.b16 %v2591, %v2589
    %v2680 = vpack.c.b16 %v2594, %v2592
    %v2681 = vpack.c.b16 %v2595, %v2593
    %v2682 = vpack.c.b16 %v2598, %v2596
    %v2683 = vpack.c.b16 %v2599, %v2597
    %v2684 = vpack.c.b16 %v2602, %v2600
    %v2685 = vpack.c.b16 %v2603, %v2601
    %v2686 = vpack.c.b16 %v2606, %v2604
    %v2687 = vpack.c.b16 %v2607, %v2605
    %v2688 = vpack.c.b16 %v2610, %v2608
    %v2689 = vpack.c.b16 %v2611, %v2609
    %v2690 = vpack.c.b16 %v2614, %v2612
    %v2691 = vpack.c.b16 %v2615, %v2613
    %v2692 = vpack.c.b16 %v2618, %v2616
    %v2693 = vpack.c.b16 %v2619, %v2617
    %v2694 = vpack.c.b16 %v2622, %v2620
    %v2695 = vpack.c.b16 %v2623, %v2621
    %v2696 = vpack.c.b16 %v2626, %v2624
    %v2697 = vpack.c.b16 %v2627, %v2625
    %v2698 = vpack.c.b16 %v2630, %v2628
    %v2699 = vpack.c.b16 %v2631, %v2629
    %v2700 = vpack.c.b16 %v2634, %v2632
    %v2701 = vpack.c.b16 %v2635, %v2633
    %v2702 = vpack.c.b16 %v2638, %v2636
    %v2703 = vpack.c.b16 %v2639, %v2637
    %2768 = vmatprep.subr.bf16.mxu0 %v2641
    %2769 = vmatpush1.bf16.msra.mxu0 %v2640
    %2770 = vmatprep.subr.bf16.mxu0 %v2643
    %2771 = vmatpush1.bf16.msra.mxu0 %v2642
    %2772 = vmatprep.subr.bf16.mxu0 %v2645
    %2773 = vmatpush1.bf16.msra.mxu0 %v2644
    %2774 = vmatprep.subr.bf16.mxu0 %v2647
    %2775 = vmatpush1.bf16.msra.mxu0 %v2646
    %2776 = vmatprep.subr.bf16.mxu0 %v2649
    %2777 = vmatpush1.bf16.msra.mxu0 %v2648
    %2778 = vmatprep.subr.bf16.mxu0 %v2651
    %2779 = vmatpush1.bf16.msra.mxu0 %v2650
    %2780 = vmatprep.subr.bf16.mxu0 %v2653
    %2781 = vmatpush1.bf16.msra.mxu0 %v2652
    %2782 = vmatprep.subr.bf16.mxu0 %v2655
    %2783 = vmatpush1.bf16.msra.mxu0 %v2654
    %2784 = vmatprep.subr.bf16.mxu0 %v2657
    %2785 = vmatpush1.bf16.msra.mxu0 %v2656
    %2786 = vmatprep.subr.bf16.mxu0 %v2659
    %2787 = vmatpush1.bf16.msra.mxu0 %v2658
    %2788 = vmatprep.subr.bf16.mxu0 %v2661
    %2789 = vmatpush1.bf16.msra.mxu0 %v2660
    %2790 = vmatprep.subr.bf16.mxu0 %v2663
    %2791 = vmatpush1.bf16.msra.mxu0 %v2662
    %2792 = vmatprep.subr.bf16.mxu0 %v2665
    %2793 = vmatpush1.bf16.msra.mxu0 %v2664
    %2794 = vmatprep.subr.bf16.mxu0 %v2667
    %2795 = vmatpush1.bf16.msra.mxu0 %v2666
    %2796 = vmatprep.subr.bf16.mxu0 %v2669
    %2797 = vmatpush1.bf16.msra.mxu0 %v2668
    %2798 = vmatprep.subr.bf16.mxu0 %v2671
    %2799 = vmatpush1.bf16.msra.mxu0 %v2670
    %2800 = vmatprep.mubr.bf16.mxu0 %v2433
    %2801 = vmatmul.mubr.bf16.gmra.mrb[0].mxu0 %v2432
    %v2802 = vpop.f32.mrb[0].mxu0
    %v2803 = vadd.f32 %v2441, %v2802
    %v2804 = vpop.f32.mrb[0].mxu0
    %v2805 = vadd.f32 %v2445, %v2804
    %v2806 = vpop.f32.mrb[0].mxu0
    %v2807 = vpop.f32.mrb[0].mxu0
    %2808 = vdwg.mxu0
    %2809 = vmatprep.subr.bf16.mxu0 %v2673
    %2810 = vmatpush1.bf16.msra.mxu0 %v2672
    %2811 = vmatprep.subr.bf16.mxu0 %v2675
    %2812 = vmatpush1.bf16.msra.mxu0 %v2674
    %2813 = vmatprep.subr.bf16.mxu0 %v2677
    %2814 = vmatpush1.bf16.msra.mxu0 %v2676
    %2815 = vmatprep.subr.bf16.mxu0 %v2679
    %2816 = vmatpush1.bf16.msra.mxu0 %v2678
    %2817 = vmatprep.subr.bf16.mxu0 %v2681
    %2818 = vmatpush1.bf16.msra.mxu0 %v2680
    %2819 = vmatprep.subr.bf16.mxu0 %v2683
    %2820 = vmatpush1.bf16.msra.mxu0 %v2682
    %2821 = vmatprep.subr.bf16.mxu0 %v2685
    %2822 = vmatpush1.bf16.msra.mxu0 %v2684
    %2823 = vmatprep.subr.bf16.mxu0 %v2687
    %2824 = vmatpush1.bf16.msra.mxu0 %v2686
    %2825 = vmatprep.subr.bf16.mxu0 %v2689
    %2826 = vmatpush1.bf16.msra.mxu0 %v2688
    %2827 = vmatprep.subr.bf16.mxu0 %v2691
    %2828 = vmatpush1.bf16.msra.mxu0 %v2690
    %2829 = vmatprep.subr.bf16.mxu0 %v2693
    %2830 = vmatpush1.bf16.msra.mxu0 %v2692
    %2831 = vmatprep.subr.bf16.mxu0 %v2695
    %2832 = vmatpush1.bf16.msra.mxu0 %v2694
    %2833 = vmatprep.subr.bf16.mxu0 %v2697
    %2834 = vmatpush1.bf16.msra.mxu0 %v2696
    %2835 = vmatprep.subr.bf16.mxu0 %v2699
    %2836 = vmatpush1.bf16.msra.mxu0 %v2698
    %2837 = vmatprep.subr.bf16.mxu0 %v2701
    %2838 = vmatpush1.bf16.msra.mxu0 %v2700
    %2839 = vmatprep.subr.bf16.mxu0 %v2703
    %2840 = vmatpush1.bf16.msra.mxu0 %v2702
    %2841 = vmatprep.mubr.bf16.mxu0 %v2435
    %2842 = vmatmul.mubr.bf16.gmra.mrb[0].mxu0 %v2434
    %v2843 = vpop.f32.mrb[0].mxu0
    %v2844 = vadd.f32 %v2803, %v2843
    %v2845 = vpop.f32.mrb[0].mxu0
    %v2846 = vadd.f32 %v2805, %v2845
    %v2847 = vpop.f32.mrb[0].mxu0
    %v2848 = vpop.f32.mrb[0].mxu0
    %2849 = vdwg.mxu0
    %v2850 = vld [vmem:[#allocation12] sm:$0x3]
    %v2851 = vld [vmem:[#allocation14] sm:$0x3]
    %v2852 = vsel %vm266, %v2844, 0.0
    %v2853 = vsel %vm266, %v2846, 0.0
    %v2854 = vadd.f32 %v2852, %v2853
    %2855 = vadd.xlane.f32.xlu0 %v2854
    %v2856 = vpop.xlane.xlu0 %2855
    %v2857 = vrcp.pop 256.0
    %v2858 = vmul.f32 %v2856, %v2857
    %v2859 = vsub.f32 %v2844, %v2858
    %v2860 = vsub.f32 %v2846, %v2858
    %v2861 = vmul.f32 %v2859, %v2859
    %v2862 = vmul.f32 %v2860, %v2860
    %v2863 = vsel %vm266, %v2861, 0.0
    %v2864 = vsel %vm266, %v2862, 0.0
    %v2865 = vadd.f32 %v2863, %v2864
    %2866 = vadd.xlane.f32.xlu0 %v2865
    %v2867 = vpop.xlane.xlu0 %2866
    %v2868 = vmul.f32 %v2867, %v2857
    %v2869 = vadd.f32 %v2868, 1e-05
    %v2870 = vrsqrt.pop %v2869
    %v2871 = vmul.f32 %v2859, %v2870
    %v2872 = vmul.f32 %v2860, %v2870
    %v2874 = vlaneseq
    %v2875 = vshrl.u32 %v2874, 7
    %v2876 = vsub.s32 0, %v2875
    %v2877 = vrot.slane %v2850, %v2876
    %v2878 = vlaneseq
    %v2879 = vshrl.u32 %v2878, 7
    %v2880 = vsub.s32 1, %v2879
    %v2881 = vrot.slane %v2850, %v2880
    %v2884 = vmul.f32 %v2871, %v2877
    %v2885 = vmul.f32 %v2872, %v2881
    %v2887 = vlaneseq
    %v2888 = vshrl.u32 %v2887, 7
    %v2889 = vsub.s32 0, %v2888
    %v2890 = vrot.slane %v2851, %v2889
    %v2891 = vlaneseq
    %v2892 = vshrl.u32 %v2891, 7
    %v2893 = vsub.s32 1, %v2892
    %v2894 = vrot.slane %v2851, %v2893
    %v2897 = vadd.f32 %v2884, %v2890
    %v2898 = vadd.f32 %v2885, %v2894
    %v2899 = vmax.f32 %v2897, 0.0
    %v2900 = vmax.f32 %v2898, 0.0
    %v2901 = vld [vmem:[#allocation15] sm:$0xff]
    %v2902 = vld [vmem:[#allocation15 + $0x8] sm:$0xff]
    %v2903 = vld [vmem:[#allocation15 + $0x10] sm:$0xff]
    %v2904 = vld [vmem:[#allocation15 + $0x18] sm:$0xff]
    %v2905 = vld [vmem:[#allocation15 + $0x20] sm:$0xff]
    %v2906 = vld [vmem:[#allocation15 + $0x28] sm:$0xff]
    %v2907 = vld [vmem:[#allocation15 + $0x30] sm:$0xff]
    %v2908 = vld [vmem:[#allocation15 + $0x38] sm:$0xff]
    %v2909 = vld [vmem:[#allocation15 + $0x40] sm:$0xff]
    %v2910 = vld [vmem:[#allocation15 + $0x48] sm:$0xff]
    %v2911 = vld [vmem:[#allocation15 + $0x50] sm:$0xff]
    %v2912 = vld [vmem:[#allocation15 + $0x58] sm:$0xff]
    %v2913 = vld [vmem:[#allocation15 + $0x60] sm:$0xff]
    %v2914 = vld [vmem:[#allocation15 + $0x68] sm:$0xff]
    %v2915 = vld [vmem:[#allocation15 + $0x70] sm:$0xff]
    %v2916 = vld [vmem:[#allocation15 + $0x78] sm:$0xff]
    %v2917 = vld [vmem:[#allocation15 + $0x80] sm:$0xff]
    %v2918 = vld [vmem:[#allocation15 + $0x88] sm:$0xff]
    %v2919 = vld [vmem:[#allocation15 + $0x90] sm:$0xff]
    %v2920 = vld [vmem:[#allocation15 + $0x98] sm:$0xff]
    %v2921 = vld [vmem:[#allocation15 + $0xa0] sm:$0xff]
    %v2922 = vld [vmem:[#allocation15 + $0xa8] sm:$0xff]
    %v2923 = vld [vmem:[#allocation15 + $0xb0] sm:$0xff]
    %v2924 = vld [vmem:[#allocation15 + $0xb8] sm:$0xff]
    %v2925 = vld [vmem:[#allocation15 + $0xc0] sm:$0xff]
    %v2926 = vld [vmem:[#allocation15 + $0xc8] sm:$0xff]
    %v2927 = vld [vmem:[#allocation15 + $0xd0] sm:$0xff]
    %v2928 = vld [vmem:[#allocation15 + $0xd8] sm:$0xff]
    %v2929 = vld [vmem:[#allocation15 + $0xe0] sm:$0xff]
    %v2930 = vld [vmem:[#allocation15 + $0xe8] sm:$0xff]
    %v2931 = vld [vmem:[#allocation15 + $0xf0] sm:$0xff]
    %v2932 = vld [vmem:[#allocation15 + $0xf8] sm:$0xff]
    %v2933 = vld [vmem:[#allocation15 + $0x100] sm:$0xff]
    %v2934 = vld [vmem:[#allocation15 + $0x108] sm:$0xff]
    %v2935 = vld [vmem:[#allocation15 + $0x110] sm:$0xff]
    %v2936 = vld [vmem:[#allocation15 + $0x118] sm:$0xff]
    %v2937 = vld [vmem:[#allocation15 + $0x120] sm:$0xff]
    %v2938 = vld [vmem:[#allocation15 + $0x128] sm:$0xff]
    %v2939 = vld [vmem:[#allocation15 + $0x130] sm:$0xff]
    %v2940 = vld [vmem:[#allocation15 + $0x138] sm:$0xff]
    %v2941 = vld [vmem:[#allocation15 + $0x140] sm:$0xff]
    %v2942 = vld [vmem:[#allocation15 + $0x148] sm:$0xff]
    %v2943 = vld [vmem:[#allocation15 + $0x150] sm:$0xff]
    %v2944 = vld [vmem:[#allocation15 + $0x158] sm:$0xff]
    %v2945 = vld [vmem:[#allocation15 + $0x160] sm:$0xff]
    %v2946 = vld [vmem:[#allocation15 + $0x168] sm:$0xff]
    %v2947 = vld [vmem:[#allocation15 + $0x170] sm:$0xff]
    %v2948 = vld [vmem:[#allocation15 + $0x178] sm:$0xff]
    %v2949 = vld [vmem:[#allocation15 + $0x180] sm:$0xff]
    %v2950 = vld [vmem:[#allocation15 + $0x188] sm:$0xff]
    %v2951 = vld [vmem:[#allocation15 + $0x190] sm:$0xff]
    %v2952 = vld [vmem:[#allocation15 + $0x198] sm:$0xff]
    %v2953 = vld [vmem:[#allocation15 + $0x1a0] sm:$0xff]
    %v2954 = vld [vmem:[#allocation15 + $0x1a8] sm:$0xff]
    %v2955 = vld [vmem:[#allocation15 + $0x1b0] sm:$0xff]
    %v2956 = vld [vmem:[#allocation15 + $0x1b8] sm:$0xff]
    %v2957 = vld [vmem:[#allocation15 + $0x1c0] sm:$0xff]
    %v2958 = vld [vmem:[#allocation15 + $0x1c8] sm:$0xff]
    %v2959 = vld [vmem:[#allocation15 + $0x1d0] sm:$0xff]
    %v2960 = vld [vmem:[#allocation15 + $0x1d8] sm:$0xff]
    %v2961 = vld [vmem:[#allocation15 + $0x1e0] sm:$0xff]
    %v2962 = vld [vmem:[#allocation15 + $0x1e8] sm:$0xff]
    %v2963 = vld [vmem:[#allocation15 + $0x1f0] sm:$0xff]
    %v2964 = vld [vmem:[#allocation15 + $0x1f8] sm:$0xff]
    %v2965 = vpack.c.bf16 %v2364, %v2364
    %v2966 = vpack.c.bf16 %v2365, %v2365
    %v2967 = vpack.c.bf16 %v2366, %v2366
    %v2968 = vpack.c.bf16 %v2367, %v2367
    %v2969 = vld [vmem:[#allocation17] sm:$0x3]
    %v2971 = vlaneseq
    %v2972 = vshrl.u32 %v2971, 7
    %v2973 = vsub.s32 0, %v2972
    %v2974 = vrot.slane %v2969, %v2973
    %v2975 = vlaneseq
    %v2976 = vshrl.u32 %v2975, 7
    %v2977 = vsub.s32 1, %v2976
    %v2978 = vrot.slane %v2969, %v2977
    %v3045 = vunpack.c.l.b16 %v2901
    %v3046 = vunpack.c.h.b16 %v2901
    %v3047 = vunpack.c.l.b16 %v2902
    %v3048 = vunpack.c.h.b16 %v2902
    %v3049 = vunpack.c.l.b16 %v2903
    %v3050 = vunpack.c.h.b16 %v2903
    %v3051 = vunpack.c.l.b16 %v2904
    %v3052 = vunpack.c.h.b16 %v2904
    %v3053 = vunpack.c.l.b16 %v2905
    %v3054 = vunpack.c.h.b16 %v2905
    %v3055 = vunpack.c.l.b16 %v2906
    %v3056 = vunpack.c.h.b16 %v2906
    %v3057 = vunpack.c.l.b16 %v2907
    %v3058 = vunpack.c.h.b16 %v2907
    %v3059 = vunpack.c.l.b16 %v2908
    %v3060 = vunpack.c.h.b16 %v2908
    %v3061 = vunpack.c.l.b16 %v2909
    %v3062 = vunpack.c.h.b16 %v2909
    %v3063 = vunpack.c.l.b16 %v2910
    %v3064 = vunpack.c.h.b16 %v2910
    %v3065 = vunpack.c.l.b16 %v2911
    %v3066 = vunpack.c.h.b16 %v2911
    %v3067 = vunpack.c.l.b16 %v2912
    %v3068 = vunpack.c.h.b16 %v2912
    %v3069 = vunpack.c.l.b16 %v2913
    %v3070 = vunpack.c.h.b16 %v2913
    %v3071 = vunpack.c.l.b16 %v2914
    %v3072 = vunpack.c.h.b16 %v2914
    %v3073 = vunpack.c.l.b16 %v2915
    %v3074 = vunpack.c.h.b16 %v2915
    %v3075 = vunpack.c.l.b16 %v2916
    %v3076 = vunpack.c.h.b16 %v2916
    %v3077 = vunpack.c.l.b16 %v2917
    %v3078 = vunpack.c.h.b16 %v2917
    %v3079 = vunpack.c.l.b16 %v2918
    %v3080 = vunpack.c.h.b16 %v2918
    %v3081 = vunpack.c.l.b16 %v2919
    %v3082 = vunpack.c.h.b16 %v2919
    %v3083 = vunpack.c.l.b16 %v2920
    %v3084 = vunpack.c.h.b16 %v2920
    %v3085 = vunpack.c.l.b16 %v2921
    %v3086 = vunpack.c.h.b16 %v2921
    %v3087 = vunpack.c.l.b16 %v2922
    %v3088 = vunpack.c.h.b16 %v2922
    %v3089 = vunpack.c.l.b16 %v2923
    %v3090 = vunpack.c.h.b16 %v2923
    %v3091 = vunpack.c.l.b16 %v2924
    %v3092 = vunpack.c.h.b16 %v2924
    %v3093 = vunpack.c.l.b16 %v2925
    %v3094 = vunpack.c.h.b16 %v2925
    %v3095 = vunpack.c.l.b16 %v2926
    %v3096 = vunpack.c.h.b16 %v2926
    %v3097 = vunpack.c.l.b16 %v2927
    %v3098 = vunpack.c.h.b16 %v2927
    %v3099 = vunpack.c.l.b16 %v2928
    %v3100 = vunpack.c.h.b16 %v2928
    %v3101 = vunpack.c.l.b16 %v2929
    %v3102 = vunpack.c.h.b16 %v2929
    %v3103 = vunpack.c.l.b16 %v2930
    %v3104 = vunpack.c.h.b16 %v2930
    %v3105 = vunpack.c.l.b16 %v2931
    %v3106 = vunpack.c.h.b16 %v2931
    %v3107 = vunpack.c.l.b16 %v2932
    %v3108 = vunpack.c.h.b16 %v2932
    %v3109 = vunpack.c.l.b16 %v2933
    %v3110 = vunpack.c.h.b16 %v2933
    %v3111 = vunpack.c.l.b16 %v2934
    %v3112 = vunpack.c.h.b16 %v2934
    %v3113 = vunpack.c.l.b16 %v2935
    %v3114 = vunpack.c.h.b16 %v2935
    %v3115 = vunpack.c.l.b16 %v2936
    %v3116 = vunpack.c.h.b16 %v2936
    %v3117 = vunpack.c.l.b16 %v2937
    %v3118 = vunpack.c.h.b16 %v2937
    %v3119 = vunpack.c.l.b16 %v2938
    %v3120 = vunpack.c.h.b16 %v2938
    %v3121 = vunpack.c.l.b16 %v2939
    %v3122 = vunpack.c.h.b16 %v2939
    %v3123 = vunpack.c.l.b16 %v2940
    %v3124 = vunpack.c.h.b16 %v2940
    %v3125 = vunpack.c.l.b16 %v2941
    %v3126 = vunpack.c.h.b16 %v2941
    %v3127 = vunpack.c.l.b16 %v2942
    %v3128 = vunpack.c.h.b16 %v2942
    %v3129 = vunpack.c.l.b16 %v2943
    %v3130 = vunpack.c.h.b16 %v2943
    %v3131 = vunpack.c.l.b16 %v2944
    %v3132 = vunpack.c.h.b16 %v2944
    %v3133 = vunpack.c.l.b16 %v2945
    %v3134 = vunpack.c.h.b16 %v2945
    %v3135 = vunpack.c.l.b16 %v2946
    %v3136 = vunpack.c.h.b16 %v2946
    %v3137 = vunpack.c.l.b16 %v2947
    %v3138 = vunpack.c.h.b16 %v2947
    %v3139 = vunpack.c.l.b16 %v2948
    %v3140 = vunpack.c.h.b16 %v2948
    %v3141 = vunpack.c.l.b16 %v2949
    %v3142 = vunpack.c.h.b16 %v2949
    %v3143 = vunpack.c.l.b16 %v2950
    %v3144 = vunpack.c.h.b16 %v2950
    %v3145 = vunpack.c.l.b16 %v2951
    %v3146 = vunpack.c.h.b16 %v2951
    %v3147 = vunpack.c.l.b16 %v2952
    %v3148 = vunpack.c.h.b16 %v2952
    %v3149 = vunpack.c.l.b16 %v2953
    %v3150 = vunpack.c.h.b16 %v2953
    %v3151 = vunpack.c.l.b16 %v2954
    %v3152 = vunpack.c.h.b16 %v2954
    %v3153 = vunpack.c.l.b16 %v2955
    %v3154 = vunpack.c.h.b16 %v2955
    %v3155 = vunpack.c.l.b16 %v2956
    %v3156 = vunpack.c.h.b16 %v2956
    %v3157 = vunpack.c.l.b16 %v2957
    %v3158 = vunpack.c.h.b16 %v2957
    %v3159 = vunpack.c.l.b16 %v2958
    %v3160 = vunpack.c.h.b16 %v2958
    %v3161 = vunpack.c.l.b16 %v2959
    %v3162 = vunpack.c.h.b16 %v2959
    %v3163 = vunpack.c.l.b16 %v2960
    %v3164 = vunpack.c.h.b16 %v2960
    %v3165 = vunpack.c.l.b16 %v2961
    %v3166 = vunpack.c.h.b16 %v2961
    %v3167 = vunpack.c.l.b16 %v2962
    %v3168 = vunpack.c.h.b16 %v2962
    %v3169 = vunpack.c.l.b16 %v2963
    %v3170 = vunpack.c.h.b16 %v2963
    %v3171 = vunpack.c.l.b16 %v2964
    %v3172 = vunpack.c.h.b16 %v2964
    %v3173 = vpack.c.b16 %v3047, %v3045
    %v3174 = vpack.c.b16 %v3048, %v3046
    %v3175 = vpack.c.b16 %v3051, %v3049
    %v3176 = vpack.c.b16 %v3052, %v3050
    %v3177 = vpack.c.b16 %v3055, %v3053
    %v3178 = vpack.c.b16 %v3056, %v3054
    %v3179 = vpack.c.b16 %v3059, %v3057
    %v3180 = vpack.c.b16 %v3060, %v3058
    %v3181 = vpack.c.b16 %v3063, %v3061
    %v3182 = vpack.c.b16 %v3064, %v3062
    %v3183 = vpack.c.b16 %v3067, %v3065
    %v3184 = vpack.c.b16 %v3068, %v3066
    %v3185 = vpack.c.b16 %v3071, %v3069
    %v3186 = vpack.c.b16 %v3072, %v3070
    %v3187 = vpack.c.b16 %v3075, %v3073
    %v3188 = vpack.c.b16 %v3076, %v3074
    %v3189 = vpack.c.b16 %v3079, %v3077
    %v3190 = vpack.c.b16 %v3080, %v3078
    %v3191 = vpack.c.b16 %v3083, %v3081
    %v3192 = vpack.c.b16 %v3084, %v3082
    %v3193 = vpack.c.b16 %v3087, %v3085
    %v3194 = vpack.c.b16 %v3088, %v3086
    %v3195 = vpack.c.b16 %v3091, %v3089
    %v3196 = vpack.c.b16 %v3092, %v3090
    %v3197 = vpack.c.b16 %v3095, %v3093
    %v3198 = vpack.c.b16 %v3096, %v3094
    %v3199 = vpack.c.b16 %v3099, %v3097
    %v3200 = vpack.c.b16 %v3100, %v3098
    %v3201 = vpack.c.b16 %v3103, %v3101
    %v3202 = vpack.c.b16 %v3104, %v3102
    %v3203 = vpack.c.b16 %v3107, %v3105
    %v3204 = vpack.c.b16 %v3108, %v3106
    %v3205 = vpack.c.b16 %v3111, %v3109
    %v3206 = vpack.c.b16 %v3112, %v3110
    %v3207 = vpack.c.b16 %v3115, %v3113
    %v3208 = vpack.c.b16 %v3116, %v3114
    %v3209 = vpack.c.b16 %v3119, %v3117
    %v3210 = vpack.c.b16 %v3120, %v3118
    %v3211 = vpack.c.b16 %v3123, %v3121
    %v3212 = vpack.c.b16 %v3124, %v3122
    %v3213 = vpack.c.b16 %v3127, %v3125
    %v3214 = vpack.c.b16 %v3128, %v3126
    %v3215 = vpack.c.b16 %v3131, %v3129
    %v3216 = vpack.c.b16 %v3132, %v3130
    %v3217 = vpack.c.b16 %v3135, %v3133
    %v3218 = vpack.c.b16 %v3136, %v3134
    %v3219 = vpack.c.b16 %v3139, %v3137
    %v3220 = vpack.c.b16 %v3140, %v3138
    %v3221 = vpack.c.b16 %v3143, %v3141
    %v3222 = vpack.c.b16 %v3144, %v3142
    %v3223 = vpack.c.b16 %v3147, %v3145
    %v3224 = vpack.c.b16 %v3148, %v3146
    %v3225 = vpack.c.b16 %v3151, %v3149
    %v3226 = vpack.c.b16 %v3152, %v3150
    %v3227 = vpack.c.b16 %v3155, %v3153
    %v3228 = vpack.c.b16 %v3156, %v3154
    %v3229 = vpack.c.b16 %v3159, %v3157
    %v3230 = vpack.c.b16 %v3160, %v3158
    %v3231 = vpack.c.b16 %v3163, %v3161
    %v3232 = vpack.c.b16 %v3164, %v3162
    %v3233 = vpack.c.b16 %v3167, %v3165
    %v3234 = vpack.c.b16 %v3168, %v3166
    %v3235 = vpack.c.b16 %v3171, %v3169
    %v3236 = vpack.c.b16 %v3172, %v3170
    %3301 = vmatprep.subr.bf16.mxu0 %v3174
    %3302 = vmatpush1.bf16.msra.mxu0 %v3173
    %3303 = vmatprep.subr.bf16.mxu0 %v3176
    %3304 = vmatpush1.bf16.msra.mxu0 %v3175
    %3305 = vmatprep.subr.bf16.mxu0 %v3178
    %3306 = vmatpush1.bf16.msra.mxu0 %v3177
    %3307 = vmatprep.subr.bf16.mxu0 %v3180
    %3308 = vmatpush1.bf16.msra.mxu0 %v3179
    %3309 = vmatprep.subr.bf16.mxu0 %v3182
    %3310 = vmatpush1.bf16.msra.mxu0 %v3181
    %3311 = vmatprep.subr.bf16.mxu0 %v3184
    %3312 = vmatpush1.bf16.msra.mxu0 %v3183
    %3313 = vmatprep.subr.bf16.mxu0 %v3186
    %3314 = vmatpush1.bf16.msra.mxu0 %v3185
    %3315 = vmatprep.subr.bf16.mxu0 %v3188
    %3316 = vmatpush1.bf16.msra.mxu0 %v3187
    %3317 = vmatprep.subr.bf16.mxu0 %v3190
    %3318 = vmatpush1.bf16.msra.mxu0 %v3189
    %3319 = vmatprep.subr.bf16.mxu0 %v3192
    %3320 = vmatpush1.bf16.msra.mxu0 %v3191
    %3321 = vmatprep.subr.bf16.mxu0 %v3194
    %3322 = vmatpush1.bf16.msra.mxu0 %v3193
    %3323 = vmatprep.subr.bf16.mxu0 %v3196
    %3324 = vmatpush1.bf16.msra.mxu0 %v3195
    %3325 = vmatprep.subr.bf16.mxu0 %v3198
    %3326 = vmatpush1.bf16.msra.mxu0 %v3197
    %3327 = vmatprep.subr.bf16.mxu0 %v3200
    %3328 = vmatpush1.bf16.msra.mxu0 %v3199
    %3329 = vmatprep.subr.bf16.mxu0 %v3202
    %3330 = vmatpush1.bf16.msra.mxu0 %v3201
    %3331 = vmatprep.subr.bf16.mxu0 %v3204
    %3332 = vmatpush1.bf16.msra.mxu0 %v3203
    %3333 = vmatprep.mubr.bf16.mxu0 %v2966
    %3334 = vmatmul.mubr.bf16.gmra.mrb[0].mxu0 %v2965
    %v3335 = vpop.f32.mrb[0].mxu0
    %v3336 = vadd.f32 %v2974, %v3335
    %v3337 = vpop.f32.mrb[0].mxu0
    %v3338 = vadd.f32 %v2978, %v3337
    %v3339 = vpop.f32.mrb[0].mxu0
    %v3340 = vpop.f32.mrb[0].mxu0
    %3341 = vdwg.mxu0
    %3342 = vmatprep.subr.bf16.mxu0 %v3206
    %3343 = vmatpush1.bf16.msra.mxu0 %v3205
    %3344 = vmatprep.subr.bf16.mxu0 %v3208
    %3345 = vmatpush1.bf16.msra.mxu0 %v3207
    %3346 = vmatprep.subr.bf16.mxu0 %v3210
    %3347 = vmatpush1.bf16.msra.mxu0 %v3209
    %3348 = vmatprep.subr.bf16.mxu0 %v3212
    %3349 = vmatpush1.bf16.msra.mxu0 %v3211
    %3350 = vmatprep.subr.bf16.mxu0 %v3214
    %3351 = vmatpush1.bf16.msra.mxu0 %v3213
    %3352 = vmatprep.subr.bf16.mxu0 %v3216
    %3353 = vmatpush1.bf16.msra.mxu0 %v3215
    %3354 = vmatprep.subr.bf16.mxu0 %v3218
    %3355 = vmatpush1.bf16.msra.mxu0 %v3217
    %3356 = vmatprep.subr.bf16.mxu0 %v3220
    %3357 = vmatpush1.bf16.msra.mxu0 %v3219
    %3358 = vmatprep.subr.bf16.mxu0 %v3222
    %3359 = vmatpush1.bf16.msra.mxu0 %v3221
    %3360 = vmatprep.subr.bf16.mxu0 %v3224
    %3361 = vmatpush1.bf16.msra.mxu0 %v3223
    %3362 = vmatprep.subr.bf16.mxu0 %v3226
    %3363 = vmatpush1.bf16.msra.mxu0 %v3225
    %3364 = vmatprep.subr.bf16.mxu0 %v3228
    %3365 = vmatpush1.bf16.msra.mxu0 %v3227
    %3366 = vmatprep.subr.bf16.mxu0 %v3230
    %3367 = vmatpush1.bf16.msra.mxu0 %v3229
    %3368 = vmatprep.subr.bf16.mxu0 %v3232
    %3369 = vmatpush1.bf16.msra.mxu0 %v3231
    %3370 = vmatprep.subr.bf16.mxu0 %v3234
    %3371 = vmatpush1.bf16.msra.mxu0 %v3233
    %3372 = vmatprep.subr.bf16.mxu0 %v3236
    %3373 = vmatpush1.bf16.msra.mxu0 %v3235
    %3374 = vmatprep.mubr.bf16.mxu0 %v2968
    %3375 = vmatmul.mubr.bf16.gmra.mrb[0].mxu0 %v2967
    %v3376 = vpop.f32.mrb[0].mxu0
    %v3377 = vadd.f32 %v3336, %v3376
    %v3378 = vpop.f32.mrb[0].mxu0
    %v3379 = vadd.f32 %v3338, %v3378
    %v3380 = vpop.f32.mrb[0].mxu0
    %v3381 = vpop.f32.mrb[0].mxu0
    %3382 = vdwg.mxu0
    %v3383 = vld [vmem:[#allocation18] sm:$0x3]
    %v3384 = vld [vmem:[#allocation20] sm:$0x3]
    %v3385 = vsel %vm266, %v3377, 0.0
    %v3386 = vsel %vm266, %v3379, 0.0
    %v3387 = vadd.f32 %v3385, %v3386
    %3388 = vadd.xlane.f32.xlu0 %v3387
    %v3389 = vpop.xlane.xlu0 %3388
    %v3390 = vmul.f32 %v3389, %v2857
    %v3391 = vsub.f32 %v3377, %v3390
    %v3392 = vsub.f32 %v3379, %v3390
    %v3393 = vmul.f32 %v3391, %v3391
    %v3394 = vmul.f32 %v3392, %v3392
    %v3395 = vsel %vm266, %v3393, 0.0
    %v3396 = vsel %vm266, %v3394, 0.0
    %v3397 = vadd.f32 %v3395, %v3396
    %3398 = vadd.xlane.f32.xlu0 %v3397
    %v3399 = vpop.xlane.xlu0 %3398
    %v3400 = vmul.f32 %v3399, %v2857
    %v3401 = vadd.f32 %v3400, 1e-05
    %v3402 = vrsqrt.pop %v3401
    %v3403 = vmul.f32 %v3391, %v3402
    %v3404 = vmul.f32 %v3392, %v3402
    %v3406 = vlaneseq
    %v3407 = vshrl.u32 %v3406, 7
    %v3408 = vsub.s32 0, %v3407
    %v3409 = vrot.slane %v3383, %v3408
    %v3410 = vlaneseq
    %v3411 = vshrl.u32 %v3410, 7
    %v3412 = vsub.s32 1, %v3411
    %v3413 = vrot.slane %v3383, %v3412
    %v3416 = vmul.f32 %v3403, %v3409
    %v3417 = vmul.f32 %v3404, %v3413
    %v3419 = vlaneseq
    %v3420 = vshrl.u32 %v3419, 7
    %v3421 = vsub.s32 0, %v3420
    %v3422 = vrot.slane %v3384, %v3421
    %v3423 = vlaneseq
    %v3424 = vshrl.u32 %v3423, 7
    %v3425 = vsub.s32 1, %v3424
    %v3426 = vrot.slane %v3384, %v3425
    %v3429 = vadd.f32 %v3416, %v3422
    %v3430 = vadd.f32 %v3417, %v3426
    %v3431 = vmax.f32 %v3429, 0.0
    %v3432 = vmax.f32 %v3430, 0.0
    %v3433 = vld [vmem:[%s11] sm:$0xf]
    %v3434 = vld [vmem:[%s11 + $0x4] sm:$0xf]
    %v3435 = vld [vmem:[%s11 + $0x8] sm:$0xf]
    %v3436 = vld [vmem:[%s11 + $0xc] sm:$0xf]
    %v3437 = vld [vmem:[%s11 + $0x10] sm:$0xf]
    %v3438 = vld [vmem:[%s11 + $0x14] sm:$0xf]
    %v3439 = vld [vmem:[%s11 + $0x18] sm:$0xf]
    %v3440 = vld [vmem:[%s11 + $0x1c] sm:$0xf]
    %v3441 = vld [vmem:[%s11 + $0x20] sm:$0xf]
    %v3442 = vld [vmem:[%s11 + $0x24] sm:$0xf]
    %v3443 = vld [vmem:[%s11 + $0x28] sm:$0xf]
    %v3444 = vld [vmem:[%s11 + $0x2c] sm:$0xf]
    %v3445 = vld [vmem:[%s11 + $0x30] sm:$0xf]
    %v3446 = vld [vmem:[%s11 + $0x34] sm:$0xf]
    %v3447 = vld [vmem:[%s11 + $0x38] sm:$0xf]
    %v3448 = vld [vmem:[%s11 + $0x3c] sm:$0xf]
    %v3449 = vld [vmem:[%s11 + $0x40] sm:$0xf]
    %v3450 = vld [vmem:[%s11 + $0x44] sm:$0xf]
    %v3451 = vld [vmem:[%s11 + $0x48] sm:$0xf]
    %v3452 = vld [vmem:[%s11 + $0x4c] sm:$0xf]
    %v3453 = vld [vmem:[%s11 + $0x50] sm:$0xf]
    %v3454 = vld [vmem:[%s11 + $0x54] sm:$0xf]
    %v3455 = vld [vmem:[%s11 + $0x58] sm:$0xf]
    %v3456 = vld [vmem:[%s11 + $0x5c] sm:$0xf]
    %v3457 = vld [vmem:[%s11 + $0x60] sm:$0xf]
    %v3458 = vld [vmem:[%s11 + $0x64] sm:$0xf]
    %v3459 = vld [vmem:[%s11 + $0x68] sm:$0xf]
    %v3460 = vld [vmem:[%s11 + $0x6c] sm:$0xf]
    %v3461 = vld [vmem:[%s11 + $0x70] sm:$0xf]
    %v3462 = vld [vmem:[%s11 + $0x74] sm:$0xf]
    %v3463 = vld [vmem:[%s11 + $0x78] sm:$0xf]
    %v3464 = vld [vmem:[%s11 + $0x7c] sm:$0xf]
    %v3465 = vpack.c.bf16 %v2899, %v2899
    %v3466 = vpack.c.bf16 %v2900, %v2900
    %v3467 = vld [vmem:[#allocation2] sm:$0x1]
    %v3469 = vlaneseq
    %v3470 = vshrl.u32 %v3469, 7
    %v3471 = vsub.s32 0, %v3470
    %v3472 = vrot.slane %v3467, %v3471
    %v3506 = vunpack.c.l.b16 %v3433
    %v3507 = vunpack.c.l.b16 %v3434
    %v3508 = vunpack.c.l.b16 %v3435
    %v3509 = vunpack.c.l.b16 %v3436
    %v3510 = vunpack.c.l.b16 %v3437
    %v3511 = vunpack.c.l.b16 %v3438
    %v3512 = vunpack.c.l.b16 %v3439
    %v3513 = vunpack.c.l.b16 %v3440
    %v3514 = vunpack.c.l.b16 %v3441
    %v3515 = vunpack.c.l.b16 %v3442
    %v3516 = vunpack.c.l.b16 %v3443
    %v3517 = vunpack.c.l.b16 %v3444
    %v3518 = vunpack.c.l.b16 %v3445
    %v3519 = vunpack.c.l.b16 %v3446
    %v3520 = vunpack.c.l.b16 %v3447
    %v3521 = vunpack.c.l.b16 %v3448
    %v3522 = vunpack.c.l.b16 %v3449
    %v3523 = vunpack.c.l.b16 %v3450
    %v3524 = vunpack.c.l.b16 %v3451
    %v3525 = vunpack.c.l.b16 %v3452
    %v3526 = vunpack.c.l.b16 %v3453
    %v3527 = vunpack.c.l.b16 %v3454
    %v3528 = vunpack.c.l.b16 %v3455
    %v3529 = vunpack.c.l.b16 %v3456
    %v3530 = vunpack.c.l.b16 %v3457
    %v3531 = vunpack.c.l.b16 %v3458
    %v3532 = vunpack.c.l.b16 %v3459
    %v3533 = vunpack.c.l.b16 %v3460
    %v3534 = vunpack.c.l.b16 %v3461
    %v3535 = vunpack.c.l.b16 %v3462
    %v3536 = vunpack.c.l.b16 %v3463
    %v3537 = vunpack.c.l.b16 %v3464
    %v3538 = vpack.c.b16 %v3507, %v3506
    %v3539 = vpack.c.b16 %v3509, %v3508
    %v3540 = vpack.c.b16 %v3511, %v3510
    %v3541 = vpack.c.b16 %v3513, %v3512
    %v3542 = vpack.c.b16 %v3515, %v3514
    %v3543 = vpack.c.b16 %v3517, %v3516
    %v3544 = vpack.c.b16 %v3519, %v3518
    %v3545 = vpack.c.b16 %v3521, %v3520
    %v3546 = vpack.c.b16 %v3523, %v3522
    %v3547 = vpack.c.b16 %v3525, %v3524
    %v3548 = vpack.c.b16 %v3527, %v3526
    %v3549 = vpack.c.b16 %v3529, %v3528
    %v3550 = vpack.c.b16 %v3531, %v3530
    %v3551 = vpack.c.b16 %v3533, %v3532
    %v3552 = vpack.c.b16 %v3535, %v3534
    %v3553 = vpack.c.b16 %v3537, %v3536
    %3570 = vmatprep.subr.bf16.mxu0 0
    %3571 = vmatpush1.bf16.msra.mxu0 %v3538
    %3572 = vmatprep.subr.bf16.mxu0 0
    %3573 = vmatpush1.bf16.msra.mxu0 %v3539
    %3574 = vmatprep.subr.bf16.mxu0 0
    %3575 = vmatpush1.bf16.msra.mxu0 %v3540
    %3576 = vmatprep.subr.bf16.mxu0 0
    %3577 = vmatpush1.bf16.msra.mxu0 %v3541
    %3578 = vmatprep.subr.bf16.mxu0 0
    %3579 = vmatpush1.bf16.msra.mxu0 %v3542
    %3580 = vmatprep.subr.bf16.mxu0 0
    %3581 = vmatpush1.bf16.msra.mxu0 %v3543
    %3582 = vmatprep.subr.bf16.mxu0 0
    %3583 = vmatpush1.bf16.msra.mxu0 %v3544
    %3584 = vmatprep.subr.bf16.mxu0 0
    %3585 = vmatpush1.bf16.msra.mxu0 %v3545
    %3586 = vmatprep.subr.bf16.mxu0 0
    %3587 = vmatpush1.bf16.msra.mxu0 %v3546
    %3588 = vmatprep.subr.bf16.mxu0 0
    %3589 = vmatpush1.bf16.msra.mxu0 %v3547
    %3590 = vmatprep.subr.bf16.mxu0 0
    %3591 = vmatpush1.bf16.msra.mxu0 %v3548
    %3592 = vmatprep.subr.bf16.mxu0 0
    %3593 = vmatpush1.bf16.msra.mxu0 %v3549
    %3594 = vmatprep.subr.bf16.mxu0 0
    %3595 = vmatpush1.bf16.msra.mxu0 %v3550
    %3596 = vmatprep.subr.bf16.mxu0 0
    %3597 = vmatpush1.bf16.msra.mxu0 %v3551
    %3598 = vmatprep.subr.bf16.mxu0 0
    %3599 = vmatpush1.bf16.msra.mxu0 %v3552
    %3600 = vmatprep.subr.bf16.mxu0 0
    %3601 = vmatpush1.bf16.msra.mxu0 %v3553
    %3602 = vmatprep.mubr.bf16.mxu0 %v3466
    %3603 = vmatmul.mubr.bf16.gmra.mrb[0].mxu0 %v3465
    %v3604 = vpop.f32.mrb[0].mxu0
    %v3605 = vadd.f32 %v3472, %v3604
    %v3606 = vpop.f32.mrb[0].mxu0
    %v3607 = vpop.f32.mrb[0].mxu0
    %v3608 = vpop.f32.mrb[0].mxu0
    %3609 = vdwg.mxu0
    %v3610 = vld [vmem:[#allocation21] sm:$0xf]
    %v3611 = vld [vmem:[#allocation21 + $0x4] sm:$0xf]
    %v3612 = vld [vmem:[#allocation21 + $0x8] sm:$0xf]
    %v3613 = vld [vmem:[#allocation21 + $0xc] sm:$0xf]
    %v3614 = vld [vmem:[#allocation21 + $0x10] sm:$0xf]
    %v3615 = vld [vmem:[#allocation21 + $0x14] sm:$0xf]
    %v3616 = vld [vmem:[#allocation21 + $0x18] sm:$0xf]
    %v3617 = vld [vmem:[#allocation21 + $0x1c] sm:$0xf]
    %v3618 = vld [vmem:[#allocation21 + $0x20] sm:$0xf]
    %v3619 = vld [vmem:[#allocation21 + $0x24] sm:$0xf]
    %v3620 = vld [vmem:[#allocation21 + $0x28] sm:$0xf]
    %v3621 = vld [vmem:[#allocation21 + $0x2c] sm:$0xf]
    %v3622 = vld [vmem:[#allocation21 + $0x30] sm:$0xf]
    %v3623 = vld [vmem:[#allocation21 + $0x34] sm:$0xf]
    %v3624 = vld [vmem:[#allocation21 + $0x38] sm:$0xf]
    %v3625 = vld [vmem:[#allocation21 + $0x3c] sm:$0xf]
    %v3626 = vld [vmem:[#allocation21 + $0x40] sm:$0xf]
    %v3627 = vld [vmem:[#allocation21 + $0x44] sm:$0xf]
    %v3628 = vld [vmem:[#allocation21 + $0x48] sm:$0xf]
    %v3629 = vld [vmem:[#allocation21 + $0x4c] sm:$0xf]
    %v3630 = vld [vmem:[#allocation21 + $0x50] sm:$0xf]
    %v3631 = vld [vmem:[#allocation21 + $0x54] sm:$0xf]
    %v3632 = vld [vmem:[#allocation21 + $0x58] sm:$0xf]
    %v3633 = vld [vmem:[#allocation21 + $0x5c] sm:$0xf]
    %v3634 = vld [vmem:[#allocation21 + $0x60] sm:$0xf]
    %v3635 = vld [vmem:[#allocation21 + $0x64] sm:$0xf]
    %v3636 = vld [vmem:[#allocation21 + $0x68] sm:$0xf]
    %v3637 = vld [vmem:[#allocation21 + $0x6c] sm:$0xf]
    %v3638 = vld [vmem:[#allocation21 + $0x70] sm:$0xf]
    %v3639 = vld [vmem:[#allocation21 + $0x74] sm:$0xf]
    %v3640 = vld [vmem:[#allocation21 + $0x78] sm:$0xf]
    %v3641 = vld [vmem:[#allocation21 + $0x7c] sm:$0xf]
    %v3642 = vpack.c.bf16 %v3431, %v3431
    %v3643 = vpack.c.bf16 %v3432, %v3432
    %v3644 = vld [vmem:[%s18] sm:$0x1]
    %v3646 = vlaneseq
    %v3647 = vshrl.u32 %v3646, 7
    %v3648 = vsub.s32 0, %v3647
    %v3649 = vrot.slane %v3644, %v3648
    %v3683 = vunpack.c.l.b16 %v3610
    %v3684 = vunpack.c.l.b16 %v3611
    %v3685 = vunpack.c.l.b16 %v3612
    %v3686 = vunpack.c.l.b16 %v3613
    %v3687 = vunpack.c.l.b16 %v3614
    %v3688 = vunpack.c.l.b16 %v3615
    %v3689 = vunpack.c.l.b16 %v3616
    %v3690 = vunpack.c.l.b16 %v3617
    %v3691 = vunpack.c.l.b16 %v3618
    %v3692 = vunpack.c.l.b16 %v3619
    %v3693 = vunpack.c.l.b16 %v3620
    %v3694 = vunpack.c.l.b16 %v3621
    %v3695 = vunpack.c.l.b16 %v3622
    %v3696 = vunpack.c.l.b16 %v3623
    %v3697 = vunpack.c.l.b16 %v3624
    %v3698 = vunpack.c.l.b16 %v3625
    %v3699 = vunpack.c.l.b16 %v3626
    %v3700 = vunpack.c.l.b16 %v3627
    %v3701 = vunpack.c.l.b16 %v3628
    %v3702 = vunpack.c.l.b16 %v3629
    %v3703 = vunpack.c.l.b16 %v3630
    %v3704 = vunpack.c.l.b16 %v3631
    %v3705 = vunpack.c.l.b16 %v3632
    %v3706 = vunpack.c.l.b16 %v3633
    %v3707 = vunpack.c.l.b16 %v3634
    %v3708 = vunpack.c.l.b16 %v3635
    %v3709 = vunpack.c.l.b16 %v3636
    %v3710 = vunpack.c.l.b16 %v3637
    %v3711 = vunpack.c.l.b16 %v3638
    %v3712 = vunpack.c.l.b16 %v3639
    %v3713 = vunpack.c.l.b16 %v3640
    %v3714 = vunpack.c.l.b16 %v3641
    %v3715 = vpack.c.b16 %v3684, %v3683
    %v3716 = vpack.c.b16 %v3686, %v3685
    %v3717 = vpack.c.b16 %v3688, %v3687
    %v3718 = vpack.c.b16 %v3690, %v3689
    %v3719 = vpack.c.b16 %v3692, %v3691
    %v3720 = vpack.c.b16 %v3694, %v3693
    %v3721 = vpack.c.b16 %v3696, %v3695
    %v3722 = vpack.c.b16 %v3698, %v3697
    %v3723 = vpack.c.b16 %v3700, %v3699
    %v3724 = vpack.c.b16 %v3702, %v3701
    %v3725 = vpack.c.b16 %v3704, %v3703
    %v3726 = vpack.c.b16 %v3706, %v3705
    %v3727 = vpack.c.b16 %v3708, %v3707
    %v3728 = vpack.c.b16 %v3710, %v3709
    %v3729 = vpack.c.b16 %v3712, %v3711
    %v3730 = vpack.c.b16 %v3714, %v3713
    %3747 = vmatprep.subr.bf16.mxu0 0
    %3748 = vmatpush1.bf16.msra.mxu0 %v3715
    %3749 = vmatprep.subr.bf16.mxu0 0
    %3750 = vmatpush1.bf16.msra.mxu0 %v3716
    %3751 = vmatprep.subr.bf16.mxu0 0
    %3752 = vmatpush1.bf16.msra.mxu0 %v3717
    %3753 = vmatprep.subr.bf16.mxu0 0
    %3754 = vmatpush1.bf16.msra.mxu0 %v3718
    %3755 = vmatprep.subr.bf16.mxu0 0
    %3756 = vmatpush1.bf16.msra.mxu0 %v3719
    %3757 = vmatprep.subr.bf16.mxu0 0
    %3758 = vmatpush1.bf16.msra.mxu0 %v3720
    %3759 = vmatprep.subr.bf16.mxu0 0
    %3760 = vmatpush1.bf16.msra.mxu0 %v3721
    %3761 = vmatprep.subr.bf16.mxu0 0
    %3762 = vmatpush1.bf16.msra.mxu0 %v3722
    %3763 = vmatprep.subr.bf16.mxu0 0
    %3764 = vmatpush1.bf16.msra.mxu0 %v3723
    %3765 = vmatprep.subr.bf16.mxu0 0
    %3766 = vmatpush1.bf16.msra.mxu0 %v3724
    %3767 = vmatprep.subr.bf16.mxu0 0
    %3768 = vmatpush1.bf16.msra.mxu0 %v3725
    %3769 = vmatprep.subr.bf16.mxu0 0
    %3770 = vmatpush1.bf16.msra.mxu0 %v3726
    %3771 = vmatprep.subr.bf16.mxu0 0
    %3772 = vmatpush1.bf16.msra.mxu0 %v3727
    %3773 = vmatprep.subr.bf16.mxu0 0
    %3774 = vmatpush1.bf16.msra.mxu0 %v3728
    %3775 = vmatprep.subr.bf16.mxu0 0
    %3776 = vmatpush1.bf16.msra.mxu0 %v3729
    %3777 = vmatprep.subr.bf16.mxu0 0
    %3778 = vmatpush1.bf16.msra.mxu0 %v3730
    %3779 = vmatprep.mubr.bf16.mxu0 %v3643
    %3780 = vmatmul.mubr.bf16.gmra.mrb[0].mxu0 %v3642
    %v3781 = vpop.f32.mrb[0].mxu0
    %v3782 = vadd.f32 %v3649, %v3781
    %v3783 = vpop.f32.mrb[0].mxu0
    %v3784 = vpop.f32.mrb[0].mxu0
    %v3785 = vpop.f32.mrb[0].mxu0
    %3786 = vdwg.mxu0
    %v3787 = vsel %vm266, %v3782, 0.0
    %3788 = vadd.xlane.f32.xlu0 %v3787
    %v3789 = vpop.xlane.xlu0 %3788
    %v3790 = vmul.f32 %v3789, 0.25
    %v3791 = vsub.f32 %v3782, %v3790
    %3793 = vset.pattern.permute.xlu0 0
    %3794 = vperm.xlu0 %3793, %v3605
    %v3795 = vpop.permute.xlu0 %3794
    %v3797 = vadd.f32 %v3795, %v3791
    %3798 = vst [vmem:[#allocation23] sm:$0x3] %v3797
    // Predicated region
    $region126: #{transformer_dueling_forward.3} parent=1 // pred_check
      _
    $region127: #{transformer_dueling_forward.3} parent=1 // pred_check_branch
      %3800 = sbr.rel (0) target = $region129
    $region128: #{transformer_dueling_forward.3} parent=1 // pred_region
      %s3802 = ssub.s32 32, 32
      %3803 = vsyncadd [#allocation5], %s3802
      %s3805 = sshll.u32 [#allocation23], 4
      %s3806 = int_to_ptr.vmem [resolvable:$true] %s3805
      %3808 = dma.vmem_to_hbm [thread:$0]  %s3806, 32, %s19, [#allocation5]
    $region129: #{transformer_dueling_forward.3} parent=1 // pred_fallthru
      _
    // Predicated region
    $region130: #{transformer_dueling_forward.3} parent=1 // pred_check
      _
    $region131: #{transformer_dueling_forward.3} parent=1 // pred_check_branch
      %3810 = sbr.rel (0) target = $region133
    $region132: #{transformer_dueling_forward.3} parent=1 // pred_region
      %3811 = dma.done [#allocation5], 32
    $region133: #{transformer_dueling_forward.3} parent=1 // pred_fallthru
      _
    %3812 = vsyncpa [#allocation4], 1
    %3813 = vsyncpa [#allocation7], 1
    %3814 = vsyncpa [#allocation10], 1
    %3815 = vsyncpa [#allocation13], 1
    %3816 = vsyncpa [#allocation16], 1
    %3817 = vsyncpa [#allocation19], 1
    %3818 = vsyncpa [#allocation22], 1
    %3819 = vsyncpa [#allocation5], 1

</llo_original>
